<compile_context>
chip_gen: v6e
topology: v6e:2x2x1
jax: 0.10.0
libtpu: 0.0.40
codegen_flags: <defaults>
</compile_context>

<pallas_src>
import jax
import jax.numpy as jnp
from jax.experimental import pallas as pl
from jax.experimental.pallas import tpu as pltpu

EPS = 1e-3


def _dwconv_bn_kernel(x_ref, w_ref, gamma_ref, beta_ref, out_ref, xpad_ref):
    # x_ref    : (N, H, W, Cb) f32   NHWC input block (channels on lanes)
    # w_ref    : (3, 3, 1, Cb) f32   depthwise taps, each a (1, Cb) lane vector
    # gamma_ref: (1, Cb) f32
    # beta_ref : (1, Cb) f32
    # out_ref  : (N, H, W, Cb) f32
    # xpad_ref : (H+2, PADW, Cb) f32 VMEM scratch; real rows live at columns
    #                                [XOFF, XOFF+W) so every scratch store is
    #                                sublane-tile aligned, halo columns are zero.
    N, H, W, Cb = out_ref.shape
    XOFF = 8  # tile-aligned column offset of the real data inside the scratch

    # Hoist the 9 taps once as (1, Cb) lane vectors (no per-tap 1-D relayout).
    taps = [[w_ref[ky, kx] for kx in range(3)] for ky in range(3)]

    sum_acc = jnp.zeros((W, Cb), jnp.float32)   # running per-channel sum
    sq_acc = jnp.zeros((W, Cb), jnp.float32)    # running per-channel sum of squares

    for n in range(N):
        # Build the zero-padded copy of image n inside VMEM (halo in-kernel).
        xpad_ref[...] = jnp.zeros_like(xpad_ref)
        xpad_ref[1:H + 1, XOFF:XOFF + W, :] = x_ref[n]

        for i in range(H):                      # static unroll over output rows
            rows = (xpad_ref[i], xpad_ref[i + 1], xpad_ref[i + 2])  # aligned loads
            acc = jnp.zeros((W, Cb), jnp.float32)
            for ky in range(3):
                r = rows[ky]
                for kx in range(3):
                    lo = XOFF - 1 + kx          # padded col kx -> scratch col
                    acc = acc + r[lo:lo + W, :] * taps[ky][kx]
            sum_acc = sum_acc + acc
            sq_acc = sq_acc + acc * acc
            out_ref[n, i] = acc                 # stash un-normalized conv row

    # BatchNorm (training-mode batch stats, biased variance) folded into a
    # single per-channel scale/bias.
    inv_cnt = 1.0 / float(N * H * W)
    mean = sum_acc.sum(axis=0, keepdims=True) * inv_cnt           # (1, Cb)
    var = sq_acc.sum(axis=0, keepdims=True) * inv_cnt - mean * mean
    scale = gamma_ref[...] * jax.lax.rsqrt(var + EPS)             # (1, Cb)
    bias = beta_ref[...] - mean * scale                           # (1, Cb)

    # Single FMA normalization pass, in place, lane-dense stores.
    for n in range(N):
        for i in range(H):
            out_ref[n, i] = out_ref[n, i] * scale + bias


def torch_weight_to_hw1c(w_c133):
    """PyTorch depthwise weight (C,1,3,3) -> (3,3,1,C). One-time parameter relayout."""
    return jnp.transpose(w_c133, (2, 3, 1, 0)).astype(jnp.float32)


def depthwise_conv_bn_nhwc(x_nhwc, w_hw1c, gamma, beta, *, c_blocks=1):
    """Fast path: NHWC activations, no pad / no transpose around the kernel.

    c_blocks=1 on v5e/v6e (single TensorCore, grid steps only add overhead);
    c_blocks=2 on v7x so both TensorCores get an exact per-channel slice.
    """
    N, H, W, C = x_nhwc.shape
    assert C % c_blocks == 0
    cb = C // c_blocks
    assert cb == C or cb % 128 == 0, "channel block must stay lane-aligned"
    pad_w = 8 + 8 * pl.cdiv(W + 1, 8)   # real data at a tile-aligned column offset

    return pl.pallas_call(
        _dwconv_bn_kernel,
        out_shape=jax.ShapeDtypeStruct((N, H, W, C), jnp.float32),
        grid=(c_blocks,),
        in_specs=[
            pl.BlockSpec((N, H, W, cb), lambda c: (0, 0, 0, c)),
            pl.BlockSpec((3, 3, 1, cb), lambda c: (0, 0, 0, c)),
            pl.BlockSpec((1, cb), lambda c: (0, c)),
            pl.BlockSpec((1, cb), lambda c: (0, c)),
        ],
        out_specs=pl.BlockSpec((N, H, W, cb), lambda c: (0, 0, 0, c)),
        scratch_shapes=[pltpu.VMEM((H + 2, pad_w, cb), jnp.float32)],
        compiler_params=pltpu.CompilerParams(dimension_semantics=("parallel",)),
    )(x_nhwc.astype(jnp.float32), w_hw1c.astype(jnp.float32),
      gamma.reshape(1, C).astype(jnp.float32),
      beta.reshape(1, C).astype(jnp.float32))


def depthwise_conv_bn_nchw(x_nchw, w_c133, gamma, beta, *, c_blocks=1):
    """PyTorch-layout adapter. In a full NHWC model these transposes disappear."""
    x_nhwc = jnp.transpose(x_nchw, (0, 2, 3, 1))
    y = depthwise_conv_bn_nhwc(x_nhwc, torch_weight_to_hw1c(w_c133), gamma, beta,
                               c_blocks=c_blocks)
    return jnp.transpose(y, (0, 3, 1, 2))


def reference_nchw(x_nchw, w_c133, gamma, beta):
    C = x_nchw.shape[1]
    y = jax.lax.conv_general_dilated(
        x_nchw, w_c133, window_strides=(1, 1), padding=((1, 1), (1, 1)),
        feature_group_count=C, dimension_numbers=("NCHW", "OIHW", "NCHW"),
        precision=jax.lax.Precision.HIGHEST)
    mean = jnp.mean(y, axis=(0, 2, 3), keepdims=True)
    var = jnp.mean((y - mean) ** 2, axis=(0, 2, 3), keepdims=True)
    return ((y - mean) * jax.lax.rsqrt(var + EPS) * gamma.reshape(1, C, 1, 1)
            + beta.reshape(1, C, 1, 1))


# TODO(synk): PyTorch training-mode BatchNorm2d also updates running_mean /
# running_var (momentum=0.1); only the normalized forward output is produced here.

if __name__ == "__main__":
    # Shapes implied by the module: x = (1, 1536, 7, 7), depthwise weight (1536,1,3,3)
    N, C, H, W = 1, 1536, 7, 7

    key = jax.random.PRNGKey(0)
    kx_, kw_, kg_, kb_ = jax.random.split(key, 4)
    x_nchw = jax.random.normal(kx_, (N, C, H, W), dtype=jnp.float32)
    w_c133 = 0.1 * jax.random.normal(kw_, (C, 1, 3, 3), dtype=jnp.float32)
    gamma = 1.0 + 0.1 * jax.random.normal(kg_, (C,), dtype=jnp.float32)
    beta = 0.1 * jax.random.normal(kb_, (C,), dtype=jnp.float32)

    # Fast NHWC path (single invocation: v5e / v6e configuration).
    x_nhwc = jnp.transpose(x_nchw, (0, 2, 3, 1))
    w_hw1c = torch_weight_to_hw1c(w_c133)
    out_nhwc = jax.block_until_ready(
        depthwise_conv_bn_nhwc(x_nhwc, w_hw1c, gamma, beta, c_blocks=1))

    ref_nchw = jax.block_until_ready(reference_nchw(x_nchw, w_c133, gamma, beta))
    ref_nhwc = jnp.transpose(ref_nchw, (0, 2, 3, 1))
    assert out_nhwc.shape == (N, H, W, C)
    err = float(jnp.max(jnp.abs(out_nhwc - ref_nhwc)))
    assert jnp.allclose(out_nhwc, ref_nhwc, atol=2e-3, rtol=2e-3), \
        f"max abs err {err}"

    # v7x-style two-TensorCore channel split (exact: BN stats are per-channel),
    # exercised through the PyTorch NCHW adapter.
    out2_nchw = jax.block_until_ready(
        depthwise_conv_bn_nchw(x_nchw, w_c133, gamma, beta, c_blocks=2))
    err2 = float(jnp.max(jnp.abs(out2_nchw - ref_nchw)))
    assert out2_nchw.shape == (N, C, H, W)
    assert jnp.allclose(out2_nchw, ref_nchw, atol=2e-3, rtol=2e-3), \
        f"max abs err {err2}"

    print("KERNEL_OK")
</pallas_src>

<mosaic_0001>
module attributes {stable_mosaic.version = 11 : i64} {
  func.func @_dwconv_bn_kernel(%arg0: i32, %arg1: memref<1x7x7x1536xf32, #tpu.memory_space<vmem>>, %arg2: memref<3x3x1x1536xf32, #tpu.memory_space<vmem>>, %arg3: memref<1x1536xf32, #tpu.memory_space<vmem>>, %arg4: memref<1x1536xf32, #tpu.memory_space<vmem>>, %arg5: memref<1x7x7x1536xf32, #tpu.memory_space<vmem>>, %arg6: memref<9x16x1536xf32, #tpu.memory_space<vmem>>) attributes {dimension_semantics = [#tpu.dimension_semantics<parallel>], iteration_bounds = array<i64: 1>, scalar_prefetch = 0 : i64, scratch_operands = 1 : i64, tpu.core_type = #tpu.core_type<tc>, window_params = [{transform_indices = @transform_0, window_bounds = array<i64: 1, 7, 7, 1536>}, {transform_indices = @transform_1, window_bounds = array<i64: 3, 3, 1, 1536>}, {transform_indices = @transform_2, window_bounds = array<i64: 1, 1536>}, {transform_indices = @transform_3, window_bounds = array<i64: 1, 1536>}, {transform_indices = @transform_4, window_bounds = array<i64: 1, 7, 7, 1536>}]} {
    %c0 = arith.constant 0 : index
    %c0_0 = arith.constant 0 : index
    %c0_1 = arith.constant 0 : index
    %c0_2 = arith.constant 0 : index
    %0 = vector.load %arg2[%c0, %c0_0, %c0_1, %c0_2] : memref<3x3x1x1536xf32, #tpu.memory_space<vmem>>, vector<1x1x1x1536xf32>
    %1 = vector.shape_cast %0 : vector<1x1x1x1536xf32> to vector<1x1536xf32>
    %c0_3 = arith.constant 0 : index
    %c1 = arith.constant 1 : index
    %c0_4 = arith.constant 0 : index
    %c0_5 = arith.constant 0 : index
    %2 = vector.load %arg2[%c0_3, %c1, %c0_4, %c0_5] : memref<3x3x1x1536xf32, #tpu.memory_space<vmem>>, vector<1x1x1x1536xf32>
    %3 = vector.shape_cast %2 : vector<1x1x1x1536xf32> to vector<1x1536xf32>
    %c0_6 = arith.constant 0 : index
    %c2 = arith.constant 2 : index
    %c0_7 = arith.constant 0 : index
    %c0_8 = arith.constant 0 : index
    %4 = vector.load %arg2[%c0_6, %c2, %c0_7, %c0_8] : memref<3x3x1x1536xf32, #tpu.memory_space<vmem>>, vector<1x1x1x1536xf32>
    %5 = vector.shape_cast %4 : vector<1x1x1x1536xf32> to vector<1x1536xf32>
    %c1_9 = arith.constant 1 : index
    %c0_10 = arith.constant 0 : index
    %c0_11 = arith.constant 0 : index
    %c0_12 = arith.constant 0 : index
    %6 = vector.load %arg2[%c1_9, %c0_10, %c0_11, %c0_12] : memref<3x3x1x1536xf32, #tpu.memory_space<vmem>>, vector<1x1x1x1536xf32>
    %7 = vector.shape_cast %6 : vector<1x1x1x1536xf32> to vector<1x1536xf32>
    %c1_13 = arith.constant 1 : index
    %c1_14 = arith.constant 1 : index
    %c0_15 = arith.constant 0 : index
    %c0_16 = arith.constant 0 : index
    %8 = vector.load %arg2[%c1_13, %c1_14, %c0_15, %c0_16] : memref<3x3x1x1536xf32, #tpu.memory_space<vmem>>, vector<1x1x1x1536xf32>
    %9 = vector.shape_cast %8 : vector<1x1x1x1536xf32> to vector<1x1536xf32>
    %c1_17 = arith.constant 1 : index
    %c2_18 = arith.constant 2 : index
    %c0_19 = arith.constant 0 : index
    %c0_20 = arith.constant 0 : index
    %10 = vector.load %arg2[%c1_17, %c2_18, %c0_19, %c0_20] : memref<3x3x1x1536xf32, #tpu.memory_space<vmem>>, vector<1x1x1x1536xf32>
    %11 = vector.shape_cast %10 : vector<1x1x1x1536xf32> to vector<1x1536xf32>
    %c2_21 = arith.constant 2 : index
    %c0_22 = arith.constant 0 : index
    %c0_23 = arith.constant 0 : index
    %c0_24 = arith.constant 0 : index
    %12 = vector.load %arg2[%c2_21, %c0_22, %c0_23, %c0_24] : memref<3x3x1x1536xf32, #tpu.memory_space<vmem>>, vector<1x1x1x1536xf32>
    %13 = vector.shape_cast %12 : vector<1x1x1x1536xf32> to vector<1x1536xf32>
    %c2_25 = arith.constant 2 : index
    %c1_26 = arith.constant 1 : index
    %c0_27 = arith.constant 0 : index
    %c0_28 = arith.constant 0 : index
    %14 = vector.load %arg2[%c2_25, %c1_26, %c0_27, %c0_28] : memref<3x3x1x1536xf32, #tpu.memory_space<vmem>>, vector<1x1x1x1536xf32>
    %15 = vector.shape_cast %14 : vector<1x1x1x1536xf32> to vector<1x1536xf32>
    %c2_29 = arith.constant 2 : index
    %c2_30 = arith.constant 2 : index
    %c0_31 = arith.constant 0 : index
    %c0_32 = arith.constant 0 : index
    %16 = vector.load %arg2[%c2_29, %c2_30, %c0_31, %c0_32] : memref<3x3x1x1536xf32, #tpu.memory_space<vmem>>, vector<1x1x1x1536xf32>
    %17 = vector.shape_cast %16 : vector<1x1x1x1536xf32> to vector<1x1536xf32>
    %cst = arith.constant 0.000000e+00 : f32
    %18 = vector.broadcast %cst : f32 to vector<7x1536xf32>
    %cst_33 = arith.constant 0.000000e+00 : f32
    %19 = vector.broadcast %cst_33 : f32 to vector<7x1536xf32>
    %cst_34 = arith.constant 0.000000e+00 : f32
    %20 = vector.broadcast %cst_34 : f32 to vector<9x16x1536xf32>
    %c0_35 = arith.constant 0 : index
    %c0_36 = arith.constant 0 : index
    %c0_37 = arith.constant 0 : index
    %21 = vector.load %arg6[%c0_35, %c0_36, %c0_37] : memref<9x16x1536xf32, #tpu.memory_space<vmem>>, vector<9x16x1536xf32>
    tpu.vector_store %arg6[%c0_35, %c0_36, %c0_37], %20 {strides = array<i32>} : memref<9x16x1536xf32, #tpu.memory_space<vmem>>, vector<9x16x1536xf32>,
    %c0_38 = arith.constant 0 : index
    %c0_39 = arith.constant 0 : index
    %c0_40 = arith.constant 0 : index
    %c0_41 = arith.constant 0 : index
    %22 = vector.load %arg1[%c0_38, %c0_39, %c0_40, %c0_41] : memref<1x7x7x1536xf32, #tpu.memory_space<vmem>>, vector<1x7x7x1536xf32>
    %23 = vector.shape_cast %22 : vector<1x7x7x1536xf32> to vector<7x7x1536xf32>
    %c1_42 = arith.constant 1 : index
    %c8 = arith.constant 8 : index
    %c0_43 = arith.constant 0 : index
    %24 = vector.load %arg6[%c1_42, %c8, %c0_43] : memref<9x16x1536xf32, #tpu.memory_space<vmem>>, vector<7x7x1536xf32>
    tpu.vector_store %arg6[%c1_42, %c8, %c0_43], %23 {strides = array<i32>} : memref<9x16x1536xf32, #tpu.memory_space<vmem>>, vector<7x7x1536xf32>,
    %c0_44 = arith.constant 0 : index
    %c0_45 = arith.constant 0 : index
    %c0_46 = arith.constant 0 : index
    %25 = vector.load %arg6[%c0_44, %c0_45, %c0_46] : memref<9x16x1536xf32, #tpu.memory_space<vmem>>, vector<1x16x1536xf32>
    %26 = vector.shape_cast %25 : vector<1x16x1536xf32> to vector<16x1536xf32>
    %c1_47 = arith.constant 1 : index
    %c0_48 = arith.constant 0 : index
    %c0_49 = arith.constant 0 : index
    %27 = vector.load %arg6[%c1_47, %c0_48, %c0_49] : memref<9x16x1536xf32, #tpu.memory_space<vmem>>, vector<1x16x1536xf32>
    %28 = vector.shape_cast %27 : vector<1x16x1536xf32> to vector<16x1536xf32>
    %c2_50 = arith.constant 2 : index
    %c0_51 = arith.constant 0 : index
    %c0_52 = arith.constant 0 : index
    %29 = vector.load %arg6[%c2_50, %c0_51, %c0_52] : memref<9x16x1536xf32, #tpu.memory_space<vmem>>, vector<1x16x1536xf32>
    %30 = vector.shape_cast %29 : vector<1x16x1536xf32> to vector<16x1536xf32>
    %cst_53 = arith.constant 0.000000e+00 : f32
    %31 = vector.broadcast %cst_53 : f32 to vector<7x1536xf32>
    %32 = vector.extract_strided_slice %26 {offsets = [7, 0], sizes = [7, 1536], strides = [1, 1]} : vector<16x1536xf32> to vector<7x1536xf32>
    %33 = vector.broadcast %1 : vector<1x1536xf32> to vector<7x1536xf32>
    %34 = arith.mulf %32, %33 : vector<7x1536xf32>
    %35 = arith.addf %31, %34 : vector<7x1536xf32>
    %36 = vector.extract_strided_slice %26 {offsets = [8, 0], sizes = [7, 1536], strides = [1, 1]} : vector<16x1536xf32> to vector<7x1536xf32>
    %37 = vector.broadcast %3 : vector<1x1536xf32> to vector<7x1536xf32>
    %38 = arith.mulf %36, %37 : vector<7x1536xf32>
    %39 = arith.addf %35, %38 : vector<7x1536xf32>
    %40 = vector.extract_strided_slice %26 {offsets = [9, 0], sizes = [7, 1536], strides = [1, 1]} : vector<16x1536xf32> to vector<7x1536xf32>
    %41 = vector.broadcast %5 : vector<1x1536xf32> to vector<7x1536xf32>
    %42 = arith.mulf %40, %41 : vector<7x1536xf32>
    %43 = arith.addf %39, %42 : vector<7x1536xf32>
    %44 = vector.extract_strided_slice %28 {offsets = [7, 0], sizes = [7, 1536], strides = [1, 1]} : vector<16x1536xf32> to vector<7x1536xf32>
    %45 = vector.broadcast %7 : vector<1x1536xf32> to vector<7x1536xf32>
    %46 = arith.mulf %44, %45 : vector<7x1536xf32>
    %47 = arith.addf %43, %46 : vector<7x1536xf32>
    %48 = vector.extract_strided_slice %28 {offsets = [8, 0], sizes = [7, 1536], strides = [1, 1]} : vector<16x1536xf32> to vector<7x1536xf32>
    %49 = vector.broadcast %9 : vector<1x1536xf32> to vector<7x1536xf32>
    %50 = arith.mulf %48, %49 : vector<7x1536xf32>
    %51 = arith.addf %47, %50 : vector<7x1536xf32>
    %52 = vector.extract_strided_slice %28 {offsets = [9, 0], sizes = [7, 1536], strides = [1, 1]} : vector<16x1536xf32> to vector<7x1536xf32>
    %53 = vector.broadcast %11 : vector<1x1536xf32> to vector<7x1536xf32>
    %54 = arith.mulf %52, %53 : vector<7x1536xf32>
    %55 = arith.addf %51, %54 : vector<7x1536xf32>
    %56 = vector.extract_strided_slice %30 {offsets = [7, 0], sizes = [7, 1536], strides = [1, 1]} : vector<16x1536xf32> to vector<7x1536xf32>
    %57 = vector.broadcast %13 : vector<1x1536xf32> to vector<7x1536xf32>
    %58 = arith.mulf %56, %57 : vector<7x1536xf32>
    %59 = arith.addf %55, %58 : vector<7x1536xf32>
    %60 = vector.extract_strided_slice %30 {offsets = [8, 0], sizes = [7, 1536], strides = [1, 1]} : vector<16x1536xf32> to vector<7x1536xf32>
    %61 = vector.broadcast %15 : vector<1x1536xf32> to vector<7x1536xf32>
    %62 = arith.mulf %60, %61 : vector<7x1536xf32>
    %63 = arith.addf %59, %62 : vector<7x1536xf32>
    %64 = vector.extract_strided_slice %30 {offsets = [9, 0], sizes = [7, 1536], strides = [1, 1]} : vector<16x1536xf32> to vector<7x1536xf32>
    %65 = vector.broadcast %17 : vector<1x1536xf32> to vector<7x1536xf32>
    %66 = arith.mulf %64, %65 : vector<7x1536xf32>
    %67 = arith.addf %63, %66 : vector<7x1536xf32>
    %68 = arith.addf %18, %67 : vector<7x1536xf32>
    %69 = arith.mulf %67, %67 : vector<7x1536xf32>
    %70 = arith.addf %19, %69 : vector<7x1536xf32>
    %c0_54 = arith.constant 0 : index
    %c0_55 = arith.constant 0 : index
    %c0_56 = arith.constant 0 : index
    %c0_57 = arith.constant 0 : index
    %71 = vector.load %arg5[%c0_54, %c0_55, %c0_56, %c0_57] : memref<1x7x7x1536xf32, #tpu.memory_space<vmem>>, vector<1x1x7x1536xf32>
    %72 = vector.shape_cast %71 : vector<1x1x7x1536xf32> to vector<7x1536xf32>
    %73 = vector.shape_cast %67 : vector<7x1536xf32> to vector<1x1x7x1536xf32>
    tpu.vector_store %arg5[%c0_54, %c0_55, %c0_56, %c0_57], %73 {strides = array<i32>} : memref<1x7x7x1536xf32, #tpu.memory_space<vmem>>, vector<1x1x7x1536xf32>,
    %c1_58 = arith.constant 1 : index
    %c0_59 = arith.constant 0 : index
    %c0_60 = arith.constant 0 : index
    %74 = vector.load %arg6[%c1_58, %c0_59, %c0_60] : memref<9x16x1536xf32, #tpu.memory_space<vmem>>, vector<1x16x1536xf32>
    %75 = vector.shape_cast %74 : vector<1x16x1536xf32> to vector<16x1536xf32>
    %c2_61 = arith.constant 2 : index
    %c0_62 = arith.constant 0 : index
    %c0_63 = arith.constant 0 : index
    %76 = vector.load %arg6[%c2_61, %c0_62, %c0_63] : memref<9x16x1536xf32, #tpu.memory_space<vmem>>, vector<1x16x1536xf32>
    %77 = vector.shape_cast %76 : vector<1x16x1536xf32> to vector<16x1536xf32>
    %c3 = arith.constant 3 : index
    %c0_64 = arith.constant 0 : index
    %c0_65 = arith.constant 0 : index
    %78 = vector.load %arg6[%c3, %c0_64, %c0_65] : memref<9x16x1536xf32, #tpu.memory_space<vmem>>, vector<1x16x1536xf32>
    %79 = vector.shape_cast %78 : vector<1x16x1536xf32> to vector<16x1536xf32>
    %cst_66 = arith.constant 0.000000e+00 : f32
    %80 = vector.broadcast %cst_66 : f32 to vector<7x1536xf32>
    %81 = vector.extract_strided_slice %75 {offsets = [7, 0], sizes = [7, 1536], strides = [1, 1]} : vector<16x1536xf32> to vector<7x1536xf32>
    %82 = vector.broadcast %1 : vector<1x1536xf32> to vector<7x1536xf32>
    %83 = arith.mulf %81, %82 : vector<7x1536xf32>
    %84 = arith.addf %80, %83 : vector<7x1536xf32>
    %85 = vector.extract_strided_slice %75 {offsets = [8, 0], sizes = [7, 1536], strides = [1, 1]} : vector<16x1536xf32> to vector<7x1536xf32>
    %86 = vector.broadcast %3 : vector<1x1536xf32> to vector<7x1536xf32>
    %87 = arith.mulf %85, %86 : vector<7x1536xf32>
    %88 = arith.addf %84, %87 : vector<7x1536xf32>
    %89 = vector.extract_strided_slice %75 {offsets = [9, 0], sizes = [7, 1536], strides = [1, 1]} : vector<16x1536xf32> to vector<7x1536xf32>
    %90 = vector.broadcast %5 : vector<1x1536xf32> to vector<7x1536xf32>
    %91 = arith.mulf %89, %90 : vector<7x1536xf32>
    %92 = arith.addf %88, %91 : vector<7x1536xf32>
    %93 = vector.extract_strided_slice %77 {offsets = [7, 0], sizes = [7, 1536], strides = [1, 1]} : vector<16x1536xf32> to vector<7x1536xf32>
    %94 = vector.broadcast %7 : vector<1x1536xf32> to vector<7x1536xf32>
    %95 = arith.mulf %93, %94 : vector<7x1536xf32>
    %96 = arith.addf %92, %95 : vector<7x1536xf32>
    %97 = vector.extract_strided_slice %77 {offsets = [8, 0], sizes = [7, 1536], strides = [1, 1]} : vector<16x1536xf32> to vector<7x1536xf32>
    %98 = vector.broadcast %9 : vector<1x1536xf32> to vector<7x1536xf32>
    %99 = arith.mulf %97, %98 : vector<7x1536xf32>
    %100 = arith.addf %96, %99 : vector<7x1536xf32>
    %101 = vector.extract_strided_slice %77 {offsets = [9, 0], sizes = [7, 1536], strides = [1, 1]} : vector<16x1536xf32> to vector<7x1536xf32>
    %102 = vector.broadcast %11 : vector<1x1536xf32> to vector<7x1536xf32>
    %103 = arith.mulf %101, %102 : vector<7x1536xf32>
    %104 = arith.addf %100, %103 : vector<7x1536xf32>
    %105 = vector.extract_strided_slice %79 {offsets = [7, 0], sizes = [7, 1536], strides = [1, 1]} : vector<16x1536xf32> to vector<7x1536xf32>
    %106 = vector.broadcast %13 : vector<1x1536xf32> to vector<7x1536xf32>
    %107 = arith.mulf %105, %106 : vector<7x1536xf32>
    %108 = arith.addf %104, %107 : vector<7x1536xf32>
    %109 = vector.extract_strided_slice %79 {offsets = [8, 0], sizes = [7, 1536], strides = [1, 1]} : vector<16x1536xf32> to vector<7x1536xf32>
    %110 = vector.broadcast %15 : vector<1x1536xf32> to vector<7x1536xf32>
    %111 = arith.mulf %109, %110 : vector<7x1536xf32>
    %112 = arith.addf %108, %111 : vector<7x1536xf32>
    %113 = vector.extract_strided_slice %79 {offsets = [9, 0], sizes = [7, 1536], strides = [1, 1]} : vector<16x1536xf32> to vector<7x1536xf32>
    %114 = vector.broadcast %17 : vector<1x1536xf32> to vector<7x1536xf32>
    %115 = arith.mulf %113, %114 : vector<7x1536xf32>
    %116 = arith.addf %112, %115 : vector<7x1536xf32>
    %117 = arith.addf %68, %116 : vector<7x1536xf32>
    %118 = arith.mulf %116, %116 : vector<7x1536xf32>
    %119 = arith.addf %70, %118 : vector<7x1536xf32>
    %c0_67 = arith.constant 0 : index
    %c1_68 = arith.constant 1 : index
    %c0_69 = arith.constant 0 : index
    %c0_70 = arith.constant 0 : index
    %120 = vector.load %arg5[%c0_67, %c1_68, %c0_69, %c0_70] : memref<1x7x7x1536xf32, #tpu.memory_space<vmem>>, vector<1x1x7x1536xf32>
    %121 = vector.shape_cast %120 : vector<1x1x7x1536xf32> to vector<7x1536xf32>
    %122 = vector.shape_cast %116 : vector<7x1536xf32> to vector<1x1x7x1536xf32>
    tpu.vector_store %arg5[%c0_67, %c1_68, %c0_69, %c0_70], %122 {strides = array<i32>} : memref<1x7x7x1536xf32, #tpu.memory_space<vmem>>, vector<1x1x7x1536xf32>,
    %c2_71 = arith.constant 2 : index
    %c0_72 = arith.constant 0 : index
    %c0_73 = arith.constant 0 : index
    %123 = vector.load %arg6[%c2_71, %c0_72, %c0_73] : memref<9x16x1536xf32, #tpu.memory_space<vmem>>, vector<1x16x1536xf32>
    %124 = vector.shape_cast %123 : vector<1x16x1536xf32> to vector<16x1536xf32>
    %c3_74 = arith.constant 3 : index
    %c0_75 = arith.constant 0 : index
    %c0_76 = arith.constant 0 : index
    %125 = vector.load %arg6[%c3_74, %c0_75, %c0_76] : memref<9x16x1536xf32, #tpu.memory_space<vmem>>, vector<1x16x1536xf32>
    %126 = vector.shape_cast %125 : vector<1x16x1536xf32> to vector<16x1536xf32>
    %c4 = arith.constant 4 : index
    %c0_77 = arith.constant 0 : index
    %c0_78 = arith.constant 0 : index
    %127 = vector.load %arg6[%c4, %c0_77, %c0_78] : memref<9x16x1536xf32, #tpu.memory_space<vmem>>, vector<1x16x1536xf32>
    %128 = vector.shape_cast %127 : vector<1x16x1536xf32> to vector<16x1536xf32>
    %cst_79 = arith.constant 0.000000e+00 : f32
    %129 = vector.broadcast %cst_79 : f32 to vector<7x1536xf32>
    %130 = vector.extract_strided_slice %124 {offsets = [7, 0], sizes = [7, 1536], strides = [1, 1]} : vector<16x1536xf32> to vector<7x1536xf32>
    %131 = vector.broadcast %1 : vector<1x1536xf32> to vector<7x1536xf32>
    %132 = arith.mulf %130, %131 : vector<7x1536xf32>
    %133 = arith.addf %129, %132 : vector<7x1536xf32>
    %134 = vector.extract_strided_slice %124 {offsets = [8, 0], sizes = [7, 1536], strides = [1, 1]} : vector<16x1536xf32> to vector<7x1536xf32>
    %135 = vector.broadcast %3 : vector<1x1536xf32> to vector<7x1536xf32>
    %136 = arith.mulf %134, %135 : vector<7x1536xf32>
    %137 = arith.addf %133, %136 : vector<7x1536xf32>
    %138 = vector.extract_strided_slice %124 {offsets = [9, 0], sizes = [7, 1536], strides = [1, 1]} : vector<16x1536xf32> to vector<7x1536xf32>
    %139 = vector.broadcast %5 : vector<1x1536xf32> to vector<7x1536xf32>
    %140 = arith.mulf %138, %139 : vector<7x1536xf32>
    %141 = arith.addf %137, %140 : vector<7x1536xf32>
    %142 = vector.extract_strided_slice %126 {offsets = [7, 0], sizes = [7, 1536], strides = [1, 1]} : vector<16x1536xf32> to vector<7x1536xf32>
    %143 = vector.broadcast %7 : vector<1x1536xf32> to vector<7x1536xf32>
    %144 = arith.mulf %142, %143 : vector<7x1536xf32>
    %145 = arith.addf %141, %144 : vector<7x1536xf32>
    %146 = vector.extract_strided_slice %126 {offsets = [8, 0], sizes = [7, 1536], strides = [1, 1]} : vector<16x1536xf32> to vector<7x1536xf32>
    %147 = vector.broadcast %9 : vector<1x1536xf32> to vector<7x1536xf32>
    %148 = arith.mulf %146, %147 : vector<7x1536xf32>
    %149 = arith.addf %145, %148 : vector<7x1536xf32>
    %150 = vector.extract_strided_slice %126 {offsets = [9, 0], sizes = [7, 1536], strides = [1, 1]} : vector<16x1536xf32> to vector<7x1536xf32>
    %151 = vector.broadcast %11 : vector<1x1536xf32> to vector<7x1536xf32>
    %152 = arith.mulf %150, %151 : vector<7x1536xf32>
    %153 = arith.addf %149, %152 : vector<7x1536xf32>
    %154 = vector.extract_strided_slice %128 {offsets = [7, 0], sizes = [7, 1536], strides = [1, 1]} : vector<16x1536xf32> to vector<7x1536xf32>
    %155 = vector.broadcast %13 : vector<1x1536xf32> to vector<7x1536xf32>
    %156 = arith.mulf %154, %155 : vector<7x1536xf32>
    %157 = arith.addf %153, %156 : vector<7x1536xf32>
    %158 = vector.extract_strided_slice %128 {offsets = [8, 0], sizes = [7, 1536], strides = [1, 1]} : vector<16x1536xf32> to vector<7x1536xf32>
    %159 = vector.broadcast %15 : vector<1x1536xf32> to vector<7x1536xf32>
    %160 = arith.mulf %158, %159 : vector<7x1536xf32>
    %161 = arith.addf %157, %160 : vector<7x1536xf32>
    %162 = vector.extract_strided_slice %128 {offsets = [9, 0], sizes = [7, 1536], strides = [1, 1]} : vector<16x1536xf32> to vector<7x1536xf32>
    %163 = vector.broadcast %17 : vector<1x1536xf32> to vector<7x1536xf32>
    %164 = arith.mulf %162, %163 : vector<7x1536xf32>
    %165 = arith.addf %161, %164 : vector<7x1536xf32>
    %166 = arith.addf %117, %165 : vector<7x1536xf32>
    %167 = arith.mulf %165, %165 : vector<7x1536xf32>
    %168 = arith.addf %119, %167 : vector<7x1536xf32>
    %c0_80 = arith.constant 0 : index
    %c2_81 = arith.constant 2 : index
    %c0_82 = arith.constant 0 : index
    %c0_83 = arith.constant 0 : index
    %169 = vector.load %arg5[%c0_80, %c2_81, %c0_82, %c0_83] : memref<1x7x7x1536xf32, #tpu.memory_space<vmem>>, vector<1x1x7x1536xf32>
    %170 = vector.shape_cast %169 : vector<1x1x7x1536xf32> to vector<7x1536xf32>
    %171 = vector.shape_cast %165 : vector<7x1536xf32> to vector<1x1x7x1536xf32>
    tpu.vector_store %arg5[%c0_80, %c2_81, %c0_82, %c0_83], %171 {strides = array<i32>} : memref<1x7x7x1536xf32, #tpu.memory_space<vmem>>, vector<1x1x7x1536xf32>,
    %c3_84 = arith.constant 3 : index
    %c0_85 = arith.constant 0 : index
    %c0_86 = arith.constant 0 : index
    %172 = vector.load %arg6[%c3_84, %c0_85, %c0_86] : memref<9x16x1536xf32, #tpu.memory_space<vmem>>, vector<1x16x1536xf32>
    %173 = vector.shape_cast %172 : vector<1x16x1536xf32> to vector<16x1536xf32>
    %c4_87 = arith.constant 4 : index
    %c0_88 = arith.constant 0 : index
    %c0_89 = arith.constant 0 : index
    %174 = vector.load %arg6[%c4_87, %c0_88, %c0_89] : memref<9x16x1536xf32, #tpu.memory_space<vmem>>, vector<1x16x1536xf32>
    %175 = vector.shape_cast %174 : vector<1x16x1536xf32> to vector<16x1536xf32>
    %c5 = arith.constant 5 : index
    %c0_90 = arith.constant 0 : index
    %c0_91 = arith.constant 0 : index
    %176 = vector.load %arg6[%c5, %c0_90, %c0_91] : memref<9x16x1536xf32, #tpu.memory_space<vmem>>, vector<1x16x1536xf32>
    %177 = vector.shape_cast %176 : vector<1x16x1536xf32> to vector<16x1536xf32>
    %cst_92 = arith.constant 0.000000e+00 : f32
    %178 = vector.broadcast %cst_92 : f32 to vector<7x1536xf32>
    %179 = vector.extract_strided_slice %173 {offsets = [7, 0], sizes = [7, 1536], strides = [1, 1]} : vector<16x1536xf32> to vector<7x1536xf32>
    %180 = vector.broadcast %1 : vector<1x1536xf32> to vector<7x1536xf32>
    %181 = arith.mulf %179, %180 : vector<7x1536xf32>
    %182 = arith.addf %178, %181 : vector<7x1536xf32>
    %183 = vector.extract_strided_slice %173 {offsets = [8, 0], sizes = [7, 1536], strides = [1, 1]} : vector<16x1536xf32> to vector<7x1536xf32>
    %184 = vector.broadcast %3 : vector<1x1536xf32> to vector<7x1536xf32>
    %185 = arith.mulf %183, %184 : vector<7x1536xf32>
    %186 = arith.addf %182, %185 : vector<7x1536xf32>
    %187 = vector.extract_strided_slice %173 {offsets = [9, 0], sizes = [7, 1536], strides = [1, 1]} : vector<16x1536xf32> to vector<7x1536xf32>
    %188 = vector.broadcast %5 : vector<1x1536xf32> to vector<7x1536xf32>
    %189 = arith.mulf %187, %188 : vector<7x1536xf32>
    %190 = arith.addf %186, %189 : vector<7x1536xf32>
    %191 = vector.extract_strided_slice %175 {offsets = [7, 0], sizes = [7, 1536], strides = [1, 1]} : vector<16x1536xf32> to vector<7x1536xf32>
    %192 = vector.broadcast %7 : vector<1x1536xf32> to vector<7x1536xf32>
    %193 = arith.mulf %191, %192 : vector<7x1536xf32>
    %194 = arith.addf %190, %193 : vector<7x1536xf32>
    %195 = vector.extract_strided_slice %175 {offsets = [8, 0], sizes = [7, 1536], strides = [1, 1]} : vector<16x1536xf32> to vector<7x1536xf32>
    %196 = vector.broadcast %9 : vector<1x1536xf32> to vector<7x1536xf32>
    %197 = arith.mulf %195, %196 : vector<7x1536xf32>
    %198 = arith.addf %194, %197 : vector<7x1536xf32>
    %199 = vector.extract_strided_slice %175 {offsets = [9, 0], sizes = [7, 1536], strides = [1, 1]} : vector<16x1536xf32> to vector<7x1536xf32>
    %200 = vector.broadcast %11 : vector<1x1536xf32> to vector<7x1536xf32>
    %201 = arith.mulf %199, %200 : vector<7x1536xf32>
    %202 = arith.addf %198, %201 : vector<7x1536xf32>
    %203 = vector.extract_strided_slice %177 {offsets = [7, 0], sizes = [7, 1536], strides = [1, 1]} : vector<16x1536xf32> to vector<7x1536xf32>
    %204 = vector.broadcast %13 : vector<1x1536xf32> to vector<7x1536xf32>
    %205 = arith.mulf %203, %204 : vector<7x1536xf32>
    %206 = arith.addf %202, %205 : vector<7x1536xf32>
    %207 = vector.extract_strided_slice %177 {offsets = [8, 0], sizes = [7, 1536], strides = [1, 1]} : vector<16x1536xf32> to vector<7x1536xf32>
    %208 = vector.broadcast %15 : vector<1x1536xf32> to vector<7x1536xf32>
    %209 = arith.mulf %207, %208 : vector<7x1536xf32>
    %210 = arith.addf %206, %209 : vector<7x1536xf32>
    %211 = vector.extract_strided_slice %177 {offsets = [9, 0], sizes = [7, 1536], strides = [1, 1]} : vector<16x1536xf32> to vector<7x1536xf32>
    %212 = vector.broadcast %17 : vector<1x1536xf32> to vector<7x1536xf32>
    %213 = arith.mulf %211, %212 : vector<7x1536xf32>
    %214 = arith.addf %210, %213 : vector<7x1536xf32>
    %215 = arith.addf %166, %214 : vector<7x1536xf32>
    %216 = arith.mulf %214, %214 : vector<7x1536xf32>
    %217 = arith.addf %168, %216 : vector<7x1536xf32>
    %c0_93 = arith.constant 0 : index
    %c3_94 = arith.constant 3 : index
    %c0_95 = arith.constant 0 : index
    %c0_96 = arith.constant 0 : index
    %218 = vector.load %arg5[%c0_93, %c3_94, %c0_95, %c0_96] : memref<1x7x7x1536xf32, #tpu.memory_space<vmem>>, vector<1x1x7x1536xf32>
    %219 = vector.shape_cast %218 : vector<1x1x7x1536xf32> to vector<7x1536xf32>
    %220 = vector.shape_cast %214 : vector<7x1536xf32> to vector<1x1x7x1536xf32>
    tpu.vector_store %arg5[%c0_93, %c3_94, %c0_95, %c0_96], %220 {strides = array<i32>} : memref<1x7x7x1536xf32, #tpu.memory_space<vmem>>, vector<1x1x7x1536xf32>,
    %c4_97 = arith.constant 4 : index
    %c0_98 = arith.constant 0 : index
    %c0_99 = arith.constant 0 : index
    %221 = vector.load %arg6[%c4_97, %c0_98, %c0_99] : memref<9x16x1536xf32, #tpu.memory_space<vmem>>, vector<1x16x1536xf32>
    %222 = vector.shape_cast %221 : vector<1x16x1536xf32> to vector<16x1536xf32>
    %c5_100 = arith.constant 5 : index
    %c0_101 = arith.constant 0 : index
    %c0_102 = arith.constant 0 : index
    %223 = vector.load %arg6[%c5_100, %c0_101, %c0_102] : memref<9x16x1536xf32, #tpu.memory_space<vmem>>, vector<1x16x1536xf32>
    %224 = vector.shape_cast %223 : vector<1x16x1536xf32> to vector<16x1536xf32>
    %c6 = arith.constant 6 : index
    %c0_103 = arith.constant 0 : index
    %c0_104 = arith.constant 0 : index
    %225 = vector.load %arg6[%c6, %c0_103, %c0_104] : memref<9x16x1536xf32, #tpu.memory_space<vmem>>, vector<1x16x1536xf32>
    %226 = vector.shape_cast %225 : vector<1x16x1536xf32> to vector<16x1536xf32>
    %cst_105 = arith.constant 0.000000e+00 : f32
    %227 = vector.broadcast %cst_105 : f32 to vector<7x1536xf32>
    %228 = vector.extract_strided_slice %222 {offsets = [7, 0], sizes = [7, 1536], strides = [1, 1]} : vector<16x1536xf32> to vector<7x1536xf32>
    %229 = vector.broadcast %1 : vector<1x1536xf32> to vector<7x1536xf32>
    %230 = arith.mulf %228, %229 : vector<7x1536xf32>
    %231 = arith.addf %227, %230 : vector<7x1536xf32>
    %232 = vector.extract_strided_slice %222 {offsets = [8, 0], sizes = [7, 1536], strides = [1, 1]} : vector<16x1536xf32> to vector<7x1536xf32>
    %233 = vector.broadcast %3 : vector<1x1536xf32> to vector<7x1536xf32>
    %234 = arith.mulf %232, %233 : vector<7x1536xf32>
    %235 = arith.addf %231, %234 : vector<7x1536xf32>
    %236 = vector.extract_strided_slice %222 {offsets = [9, 0], sizes = [7, 1536], strides = [1, 1]} : vector<16x1536xf32> to vector<7x1536xf32>
    %237 = vector.broadcast %5 : vector<1x1536xf32> to vector<7x1536xf32>
    %238 = arith.mulf %236, %237 : vector<7x1536xf32>
    %239 = arith.addf %235, %238 : vector<7x1536xf32>
    %240 = vector.extract_strided_slice %224 {offsets = [7, 0], sizes = [7, 1536], strides = [1, 1]} : vector<16x1536xf32> to vector<7x1536xf32>
    %241 = vector.broadcast %7 : vector<1x1536xf32> to vector<7x1536xf32>
    %242 = arith.mulf %240, %241 : vector<7x1536xf32>
    %243 = arith.addf %239, %242 : vector<7x1536xf32>
    %244 = vector.extract_strided_slice %224 {offsets = [8, 0], sizes = [7, 1536], strides = [1, 1]} : vector<16x1536xf32> to vector<7x1536xf32>
    %245 = vector.broadcast %9 : vector<1x1536xf32> to vector<7x1536xf32>
    %246 = arith.mulf %244, %245 : vector<7x1536xf32>
    %247 = arith.addf %243, %246 : vector<7x1536xf32>
    %248 = vector.extract_strided_slice %224 {offsets = [9, 0], sizes = [7, 1536], strides = [1, 1]} : vector<16x1536xf32> to vector<7x1536xf32>
    %249 = vector.broadcast %11 : vector<1x1536xf32> to vector<7x1536xf32>
    %250 = arith.mulf %248, %249 : vector<7x1536xf32>
    %251 = arith.addf %247, %250 : vector<7x1536xf32>
    %252 = vector.extract_strided_slice %226 {offsets = [7, 0], sizes = [7, 1536], strides = [1, 1]} : vector<16x1536xf32> to vector<7x1536xf32>
    %253 = vector.broadcast %13 : vector<1x1536xf32> to vector<7x1536xf32>
    %254 = arith.mulf %252, %253 : vector<7x1536xf32>
    %255 = arith.addf %251, %254 : vector<7x1536xf32>
    %256 = vector.extract_strided_slice %226 {offsets = [8, 0], sizes = [7, 1536], strides = [1, 1]} : vector<16x1536xf32> to vector<7x1536xf32>
    %257 = vector.broadcast %15 : vector<1x1536xf32> to vector<7x1536xf32>
    %258 = arith.mulf %256, %257 : vector<7x1536xf32>
    %259 = arith.addf %255, %258 : vector<7x1536xf32>
    %260 = vector.extract_strided_slice %226 {offsets = [9, 0], sizes = [7, 1536], strides = [1, 1]} : vector<16x1536xf32> to vector<7x1536xf32>
    %261 = vector.broadcast %17 : vector<1x1536xf32> to vector<7x1536xf32>
    %262 = arith.mulf %260, %261 : vector<7x1536xf32>
    %263 = arith.addf %259, %262 : vector<7x1536xf32>
    %264 = arith.addf %215, %263 : vector<7x1536xf32>
    %265 = arith.mulf %263, %263 : vector<7x1536xf32>
    %266 = arith.addf %217, %265 : vector<7x1536xf32>
    %c0_106 = arith.constant 0 : index
    %c4_107 = arith.constant 4 : index
    %c0_108 = arith.constant 0 : index
    %c0_109 = arith.constant 0 : index
    %267 = vector.load %arg5[%c0_106, %c4_107, %c0_108, %c0_109] : memref<1x7x7x1536xf32, #tpu.memory_space<vmem>>, vector<1x1x7x1536xf32>
    %268 = vector.shape_cast %267 : vector<1x1x7x1536xf32> to vector<7x1536xf32>
    %269 = vector.shape_cast %263 : vector<7x1536xf32> to vector<1x1x7x1536xf32>
    tpu.vector_store %arg5[%c0_106, %c4_107, %c0_108, %c0_109], %269 {strides = array<i32>} : memref<1x7x7x1536xf32, #tpu.memory_space<vmem>>, vector<1x1x7x1536xf32>,
    %c5_110 = arith.constant 5 : index
    %c0_111 = arith.constant 0 : index
    %c0_112 = arith.constant 0 : index
    %270 = vector.load %arg6[%c5_110, %c0_111, %c0_112] : memref<9x16x1536xf32, #tpu.memory_space<vmem>>, vector<1x16x1536xf32>
    %271 = vector.shape_cast %270 : vector<1x16x1536xf32> to vector<16x1536xf32>
    %c6_113 = arith.constant 6 : index
    %c0_114 = arith.constant 0 : index
    %c0_115 = arith.constant 0 : index
    %272 = vector.load %arg6[%c6_113, %c0_114, %c0_115] : memref<9x16x1536xf32, #tpu.memory_space<vmem>>, vector<1x16x1536xf32>
    %273 = vector.shape_cast %272 : vector<1x16x1536xf32> to vector<16x1536xf32>
    %c7 = arith.constant 7 : index
    %c0_116 = arith.constant 0 : index
    %c0_117 = arith.constant 0 : index
    %274 = vector.load %arg6[%c7, %c0_116, %c0_117] : memref<9x16x1536xf32, #tpu.memory_space<vmem>>, vector<1x16x1536xf32>
    %275 = vector.shape_cast %274 : vector<1x16x1536xf32> to vector<16x1536xf32>
    %cst_118 = arith.constant 0.000000e+00 : f32
    %276 = vector.broadcast %cst_118 : f32 to vector<7x1536xf32>
    %277 = vector.extract_strided_slice %271 {offsets = [7, 0], sizes = [7, 1536], strides = [1, 1]} : vector<16x1536xf32> to vector<7x1536xf32>
    %278 = vector.broadcast %1 : vector<1x1536xf32> to vector<7x1536xf32>
    %279 = arith.mulf %277, %278 : vector<7x1536xf32>
    %280 = arith.addf %276, %279 : vector<7x1536xf32>
    %281 = vector.extract_strided_slice %271 {offsets = [8, 0], sizes = [7, 1536], strides = [1, 1]} : vector<16x1536xf32> to vector<7x1536xf32>
    %282 = vector.broadcast %3 : vector<1x1536xf32> to vector<7x1536xf32>
    %283 = arith.mulf %281, %282 : vector<7x1536xf32>
    %284 = arith.addf %280, %283 : vector<7x1536xf32>
    %285 = vector.extract_strided_slice %271 {offsets = [9, 0], sizes = [7, 1536], strides = [1, 1]} : vector<16x1536xf32> to vector<7x1536xf32>
    %286 = vector.broadcast %5 : vector<1x1536xf32> to vector<7x1536xf32>
    %287 = arith.mulf %285, %286 : vector<7x1536xf32>
    %288 = arith.addf %284, %287 : vector<7x1536xf32>
    %289 = vector.extract_strided_slice %273 {offsets = [7, 0], sizes = [7, 1536], strides = [1, 1]} : vector<16x1536xf32> to vector<7x1536xf32>
    %290 = vector.broadcast %7 : vector<1x1536xf32> to vector<7x1536xf32>
    %291 = arith.mulf %289, %290 : vector<7x1536xf32>
    %292 = arith.addf %288, %291 : vector<7x1536xf32>
    %293 = vector.extract_strided_slice %273 {offsets = [8, 0], sizes = [7, 1536], strides = [1, 1]} : vector<16x1536xf32> to vector<7x1536xf32>
    %294 = vector.broadcast %9 : vector<1x1536xf32> to vector<7x1536xf32>
    %295 = arith.mulf %293, %294 : vector<7x1536xf32>
    %296 = arith.addf %292, %295 : vector<7x1536xf32>
    %297 = vector.extract_strided_slice %273 {offsets = [9, 0], sizes = [7, 1536], strides = [1, 1]} : vector<16x1536xf32> to vector<7x1536xf32>
    %298 = vector.broadcast %11 : vector<1x1536xf32> to vector<7x1536xf32>
    %299 = arith.mulf %297, %298 : vector<7x1536xf32>
    %300 = arith.addf %296, %299 : vector<7x1536xf32>
    %301 = vector.extract_strided_slice %275 {offsets = [7, 0], sizes = [7, 1536], strides = [1, 1]} : vector<16x1536xf32> to vector<7x1536xf32>
    %302 = vector.broadcast %13 : vector<1x1536xf32> to vector<7x1536xf32>
    %303 = arith.mulf %301, %302 : vector<7x1536xf32>
    %304 = arith.addf %300, %303 : vector<7x1536xf32>
    %305 = vector.extract_strided_slice %275 {offsets = [8, 0], sizes = [7, 1536], strides = [1, 1]} : vector<16x1536xf32> to vector<7x1536xf32>
    %306 = vector.broadcast %15 : vector<1x1536xf32> to vector<7x1536xf32>
    %307 = arith.mulf %305, %306 : vector<7x1536xf32>
    %308 = arith.addf %304, %307 : vector<7x1536xf32>
    %309 = vector.extract_strided_slice %275 {offsets = [9, 0], sizes = [7, 1536], strides = [1, 1]} : vector<16x1536xf32> to vector<7x1536xf32>
    %310 = vector.broadcast %17 : vector<1x1536xf32> to vector<7x1536xf32>
    %311 = arith.mulf %309, %310 : vector<7x1536xf32>
    %312 = arith.addf %308, %311 : vector<7x1536xf32>
    %313 = arith.addf %264, %312 : vector<7x1536xf32>
    %314 = arith.mulf %312, %312 : vector<7x1536xf32>
    %315 = arith.addf %266, %314 : vector<7x1536xf32>
    %c0_119 = arith.constant 0 : index
    %c5_120 = arith.constant 5 : index
    %c0_121 = arith.constant 0 : index
    %c0_122 = arith.constant 0 : index
    %316 = vector.load %arg5[%c0_119, %c5_120, %c0_121, %c0_122] : memref<1x7x7x1536xf32, #tpu.memory_space<vmem>>, vector<1x1x7x1536xf32>
    %317 = vector.shape_cast %316 : vector<1x1x7x1536xf32> to vector<7x1536xf32>
    %318 = vector.shape_cast %312 : vector<7x1536xf32> to vector<1x1x7x1536xf32>
    tpu.vector_store %arg5[%c0_119, %c5_120, %c0_121, %c0_122], %318 {strides = array<i32>} : memref<1x7x7x1536xf32, #tpu.memory_space<vmem>>, vector<1x1x7x1536xf32>,
    %c6_123 = arith.constant 6 : index
    %c0_124 = arith.constant 0 : index
    %c0_125 = arith.constant 0 : index
    %319 = vector.load %arg6[%c6_123, %c0_124, %c0_125] : memref<9x16x1536xf32, #tpu.memory_space<vmem>>, vector<1x16x1536xf32>
    %320 = vector.shape_cast %319 : vector<1x16x1536xf32> to vector<16x1536xf32>
    %c7_126 = arith.constant 7 : index
    %c0_127 = arith.constant 0 : index
    %c0_128 = arith.constant 0 : index
    %321 = vector.load %arg6[%c7_126, %c0_127, %c0_128] : memref<9x16x1536xf32, #tpu.memory_space<vmem>>, vector<1x16x1536xf32>
    %322 = vector.shape_cast %321 : vector<1x16x1536xf32> to vector<16x1536xf32>
    %c8_129 = arith.constant 8 : index
    %c0_130 = arith.constant 0 : index
    %c0_131 = arith.constant 0 : index
    %323 = vector.load %arg6[%c8_129, %c0_130, %c0_131] : memref<9x16x1536xf32, #tpu.memory_space<vmem>>, vector<1x16x1536xf32>
    %324 = vector.shape_cast %323 : vector<1x16x1536xf32> to vector<16x1536xf32>
    %cst_132 = arith.constant 0.000000e+00 : f32
    %325 = vector.broadcast %cst_132 : f32 to vector<7x1536xf32>
    %326 = vector.extract_strided_slice %320 {offsets = [7, 0], sizes = [7, 1536], strides = [1, 1]} : vector<16x1536xf32> to vector<7x1536xf32>
    %327 = vector.broadcast %1 : vector<1x1536xf32> to vector<7x1536xf32>
    %328 = arith.mulf %326, %327 : vector<7x1536xf32>
    %329 = arith.addf %325, %328 : vector<7x1536xf32>
    %330 = vector.extract_strided_slice %320 {offsets = [8, 0], sizes = [7, 1536], strides = [1, 1]} : vector<16x1536xf32> to vector<7x1536xf32>
    %331 = vector.broadcast %3 : vector<1x1536xf32> to vector<7x1536xf32>
    %332 = arith.mulf %330, %331 : vector<7x1536xf32>
    %333 = arith.addf %329, %332 : vector<7x1536xf32>
    %334 = vector.extract_strided_slice %320 {offsets = [9, 0], sizes = [7, 1536], strides = [1, 1]} : vector<16x1536xf32> to vector<7x1536xf32>
    %335 = vector.broadcast %5 : vector<1x1536xf32> to vector<7x1536xf32>
    %336 = arith.mulf %334, %335 : vector<7x1536xf32>
    %337 = arith.addf %333, %336 : vector<7x1536xf32>
    %338 = vector.extract_strided_slice %322 {offsets = [7, 0], sizes = [7, 1536], strides = [1, 1]} : vector<16x1536xf32> to vector<7x1536xf32>
    %339 = vector.broadcast %7 : vector<1x1536xf32> to vector<7x1536xf32>
    %340 = arith.mulf %338, %339 : vector<7x1536xf32>
    %341 = arith.addf %337, %340 : vector<7x1536xf32>
    %342 = vector.extract_strided_slice %322 {offsets = [8, 0], sizes = [7, 1536], strides = [1, 1]} : vector<16x1536xf32> to vector<7x1536xf32>
    %343 = vector.broadcast %9 : vector<1x1536xf32> to vector<7x1536xf32>
    %344 = arith.mulf %342, %343 : vector<7x1536xf32>
    %345 = arith.addf %341, %344 : vector<7x1536xf32>
    %346 = vector.extract_strided_slice %322 {offsets = [9, 0], sizes = [7, 1536], strides = [1, 1]} : vector<16x1536xf32> to vector<7x1536xf32>
    %347 = vector.broadcast %11 : vector<1x1536xf32> to vector<7x1536xf32>
    %348 = arith.mulf %346, %347 : vector<7x1536xf32>
    %349 = arith.addf %345, %348 : vector<7x1536xf32>
    %350 = vector.extract_strided_slice %324 {offsets = [7, 0], sizes = [7, 1536], strides = [1, 1]} : vector<16x1536xf32> to vector<7x1536xf32>
    %351 = vector.broadcast %13 : vector<1x1536xf32> to vector<7x1536xf32>
    %352 = arith.mulf %350, %351 : vector<7x1536xf32>
    %353 = arith.addf %349, %352 : vector<7x1536xf32>
    %354 = vector.extract_strided_slice %324 {offsets = [8, 0], sizes = [7, 1536], strides = [1, 1]} : vector<16x1536xf32> to vector<7x1536xf32>
    %355 = vector.broadcast %15 : vector<1x1536xf32> to vector<7x1536xf32>
    %356 = arith.mulf %354, %355 : vector<7x1536xf32>
    %357 = arith.addf %353, %356 : vector<7x1536xf32>
    %358 = vector.extract_strided_slice %324 {offsets = [9, 0], sizes = [7, 1536], strides = [1, 1]} : vector<16x1536xf32> to vector<7x1536xf32>
    %359 = vector.broadcast %17 : vector<1x1536xf32> to vector<7x1536xf32>
    %360 = arith.mulf %358, %359 : vector<7x1536xf32>
    %361 = arith.addf %357, %360 : vector<7x1536xf32>
    %362 = arith.addf %313, %361 : vector<7x1536xf32>
    %363 = arith.mulf %361, %361 : vector<7x1536xf32>
    %364 = arith.addf %315, %363 : vector<7x1536xf32>
    %c0_133 = arith.constant 0 : index
    %c6_134 = arith.constant 6 : index
    %c0_135 = arith.constant 0 : index
    %c0_136 = arith.constant 0 : index
    %365 = vector.load %arg5[%c0_133, %c6_134, %c0_135, %c0_136] : memref<1x7x7x1536xf32, #tpu.memory_space<vmem>>, vector<1x1x7x1536xf32>
    %366 = vector.shape_cast %365 : vector<1x1x7x1536xf32> to vector<7x1536xf32>
    %367 = vector.shape_cast %361 : vector<7x1536xf32> to vector<1x1x7x1536xf32>
    tpu.vector_store %arg5[%c0_133, %c6_134, %c0_135, %c0_136], %367 {strides = array<i32>} : memref<1x7x7x1536xf32, #tpu.memory_space<vmem>>, vector<1x1x7x1536xf32>,
    %cst_137 = arith.constant dense<0.000000e+00> : vector<1536xf32>
    %368 = vector.multi_reduction <add>, %362, %cst_137 [0] : vector<7x1536xf32> to vector<1536xf32>
    %369 = vector.shape_cast %368 : vector<1536xf32> to vector<1x1536xf32>
    %cst_138 = arith.constant 0.0204081628 : f32
    %370 = vector.broadcast %cst_138 : f32 to vector<1x1536xf32>
    %371 = arith.mulf %369, %370 : vector<1x1536xf32>
    %cst_139 = arith.constant dense<0.000000e+00> : vector<1536xf32>
    %372 = vector.multi_reduction <add>, %364, %cst_139 [0] : vector<7x1536xf32> to vector<1536xf32>
    %373 = vector.shape_cast %372 : vector<1536xf32> to vector<1x1536xf32>
    %cst_140 = arith.constant 0.0204081628 : f32
    %374 = vector.broadcast %cst_140 : f32 to vector<1x1536xf32>
    %375 = arith.mulf %373, %374 : vector<1x1536xf32>
    %376 = arith.mulf %371, %371 : vector<1x1536xf32>
    %377 = arith.subf %375, %376 : vector<1x1536xf32>
    %c0_141 = arith.constant 0 : index
    %c0_142 = arith.constant 0 : index
    %378 = vector.load %arg3[%c0_141, %c0_142] : memref<1x1536xf32, #tpu.memory_space<vmem>>, vector<1x1536xf32>
    %cst_143 = arith.constant 1.000000e-03 : f32
    %379 = vector.broadcast %cst_143 : f32 to vector<1x1536xf32>
    %380 = arith.addf %377, %379 : vector<1x1536xf32>
    %381 = math.rsqrt %380 : vector<1x1536xf32>
    %382 = arith.mulf %378, %381 : vector<1x1536xf32>
    %c0_144 = arith.constant 0 : index
    %c0_145 = arith.constant 0 : index
    %383 = vector.load %arg4[%c0_144, %c0_145] : memref<1x1536xf32, #tpu.memory_space<vmem>>, vector<1x1536xf32>
    %384 = arith.mulf %371, %382 : vector<1x1536xf32>
    %385 = arith.subf %383, %384 : vector<1x1536xf32>
    %c0_146 = arith.constant 0 : index
    %c0_147 = arith.constant 0 : index
    %c0_148 = arith.constant 0 : index
    %c0_149 = arith.constant 0 : index
    %386 = vector.load %arg5[%c0_146, %c0_147, %c0_148, %c0_149] : memref<1x7x7x1536xf32, #tpu.memory_space<vmem>>, vector<1x1x7x1536xf32>
    %387 = vector.shape_cast %386 : vector<1x1x7x1536xf32> to vector<7x1536xf32>
    %388 = vector.broadcast %382 : vector<1x1536xf32> to vector<7x1536xf32>
    %389 = arith.mulf %387, %388 : vector<7x1536xf32>
    %390 = vector.broadcast %385 : vector<1x1536xf32> to vector<7x1536xf32>
    %391 = arith.addf %389, %390 : vector<7x1536xf32>
    %c0_150 = arith.constant 0 : index
    %c0_151 = arith.constant 0 : index
    %c0_152 = arith.constant 0 : index
    %c0_153 = arith.constant 0 : index
    %392 = vector.load %arg5[%c0_150, %c0_151, %c0_152, %c0_153] : memref<1x7x7x1536xf32, #tpu.memory_space<vmem>>, vector<1x1x7x1536xf32>
    %393 = vector.shape_cast %392 : vector<1x1x7x1536xf32> to vector<7x1536xf32>
    %394 = vector.shape_cast %391 : vector<7x1536xf32> to vector<1x1x7x1536xf32>
    tpu.vector_store %arg5[%c0_150, %c0_151, %c0_152, %c0_153], %394 {strides = array<i32>} : memref<1x7x7x1536xf32, #tpu.memory_space<vmem>>, vector<1x1x7x1536xf32>,
    %c0_154 = arith.constant 0 : index
    %c1_155 = arith.constant 1 : index
    %c0_156 = arith.constant 0 : index
    %c0_157 = arith.constant 0 : index
    %395 = vector.load %arg5[%c0_154, %c1_155, %c0_156, %c0_157] : memref<1x7x7x1536xf32, #tpu.memory_space<vmem>>, vector<1x1x7x1536xf32>
    %396 = vector.shape_cast %395 : vector<1x1x7x1536xf32> to vector<7x1536xf32>
    %397 = vector.broadcast %382 : vector<1x1536xf32> to vector<7x1536xf32>
    %398 = arith.mulf %396, %397 : vector<7x1536xf32>
    %399 = vector.broadcast %385 : vector<1x1536xf32> to vector<7x1536xf32>
    %400 = arith.addf %398, %399 : vector<7x1536xf32>
    %c0_158 = arith.constant 0 : index
    %c1_159 = arith.constant 1 : index
    %c0_160 = arith.constant 0 : index
    %c0_161 = arith.constant 0 : index
    %401 = vector.load %arg5[%c0_158, %c1_159, %c0_160, %c0_161] : memref<1x7x7x1536xf32, #tpu.memory_space<vmem>>, vector<1x1x7x1536xf32>
    %402 = vector.shape_cast %401 : vector<1x1x7x1536xf32> to vector<7x1536xf32>
    %403 = vector.shape_cast %400 : vector<7x1536xf32> to vector<1x1x7x1536xf32>
    tpu.vector_store %arg5[%c0_158, %c1_159, %c0_160, %c0_161], %403 {strides = array<i32>} : memref<1x7x7x1536xf32, #tpu.memory_space<vmem>>, vector<1x1x7x1536xf32>,
    %c0_162 = arith.constant 0 : index
    %c2_163 = arith.constant 2 : index
    %c0_164 = arith.constant 0 : index
    %c0_165 = arith.constant 0 : index
    %404 = vector.load %arg5[%c0_162, %c2_163, %c0_164, %c0_165] : memref<1x7x7x1536xf32, #tpu.memory_space<vmem>>, vector<1x1x7x1536xf32>
    %405 = vector.shape_cast %404 : vector<1x1x7x1536xf32> to vector<7x1536xf32>
    %406 = vector.broadcast %382 : vector<1x1536xf32> to vector<7x1536xf32>
    %407 = arith.mulf %405, %406 : vector<7x1536xf32>
    %408 = vector.broadcast %385 : vector<1x1536xf32> to vector<7x1536xf32>
    %409 = arith.addf %407, %408 : vector<7x1536xf32>
    %c0_166 = arith.constant 0 : index
    %c2_167 = arith.constant 2 : index
    %c0_168 = arith.constant 0 : index
    %c0_169 = arith.constant 0 : index
    %410 = vector.load %arg5[%c0_166, %c2_167, %c0_168, %c0_169] : memref<1x7x7x1536xf32, #tpu.memory_space<vmem>>, vector<1x1x7x1536xf32>
    %411 = vector.shape_cast %410 : vector<1x1x7x1536xf32> to vector<7x1536xf32>
    %412 = vector.shape_cast %409 : vector<7x1536xf32> to vector<1x1x7x1536xf32>
    tpu.vector_store %arg5[%c0_166, %c2_167, %c0_168, %c0_169], %412 {strides = array<i32>} : memref<1x7x7x1536xf32, #tpu.memory_space<vmem>>, vector<1x1x7x1536xf32>,
    %c0_170 = arith.constant 0 : index
    %c3_171 = arith.constant 3 : index
    %c0_172 = arith.constant 0 : index
    %c0_173 = arith.constant 0 : index
    %413 = vector.load %arg5[%c0_170, %c3_171, %c0_172, %c0_173] : memref<1x7x7x1536xf32, #tpu.memory_space<vmem>>, vector<1x1x7x1536xf32>
    %414 = vector.shape_cast %413 : vector<1x1x7x1536xf32> to vector<7x1536xf32>
    %415 = vector.broadcast %382 : vector<1x1536xf32> to vector<7x1536xf32>
    %416 = arith.mulf %414, %415 : vector<7x1536xf32>
    %417 = vector.broadcast %385 : vector<1x1536xf32> to vector<7x1536xf32>
    %418 = arith.addf %416, %417 : vector<7x1536xf32>
    %c0_174 = arith.constant 0 : index
    %c3_175 = arith.constant 3 : index
    %c0_176 = arith.constant 0 : index
    %c0_177 = arith.constant 0 : index
    %419 = vector.load %arg5[%c0_174, %c3_175, %c0_176, %c0_177] : memref<1x7x7x1536xf32, #tpu.memory_space<vmem>>, vector<1x1x7x1536xf32>
    %420 = vector.shape_cast %419 : vector<1x1x7x1536xf32> to vector<7x1536xf32>
    %421 = vector.shape_cast %418 : vector<7x1536xf32> to vector<1x1x7x1536xf32>
    tpu.vector_store %arg5[%c0_174, %c3_175, %c0_176, %c0_177], %421 {strides = array<i32>} : memref<1x7x7x1536xf32, #tpu.memory_space<vmem>>, vector<1x1x7x1536xf32>,
    %c0_178 = arith.constant 0 : index
    %c4_179 = arith.constant 4 : index
    %c0_180 = arith.constant 0 : index
    %c0_181 = arith.constant 0 : index
    %422 = vector.load %arg5[%c0_178, %c4_179, %c0_180, %c0_181] : memref<1x7x7x1536xf32, #tpu.memory_space<vmem>>, vector<1x1x7x1536xf32>
    %423 = vector.shape_cast %422 : vector<1x1x7x1536xf32> to vector<7x1536xf32>
    %424 = vector.broadcast %382 : vector<1x1536xf32> to vector<7x1536xf32>
    %425 = arith.mulf %423, %424 : vector<7x1536xf32>
    %426 = vector.broadcast %385 : vector<1x1536xf32> to vector<7x1536xf32>
    %427 = arith.addf %425, %426 : vector<7x1536xf32>
    %c0_182 = arith.constant 0 : index
    %c4_183 = arith.constant 4 : index
    %c0_184 = arith.constant 0 : index
    %c0_185 = arith.constant 0 : index
    %428 = vector.load %arg5[%c0_182, %c4_183, %c0_184, %c0_185] : memref<1x7x7x1536xf32, #tpu.memory_space<vmem>>, vector<1x1x7x1536xf32>
    %429 = vector.shape_cast %428 : vector<1x1x7x1536xf32> to vector<7x1536xf32>
    %430 = vector.shape_cast %427 : vector<7x1536xf32> to vector<1x1x7x1536xf32>
    tpu.vector_store %arg5[%c0_182, %c4_183, %c0_184, %c0_185], %430 {strides = array<i32>} : memref<1x7x7x1536xf32, #tpu.memory_space<vmem>>, vector<1x1x7x1536xf32>,
    %c0_186 = arith.constant 0 : index
    %c5_187 = arith.constant 5 : index
    %c0_188 = arith.constant 0 : index
    %c0_189 = arith.constant 0 : index
    %431 = vector.load %arg5[%c0_186, %c5_187, %c0_188, %c0_189] : memref<1x7x7x1536xf32, #tpu.memory_space<vmem>>, vector<1x1x7x1536xf32>
    %432 = vector.shape_cast %431 : vector<1x1x7x1536xf32> to vector<7x1536xf32>
    %433 = vector.broadcast %382 : vector<1x1536xf32> to vector<7x1536xf32>
    %434 = arith.mulf %432, %433 : vector<7x1536xf32>
    %435 = vector.broadcast %385 : vector<1x1536xf32> to vector<7x1536xf32>
    %436 = arith.addf %434, %435 : vector<7x1536xf32>
    %c0_190 = arith.constant 0 : index
    %c5_191 = arith.constant 5 : index
    %c0_192 = arith.constant 0 : index
    %c0_193 = arith.constant 0 : index
    %437 = vector.load %arg5[%c0_190, %c5_191, %c0_192, %c0_193] : memref<1x7x7x1536xf32, #tpu.memory_space<vmem>>, vector<1x1x7x1536xf32>
    %438 = vector.shape_cast %437 : vector<1x1x7x1536xf32> to vector<7x1536xf32>
    %439 = vector.shape_cast %436 : vector<7x1536xf32> to vector<1x1x7x1536xf32>
    tpu.vector_store %arg5[%c0_190, %c5_191, %c0_192, %c0_193], %439 {strides = array<i32>} : memref<1x7x7x1536xf32, #tpu.memory_space<vmem>>, vector<1x1x7x1536xf32>,
    %c0_194 = arith.constant 0 : index
    %c6_195 = arith.constant 6 : index
    %c0_196 = arith.constant 0 : index
    %c0_197 = arith.constant 0 : index
    %440 = vector.load %arg5[%c0_194, %c6_195, %c0_196, %c0_197] : memref<1x7x7x1536xf32, #tpu.memory_space<vmem>>, vector<1x1x7x1536xf32>
    %441 = vector.shape_cast %440 : vector<1x1x7x1536xf32> to vector<7x1536xf32>
    %442 = vector.broadcast %382 : vector<1x1536xf32> to vector<7x1536xf32>
    %443 = arith.mulf %441, %442 : vector<7x1536xf32>
    %444 = vector.broadcast %385 : vector<1x1536xf32> to vector<7x1536xf32>
    %445 = arith.addf %443, %444 : vector<7x1536xf32>
    %c0_198 = arith.constant 0 : index
    %c6_199 = arith.constant 6 : index
    %c0_200 = arith.constant 0 : index
    %c0_201 = arith.constant 0 : index
    %446 = vector.load %arg5[%c0_198, %c6_199, %c0_200, %c0_201] : memref<1x7x7x1536xf32, #tpu.memory_space<vmem>>, vector<1x1x7x1536xf32>
    %447 = vector.shape_cast %446 : vector<1x1x7x1536xf32> to vector<7x1536xf32>
    %448 = vector.shape_cast %445 : vector<7x1536xf32> to vector<1x1x7x1536xf32>
    tpu.vector_store %arg5[%c0_198, %c6_199, %c0_200, %c0_201], %448 {strides = array<i32>} : memref<1x7x7x1536xf32, #tpu.memory_space<vmem>>, vector<1x1x7x1536xf32>,
    return
  }
  func.func @transform_0(%arg0: i32) -> (i32, i32, i32, i32) {
    %c0_i32 = arith.constant 0 : i32
    %c0_i32_0 = arith.constant 0 : i32
    %c0_i32_1 = arith.constant 0 : i32
    %c0_i32_2 = arith.constant 0 : i32
    return %c0_i32, %c0_i32_0, %c0_i32_1, %arg0 : i32, i32, i32, i32
  }
  func.func @transform_1(%arg0: i32) -> (i32, i32, i32, i32) {
    %c0_i32 = arith.constant 0 : i32
    %c0_i32_0 = arith.constant 0 : i32
    %c0_i32_1 = arith.constant 0 : i32
    %c0_i32_2 = arith.constant 0 : i32
    return %c0_i32, %c0_i32_0, %c0_i32_1, %arg0 : i32, i32, i32, i32
  }
  func.func @transform_2(%arg0: i32) -> (i32, i32) {
    %c0_i32 = arith.constant 0 : i32
    %c0_i32_0 = arith.constant 0 : i32
    return %c0_i32, %arg0 : i32, i32
  }
  func.func @transform_3(%arg0: i32) -> (i32, i32) {
    %c0_i32 = arith.constant 0 : i32
    %c0_i32_0 = arith.constant 0 : i32
    return %c0_i32, %arg0 : i32, i32
  }
  func.func @transform_4(%arg0: i32) -> (i32, i32, i32, i32) {
    %c0_i32 = arith.constant 0 : i32
    %c0_i32_0 = arith.constant 0 : i32
    %c0_i32_1 = arith.constant 0 : i32
    %c0_i32_2 = arith.constant 0 : i32
    return %c0_i32, %c0_i32_0, %c0_i32_1, %arg0 : i32, i32, i32, i32
  }
}

</mosaic_0001>

<llo_original>
// kernel: tpu_custom_call.1
$region0: #{tpu_custom_call.1}
  #allocation0 [shape = 'u32[]', space=smem, size = 0x4, offset = 0x4, fixed_abs, tag = 'smem constant byte address 0x4 - core index']
  #allocation1 [shape = 'u32[144,128]{1,0:T(1,128)}', space=vmem, size = 0x12000, scoped, tag = 'internal scratch']
  #allocation2 [shape = 'f32[9,16,1536]{2,1,0:T(8,128)}', space=vmem, size = 0xd8000, scoped, tag = 'scratch operand']
  %s0 = inlined_call_operand.vmem [shape: f32[1,7,7,1536], index: 0, kind: input, shape index: {}]
  %s1 = inlined_call_operand.vmem [shape: f32[3,3,1,1536], index: 1, kind: input, shape index: {}]
  %s2 = inlined_call_operand.vmem [shape: f32[1,1536], index: 2, kind: input, shape index: {}]
  %s3 = inlined_call_operand.vmem [shape: f32[1,1536], index: 3, kind: input, shape index: {}]
  %s4 = inlined_call_operand.vmem [shape: f32[1,7,7,1536], index: 4, kind: output, shape index: {}]
  %s5 = sld [smem:[#allocation0]]
  $region26: #{tpu_custom_call.1} parent=0
    _
  %s7 = ssub.s32 1, %s5
  %s8 = scalar_select 0, %s7, %s5
  // Predicated region
  $region2: #{tpu_custom_call.1} parent=0 // pred_check
    _
  $region3: #{tpu_custom_call.1} parent=0 // pred_check_branch
    %10 = sbr.rel (0) target = $region5
  $region4: #{tpu_custom_call.1} parent=0 // pred_region
    _
  $region5: #{tpu_custom_call.1} parent=0 // pred_fallthru
    _
  // Predicated region
  $region6: #{tpu_custom_call.1} parent=0 // pred_check
    _
  $region7: #{tpu_custom_call.1} parent=0 // pred_check_branch
    %12 = sbr.rel (0) target = $region9
  $region8: #{tpu_custom_call.1} parent=0 // pred_region
    _
  $region9: #{tpu_custom_call.1} parent=0 // pred_fallthru
    _
  // Predicated region
  $region10: #{tpu_custom_call.1} parent=0 // pred_check
    _
  $region11: #{tpu_custom_call.1} parent=0 // pred_check_branch
    %14 = sbr.rel (0) target = $region13
  $region12: #{tpu_custom_call.1} parent=0 // pred_region
    _
  $region13: #{tpu_custom_call.1} parent=0 // pred_fallthru
    _
  // Predicated region
  $region14: #{tpu_custom_call.1} parent=0 // pred_check
    _
  $region15: #{tpu_custom_call.1} parent=0 // pred_check_branch
    %16 = sbr.rel (0) target = $region17
  $region16: #{tpu_custom_call.1} parent=0 // pred_region
    _
  $region17: #{tpu_custom_call.1} parent=0 // pred_fallthru
    _
  %v17 = vld [vmem:[%s1] sm:$0xff]
  %v18 = vld [vmem:[%s1 + $0x8] sm:$0xf]
  %s19 = scalar_lea.vmem %s1, 12
  %v20 = vld [vmem:[%s19] sm:$0xff]
  %v21 = vld [vmem:[%s19 + $0x8] sm:$0xf]
  %s22 = scalar_lea.vmem %s1, 24
  %v23 = vld [vmem:[%s22] sm:$0xff]
  %v24 = vld [vmem:[%s22 + $0x8] sm:$0xf]
  %s25 = scalar_lea.vmem %s1, 36
  %v26 = vld [vmem:[%s25] sm:$0xff]
  %v27 = vld [vmem:[%s25 + $0x8] sm:$0xf]
  %s28 = scalar_lea.vmem %s1, 48
  %v29 = vld [vmem:[%s28] sm:$0xff]
  %v30 = vld [vmem:[%s28 + $0x8] sm:$0xf]
  %s31 = scalar_lea.vmem %s1, 60
  %v32 = vld [vmem:[%s31] sm:$0xff]
  %v33 = vld [vmem:[%s31 + $0x8] sm:$0xf]
  %s34 = scalar_lea.vmem %s1, 72
  %v35 = vld [vmem:[%s34] sm:$0xff]
  %v36 = vld [vmem:[%s34 + $0x8] sm:$0xf]
  %s37 = scalar_lea.vmem %s1, 84
  %v38 = vld [vmem:[%s37] sm:$0xff]
  %v39 = vld [vmem:[%s37 + $0x8] sm:$0xf]
  %s40 = scalar_lea.vmem %s1, 96
  %v41 = vld [vmem:[%s40] sm:$0xff]
  %v42 = vld [vmem:[%s40 + $0x8] sm:$0xf]
  %43 = vst [vmem:[#allocation2] sm:$0xff] 0.0
  %44 = vst [vmem:[#allocation2 + $0x8] sm:$0xff] 0.0
  %45 = vst [vmem:[#allocation2 + $0x10] sm:$0xff] 0.0
  %46 = vst [vmem:[#allocation2 + $0x18] sm:$0xff] 0.0
  %47 = vst [vmem:[#allocation2 + $0x20] sm:$0xff] 0.0
  %48 = vst [vmem:[#allocation2 + $0x28] sm:$0xff] 0.0
  %49 = vst [vmem:[#allocation2 + $0x30] sm:$0xff] 0.0
  %50 = vst [vmem:[#allocation2 + $0x38] sm:$0xff] 0.0
  %51 = vst [vmem:[#allocation2 + $0x40] sm:$0xff] 0.0
  %52 = vst [vmem:[#allocation2 + $0x48] sm:$0xff] 0.0
  %53 = vst [vmem:[#allocation2 + $0x50] sm:$0xff] 0.0
  %54 = vst [vmem:[#allocation2 + $0x58] sm:$0xff] 0.0
  %55 = vst [vmem:[#allocation2 + $0x60] sm:$0xff] 0.0
  %56 = vst [vmem:[#allocation2 + $0x68] sm:$0xff] 0.0
  %57 = vst [vmem:[#allocation2 + $0x70] sm:$0xff] 0.0
  %58 = vst [vmem:[#allocation2 + $0x78] sm:$0xff] 0.0
  %59 = vst [vmem:[#allocation2 + $0x80] sm:$0xff] 0.0
  %60 = vst [vmem:[#allocation2 + $0x88] sm:$0xff] 0.0
  %61 = vst [vmem:[#allocation2 + $0x90] sm:$0xff] 0.0
  %62 = vst [vmem:[#allocation2 + $0x98] sm:$0xff] 0.0
  %63 = vst [vmem:[#allocation2 + $0xa0] sm:$0xff] 0.0
  %64 = vst [vmem:[#allocation2 + $0xa8] sm:$0xff] 0.0
  %65 = vst [vmem:[#allocation2 + $0xb0] sm:$0xff] 0.0
  %66 = vst [vmem:[#allocation2 + $0xb8] sm:$0xff] 0.0
  %67 = vst [vmem:[#allocation2 + $0xc0] sm:$0xff] 0.0
  %68 = vst [vmem:[#allocation2 + $0xc8] sm:$0xff] 0.0
  %69 = vst [vmem:[#allocation2 + $0xd0] sm:$0xff] 0.0
  %70 = vst [vmem:[#allocation2 + $0xd8] sm:$0xff] 0.0
  %71 = vst [vmem:[#allocation2 + $0xe0] sm:$0xff] 0.0
  %72 = vst [vmem:[#allocation2 + $0xe8] sm:$0xff] 0.0
  %73 = vst [vmem:[#allocation2 + $0xf0] sm:$0xff] 0.0
  %74 = vst [vmem:[#allocation2 + $0xf8] sm:$0xff] 0.0
  %75 = vst [vmem:[#allocation2 + $0x100] sm:$0xff] 0.0
  %76 = vst [vmem:[#allocation2 + $0x108] sm:$0xff] 0.0
  %77 = vst [vmem:[#allocation2 + $0x110] sm:$0xff] 0.0
  %78 = vst [vmem:[#allocation2 + $0x118] sm:$0xff] 0.0
  %79 = vst [vmem:[#allocation2 + $0x120] sm:$0xff] 0.0
  %80 = vst [vmem:[#allocation2 + $0x128] sm:$0xff] 0.0
  %81 = vst [vmem:[#allocation2 + $0x130] sm:$0xff] 0.0
  %82 = vst [vmem:[#allocation2 + $0x138] sm:$0xff] 0.0
  %83 = vst [vmem:[#allocation2 + $0x140] sm:$0xff] 0.0
  %84 = vst [vmem:[#allocation2 + $0x148] sm:$0xff] 0.0
  %85 = vst [vmem:[#allocation2 + $0x150] sm:$0xff] 0.0
  %86 = vst [vmem:[#allocation2 + $0x158] sm:$0xff] 0.0
  %87 = vst [vmem:[#allocation2 + $0x160] sm:$0xff] 0.0
  %88 = vst [vmem:[#allocation2 + $0x168] sm:$0xff] 0.0
  %89 = vst [vmem:[#allocation2 + $0x170] sm:$0xff] 0.0
  %90 = vst [vmem:[#allocation2 + $0x178] sm:$0xff] 0.0
  %91 = vst [vmem:[#allocation2 + $0x180] sm:$0xff] 0.0
  %92 = vst [vmem:[#allocation2 + $0x188] sm:$0xff] 0.0
  %93 = vst [vmem:[#allocation2 + $0x190] sm:$0xff] 0.0
  %94 = vst [vmem:[#allocation2 + $0x198] sm:$0xff] 0.0
  %95 = vst [vmem:[#allocation2 + $0x1a0] sm:$0xff] 0.0
  %96 = vst [vmem:[#allocation2 + $0x1a8] sm:$0xff] 0.0
  %97 = vst [vmem:[#allocation2 + $0x1b0] sm:$0xff] 0.0
  %98 = vst [vmem:[#allocation2 + $0x1b8] sm:$0xff] 0.0
  %99 = vst [vmem:[#allocation2 + $0x1c0] sm:$0xff] 0.0
  %100 = vst [vmem:[#allocation2 + $0x1c8] sm:$0xff] 0.0
  %101 = vst [vmem:[#allocation2 + $0x1d0] sm:$0xff] 0.0
  %102 = vst [vmem:[#allocation2 + $0x1d8] sm:$0xff] 0.0
  %103 = vst [vmem:[#allocation2 + $0x1e0] sm:$0xff] 0.0
  %104 = vst [vmem:[#allocation2 + $0x1e8] sm:$0xff] 0.0
  %105 = vst [vmem:[#allocation2 + $0x1f0] sm:$0xff] 0.0
  %106 = vst [vmem:[#allocation2 + $0x1f8] sm:$0xff] 0.0
  %107 = vst [vmem:[#allocation2 + $0x200] sm:$0xff] 0.0
  %108 = vst [vmem:[#allocation2 + $0x208] sm:$0xff] 0.0
  %109 = vst [vmem:[#allocation2 + $0x210] sm:$0xff] 0.0
  %110 = vst [vmem:[#allocation2 + $0x218] sm:$0xff] 0.0
  %111 = vst [vmem:[#allocation2 + $0x220] sm:$0xff] 0.0
  %112 = vst [vmem:[#allocation2 + $0x228] sm:$0xff] 0.0
  %113 = vst [vmem:[#allocation2 + $0x230] sm:$0xff] 0.0
  %114 = vst [vmem:[#allocation2 + $0x238] sm:$0xff] 0.0
  %115 = vst [vmem:[#allocation2 + $0x240] sm:$0xff] 0.0
  %116 = vst [vmem:[#allocation2 + $0x248] sm:$0xff] 0.0
  %117 = vst [vmem:[#allocation2 + $0x250] sm:$0xff] 0.0
  %118 = vst [vmem:[#allocation2 + $0x258] sm:$0xff] 0.0
  %119 = vst [vmem:[#allocation2 + $0x260] sm:$0xff] 0.0
  %120 = vst [vmem:[#allocation2 + $0x268] sm:$0xff] 0.0
  %121 = vst [vmem:[#allocation2 + $0x270] sm:$0xff] 0.0
  %122 = vst [vmem:[#allocation2 + $0x278] sm:$0xff] 0.0
  %123 = vst [vmem:[#allocation2 + $0x280] sm:$0xff] 0.0
  %124 = vst [vmem:[#allocation2 + $0x288] sm:$0xff] 0.0
  %125 = vst [vmem:[#allocation2 + $0x290] sm:$0xff] 0.0
  %126 = vst [vmem:[#allocation2 + $0x298] sm:$0xff] 0.0
  %127 = vst [vmem:[#allocation2 + $0x2a0] sm:$0xff] 0.0
  %128 = vst [vmem:[#allocation2 + $0x2a8] sm:$0xff] 0.0
  %129 = vst [vmem:[#allocation2 + $0x2b0] sm:$0xff] 0.0
  %130 = vst [vmem:[#allocation2 + $0x2b8] sm:$0xff] 0.0
  %131 = vst [vmem:[#allocation2 + $0x2c0] sm:$0xff] 0.0
  %132 = vst [vmem:[#allocation2 + $0x2c8] sm:$0xff] 0.0
  %133 = vst [vmem:[#allocation2 + $0x2d0] sm:$0xff] 0.0
  %134 = vst [vmem:[#allocation2 + $0x2d8] sm:$0xff] 0.0
  %135 = vst [vmem:[#allocation2 + $0x2e0] sm:$0xff] 0.0
  %136 = vst [vmem:[#allocation2 + $0x2e8] sm:$0xff] 0.0
  %137 = vst [vmem:[#allocation2 + $0x2f0] sm:$0xff] 0.0
  %138 = vst [vmem:[#allocation2 + $0x2f8] sm:$0xff] 0.0
  %139 = vst [vmem:[#allocation2 + $0x300] sm:$0xff] 0.0
  %140 = vst [vmem:[#allocation2 + $0x308] sm:$0xff] 0.0
  %141 = vst [vmem:[#allocation2 + $0x310] sm:$0xff] 0.0
  %142 = vst [vmem:[#allocation2 + $0x318] sm:$0xff] 0.0
  %143 = vst [vmem:[#allocation2 + $0x320] sm:$0xff] 0.0
  %144 = vst [vmem:[#allocation2 + $0x328] sm:$0xff] 0.0
  %145 = vst [vmem:[#allocation2 + $0x330] sm:$0xff] 0.0
  %146 = vst [vmem:[#allocation2 + $0x338] sm:$0xff] 0.0
  %147 = vst [vmem:[#allocation2 + $0x340] sm:$0xff] 0.0
  %148 = vst [vmem:[#allocation2 + $0x348] sm:$0xff] 0.0
  %149 = vst [vmem:[#allocation2 + $0x350] sm:$0xff] 0.0
  %150 = vst [vmem:[#allocation2 + $0x358] sm:$0xff] 0.0
  %151 = vst [vmem:[#allocation2 + $0x360] sm:$0xff] 0.0
  %152 = vst [vmem:[#allocation2 + $0x368] sm:$0xff] 0.0
  %153 = vst [vmem:[#allocation2 + $0x370] sm:$0xff] 0.0
  %154 = vst [vmem:[#allocation2 + $0x378] sm:$0xff] 0.0
  %155 = vst [vmem:[#allocation2 + $0x380] sm:$0xff] 0.0
  %156 = vst [vmem:[#allocation2 + $0x388] sm:$0xff] 0.0
  %157 = vst [vmem:[#allocation2 + $0x390] sm:$0xff] 0.0
  %158 = vst [vmem:[#allocation2 + $0x398] sm:$0xff] 0.0
  %159 = vst [vmem:[#allocation2 + $0x3a0] sm:$0xff] 0.0
  %160 = vst [vmem:[#allocation2 + $0x3a8] sm:$0xff] 0.0
  %161 = vst [vmem:[#allocation2 + $0x3b0] sm:$0xff] 0.0
  %162 = vst [vmem:[#allocation2 + $0x3b8] sm:$0xff] 0.0
  %163 = vst [vmem:[#allocation2 + $0x3c0] sm:$0xff] 0.0
  %164 = vst [vmem:[#allocation2 + $0x3c8] sm:$0xff] 0.0
  %165 = vst [vmem:[#allocation2 + $0x3d0] sm:$0xff] 0.0
  %166 = vst [vmem:[#allocation2 + $0x3d8] sm:$0xff] 0.0
  %167 = vst [vmem:[#allocation2 + $0x3e0] sm:$0xff] 0.0
  %168 = vst [vmem:[#allocation2 + $0x3e8] sm:$0xff] 0.0
  %169 = vst [vmem:[#allocation2 + $0x3f0] sm:$0xff] 0.0
  %170 = vst [vmem:[#allocation2 + $0x3f8] sm:$0xff] 0.0
  %171 = vst [vmem:[#allocation2 + $0x400] sm:$0xff] 0.0
  %172 = vst [vmem:[#allocation2 + $0x408] sm:$0xff] 0.0
  %173 = vst [vmem:[#allocation2 + $0x410] sm:$0xff] 0.0
  %174 = vst [vmem:[#allocation2 + $0x418] sm:$0xff] 0.0
  %175 = vst [vmem:[#allocation2 + $0x420] sm:$0xff] 0.0
  %176 = vst [vmem:[#allocation2 + $0x428] sm:$0xff] 0.0
  %177 = vst [vmem:[#allocation2 + $0x430] sm:$0xff] 0.0
  %178 = vst [vmem:[#allocation2 + $0x438] sm:$0xff] 0.0
  %179 = vst [vmem:[#allocation2 + $0x440] sm:$0xff] 0.0
  %180 = vst [vmem:[#allocation2 + $0x448] sm:$0xff] 0.0
  %181 = vst [vmem:[#allocation2 + $0x450] sm:$0xff] 0.0
  %182 = vst [vmem:[#allocation2 + $0x458] sm:$0xff] 0.0
  %183 = vst [vmem:[#allocation2 + $0x460] sm:$0xff] 0.0
  %184 = vst [vmem:[#allocation2 + $0x468] sm:$0xff] 0.0
  %185 = vst [vmem:[#allocation2 + $0x470] sm:$0xff] 0.0
  %186 = vst [vmem:[#allocation2 + $0x478] sm:$0xff] 0.0
  %187 = vst [vmem:[#allocation2 + $0x480] sm:$0xff] 0.0
  %188 = vst [vmem:[#allocation2 + $0x488] sm:$0xff] 0.0
  %189 = vst [vmem:[#allocation2 + $0x490] sm:$0xff] 0.0
  %190 = vst [vmem:[#allocation2 + $0x498] sm:$0xff] 0.0
  %191 = vst [vmem:[#allocation2 + $0x4a0] sm:$0xff] 0.0
  %192 = vst [vmem:[#allocation2 + $0x4a8] sm:$0xff] 0.0
  %193 = vst [vmem:[#allocation2 + $0x4b0] sm:$0xff] 0.0
  %194 = vst [vmem:[#allocation2 + $0x4b8] sm:$0xff] 0.0
  %195 = vst [vmem:[#allocation2 + $0x4c0] sm:$0xff] 0.0
  %196 = vst [vmem:[#allocation2 + $0x4c8] sm:$0xff] 0.0
  %197 = vst [vmem:[#allocation2 + $0x4d0] sm:$0xff] 0.0
  %198 = vst [vmem:[#allocation2 + $0x4d8] sm:$0xff] 0.0
  %199 = vst [vmem:[#allocation2 + $0x4e0] sm:$0xff] 0.0
  %200 = vst [vmem:[#allocation2 + $0x4e8] sm:$0xff] 0.0
  %201 = vst [vmem:[#allocation2 + $0x4f0] sm:$0xff] 0.0
  %202 = vst [vmem:[#allocation2 + $0x4f8] sm:$0xff] 0.0
  %203 = vst [vmem:[#allocation2 + $0x500] sm:$0xff] 0.0
  %204 = vst [vmem:[#allocation2 + $0x508] sm:$0xff] 0.0
  %205 = vst [vmem:[#allocation2 + $0x510] sm:$0xff] 0.0
  %206 = vst [vmem:[#allocation2 + $0x518] sm:$0xff] 0.0
  %207 = vst [vmem:[#allocation2 + $0x520] sm:$0xff] 0.0
  %208 = vst [vmem:[#allocation2 + $0x528] sm:$0xff] 0.0
  %209 = vst [vmem:[#allocation2 + $0x530] sm:$0xff] 0.0
  %210 = vst [vmem:[#allocation2 + $0x538] sm:$0xff] 0.0
  %211 = vst [vmem:[#allocation2 + $0x540] sm:$0xff] 0.0
  %212 = vst [vmem:[#allocation2 + $0x548] sm:$0xff] 0.0
  %213 = vst [vmem:[#allocation2 + $0x550] sm:$0xff] 0.0
  %214 = vst [vmem:[#allocation2 + $0x558] sm:$0xff] 0.0
  %215 = vst [vmem:[#allocation2 + $0x560] sm:$0xff] 0.0
  %216 = vst [vmem:[#allocation2 + $0x568] sm:$0xff] 0.0
  %217 = vst [vmem:[#allocation2 + $0x570] sm:$0xff] 0.0
  %218 = vst [vmem:[#allocation2 + $0x578] sm:$0xff] 0.0
  %219 = vst [vmem:[#allocation2 + $0x580] sm:$0xff] 0.0
  %220 = vst [vmem:[#allocation2 + $0x588] sm:$0xff] 0.0
  %221 = vst [vmem:[#allocation2 + $0x590] sm:$0xff] 0.0
  %222 = vst [vmem:[#allocation2 + $0x598] sm:$0xff] 0.0
  %223 = vst [vmem:[#allocation2 + $0x5a0] sm:$0xff] 0.0
  %224 = vst [vmem:[#allocation2 + $0x5a8] sm:$0xff] 0.0
  %225 = vst [vmem:[#allocation2 + $0x5b0] sm:$0xff] 0.0
  %226 = vst [vmem:[#allocation2 + $0x5b8] sm:$0xff] 0.0
  %227 = vst [vmem:[#allocation2 + $0x5c0] sm:$0xff] 0.0
  %228 = vst [vmem:[#allocation2 + $0x5c8] sm:$0xff] 0.0
  %229 = vst [vmem:[#allocation2 + $0x5d0] sm:$0xff] 0.0
  %230 = vst [vmem:[#allocation2 + $0x5d8] sm:$0xff] 0.0
  %231 = vst [vmem:[#allocation2 + $0x5e0] sm:$0xff] 0.0
  %232 = vst [vmem:[#allocation2 + $0x5e8] sm:$0xff] 0.0
  %233 = vst [vmem:[#allocation2 + $0x5f0] sm:$0xff] 0.0
  %234 = vst [vmem:[#allocation2 + $0x5f8] sm:$0xff] 0.0
  %235 = vst [vmem:[#allocation2 + $0x600] sm:$0xff] 0.0
  %236 = vst [vmem:[#allocation2 + $0x608] sm:$0xff] 0.0
  %237 = vst [vmem:[#allocation2 + $0x610] sm:$0xff] 0.0
  %238 = vst [vmem:[#allocation2 + $0x618] sm:$0xff] 0.0
  %239 = vst [vmem:[#allocation2 + $0x620] sm:$0xff] 0.0
  %240 = vst [vmem:[#allocation2 + $0x628] sm:$0xff] 0.0
  %241 = vst [vmem:[#allocation2 + $0x630] sm:$0xff] 0.0
  %242 = vst [vmem:[#allocation2 + $0x638] sm:$0xff] 0.0
  %243 = vst [vmem:[#allocation2 + $0x640] sm:$0xff] 0.0
  %244 = vst [vmem:[#allocation2 + $0x648] sm:$0xff] 0.0
  %245 = vst [vmem:[#allocation2 + $0x650] sm:$0xff] 0.0
  %246 = vst [vmem:[#allocation2 + $0x658] sm:$0xff] 0.0
  %247 = vst [vmem:[#allocation2 + $0x660] sm:$0xff] 0.0
  %248 = vst [vmem:[#allocation2 + $0x668] sm:$0xff] 0.0
  %249 = vst [vmem:[#allocation2 + $0x670] sm:$0xff] 0.0
  %250 = vst [vmem:[#allocation2 + $0x678] sm:$0xff] 0.0
  %251 = vst [vmem:[#allocation2 + $0x680] sm:$0xff] 0.0
  %252 = vst [vmem:[#allocation2 + $0x688] sm:$0xff] 0.0
  %253 = vst [vmem:[#allocation2 + $0x690] sm:$0xff] 0.0
  %254 = vst [vmem:[#allocation2 + $0x698] sm:$0xff] 0.0
  %255 = vst [vmem:[#allocation2 + $0x6a0] sm:$0xff] 0.0
  %256 = vst [vmem:[#allocation2 + $0x6a8] sm:$0xff] 0.0
  %257 = vst [vmem:[#allocation2 + $0x6b0] sm:$0xff] 0.0
  %258 = vst [vmem:[#allocation2 + $0x6b8] sm:$0xff] 0.0
  %v259 = vld [vmem:[%s0] sm:$0x7f]
  %v260 = vld [vmem:[%s0 + $0x8] sm:$0x7f]
  %v261 = vld [vmem:[%s0 + $0x10] sm:$0x7f]
  %v262 = vld [vmem:[%s0 + $0x18] sm:$0x7f]
  %v263 = vld [vmem:[%s0 + $0x20] sm:$0x7f]
  %v264 = vld [vmem:[%s0 + $0x28] sm:$0x7f]
  %v265 = vld [vmem:[%s0 + $0x30] sm:$0x7f]
  %v266 = vld [vmem:[%s0 + $0x38] sm:$0x7f]
  %v267 = vld [vmem:[%s0 + $0x40] sm:$0x7f]
  %v268 = vld [vmem:[%s0 + $0x48] sm:$0x7f]
  %v269 = vld [vmem:[%s0 + $0x50] sm:$0x7f]
  %v270 = vld [vmem:[%s0 + $0x58] sm:$0x7f]
  %v271 = vld [vmem:[%s0 + $0x60] sm:$0x7f]
  %v272 = vld [vmem:[%s0 + $0x68] sm:$0x7f]
  %v273 = vld [vmem:[%s0 + $0x70] sm:$0x7f]
  %v274 = vld [vmem:[%s0 + $0x78] sm:$0x7f]
  %v275 = vld [vmem:[%s0 + $0x80] sm:$0x7f]
  %v276 = vld [vmem:[%s0 + $0x88] sm:$0x7f]
  %v277 = vld [vmem:[%s0 + $0x90] sm:$0x7f]
  %v278 = vld [vmem:[%s0 + $0x98] sm:$0x7f]
  %v279 = vld [vmem:[%s0 + $0xa0] sm:$0x7f]
  %v280 = vld [vmem:[%s0 + $0xa8] sm:$0x7f]
  %v281 = vld [vmem:[%s0 + $0xb0] sm:$0x7f]
  %v282 = vld [vmem:[%s0 + $0xb8] sm:$0x7f]
  %v283 = vld [vmem:[%s0 + $0xc0] sm:$0x7f]
  %v284 = vld [vmem:[%s0 + $0xc8] sm:$0x7f]
  %v285 = vld [vmem:[%s0 + $0xd0] sm:$0x7f]
  %v286 = vld [vmem:[%s0 + $0xd8] sm:$0x7f]
  %v287 = vld [vmem:[%s0 + $0xe0] sm:$0x7f]
  %v288 = vld [vmem:[%s0 + $0xe8] sm:$0x7f]
  %v289 = vld [vmem:[%s0 + $0xf0] sm:$0x7f]
  %v290 = vld [vmem:[%s0 + $0xf8] sm:$0x7f]
  %v291 = vld [vmem:[%s0 + $0x100] sm:$0x7f]
  %v292 = vld [vmem:[%s0 + $0x108] sm:$0x7f]
  %v293 = vld [vmem:[%s0 + $0x110] sm:$0x7f]
  %v294 = vld [vmem:[%s0 + $0x118] sm:$0x7f]
  %v295 = vld [vmem:[%s0 + $0x120] sm:$0x7f]
  %v296 = vld [vmem:[%s0 + $0x128] sm:$0x7f]
  %v297 = vld [vmem:[%s0 + $0x130] sm:$0x7f]
  %v298 = vld [vmem:[%s0 + $0x138] sm:$0x7f]
  %v299 = vld [vmem:[%s0 + $0x140] sm:$0x7f]
  %v300 = vld [vmem:[%s0 + $0x148] sm:$0x7f]
  %v301 = vld [vmem:[%s0 + $0x150] sm:$0x7f]
  %v302 = vld [vmem:[%s0 + $0x158] sm:$0x7f]
  %v303 = vld [vmem:[%s0 + $0x160] sm:$0x7f]
  %v304 = vld [vmem:[%s0 + $0x168] sm:$0x7f]
  %v305 = vld [vmem:[%s0 + $0x170] sm:$0x7f]
  %v306 = vld [vmem:[%s0 + $0x178] sm:$0x7f]
  %v307 = vld [vmem:[%s0 + $0x180] sm:$0x7f]
  %v308 = vld [vmem:[%s0 + $0x188] sm:$0x7f]
  %v309 = vld [vmem:[%s0 + $0x190] sm:$0x7f]
  %v310 = vld [vmem:[%s0 + $0x198] sm:$0x7f]
  %v311 = vld [vmem:[%s0 + $0x1a0] sm:$0x7f]
  %v312 = vld [vmem:[%s0 + $0x1a8] sm:$0x7f]
  %v313 = vld [vmem:[%s0 + $0x1b0] sm:$0x7f]
  %v314 = vld [vmem:[%s0 + $0x1b8] sm:$0x7f]
  %v315 = vld [vmem:[%s0 + $0x1c0] sm:$0x7f]
  %v316 = vld [vmem:[%s0 + $0x1c8] sm:$0x7f]
  %v317 = vld [vmem:[%s0 + $0x1d0] sm:$0x7f]
  %v318 = vld [vmem:[%s0 + $0x1d8] sm:$0x7f]
  %v319 = vld [vmem:[%s0 + $0x1e0] sm:$0x7f]
  %v320 = vld [vmem:[%s0 + $0x1e8] sm:$0x7f]
  %v321 = vld [vmem:[%s0 + $0x1f0] sm:$0x7f]
  %v322 = vld [vmem:[%s0 + $0x1f8] sm:$0x7f]
  %v323 = vld [vmem:[%s0 + $0x200] sm:$0x7f]
  %v324 = vld [vmem:[%s0 + $0x208] sm:$0x7f]
  %v325 = vld [vmem:[%s0 + $0x210] sm:$0x7f]
  %v326 = vld [vmem:[%s0 + $0x218] sm:$0x7f]
  %v327 = vld [vmem:[%s0 + $0x220] sm:$0x7f]
  %v328 = vld [vmem:[%s0 + $0x228] sm:$0x7f]
  %v329 = vld [vmem:[%s0 + $0x230] sm:$0x7f]
  %v330 = vld [vmem:[%s0 + $0x238] sm:$0x7f]
  %v331 = vld [vmem:[%s0 + $0x240] sm:$0x7f]
  %v332 = vld [vmem:[%s0 + $0x248] sm:$0x7f]
  %v333 = vld [vmem:[%s0 + $0x250] sm:$0x7f]
  %v334 = vld [vmem:[%s0 + $0x258] sm:$0x7f]
  %v335 = vld [vmem:[%s0 + $0x260] sm:$0x7f]
  %v336 = vld [vmem:[%s0 + $0x268] sm:$0x7f]
  %v337 = vld [vmem:[%s0 + $0x270] sm:$0x7f]
  %v338 = vld [vmem:[%s0 + $0x278] sm:$0x7f]
  %v339 = vld [vmem:[%s0 + $0x280] sm:$0x7f]
  %v340 = vld [vmem:[%s0 + $0x288] sm:$0x7f]
  %v341 = vld [vmem:[%s0 + $0x290] sm:$0x7f]
  %v342 = vld [vmem:[%s0 + $0x298] sm:$0x7f]
  %s343 = scalar_lea.vmem [#allocation2], 192
  %344 = vst [vmem:[%s343 + $0x60] sm:$0x7f] %v259
  %345 = vst [vmem:[%s343 + $0x68] sm:$0x7f] %v260
  %346 = vst [vmem:[%s343 + $0x70] sm:$0x7f] %v261
  %347 = vst [vmem:[%s343 + $0x78] sm:$0x7f] %v262
  %348 = vst [vmem:[%s343 + $0x80] sm:$0x7f] %v263
  %349 = vst [vmem:[%s343 + $0x88] sm:$0x7f] %v264
  %350 = vst [vmem:[%s343 + $0x90] sm:$0x7f] %v265
  %351 = vst [vmem:[%s343 + $0x98] sm:$0x7f] %v266
  %352 = vst [vmem:[%s343 + $0xa0] sm:$0x7f] %v267
  %353 = vst [vmem:[%s343 + $0xa8] sm:$0x7f] %v268
  %354 = vst [vmem:[%s343 + $0xb0] sm:$0x7f] %v269
  %355 = vst [vmem:[%s343 + $0xb8] sm:$0x7f] %v270
  %356 = vst [vmem:[%s343 + $0x120] sm:$0x7f] %v271
  %357 = vst [vmem:[%s343 + $0x128] sm:$0x7f] %v272
  %358 = vst [vmem:[%s343 + $0x130] sm:$0x7f] %v273
  %359 = vst [vmem:[%s343 + $0x138] sm:$0x7f] %v274
  %360 = vst [vmem:[%s343 + $0x140] sm:$0x7f] %v275
  %361 = vst [vmem:[%s343 + $0x148] sm:$0x7f] %v276
  %362 = vst [vmem:[%s343 + $0x150] sm:$0x7f] %v277
  %363 = vst [vmem:[%s343 + $0x158] sm:$0x7f] %v278
  %364 = vst [vmem:[%s343 + $0x160] sm:$0x7f] %v279
  %365 = vst [vmem:[%s343 + $0x168] sm:$0x7f] %v280
  %366 = vst [vmem:[%s343 + $0x170] sm:$0x7f] %v281
  %367 = vst [vmem:[%s343 + $0x178] sm:$0x7f] %v282
  %368 = vst [vmem:[%s343 + $0x1e0] sm:$0x7f] %v283
  %369 = vst [vmem:[%s343 + $0x1e8] sm:$0x7f] %v284
  %370 = vst [vmem:[%s343 + $0x1f0] sm:$0x7f] %v285
  %371 = vst [vmem:[%s343 + $0x1f8] sm:$0x7f] %v286
  %372 = vst [vmem:[%s343 + $0x200] sm:$0x7f] %v287
  %373 = vst [vmem:[%s343 + $0x208] sm:$0x7f] %v288
  %374 = vst [vmem:[%s343 + $0x210] sm:$0x7f] %v289
  %375 = vst [vmem:[%s343 + $0x218] sm:$0x7f] %v290
  %376 = vst [vmem:[%s343 + $0x220] sm:$0x7f] %v291
  %377 = vst [vmem:[%s343 + $0x228] sm:$0x7f] %v292
  %378 = vst [vmem:[%s343 + $0x230] sm:$0x7f] %v293
  %379 = vst [vmem:[%s343 + $0x238] sm:$0x7f] %v294
  %380 = vst [vmem:[%s343 + $0x2a0] sm:$0x7f] %v295
  %381 = vst [vmem:[%s343 + $0x2a8] sm:$0x7f] %v296
  %382 = vst [vmem:[%s343 + $0x2b0] sm:$0x7f] %v297
  %383 = vst [vmem:[%s343 + $0x2b8] sm:$0x7f] %v298
  %384 = vst [vmem:[%s343 + $0x2c0] sm:$0x7f] %v299
  %385 = vst [vmem:[%s343 + $0x2c8] sm:$0x7f] %v300
  %386 = vst [vmem:[%s343 + $0x2d0] sm:$0x7f] %v301
  %387 = vst [vmem:[%s343 + $0x2d8] sm:$0x7f] %v302
  %388 = vst [vmem:[%s343 + $0x2e0] sm:$0x7f] %v303
  %389 = vst [vmem:[%s343 + $0x2e8] sm:$0x7f] %v304
  %390 = vst [vmem:[%s343 + $0x2f0] sm:$0x7f] %v305
  %391 = vst [vmem:[%s343 + $0x2f8] sm:$0x7f] %v306
  %392 = vst [vmem:[%s343 + $0x360] sm:$0x7f] %v307
  %393 = vst [vmem:[%s343 + $0x368] sm:$0x7f] %v308
  %394 = vst [vmem:[%s343 + $0x370] sm:$0x7f] %v309
  %395 = vst [vmem:[%s343 + $0x378] sm:$0x7f] %v310
  %396 = vst [vmem:[%s343 + $0x380] sm:$0x7f] %v311
  %397 = vst [vmem:[%s343 + $0x388] sm:$0x7f] %v312
  %398 = vst [vmem:[%s343 + $0x390] sm:$0x7f] %v313
  %399 = vst [vmem:[%s343 + $0x398] sm:$0x7f] %v314
  %400 = vst [vmem:[%s343 + $0x3a0] sm:$0x7f] %v315
  %401 = vst [vmem:[%s343 + $0x3a8] sm:$0x7f] %v316
  %402 = vst [vmem:[%s343 + $0x3b0] sm:$0x7f] %v317
  %403 = vst [vmem:[%s343 + $0x3b8] sm:$0x7f] %v318
  %404 = vst [vmem:[%s343 + $0x420] sm:$0x7f] %v319
  %405 = vst [vmem:[%s343 + $0x428] sm:$0x7f] %v320
  %406 = vst [vmem:[%s343 + $0x430] sm:$0x7f] %v321
  %407 = vst [vmem:[%s343 + $0x438] sm:$0x7f] %v322
  %408 = vst [vmem:[%s343 + $0x440] sm:$0x7f] %v323
  %409 = vst [vmem:[%s343 + $0x448] sm:$0x7f] %v324
  %410 = vst [vmem:[%s343 + $0x450] sm:$0x7f] %v325
  %411 = vst [vmem:[%s343 + $0x458] sm:$0x7f] %v326
  %412 = vst [vmem:[%s343 + $0x460] sm:$0x7f] %v327
  %413 = vst [vmem:[%s343 + $0x468] sm:$0x7f] %v328
  %414 = vst [vmem:[%s343 + $0x470] sm:$0x7f] %v329
  %415 = vst [vmem:[%s343 + $0x478] sm:$0x7f] %v330
  %416 = vst [vmem:[%s343 + $0x4e0] sm:$0x7f] %v331
  %417 = vst [vmem:[%s343 + $0x4e8] sm:$0x7f] %v332
  %418 = vst [vmem:[%s343 + $0x4f0] sm:$0x7f] %v333
  %419 = vst [vmem:[%s343 + $0x4f8] sm:$0x7f] %v334
  %420 = vst [vmem:[%s343 + $0x500] sm:$0x7f] %v335
  %421 = vst [vmem:[%s343 + $0x508] sm:$0x7f] %v336
  %422 = vst [vmem:[%s343 + $0x510] sm:$0x7f] %v337
  %423 = vst [vmem:[%s343 + $0x518] sm:$0x7f] %v338
  %424 = vst [vmem:[%s343 + $0x520] sm:$0x7f] %v339
  %425 = vst [vmem:[%s343 + $0x528] sm:$0x7f] %v340
  %426 = vst [vmem:[%s343 + $0x530] sm:$0x7f] %v341
  %427 = vst [vmem:[%s343 + $0x538] sm:$0x7f] %v342
  %v428 = vld [vmem:[#allocation2] sm:$0xff]
  %v429 = vld [vmem:[#allocation2 + $0x8] sm:$0xff]
  %v430 = vld [vmem:[#allocation2 + $0x10] sm:$0xff]
  %v431 = vld [vmem:[#allocation2 + $0x18] sm:$0xff]
  %v432 = vld [vmem:[#allocation2 + $0x20] sm:$0xff]
  %v433 = vld [vmem:[#allocation2 + $0x28] sm:$0xff]
  %v434 = vld [vmem:[#allocation2 + $0x30] sm:$0xff]
  %v435 = vld [vmem:[#allocation2 + $0x38] sm:$0xff]
  %v436 = vld [vmem:[#allocation2 + $0x40] sm:$0xff]
  %v437 = vld [vmem:[#allocation2 + $0x48] sm:$0xff]
  %v438 = vld [vmem:[#allocation2 + $0x50] sm:$0xff]
  %v439 = vld [vmem:[#allocation2 + $0x58] sm:$0xff]
  %v440 = vld [vmem:[#allocation2 + $0x60] sm:$0xff]
  %v441 = vld [vmem:[#allocation2 + $0x68] sm:$0xff]
  %v442 = vld [vmem:[#allocation2 + $0x70] sm:$0xff]
  %v443 = vld [vmem:[#allocation2 + $0x78] sm:$0xff]
  %v444 = vld [vmem:[#allocation2 + $0x80] sm:$0xff]
  %v445 = vld [vmem:[#allocation2 + $0x88] sm:$0xff]
  %v446 = vld [vmem:[#allocation2 + $0x90] sm:$0xff]
  %v447 = vld [vmem:[#allocation2 + $0x98] sm:$0xff]
  %v448 = vld [vmem:[#allocation2 + $0xa0] sm:$0xff]
  %v449 = vld [vmem:[#allocation2 + $0xa8] sm:$0xff]
  %v450 = vld [vmem:[#allocation2 + $0xb0] sm:$0xff]
  %v451 = vld [vmem:[#allocation2 + $0xb8] sm:$0xff]
  %v452 = vld [vmem:[%s343] sm:$0xff]
  %v453 = vld [vmem:[%s343 + $0x8] sm:$0xff]
  %v454 = vld [vmem:[%s343 + $0x10] sm:$0xff]
  %v455 = vld [vmem:[%s343 + $0x18] sm:$0xff]
  %v456 = vld [vmem:[%s343 + $0x20] sm:$0xff]
  %v457 = vld [vmem:[%s343 + $0x28] sm:$0xff]
  %v458 = vld [vmem:[%s343 + $0x30] sm:$0xff]
  %v459 = vld [vmem:[%s343 + $0x38] sm:$0xff]
  %v460 = vld [vmem:[%s343 + $0x40] sm:$0xff]
  %v461 = vld [vmem:[%s343 + $0x48] sm:$0xff]
  %v462 = vld [vmem:[%s343 + $0x50] sm:$0xff]
  %v463 = vld [vmem:[%s343 + $0x58] sm:$0xff]
  %v464 = vld [vmem:[%s343 + $0x60] sm:$0xff]
  %v465 = vld [vmem:[%s343 + $0x68] sm:$0xff]
  %v466 = vld [vmem:[%s343 + $0x70] sm:$0xff]
  %v467 = vld [vmem:[%s343 + $0x78] sm:$0xff]
  %v468 = vld [vmem:[%s343 + $0x80] sm:$0xff]
  %v469 = vld [vmem:[%s343 + $0x88] sm:$0xff]
  %v470 = vld [vmem:[%s343 + $0x90] sm:$0xff]
  %v471 = vld [vmem:[%s343 + $0x98] sm:$0xff]
  %v472 = vld [vmem:[%s343 + $0xa0] sm:$0xff]
  %v473 = vld [vmem:[%s343 + $0xa8] sm:$0xff]
  %v474 = vld [vmem:[%s343 + $0xb0] sm:$0xff]
  %v475 = vld [vmem:[%s343 + $0xb8] sm:$0xff]
  %s476 = scalar_lea.vmem [#allocation2], 384
  %v477 = vld [vmem:[%s476] sm:$0xff]
  %v478 = vld [vmem:[%s476 + $0x8] sm:$0xff]
  %v479 = vld [vmem:[%s476 + $0x10] sm:$0xff]
  %v480 = vld [vmem:[%s476 + $0x18] sm:$0xff]
  %v481 = vld [vmem:[%s476 + $0x20] sm:$0xff]
  %v482 = vld [vmem:[%s476 + $0x28] sm:$0xff]
  %v483 = vld [vmem:[%s476 + $0x30] sm:$0xff]
  %v484 = vld [vmem:[%s476 + $0x38] sm:$0xff]
  %v485 = vld [vmem:[%s476 + $0x40] sm:$0xff]
  %v486 = vld [vmem:[%s476 + $0x48] sm:$0xff]
  %v487 = vld [vmem:[%s476 + $0x50] sm:$0xff]
  %v488 = vld [vmem:[%s476 + $0x58] sm:$0xff]
  %v489 = vld [vmem:[%s476 + $0x60] sm:$0xff]
  %v490 = vld [vmem:[%s476 + $0x68] sm:$0xff]
  %v491 = vld [vmem:[%s476 + $0x70] sm:$0xff]
  %v492 = vld [vmem:[%s476 + $0x78] sm:$0xff]
  %v493 = vld [vmem:[%s476 + $0x80] sm:$0xff]
  %v494 = vld [vmem:[%s476 + $0x88] sm:$0xff]
  %v495 = vld [vmem:[%s476 + $0x90] sm:$0xff]
  %v496 = vld [vmem:[%s476 + $0x98] sm:$0xff]
  %v497 = vld [vmem:[%s476 + $0xa0] sm:$0xff]
  %v498 = vld [vmem:[%s476 + $0xa8] sm:$0xff]
  %v499 = vld [vmem:[%s476 + $0xb0] sm:$0xff]
  %v500 = vld [vmem:[%s476 + $0xb8] sm:$0xff]
  %v503 = vlaneseq
  %v504 = vshrl.u32 %v503, 7
  %v505 = vsub.s32 0, %v504
  %v506 = vrot.slane %v17, %v505
  %v507 = vlaneseq
  %v508 = vshrl.u32 %v507, 7
  %v509 = vsub.s32 1, %v508
  %v510 = vrot.slane %v17, %v509
  %v511 = vlaneseq
  %v512 = vshrl.u32 %v511, 7
  %v513 = vsub.s32 2, %v512
  %v514 = vrot.slane %v17, %v513
  %v515 = vlaneseq
  %v516 = vshrl.u32 %v515, 7
  %v517 = vsub.s32 3, %v516
  %v518 = vrot.slane %v17, %v517
  %v519 = vlaneseq
  %v520 = vshrl.u32 %v519, 7
  %v521 = vsub.s32 4, %v520
  %v522 = vrot.slane %v17, %v521
  %v523 = vlaneseq
  %v524 = vshrl.u32 %v523, 7
  %v525 = vsub.s32 5, %v524
  %v526 = vrot.slane %v17, %v525
  %v527 = vlaneseq
  %v528 = vshrl.u32 %v527, 7
  %v529 = vsub.s32 6, %v528
  %v530 = vrot.slane %v17, %v529
  %v531 = vlaneseq
  %v532 = vshrl.u32 %v531, 7
  %v533 = vsub.s32 7, %v532
  %v534 = vrot.slane %v17, %v533
  %v535 = vlaneseq
  %v536 = vshrl.u32 %v535, 7
  %v537 = vsub.s32 0, %v536
  %v538 = vrot.slane %v18, %v537
  %v539 = vlaneseq
  %v540 = vshrl.u32 %v539, 7
  %v541 = vsub.s32 1, %v540
  %v542 = vrot.slane %v18, %v541
  %v543 = vlaneseq
  %v544 = vshrl.u32 %v543, 7
  %v545 = vsub.s32 2, %v544
  %v546 = vrot.slane %v18, %v545
  %v547 = vlaneseq
  %v548 = vshrl.u32 %v547, 7
  %v549 = vsub.s32 3, %v548
  %v550 = vrot.slane %v18, %v549
  %v563 = vmul.f32 %v428, %v506
  %v564 = vmul.f32 %v429, %v510
  %v565 = vmul.f32 %v430, %v514
  %v566 = vmul.f32 %v431, %v518
  %v567 = vmul.f32 %v432, %v522
  %v568 = vmul.f32 %v433, %v526
  %v569 = vmul.f32 %v434, %v530
  %v570 = vmul.f32 %v435, %v534
  %v571 = vmul.f32 %v436, %v538
  %v572 = vmul.f32 %v437, %v542
  %v573 = vmul.f32 %v438, %v546
  %v574 = vmul.f32 %v439, %v550
  %v575 = vmul.f32 %v440, %v506
  %v576 = vmul.f32 %v441, %v510
  %v577 = vmul.f32 %v442, %v514
  %v578 = vmul.f32 %v443, %v518
  %v579 = vmul.f32 %v444, %v522
  %v580 = vmul.f32 %v445, %v526
  %v581 = vmul.f32 %v446, %v530
  %v582 = vmul.f32 %v447, %v534
  %v583 = vmul.f32 %v448, %v538
  %v584 = vmul.f32 %v449, %v542
  %v585 = vmul.f32 %v450, %v546
  %v586 = vmul.f32 %v451, %v550
  %v587 = vadd.f32 %v563, 0.0
  %v588 = vadd.f32 %v564, 0.0
  %v589 = vadd.f32 %v565, 0.0
  %v590 = vadd.f32 %v566, 0.0
  %v591 = vadd.f32 %v567, 0.0
  %v592 = vadd.f32 %v568, 0.0
  %v593 = vadd.f32 %v569, 0.0
  %v594 = vadd.f32 %v570, 0.0
  %v595 = vadd.f32 %v571, 0.0
  %v596 = vadd.f32 %v572, 0.0
  %v597 = vadd.f32 %v573, 0.0
  %v598 = vadd.f32 %v574, 0.0
  %v599 = vadd.f32 %v575, 0.0
  %v600 = vadd.f32 %v576, 0.0
  %v601 = vadd.f32 %v577, 0.0
  %v602 = vadd.f32 %v578, 0.0
  %v603 = vadd.f32 %v579, 0.0
  %v604 = vadd.f32 %v580, 0.0
  %v605 = vadd.f32 %v581, 0.0
  %v606 = vadd.f32 %v582, 0.0
  %v607 = vadd.f32 %v583, 0.0
  %v608 = vadd.f32 %v584, 0.0
  %v609 = vadd.f32 %v585, 0.0
  %v610 = vadd.f32 %v586, 0.0
  %v613 = vlaneseq
  %v614 = vshrl.u32 %v613, 7
  %v615 = vsub.s32 0, %v614
  %v616 = vrot.slane %v20, %v615
  %v617 = vlaneseq
  %v618 = vshrl.u32 %v617, 7
  %v619 = vsub.s32 1, %v618
  %v620 = vrot.slane %v20, %v619
  %v621 = vlaneseq
  %v622 = vshrl.u32 %v621, 7
  %v623 = vsub.s32 2, %v622
  %v624 = vrot.slane %v20, %v623
  %v625 = vlaneseq
  %v626 = vshrl.u32 %v625, 7
  %v627 = vsub.s32 3, %v626
  %v628 = vrot.slane %v20, %v627
  %v629 = vlaneseq
  %v630 = vshrl.u32 %v629, 7
  %v631 = vsub.s32 4, %v630
  %v632 = vrot.slane %v20, %v631
  %v633 = vlaneseq
  %v634 = vshrl.u32 %v633, 7
  %v635 = vsub.s32 5, %v634
  %v636 = vrot.slane %v20, %v635
  %v637 = vlaneseq
  %v638 = vshrl.u32 %v637, 7
  %v639 = vsub.s32 6, %v638
  %v640 = vrot.slane %v20, %v639
  %v641 = vlaneseq
  %v642 = vshrl.u32 %v641, 7
  %v643 = vsub.s32 7, %v642
  %v644 = vrot.slane %v20, %v643
  %v645 = vlaneseq
  %v646 = vshrl.u32 %v645, 7
  %v647 = vsub.s32 0, %v646
  %v648 = vrot.slane %v21, %v647
  %v649 = vlaneseq
  %v650 = vshrl.u32 %v649, 7
  %v651 = vsub.s32 1, %v650
  %v652 = vrot.slane %v21, %v651
  %v653 = vlaneseq
  %v654 = vshrl.u32 %v653, 7
  %v655 = vsub.s32 2, %v654
  %v656 = vrot.slane %v21, %v655
  %v657 = vlaneseq
  %v658 = vshrl.u32 %v657, 7
  %v659 = vsub.s32 3, %v658
  %v660 = vrot.slane %v21, %v659
  %v673 = vmul.f32 %v440, %v616
  %v674 = vmul.f32 %v441, %v620
  %v675 = vmul.f32 %v442, %v624
  %v676 = vmul.f32 %v443, %v628
  %v677 = vmul.f32 %v444, %v632
  %v678 = vmul.f32 %v445, %v636
  %v679 = vmul.f32 %v446, %v640
  %v680 = vmul.f32 %v447, %v644
  %v681 = vmul.f32 %v448, %v648
  %v682 = vmul.f32 %v449, %v652
  %v683 = vmul.f32 %v450, %v656
  %v684 = vmul.f32 %v451, %v660
  %v697 = vrot.slane %v673, 1
  %v698 = vrot.slane %v674, 1
  %v699 = vrot.slane %v675, 1
  %v700 = vrot.slane %v676, 1
  %v701 = vrot.slane %v677, 1
  %v702 = vrot.slane %v678, 1
  %v703 = vrot.slane %v679, 1
  %v704 = vrot.slane %v680, 1
  %v705 = vrot.slane %v681, 1
  %v706 = vrot.slane %v682, 1
  %v707 = vrot.slane %v683, 1
  %v708 = vrot.slane %v684, 1
  %v721 = vadd.f32 %v587, %v697
  %v722 = vadd.f32 %v588, %v698
  %v723 = vadd.f32 %v589, %v699
  %v724 = vadd.f32 %v590, %v700
  %v725 = vadd.f32 %v591, %v701
  %v726 = vadd.f32 %v592, %v702
  %v727 = vadd.f32 %v593, %v703
  %v728 = vadd.f32 %v594, %v704
  %v729 = vadd.f32 %v595, %v705
  %v730 = vadd.f32 %v596, %v706
  %v731 = vadd.f32 %v597, %v707
  %v732 = vadd.f32 %v598, %v708
  %v733 = vadd.f32 %v599, %v697
  %v734 = vadd.f32 %v600, %v698
  %v735 = vadd.f32 %v601, %v699
  %v736 = vadd.f32 %v602, %v700
  %v737 = vadd.f32 %v603, %v701
  %v738 = vadd.f32 %v604, %v702
  %v739 = vadd.f32 %v605, %v703
  %v740 = vadd.f32 %v606, %v704
  %v741 = vadd.f32 %v607, %v705
  %v742 = vadd.f32 %v608, %v706
  %v743 = vadd.f32 %v609, %v707
  %v744 = vadd.f32 %v610, %v708
  %v747 = vlaneseq
  %v748 = vshrl.u32 %v747, 7
  %v749 = vsub.s32 0, %v748
  %v750 = vrot.slane %v23, %v749
  %v751 = vlaneseq
  %v752 = vshrl.u32 %v751, 7
  %v753 = vsub.s32 1, %v752
  %v754 = vrot.slane %v23, %v753
  %v755 = vlaneseq
  %v756 = vshrl.u32 %v755, 7
  %v757 = vsub.s32 2, %v756
  %v758 = vrot.slane %v23, %v757
  %v759 = vlaneseq
  %v760 = vshrl.u32 %v759, 7
  %v761 = vsub.s32 3, %v760
  %v762 = vrot.slane %v23, %v761
  %v763 = vlaneseq
  %v764 = vshrl.u32 %v763, 7
  %v765 = vsub.s32 4, %v764
  %v766 = vrot.slane %v23, %v765
  %v767 = vlaneseq
  %v768 = vshrl.u32 %v767, 7
  %v769 = vsub.s32 5, %v768
  %v770 = vrot.slane %v23, %v769
  %v771 = vlaneseq
  %v772 = vshrl.u32 %v771, 7
  %v773 = vsub.s32 6, %v772
  %v774 = vrot.slane %v23, %v773
  %v775 = vlaneseq
  %v776 = vshrl.u32 %v775, 7
  %v777 = vsub.s32 7, %v776
  %v778 = vrot.slane %v23, %v777
  %v779 = vlaneseq
  %v780 = vshrl.u32 %v779, 7
  %v781 = vsub.s32 0, %v780
  %v782 = vrot.slane %v24, %v781
  %v783 = vlaneseq
  %v784 = vshrl.u32 %v783, 7
  %v785 = vsub.s32 1, %v784
  %v786 = vrot.slane %v24, %v785
  %v787 = vlaneseq
  %v788 = vshrl.u32 %v787, 7
  %v789 = vsub.s32 2, %v788
  %v790 = vrot.slane %v24, %v789
  %v791 = vlaneseq
  %v792 = vshrl.u32 %v791, 7
  %v793 = vsub.s32 3, %v792
  %v794 = vrot.slane %v24, %v793
  %v807 = vmul.f32 %v440, %v750
  %v808 = vmul.f32 %v441, %v754
  %v809 = vmul.f32 %v442, %v758
  %v810 = vmul.f32 %v443, %v762
  %v811 = vmul.f32 %v444, %v766
  %v812 = vmul.f32 %v445, %v770
  %v813 = vmul.f32 %v446, %v774
  %v814 = vmul.f32 %v447, %v778
  %v815 = vmul.f32 %v448, %v782
  %v816 = vmul.f32 %v449, %v786
  %v817 = vmul.f32 %v450, %v790
  %v818 = vmul.f32 %v451, %v794
  %v831 = vrot.slane %v807, 2
  %v832 = vrot.slane %v808, 2
  %v833 = vrot.slane %v809, 2
  %v834 = vrot.slane %v810, 2
  %v835 = vrot.slane %v811, 2
  %v836 = vrot.slane %v812, 2
  %v837 = vrot.slane %v813, 2
  %v838 = vrot.slane %v814, 2
  %v839 = vrot.slane %v815, 2
  %v840 = vrot.slane %v816, 2
  %v841 = vrot.slane %v817, 2
  %v842 = vrot.slane %v818, 2
  %v855 = vadd.f32 %v721, %v831
  %v856 = vadd.f32 %v722, %v832
  %v857 = vadd.f32 %v723, %v833
  %v858 = vadd.f32 %v724, %v834
  %v859 = vadd.f32 %v725, %v835
  %v860 = vadd.f32 %v726, %v836
  %v861 = vadd.f32 %v727, %v837
  %v862 = vadd.f32 %v728, %v838
  %v863 = vadd.f32 %v729, %v839
  %v864 = vadd.f32 %v730, %v840
  %v865 = vadd.f32 %v731, %v841
  %v866 = vadd.f32 %v732, %v842
  %v867 = vadd.f32 %v733, %v831
  %v868 = vadd.f32 %v734, %v832
  %v869 = vadd.f32 %v735, %v833
  %v870 = vadd.f32 %v736, %v834
  %v871 = vadd.f32 %v737, %v835
  %v872 = vadd.f32 %v738, %v836
  %v873 = vadd.f32 %v739, %v837
  %v874 = vadd.f32 %v740, %v838
  %v875 = vadd.f32 %v741, %v839
  %v876 = vadd.f32 %v742, %v840
  %v877 = vadd.f32 %v743, %v841
  %v878 = vadd.f32 %v744, %v842
  %v881 = vlaneseq
  %v882 = vshrl.u32 %v881, 7
  %v883 = vsub.s32 0, %v882
  %v884 = vrot.slane %v26, %v883
  %v885 = vlaneseq
  %v886 = vshrl.u32 %v885, 7
  %v887 = vsub.s32 1, %v886
  %v888 = vrot.slane %v26, %v887
  %v889 = vlaneseq
  %v890 = vshrl.u32 %v889, 7
  %v891 = vsub.s32 2, %v890
  %v892 = vrot.slane %v26, %v891
  %v893 = vlaneseq
  %v894 = vshrl.u32 %v893, 7
  %v895 = vsub.s32 3, %v894
  %v896 = vrot.slane %v26, %v895
  %v897 = vlaneseq
  %v898 = vshrl.u32 %v897, 7
  %v899 = vsub.s32 4, %v898
  %v900 = vrot.slane %v26, %v899
  %v901 = vlaneseq
  %v902 = vshrl.u32 %v901, 7
  %v903 = vsub.s32 5, %v902
  %v904 = vrot.slane %v26, %v903
  %v905 = vlaneseq
  %v906 = vshrl.u32 %v905, 7
  %v907 = vsub.s32 6, %v906
  %v908 = vrot.slane %v26, %v907
  %v909 = vlaneseq
  %v910 = vshrl.u32 %v909, 7
  %v911 = vsub.s32 7, %v910
  %v912 = vrot.slane %v26, %v911
  %v913 = vlaneseq
  %v914 = vshrl.u32 %v913, 7
  %v915 = vsub.s32 0, %v914
  %v916 = vrot.slane %v27, %v915
  %v917 = vlaneseq
  %v918 = vshrl.u32 %v917, 7
  %v919 = vsub.s32 1, %v918
  %v920 = vrot.slane %v27, %v919
  %v921 = vlaneseq
  %v922 = vshrl.u32 %v921, 7
  %v923 = vsub.s32 2, %v922
  %v924 = vrot.slane %v27, %v923
  %v925 = vlaneseq
  %v926 = vshrl.u32 %v925, 7
  %v927 = vsub.s32 3, %v926
  %v928 = vrot.slane %v27, %v927
  %v941 = vmul.f32 %v452, %v884
  %v942 = vmul.f32 %v453, %v888
  %v943 = vmul.f32 %v454, %v892
  %v944 = vmul.f32 %v455, %v896
  %v945 = vmul.f32 %v456, %v900
  %v946 = vmul.f32 %v457, %v904
  %v947 = vmul.f32 %v458, %v908
  %v948 = vmul.f32 %v459, %v912
  %v949 = vmul.f32 %v460, %v916
  %v950 = vmul.f32 %v461, %v920
  %v951 = vmul.f32 %v462, %v924
  %v952 = vmul.f32 %v463, %v928
  %v953 = vmul.f32 %v464, %v884
  %v954 = vmul.f32 %v465, %v888
  %v955 = vmul.f32 %v466, %v892
  %v956 = vmul.f32 %v467, %v896
  %v957 = vmul.f32 %v468, %v900
  %v958 = vmul.f32 %v469, %v904
  %v959 = vmul.f32 %v470, %v908
  %v960 = vmul.f32 %v471, %v912
  %v961 = vmul.f32 %v472, %v916
  %v962 = vmul.f32 %v473, %v920
  %v963 = vmul.f32 %v474, %v924
  %v964 = vmul.f32 %v475, %v928
  %v965 = vadd.f32 %v855, %v941
  %v966 = vadd.f32 %v856, %v942
  %v967 = vadd.f32 %v857, %v943
  %v968 = vadd.f32 %v858, %v944
  %v969 = vadd.f32 %v859, %v945
  %v970 = vadd.f32 %v860, %v946
  %v971 = vadd.f32 %v861, %v947
  %v972 = vadd.f32 %v862, %v948
  %v973 = vadd.f32 %v863, %v949
  %v974 = vadd.f32 %v864, %v950
  %v975 = vadd.f32 %v865, %v951
  %v976 = vadd.f32 %v866, %v952
  %v977 = vadd.f32 %v867, %v953
  %v978 = vadd.f32 %v868, %v954
  %v979 = vadd.f32 %v869, %v955
  %v980 = vadd.f32 %v870, %v956
  %v981 = vadd.f32 %v871, %v957
  %v982 = vadd.f32 %v872, %v958
  %v983 = vadd.f32 %v873, %v959
  %v984 = vadd.f32 %v874, %v960
  %v985 = vadd.f32 %v875, %v961
  %v986 = vadd.f32 %v876, %v962
  %v987 = vadd.f32 %v877, %v963
  %v988 = vadd.f32 %v878, %v964
  %v991 = vlaneseq
  %v992 = vshrl.u32 %v991, 7
  %v993 = vsub.s32 0, %v992
  %v994 = vrot.slane %v29, %v993
  %v995 = vlaneseq
  %v996 = vshrl.u32 %v995, 7
  %v997 = vsub.s32 1, %v996
  %v998 = vrot.slane %v29, %v997
  %v999 = vlaneseq
  %v1000 = vshrl.u32 %v999, 7
  %v1001 = vsub.s32 2, %v1000
  %v1002 = vrot.slane %v29, %v1001
  %v1003 = vlaneseq
  %v1004 = vshrl.u32 %v1003, 7
  %v1005 = vsub.s32 3, %v1004
  %v1006 = vrot.slane %v29, %v1005
  %v1007 = vlaneseq
  %v1008 = vshrl.u32 %v1007, 7
  %v1009 = vsub.s32 4, %v1008
  %v1010 = vrot.slane %v29, %v1009
  %v1011 = vlaneseq
  %v1012 = vshrl.u32 %v1011, 7
  %v1013 = vsub.s32 5, %v1012
  %v1014 = vrot.slane %v29, %v1013
  %v1015 = vlaneseq
  %v1016 = vshrl.u32 %v1015, 7
  %v1017 = vsub.s32 6, %v1016
  %v1018 = vrot.slane %v29, %v1017
  %v1019 = vlaneseq
  %v1020 = vshrl.u32 %v1019, 7
  %v1021 = vsub.s32 7, %v1020
  %v1022 = vrot.slane %v29, %v1021
  %v1023 = vlaneseq
  %v1024 = vshrl.u32 %v1023, 7
  %v1025 = vsub.s32 0, %v1024
  %v1026 = vrot.slane %v30, %v1025
  %v1027 = vlaneseq
  %v1028 = vshrl.u32 %v1027, 7
  %v1029 = vsub.s32 1, %v1028
  %v1030 = vrot.slane %v30, %v1029
  %v1031 = vlaneseq
  %v1032 = vshrl.u32 %v1031, 7
  %v1033 = vsub.s32 2, %v1032
  %v1034 = vrot.slane %v30, %v1033
  %v1035 = vlaneseq
  %v1036 = vshrl.u32 %v1035, 7
  %v1037 = vsub.s32 3, %v1036
  %v1038 = vrot.slane %v30, %v1037
  %v1051 = vmul.f32 %v464, %v994
  %v1052 = vmul.f32 %v465, %v998
  %v1053 = vmul.f32 %v466, %v1002
  %v1054 = vmul.f32 %v467, %v1006
  %v1055 = vmul.f32 %v468, %v1010
  %v1056 = vmul.f32 %v469, %v1014
  %v1057 = vmul.f32 %v470, %v1018
  %v1058 = vmul.f32 %v471, %v1022
  %v1059 = vmul.f32 %v472, %v1026
  %v1060 = vmul.f32 %v473, %v1030
  %v1061 = vmul.f32 %v474, %v1034
  %v1062 = vmul.f32 %v475, %v1038
  %v1075 = vrot.slane %v1051, 1
  %v1076 = vrot.slane %v1052, 1
  %v1077 = vrot.slane %v1053, 1
  %v1078 = vrot.slane %v1054, 1
  %v1079 = vrot.slane %v1055, 1
  %v1080 = vrot.slane %v1056, 1
  %v1081 = vrot.slane %v1057, 1
  %v1082 = vrot.slane %v1058, 1
  %v1083 = vrot.slane %v1059, 1
  %v1084 = vrot.slane %v1060, 1
  %v1085 = vrot.slane %v1061, 1
  %v1086 = vrot.slane %v1062, 1
  %v1099 = vadd.f32 %v965, %v1075
  %v1100 = vadd.f32 %v966, %v1076
  %v1101 = vadd.f32 %v967, %v1077
  %v1102 = vadd.f32 %v968, %v1078
  %v1103 = vadd.f32 %v969, %v1079
  %v1104 = vadd.f32 %v970, %v1080
  %v1105 = vadd.f32 %v971, %v1081
  %v1106 = vadd.f32 %v972, %v1082
  %v1107 = vadd.f32 %v973, %v1083
  %v1108 = vadd.f32 %v974, %v1084
  %v1109 = vadd.f32 %v975, %v1085
  %v1110 = vadd.f32 %v976, %v1086
  %v1111 = vadd.f32 %v977, %v1075
  %v1112 = vadd.f32 %v978, %v1076
  %v1113 = vadd.f32 %v979, %v1077
  %v1114 = vadd.f32 %v980, %v1078
  %v1115 = vadd.f32 %v981, %v1079
  %v1116 = vadd.f32 %v982, %v1080
  %v1117 = vadd.f32 %v983, %v1081
  %v1118 = vadd.f32 %v984, %v1082
  %v1119 = vadd.f32 %v985, %v1083
  %v1120 = vadd.f32 %v986, %v1084
  %v1121 = vadd.f32 %v987, %v1085
  %v1122 = vadd.f32 %v988, %v1086
  %v1125 = vlaneseq
  %v1126 = vshrl.u32 %v1125, 7
  %v1127 = vsub.s32 0, %v1126
  %v1128 = vrot.slane %v32, %v1127
  %v1129 = vlaneseq
  %v1130 = vshrl.u32 %v1129, 7
  %v1131 = vsub.s32 1, %v1130
  %v1132 = vrot.slane %v32, %v1131
  %v1133 = vlaneseq
  %v1134 = vshrl.u32 %v1133, 7
  %v1135 = vsub.s32 2, %v1134
  %v1136 = vrot.slane %v32, %v1135
  %v1137 = vlaneseq
  %v1138 = vshrl.u32 %v1137, 7
  %v1139 = vsub.s32 3, %v1138
  %v1140 = vrot.slane %v32, %v1139
  %v1141 = vlaneseq
  %v1142 = vshrl.u32 %v1141, 7
  %v1143 = vsub.s32 4, %v1142
  %v1144 = vrot.slane %v32, %v1143
  %v1145 = vlaneseq
  %v1146 = vshrl.u32 %v1145, 7
  %v1147 = vsub.s32 5, %v1146
  %v1148 = vrot.slane %v32, %v1147
  %v1149 = vlaneseq
  %v1150 = vshrl.u32 %v1149, 7
  %v1151 = vsub.s32 6, %v1150
  %v1152 = vrot.slane %v32, %v1151
  %v1153 = vlaneseq
  %v1154 = vshrl.u32 %v1153, 7
  %v1155 = vsub.s32 7, %v1154
  %v1156 = vrot.slane %v32, %v1155
  %v1157 = vlaneseq
  %v1158 = vshrl.u32 %v1157, 7
  %v1159 = vsub.s32 0, %v1158
  %v1160 = vrot.slane %v33, %v1159
  %v1161 = vlaneseq
  %v1162 = vshrl.u32 %v1161, 7
  %v1163 = vsub.s32 1, %v1162
  %v1164 = vrot.slane %v33, %v1163
  %v1165 = vlaneseq
  %v1166 = vshrl.u32 %v1165, 7
  %v1167 = vsub.s32 2, %v1166
  %v1168 = vrot.slane %v33, %v1167
  %v1169 = vlaneseq
  %v1170 = vshrl.u32 %v1169, 7
  %v1171 = vsub.s32 3, %v1170
  %v1172 = vrot.slane %v33, %v1171
  %v1185 = vmul.f32 %v464, %v1128
  %v1186 = vmul.f32 %v465, %v1132
  %v1187 = vmul.f32 %v466, %v1136
  %v1188 = vmul.f32 %v467, %v1140
  %v1189 = vmul.f32 %v468, %v1144
  %v1190 = vmul.f32 %v469, %v1148
  %v1191 = vmul.f32 %v470, %v1152
  %v1192 = vmul.f32 %v471, %v1156
  %v1193 = vmul.f32 %v472, %v1160
  %v1194 = vmul.f32 %v473, %v1164
  %v1195 = vmul.f32 %v474, %v1168
  %v1196 = vmul.f32 %v475, %v1172
  %v1209 = vrot.slane %v1185, 2
  %v1210 = vrot.slane %v1186, 2
  %v1211 = vrot.slane %v1187, 2
  %v1212 = vrot.slane %v1188, 2
  %v1213 = vrot.slane %v1189, 2
  %v1214 = vrot.slane %v1190, 2
  %v1215 = vrot.slane %v1191, 2
  %v1216 = vrot.slane %v1192, 2
  %v1217 = vrot.slane %v1193, 2
  %v1218 = vrot.slane %v1194, 2
  %v1219 = vrot.slane %v1195, 2
  %v1220 = vrot.slane %v1196, 2
  %v1233 = vadd.f32 %v1099, %v1209
  %v1234 = vadd.f32 %v1100, %v1210
  %v1235 = vadd.f32 %v1101, %v1211
  %v1236 = vadd.f32 %v1102, %v1212
  %v1237 = vadd.f32 %v1103, %v1213
  %v1238 = vadd.f32 %v1104, %v1214
  %v1239 = vadd.f32 %v1105, %v1215
  %v1240 = vadd.f32 %v1106, %v1216
  %v1241 = vadd.f32 %v1107, %v1217
  %v1242 = vadd.f32 %v1108, %v1218
  %v1243 = vadd.f32 %v1109, %v1219
  %v1244 = vadd.f32 %v1110, %v1220
  %v1245 = vadd.f32 %v1111, %v1209
  %v1246 = vadd.f32 %v1112, %v1210
  %v1247 = vadd.f32 %v1113, %v1211
  %v1248 = vadd.f32 %v1114, %v1212
  %v1249 = vadd.f32 %v1115, %v1213
  %v1250 = vadd.f32 %v1116, %v1214
  %v1251 = vadd.f32 %v1117, %v1215
  %v1252 = vadd.f32 %v1118, %v1216
  %v1253 = vadd.f32 %v1119, %v1217
  %v1254 = vadd.f32 %v1120, %v1218
  %v1255 = vadd.f32 %v1121, %v1219
  %v1256 = vadd.f32 %v1122, %v1220
  %v1259 = vlaneseq
  %v1260 = vshrl.u32 %v1259, 7
  %v1261 = vsub.s32 0, %v1260
  %v1262 = vrot.slane %v35, %v1261
  %v1263 = vlaneseq
  %v1264 = vshrl.u32 %v1263, 7
  %v1265 = vsub.s32 1, %v1264
  %v1266 = vrot.slane %v35, %v1265
  %v1267 = vlaneseq
  %v1268 = vshrl.u32 %v1267, 7
  %v1269 = vsub.s32 2, %v1268
  %v1270 = vrot.slane %v35, %v1269
  %v1271 = vlaneseq
  %v1272 = vshrl.u32 %v1271, 7
  %v1273 = vsub.s32 3, %v1272
  %v1274 = vrot.slane %v35, %v1273
  %v1275 = vlaneseq
  %v1276 = vshrl.u32 %v1275, 7
  %v1277 = vsub.s32 4, %v1276
  %v1278 = vrot.slane %v35, %v1277
  %v1279 = vlaneseq
  %v1280 = vshrl.u32 %v1279, 7
  %v1281 = vsub.s32 5, %v1280
  %v1282 = vrot.slane %v35, %v1281
  %v1283 = vlaneseq
  %v1284 = vshrl.u32 %v1283, 7
  %v1285 = vsub.s32 6, %v1284
  %v1286 = vrot.slane %v35, %v1285
  %v1287 = vlaneseq
  %v1288 = vshrl.u32 %v1287, 7
  %v1289 = vsub.s32 7, %v1288
  %v1290 = vrot.slane %v35, %v1289
  %v1291 = vlaneseq
  %v1292 = vshrl.u32 %v1291, 7
  %v1293 = vsub.s32 0, %v1292
  %v1294 = vrot.slane %v36, %v1293
  %v1295 = vlaneseq
  %v1296 = vshrl.u32 %v1295, 7
  %v1297 = vsub.s32 1, %v1296
  %v1298 = vrot.slane %v36, %v1297
  %v1299 = vlaneseq
  %v1300 = vshrl.u32 %v1299, 7
  %v1301 = vsub.s32 2, %v1300
  %v1302 = vrot.slane %v36, %v1301
  %v1303 = vlaneseq
  %v1304 = vshrl.u32 %v1303, 7
  %v1305 = vsub.s32 3, %v1304
  %v1306 = vrot.slane %v36, %v1305
  %v1319 = vmul.f32 %v477, %v1262
  %v1320 = vmul.f32 %v478, %v1266
  %v1321 = vmul.f32 %v479, %v1270
  %v1322 = vmul.f32 %v480, %v1274
  %v1323 = vmul.f32 %v481, %v1278
  %v1324 = vmul.f32 %v482, %v1282
  %v1325 = vmul.f32 %v483, %v1286
  %v1326 = vmul.f32 %v484, %v1290
  %v1327 = vmul.f32 %v485, %v1294
  %v1328 = vmul.f32 %v486, %v1298
  %v1329 = vmul.f32 %v487, %v1302
  %v1330 = vmul.f32 %v488, %v1306
  %v1331 = vmul.f32 %v489, %v1262
  %v1332 = vmul.f32 %v490, %v1266
  %v1333 = vmul.f32 %v491, %v1270
  %v1334 = vmul.f32 %v492, %v1274
  %v1335 = vmul.f32 %v493, %v1278
  %v1336 = vmul.f32 %v494, %v1282
  %v1337 = vmul.f32 %v495, %v1286
  %v1338 = vmul.f32 %v496, %v1290
  %v1339 = vmul.f32 %v497, %v1294
  %v1340 = vmul.f32 %v498, %v1298
  %v1341 = vmul.f32 %v499, %v1302
  %v1342 = vmul.f32 %v500, %v1306
  %v1343 = vadd.f32 %v1233, %v1319
  %v1344 = vadd.f32 %v1234, %v1320
  %v1345 = vadd.f32 %v1235, %v1321
  %v1346 = vadd.f32 %v1236, %v1322
  %v1347 = vadd.f32 %v1237, %v1323
  %v1348 = vadd.f32 %v1238, %v1324
  %v1349 = vadd.f32 %v1239, %v1325
  %v1350 = vadd.f32 %v1240, %v1326
  %v1351 = vadd.f32 %v1241, %v1327
  %v1352 = vadd.f32 %v1242, %v1328
  %v1353 = vadd.f32 %v1243, %v1329
  %v1354 = vadd.f32 %v1244, %v1330
  %v1355 = vadd.f32 %v1245, %v1331
  %v1356 = vadd.f32 %v1246, %v1332
  %v1357 = vadd.f32 %v1247, %v1333
  %v1358 = vadd.f32 %v1248, %v1334
  %v1359 = vadd.f32 %v1249, %v1335
  %v1360 = vadd.f32 %v1250, %v1336
  %v1361 = vadd.f32 %v1251, %v1337
  %v1362 = vadd.f32 %v1252, %v1338
  %v1363 = vadd.f32 %v1253, %v1339
  %v1364 = vadd.f32 %v1254, %v1340
  %v1365 = vadd.f32 %v1255, %v1341
  %v1366 = vadd.f32 %v1256, %v1342
  %v1369 = vlaneseq
  %v1370 = vshrl.u32 %v1369, 7
  %v1371 = vsub.s32 0, %v1370
  %v1372 = vrot.slane %v38, %v1371
  %v1373 = vlaneseq
  %v1374 = vshrl.u32 %v1373, 7
  %v1375 = vsub.s32 1, %v1374
  %v1376 = vrot.slane %v38, %v1375
  %v1377 = vlaneseq
  %v1378 = vshrl.u32 %v1377, 7
  %v1379 = vsub.s32 2, %v1378
  %v1380 = vrot.slane %v38, %v1379
  %v1381 = vlaneseq
  %v1382 = vshrl.u32 %v1381, 7
  %v1383 = vsub.s32 3, %v1382
  %v1384 = vrot.slane %v38, %v1383
  %v1385 = vlaneseq
  %v1386 = vshrl.u32 %v1385, 7
  %v1387 = vsub.s32 4, %v1386
  %v1388 = vrot.slane %v38, %v1387
  %v1389 = vlaneseq
  %v1390 = vshrl.u32 %v1389, 7
  %v1391 = vsub.s32 5, %v1390
  %v1392 = vrot.slane %v38, %v1391
  %v1393 = vlaneseq
  %v1394 = vshrl.u32 %v1393, 7
  %v1395 = vsub.s32 6, %v1394
  %v1396 = vrot.slane %v38, %v1395
  %v1397 = vlaneseq
  %v1398 = vshrl.u32 %v1397, 7
  %v1399 = vsub.s32 7, %v1398
  %v1400 = vrot.slane %v38, %v1399
  %v1401 = vlaneseq
  %v1402 = vshrl.u32 %v1401, 7
  %v1403 = vsub.s32 0, %v1402
  %v1404 = vrot.slane %v39, %v1403
  %v1405 = vlaneseq
  %v1406 = vshrl.u32 %v1405, 7
  %v1407 = vsub.s32 1, %v1406
  %v1408 = vrot.slane %v39, %v1407
  %v1409 = vlaneseq
  %v1410 = vshrl.u32 %v1409, 7
  %v1411 = vsub.s32 2, %v1410
  %v1412 = vrot.slane %v39, %v1411
  %v1413 = vlaneseq
  %v1414 = vshrl.u32 %v1413, 7
  %v1415 = vsub.s32 3, %v1414
  %v1416 = vrot.slane %v39, %v1415
  %v1429 = vmul.f32 %v489, %v1372
  %v1430 = vmul.f32 %v490, %v1376
  %v1431 = vmul.f32 %v491, %v1380
  %v1432 = vmul.f32 %v492, %v1384
  %v1433 = vmul.f32 %v493, %v1388
  %v1434 = vmul.f32 %v494, %v1392
  %v1435 = vmul.f32 %v495, %v1396
  %v1436 = vmul.f32 %v496, %v1400
  %v1437 = vmul.f32 %v497, %v1404
  %v1438 = vmul.f32 %v498, %v1408
  %v1439 = vmul.f32 %v499, %v1412
  %v1440 = vmul.f32 %v500, %v1416
  %v1453 = vrot.slane %v1429, 1
  %v1454 = vrot.slane %v1430, 1
  %v1455 = vrot.slane %v1431, 1
  %v1456 = vrot.slane %v1432, 1
  %v1457 = vrot.slane %v1433, 1
  %v1458 = vrot.slane %v1434, 1
  %v1459 = vrot.slane %v1435, 1
  %v1460 = vrot.slane %v1436, 1
  %v1461 = vrot.slane %v1437, 1
  %v1462 = vrot.slane %v1438, 1
  %v1463 = vrot.slane %v1439, 1
  %v1464 = vrot.slane %v1440, 1
  %v1477 = vadd.f32 %v1343, %v1453
  %v1478 = vadd.f32 %v1344, %v1454
  %v1479 = vadd.f32 %v1345, %v1455
  %v1480 = vadd.f32 %v1346, %v1456
  %v1481 = vadd.f32 %v1347, %v1457
  %v1482 = vadd.f32 %v1348, %v1458
  %v1483 = vadd.f32 %v1349, %v1459
  %v1484 = vadd.f32 %v1350, %v1460
  %v1485 = vadd.f32 %v1351, %v1461
  %v1486 = vadd.f32 %v1352, %v1462
  %v1487 = vadd.f32 %v1353, %v1463
  %v1488 = vadd.f32 %v1354, %v1464
  %v1489 = vadd.f32 %v1355, %v1453
  %v1490 = vadd.f32 %v1356, %v1454
  %v1491 = vadd.f32 %v1357, %v1455
  %v1492 = vadd.f32 %v1358, %v1456
  %v1493 = vadd.f32 %v1359, %v1457
  %v1494 = vadd.f32 %v1360, %v1458
  %v1495 = vadd.f32 %v1361, %v1459
  %v1496 = vadd.f32 %v1362, %v1460
  %v1497 = vadd.f32 %v1363, %v1461
  %v1498 = vadd.f32 %v1364, %v1462
  %v1499 = vadd.f32 %v1365, %v1463
  %v1500 = vadd.f32 %v1366, %v1464
  %v1503 = vlaneseq
  %v1504 = vshrl.u32 %v1503, 7
  %v1505 = vsub.s32 0, %v1504
  %v1506 = vrot.slane %v41, %v1505
  %v1507 = vlaneseq
  %v1508 = vshrl.u32 %v1507, 7
  %v1509 = vsub.s32 1, %v1508
  %v1510 = vrot.slane %v41, %v1509
  %v1511 = vlaneseq
  %v1512 = vshrl.u32 %v1511, 7
  %v1513 = vsub.s32 2, %v1512
  %v1514 = vrot.slane %v41, %v1513
  %v1515 = vlaneseq
  %v1516 = vshrl.u32 %v1515, 7
  %v1517 = vsub.s32 3, %v1516
  %v1518 = vrot.slane %v41, %v1517
  %v1519 = vlaneseq
  %v1520 = vshrl.u32 %v1519, 7
  %v1521 = vsub.s32 4, %v1520
  %v1522 = vrot.slane %v41, %v1521
  %v1523 = vlaneseq
  %v1524 = vshrl.u32 %v1523, 7
  %v1525 = vsub.s32 5, %v1524
  %v1526 = vrot.slane %v41, %v1525
  %v1527 = vlaneseq
  %v1528 = vshrl.u32 %v1527, 7
  %v1529 = vsub.s32 6, %v1528
  %v1530 = vrot.slane %v41, %v1529
  %v1531 = vlaneseq
  %v1532 = vshrl.u32 %v1531, 7
  %v1533 = vsub.s32 7, %v1532
  %v1534 = vrot.slane %v41, %v1533
  %v1535 = vlaneseq
  %v1536 = vshrl.u32 %v1535, 7
  %v1537 = vsub.s32 0, %v1536
  %v1538 = vrot.slane %v42, %v1537
  %v1539 = vlaneseq
  %v1540 = vshrl.u32 %v1539, 7
  %v1541 = vsub.s32 1, %v1540
  %v1542 = vrot.slane %v42, %v1541
  %v1543 = vlaneseq
  %v1544 = vshrl.u32 %v1543, 7
  %v1545 = vsub.s32 2, %v1544
  %v1546 = vrot.slane %v42, %v1545
  %v1547 = vlaneseq
  %v1548 = vshrl.u32 %v1547, 7
  %v1549 = vsub.s32 3, %v1548
  %v1550 = vrot.slane %v42, %v1549
  %v1563 = vmul.f32 %v489, %v1506
  %v1564 = vmul.f32 %v490, %v1510
  %v1565 = vmul.f32 %v491, %v1514
  %v1566 = vmul.f32 %v492, %v1518
  %v1567 = vmul.f32 %v493, %v1522
  %v1568 = vmul.f32 %v494, %v1526
  %v1569 = vmul.f32 %v495, %v1530
  %v1570 = vmul.f32 %v496, %v1534
  %v1571 = vmul.f32 %v497, %v1538
  %v1572 = vmul.f32 %v498, %v1542
  %v1573 = vmul.f32 %v499, %v1546
  %v1574 = vmul.f32 %v500, %v1550
  %v1587 = vrot.slane %v1563, 2
  %v1588 = vrot.slane %v1564, 2
  %v1589 = vrot.slane %v1565, 2
  %v1590 = vrot.slane %v1566, 2
  %v1591 = vrot.slane %v1567, 2
  %v1592 = vrot.slane %v1568, 2
  %v1593 = vrot.slane %v1569, 2
  %v1594 = vrot.slane %v1570, 2
  %v1595 = vrot.slane %v1571, 2
  %v1596 = vrot.slane %v1572, 2
  %v1597 = vrot.slane %v1573, 2
  %v1598 = vrot.slane %v1574, 2
  %v1611 = vadd.f32 %v1477, %v1587
  %v1612 = vadd.f32 %v1478, %v1588
  %v1613 = vadd.f32 %v1479, %v1589
  %v1614 = vadd.f32 %v1480, %v1590
  %v1615 = vadd.f32 %v1481, %v1591
  %v1616 = vadd.f32 %v1482, %v1592
  %v1617 = vadd.f32 %v1483, %v1593
  %v1618 = vadd.f32 %v1484, %v1594
  %v1619 = vadd.f32 %v1485, %v1595
  %v1620 = vadd.f32 %v1486, %v1596
  %v1621 = vadd.f32 %v1487, %v1597
  %v1622 = vadd.f32 %v1488, %v1598
  %v1623 = vadd.f32 %v1489, %v1587
  %v1624 = vadd.f32 %v1490, %v1588
  %v1625 = vadd.f32 %v1491, %v1589
  %v1626 = vadd.f32 %v1492, %v1590
  %v1627 = vadd.f32 %v1493, %v1591
  %v1628 = vadd.f32 %v1494, %v1592
  %v1629 = vadd.f32 %v1495, %v1593
  %v1630 = vadd.f32 %v1496, %v1594
  %v1631 = vadd.f32 %v1497, %v1595
  %v1632 = vadd.f32 %v1498, %v1596
  %v1633 = vadd.f32 %v1499, %v1597
  %v1634 = vadd.f32 %v1500, %v1598
  %v1635 = vadd.f32 %v1611, 0.0
  %v1636 = vadd.f32 %v1612, 0.0
  %v1637 = vadd.f32 %v1613, 0.0
  %v1638 = vadd.f32 %v1614, 0.0
  %v1639 = vadd.f32 %v1615, 0.0
  %v1640 = vadd.f32 %v1616, 0.0
  %v1641 = vadd.f32 %v1617, 0.0
  %v1642 = vadd.f32 %v1618, 0.0
  %v1643 = vadd.f32 %v1619, 0.0
  %v1644 = vadd.f32 %v1620, 0.0
  %v1645 = vadd.f32 %v1621, 0.0
  %v1646 = vadd.f32 %v1622, 0.0
  %v1647 = vadd.f32 %v1623, 0.0
  %v1648 = vadd.f32 %v1624, 0.0
  %v1649 = vadd.f32 %v1625, 0.0
  %v1650 = vadd.f32 %v1626, 0.0
  %v1651 = vadd.f32 %v1627, 0.0
  %v1652 = vadd.f32 %v1628, 0.0
  %v1653 = vadd.f32 %v1629, 0.0
  %v1654 = vadd.f32 %v1630, 0.0
  %v1655 = vadd.f32 %v1631, 0.0
  %v1656 = vadd.f32 %v1632, 0.0
  %v1657 = vadd.f32 %v1633, 0.0
  %v1658 = vadd.f32 %v1634, 0.0
  %v1659 = vmul.f32 %v1611, %v1611
  %v1660 = vmul.f32 %v1612, %v1612
  %v1661 = vmul.f32 %v1613, %v1613
  %v1662 = vmul.f32 %v1614, %v1614
  %v1663 = vmul.f32 %v1615, %v1615
  %v1664 = vmul.f32 %v1616, %v1616
  %v1665 = vmul.f32 %v1617, %v1617
  %v1666 = vmul.f32 %v1618, %v1618
  %v1667 = vmul.f32 %v1619, %v1619
  %v1668 = vmul.f32 %v1620, %v1620
  %v1669 = vmul.f32 %v1621, %v1621
  %v1670 = vmul.f32 %v1622, %v1622
  %v1671 = vmul.f32 %v1623, %v1623
  %v1672 = vmul.f32 %v1624, %v1624
  %v1673 = vmul.f32 %v1625, %v1625
  %v1674 = vmul.f32 %v1626, %v1626
  %v1675 = vmul.f32 %v1627, %v1627
  %v1676 = vmul.f32 %v1628, %v1628
  %v1677 = vmul.f32 %v1629, %v1629
  %v1678 = vmul.f32 %v1630, %v1630
  %v1679 = vmul.f32 %v1631, %v1631
  %v1680 = vmul.f32 %v1632, %v1632
  %v1681 = vmul.f32 %v1633, %v1633
  %v1682 = vmul.f32 %v1634, %v1634
  %v1683 = vadd.f32 %v1659, 0.0
  %v1684 = vadd.f32 %v1660, 0.0
  %v1685 = vadd.f32 %v1661, 0.0
  %v1686 = vadd.f32 %v1662, 0.0
  %v1687 = vadd.f32 %v1663, 0.0
  %v1688 = vadd.f32 %v1664, 0.0
  %v1689 = vadd.f32 %v1665, 0.0
  %v1690 = vadd.f32 %v1666, 0.0
  %v1691 = vadd.f32 %v1667, 0.0
  %v1692 = vadd.f32 %v1668, 0.0
  %v1693 = vadd.f32 %v1669, 0.0
  %v1694 = vadd.f32 %v1670, 0.0
  %v1695 = vadd.f32 %v1671, 0.0
  %v1696 = vadd.f32 %v1672, 0.0
  %v1697 = vadd.f32 %v1673, 0.0
  %v1698 = vadd.f32 %v1674, 0.0
  %v1699 = vadd.f32 %v1675, 0.0
  %v1700 = vadd.f32 %v1676, 0.0
  %v1701 = vadd.f32 %v1677, 0.0
  %v1702 = vadd.f32 %v1678, 0.0
  %v1703 = vadd.f32 %v1679, 0.0
  %v1704 = vadd.f32 %v1680, 0.0
  %v1705 = vadd.f32 %v1681, 0.0
  %v1706 = vadd.f32 %v1682, 0.0
  %vm1731 = vcmask 1040384
  %v1732 = vrot.slane %v1611, 7
  %v1733 = vrot.slane %v1623, 7
  %v1734 = vsel %vm1731, %v1732, %v1733
  %v1735 = vrot.slane %v1612, 7
  %v1736 = vrot.slane %v1624, 7
  %v1737 = vsel %vm1731, %v1735, %v1736
  %v1738 = vrot.slane %v1613, 7
  %v1739 = vrot.slane %v1625, 7
  %v1740 = vsel %vm1731, %v1738, %v1739
  %v1741 = vrot.slane %v1614, 7
  %v1742 = vrot.slane %v1626, 7
  %v1743 = vsel %vm1731, %v1741, %v1742
  %v1744 = vrot.slane %v1615, 7
  %v1745 = vrot.slane %v1627, 7
  %v1746 = vsel %vm1731, %v1744, %v1745
  %v1747 = vrot.slane %v1616, 7
  %v1748 = vrot.slane %v1628, 7
  %v1749 = vsel %vm1731, %v1747, %v1748
  %v1750 = vrot.slane %v1617, 7
  %v1751 = vrot.slane %v1629, 7
  %v1752 = vsel %vm1731, %v1750, %v1751
  %v1753 = vrot.slane %v1618, 7
  %v1754 = vrot.slane %v1630, 7
  %v1755 = vsel %vm1731, %v1753, %v1754
  %v1756 = vrot.slane %v1619, 7
  %v1757 = vrot.slane %v1631, 7
  %v1758 = vsel %vm1731, %v1756, %v1757
  %v1759 = vrot.slane %v1620, 7
  %v1760 = vrot.slane %v1632, 7
  %v1761 = vsel %vm1731, %v1759, %v1760
  %v1762 = vrot.slane %v1621, 7
  %v1763 = vrot.slane %v1633, 7
  %v1764 = vsel %vm1731, %v1762, %v1763
  %v1765 = vrot.slane %v1622, 7
  %v1766 = vrot.slane %v1634, 7
  %v1767 = vsel %vm1731, %v1765, %v1766
  %1780 = vst [vmem:[%s4] sm:$0x7f] %v1734
  %1781 = vst [vmem:[%s4 + $0x8] sm:$0x7f] %v1737
  %1782 = vst [vmem:[%s4 + $0x10] sm:$0x7f] %v1740
  %1783 = vst [vmem:[%s4 + $0x18] sm:$0x7f] %v1743
  %1784 = vst [vmem:[%s4 + $0x20] sm:$0x7f] %v1746
  %1785 = vst [vmem:[%s4 + $0x28] sm:$0x7f] %v1749
  %1786 = vst [vmem:[%s4 + $0x30] sm:$0x7f] %v1752
  %1787 = vst [vmem:[%s4 + $0x38] sm:$0x7f] %v1755
  %1788 = vst [vmem:[%s4 + $0x40] sm:$0x7f] %v1758
  %1789 = vst [vmem:[%s4 + $0x48] sm:$0x7f] %v1761
  %1790 = vst [vmem:[%s4 + $0x50] sm:$0x7f] %v1764
  %1791 = vst [vmem:[%s4 + $0x58] sm:$0x7f] %v1767
  %v1792 = vld [vmem:[%s343] sm:$0xff]
  %v1793 = vld [vmem:[%s343 + $0x8] sm:$0xff]
  %v1794 = vld [vmem:[%s343 + $0x10] sm:$0xff]
  %v1795 = vld [vmem:[%s343 + $0x18] sm:$0xff]
  %v1796 = vld [vmem:[%s343 + $0x20] sm:$0xff]
  %v1797 = vld [vmem:[%s343 + $0x28] sm:$0xff]
  %v1798 = vld [vmem:[%s343 + $0x30] sm:$0xff]
  %v1799 = vld [vmem:[%s343 + $0x38] sm:$0xff]
  %v1800 = vld [vmem:[%s343 + $0x40] sm:$0xff]
  %v1801 = vld [vmem:[%s343 + $0x48] sm:$0xff]
  %v1802 = vld [vmem:[%s343 + $0x50] sm:$0xff]
  %v1803 = vld [vmem:[%s343 + $0x58] sm:$0xff]
  %v1804 = vld [vmem:[%s343 + $0x60] sm:$0xff]
  %v1805 = vld [vmem:[%s343 + $0x68] sm:$0xff]
  %v1806 = vld [vmem:[%s343 + $0x70] sm:$0xff]
  %v1807 = vld [vmem:[%s343 + $0x78] sm:$0xff]
  %v1808 = vld [vmem:[%s343 + $0x80] sm:$0xff]
  %v1809 = vld [vmem:[%s343 + $0x88] sm:$0xff]
  %v1810 = vld [vmem:[%s343 + $0x90] sm:$0xff]
  %v1811 = vld [vmem:[%s343 + $0x98] sm:$0xff]
  %v1812 = vld [vmem:[%s343 + $0xa0] sm:$0xff]
  %v1813 = vld [vmem:[%s343 + $0xa8] sm:$0xff]
  %v1814 = vld [vmem:[%s343 + $0xb0] sm:$0xff]
  %v1815 = vld [vmem:[%s343 + $0xb8] sm:$0xff]
  %v1816 = vld [vmem:[%s476] sm:$0xff]
  %v1817 = vld [vmem:[%s476 + $0x8] sm:$0xff]
  %v1818 = vld [vmem:[%s476 + $0x10] sm:$0xff]
  %v1819 = vld [vmem:[%s476 + $0x18] sm:$0xff]
  %v1820 = vld [vmem:[%s476 + $0x20] sm:$0xff]
  %v1821 = vld [vmem:[%s476 + $0x28] sm:$0xff]
  %v1822 = vld [vmem:[%s476 + $0x30] sm:$0xff]
  %v1823 = vld [vmem:[%s476 + $0x38] sm:$0xff]
  %v1824 = vld [vmem:[%s476 + $0x40] sm:$0xff]
  %v1825 = vld [vmem:[%s476 + $0x48] sm:$0xff]
  %v1826 = vld [vmem:[%s476 + $0x50] sm:$0xff]
  %v1827 = vld [vmem:[%s476 + $0x58] sm:$0xff]
  %v1828 = vld [vmem:[%s476 + $0x60] sm:$0xff]
  %v1829 = vld [vmem:[%s476 + $0x68] sm:$0xff]
  %v1830 = vld [vmem:[%s476 + $0x70] sm:$0xff]
  %v1831 = vld [vmem:[%s476 + $0x78] sm:$0xff]
  %v1832 = vld [vmem:[%s476 + $0x80] sm:$0xff]
  %v1833 = vld [vmem:[%s476 + $0x88] sm:$0xff]
  %v1834 = vld [vmem:[%s476 + $0x90] sm:$0xff]
  %v1835 = vld [vmem:[%s476 + $0x98] sm:$0xff]
  %v1836 = vld [vmem:[%s476 + $0xa0] sm:$0xff]
  %v1837 = vld [vmem:[%s476 + $0xa8] sm:$0xff]
  %v1838 = vld [vmem:[%s476 + $0xb0] sm:$0xff]
  %v1839 = vld [vmem:[%s476 + $0xb8] sm:$0xff]
  %s1840 = scalar_lea.vmem [#allocation2], 576
  %v1841 = vld [vmem:[%s1840] sm:$0xff]
  %v1842 = vld [vmem:[%s1840 + $0x8] sm:$0xff]
  %v1843 = vld [vmem:[%s1840 + $0x10] sm:$0xff]
  %v1844 = vld [vmem:[%s1840 + $0x18] sm:$0xff]
  %v1845 = vld [vmem:[%s1840 + $0x20] sm:$0xff]
  %v1846 = vld [vmem:[%s1840 + $0x28] sm:$0xff]
  %v1847 = vld [vmem:[%s1840 + $0x30] sm:$0xff]
  %v1848 = vld [vmem:[%s1840 + $0x38] sm:$0xff]
  %v1849 = vld [vmem:[%s1840 + $0x40] sm:$0xff]
  %v1850 = vld [vmem:[%s1840 + $0x48] sm:$0xff]
  %v1851 = vld [vmem:[%s1840 + $0x50] sm:$0xff]
  %v1852 = vld [vmem:[%s1840 + $0x58] sm:$0xff]
  %v1853 = vld [vmem:[%s1840 + $0x60] sm:$0xff]
  %v1854 = vld [vmem:[%s1840 + $0x68] sm:$0xff]
  %v1855 = vld [vmem:[%s1840 + $0x70] sm:$0xff]
  %v1856 = vld [vmem:[%s1840 + $0x78] sm:$0xff]
  %v1857 = vld [vmem:[%s1840 + $0x80] sm:$0xff]
  %v1858 = vld [vmem:[%s1840 + $0x88] sm:$0xff]
  %v1859 = vld [vmem:[%s1840 + $0x90] sm:$0xff]
  %v1860 = vld [vmem:[%s1840 + $0x98] sm:$0xff]
  %v1861 = vld [vmem:[%s1840 + $0xa0] sm:$0xff]
  %v1862 = vld [vmem:[%s1840 + $0xa8] sm:$0xff]
  %v1863 = vld [vmem:[%s1840 + $0xb0] sm:$0xff]
  %v1864 = vld [vmem:[%s1840 + $0xb8] sm:$0xff]
  %v1865 = vmul.f32 %v1792, %v506
  %v1866 = vmul.f32 %v1793, %v510
  %v1867 = vmul.f32 %v1794, %v514
  %v1868 = vmul.f32 %v1795, %v518
  %v1869 = vmul.f32 %v1796, %v522
  %v1870 = vmul.f32 %v1797, %v526
  %v1871 = vmul.f32 %v1798, %v530
  %v1872 = vmul.f32 %v1799, %v534
  %v1873 = vmul.f32 %v1800, %v538
  %v1874 = vmul.f32 %v1801, %v542
  %v1875 = vmul.f32 %v1802, %v546
  %v1876 = vmul.f32 %v1803, %v550
  %v1877 = vmul.f32 %v1804, %v506
  %v1878 = vmul.f32 %v1805, %v510
  %v1879 = vmul.f32 %v1806, %v514
  %v1880 = vmul.f32 %v1807, %v518
  %v1881 = vmul.f32 %v1808, %v522
  %v1882 = vmul.f32 %v1809, %v526
  %v1883 = vmul.f32 %v1810, %v530
  %v1884 = vmul.f32 %v1811, %v534
  %v1885 = vmul.f32 %v1812, %v538
  %v1886 = vmul.f32 %v1813, %v542
  %v1887 = vmul.f32 %v1814, %v546
  %v1888 = vmul.f32 %v1815, %v550
  %v1889 = vadd.f32 %v1865, 0.0
  %v1890 = vadd.f32 %v1866, 0.0
  %v1891 = vadd.f32 %v1867, 0.0
  %v1892 = vadd.f32 %v1868, 0.0
  %v1893 = vadd.f32 %v1869, 0.0
  %v1894 = vadd.f32 %v1870, 0.0
  %v1895 = vadd.f32 %v1871, 0.0
  %v1896 = vadd.f32 %v1872, 0.0
  %v1897 = vadd.f32 %v1873, 0.0
  %v1898 = vadd.f32 %v1874, 0.0
  %v1899 = vadd.f32 %v1875, 0.0
  %v1900 = vadd.f32 %v1876, 0.0
  %v1901 = vadd.f32 %v1877, 0.0
  %v1902 = vadd.f32 %v1878, 0.0
  %v1903 = vadd.f32 %v1879, 0.0
  %v1904 = vadd.f32 %v1880, 0.0
  %v1905 = vadd.f32 %v1881, 0.0
  %v1906 = vadd.f32 %v1882, 0.0
  %v1907 = vadd.f32 %v1883, 0.0
  %v1908 = vadd.f32 %v1884, 0.0
  %v1909 = vadd.f32 %v1885, 0.0
  %v1910 = vadd.f32 %v1886, 0.0
  %v1911 = vadd.f32 %v1887, 0.0
  %v1912 = vadd.f32 %v1888, 0.0
  %v1913 = vmul.f32 %v1804, %v616
  %v1914 = vmul.f32 %v1805, %v620
  %v1915 = vmul.f32 %v1806, %v624
  %v1916 = vmul.f32 %v1807, %v628
  %v1917 = vmul.f32 %v1808, %v632
  %v1918 = vmul.f32 %v1809, %v636
  %v1919 = vmul.f32 %v1810, %v640
  %v1920 = vmul.f32 %v1811, %v644
  %v1921 = vmul.f32 %v1812, %v648
  %v1922 = vmul.f32 %v1813, %v652
  %v1923 = vmul.f32 %v1814, %v656
  %v1924 = vmul.f32 %v1815, %v660
  %v1937 = vrot.slane %v1913, 1
  %v1938 = vrot.slane %v1914, 1
  %v1939 = vrot.slane %v1915, 1
  %v1940 = vrot.slane %v1916, 1
  %v1941 = vrot.slane %v1917, 1
  %v1942 = vrot.slane %v1918, 1
  %v1943 = vrot.slane %v1919, 1
  %v1944 = vrot.slane %v1920, 1
  %v1945 = vrot.slane %v1921, 1
  %v1946 = vrot.slane %v1922, 1
  %v1947 = vrot.slane %v1923, 1
  %v1948 = vrot.slane %v1924, 1
  %v1961 = vadd.f32 %v1889, %v1937
  %v1962 = vadd.f32 %v1890, %v1938
  %v1963 = vadd.f32 %v1891, %v1939
  %v1964 = vadd.f32 %v1892, %v1940
  %v1965 = vadd.f32 %v1893, %v1941
  %v1966 = vadd.f32 %v1894, %v1942
  %v1967 = vadd.f32 %v1895, %v1943
  %v1968 = vadd.f32 %v1896, %v1944
  %v1969 = vadd.f32 %v1897, %v1945
  %v1970 = vadd.f32 %v1898, %v1946
  %v1971 = vadd.f32 %v1899, %v1947
  %v1972 = vadd.f32 %v1900, %v1948
  %v1973 = vadd.f32 %v1901, %v1937
  %v1974 = vadd.f32 %v1902, %v1938
  %v1975 = vadd.f32 %v1903, %v1939
  %v1976 = vadd.f32 %v1904, %v1940
  %v1977 = vadd.f32 %v1905, %v1941
  %v1978 = vadd.f32 %v1906, %v1942
  %v1979 = vadd.f32 %v1907, %v1943
  %v1980 = vadd.f32 %v1908, %v1944
  %v1981 = vadd.f32 %v1909, %v1945
  %v1982 = vadd.f32 %v1910, %v1946
  %v1983 = vadd.f32 %v1911, %v1947
  %v1984 = vadd.f32 %v1912, %v1948
  %v1985 = vmul.f32 %v1804, %v750
  %v1986 = vmul.f32 %v1805, %v754
  %v1987 = vmul.f32 %v1806, %v758
  %v1988 = vmul.f32 %v1807, %v762
  %v1989 = vmul.f32 %v1808, %v766
  %v1990 = vmul.f32 %v1809, %v770
  %v1991 = vmul.f32 %v1810, %v774
  %v1992 = vmul.f32 %v1811, %v778
  %v1993 = vmul.f32 %v1812, %v782
  %v1994 = vmul.f32 %v1813, %v786
  %v1995 = vmul.f32 %v1814, %v790
  %v1996 = vmul.f32 %v1815, %v794
  %v2009 = vrot.slane %v1985, 2
  %v2010 = vrot.slane %v1986, 2
  %v2011 = vrot.slane %v1987, 2
  %v2012 = vrot.slane %v1988, 2
  %v2013 = vrot.slane %v1989, 2
  %v2014 = vrot.slane %v1990, 2
  %v2015 = vrot.slane %v1991, 2
  %v2016 = vrot.slane %v1992, 2
  %v2017 = vrot.slane %v1993, 2
  %v2018 = vrot.slane %v1994, 2
  %v2019 = vrot.slane %v1995, 2
  %v2020 = vrot.slane %v1996, 2
  %v2033 = vadd.f32 %v1961, %v2009
  %v2034 = vadd.f32 %v1962, %v2010
  %v2035 = vadd.f32 %v1963, %v2011
  %v2036 = vadd.f32 %v1964, %v2012
  %v2037 = vadd.f32 %v1965, %v2013
  %v2038 = vadd.f32 %v1966, %v2014
  %v2039 = vadd.f32 %v1967, %v2015
  %v2040 = vadd.f32 %v1968, %v2016
  %v2041 = vadd.f32 %v1969, %v2017
  %v2042 = vadd.f32 %v1970, %v2018
  %v2043 = vadd.f32 %v1971, %v2019
  %v2044 = vadd.f32 %v1972, %v2020
  %v2045 = vadd.f32 %v1973, %v2009
  %v2046 = vadd.f32 %v1974, %v2010
  %v2047 = vadd.f32 %v1975, %v2011
  %v2048 = vadd.f32 %v1976, %v2012
  %v2049 = vadd.f32 %v1977, %v2013
  %v2050 = vadd.f32 %v1978, %v2014
  %v2051 = vadd.f32 %v1979, %v2015
  %v2052 = vadd.f32 %v1980, %v2016
  %v2053 = vadd.f32 %v1981, %v2017
  %v2054 = vadd.f32 %v1982, %v2018
  %v2055 = vadd.f32 %v1983, %v2019
  %v2056 = vadd.f32 %v1984, %v2020
  %v2057 = vmul.f32 %v1816, %v884
  %v2058 = vmul.f32 %v1817, %v888
  %v2059 = vmul.f32 %v1818, %v892
  %v2060 = vmul.f32 %v1819, %v896
  %v2061 = vmul.f32 %v1820, %v900
  %v2062 = vmul.f32 %v1821, %v904
  %v2063 = vmul.f32 %v1822, %v908
  %v2064 = vmul.f32 %v1823, %v912
  %v2065 = vmul.f32 %v1824, %v916
  %v2066 = vmul.f32 %v1825, %v920
  %v2067 = vmul.f32 %v1826, %v924
  %v2068 = vmul.f32 %v1827, %v928
  %v2069 = vmul.f32 %v1828, %v884
  %v2070 = vmul.f32 %v1829, %v888
  %v2071 = vmul.f32 %v1830, %v892
  %v2072 = vmul.f32 %v1831, %v896
  %v2073 = vmul.f32 %v1832, %v900
  %v2074 = vmul.f32 %v1833, %v904
  %v2075 = vmul.f32 %v1834, %v908
  %v2076 = vmul.f32 %v1835, %v912
  %v2077 = vmul.f32 %v1836, %v916
  %v2078 = vmul.f32 %v1837, %v920
  %v2079 = vmul.f32 %v1838, %v924
  %v2080 = vmul.f32 %v1839, %v928
  %v2081 = vadd.f32 %v2033, %v2057
  %v2082 = vadd.f32 %v2034, %v2058
  %v2083 = vadd.f32 %v2035, %v2059
  %v2084 = vadd.f32 %v2036, %v2060
  %v2085 = vadd.f32 %v2037, %v2061
  %v2086 = vadd.f32 %v2038, %v2062
  %v2087 = vadd.f32 %v2039, %v2063
  %v2088 = vadd.f32 %v2040, %v2064
  %v2089 = vadd.f32 %v2041, %v2065
  %v2090 = vadd.f32 %v2042, %v2066
  %v2091 = vadd.f32 %v2043, %v2067
  %v2092 = vadd.f32 %v2044, %v2068
  %v2093 = vadd.f32 %v2045, %v2069
  %v2094 = vadd.f32 %v2046, %v2070
  %v2095 = vadd.f32 %v2047, %v2071
  %v2096 = vadd.f32 %v2048, %v2072
  %v2097 = vadd.f32 %v2049, %v2073
  %v2098 = vadd.f32 %v2050, %v2074
  %v2099 = vadd.f32 %v2051, %v2075
  %v2100 = vadd.f32 %v2052, %v2076
  %v2101 = vadd.f32 %v2053, %v2077
  %v2102 = vadd.f32 %v2054, %v2078
  %v2103 = vadd.f32 %v2055, %v2079
  %v2104 = vadd.f32 %v2056, %v2080
  %v2105 = vmul.f32 %v1828, %v994
  %v2106 = vmul.f32 %v1829, %v998
  %v2107 = vmul.f32 %v1830, %v1002
  %v2108 = vmul.f32 %v1831, %v1006
  %v2109 = vmul.f32 %v1832, %v1010
  %v2110 = vmul.f32 %v1833, %v1014
  %v2111 = vmul.f32 %v1834, %v1018
  %v2112 = vmul.f32 %v1835, %v1022
  %v2113 = vmul.f32 %v1836, %v1026
  %v2114 = vmul.f32 %v1837, %v1030
  %v2115 = vmul.f32 %v1838, %v1034
  %v2116 = vmul.f32 %v1839, %v1038
  %v2129 = vrot.slane %v2105, 1
  %v2130 = vrot.slane %v2106, 1
  %v2131 = vrot.slane %v2107, 1
  %v2132 = vrot.slane %v2108, 1
  %v2133 = vrot.slane %v2109, 1
  %v2134 = vrot.slane %v2110, 1
  %v2135 = vrot.slane %v2111, 1
  %v2136 = vrot.slane %v2112, 1
  %v2137 = vrot.slane %v2113, 1
  %v2138 = vrot.slane %v2114, 1
  %v2139 = vrot.slane %v2115, 1
  %v2140 = vrot.slane %v2116, 1
  %v2153 = vadd.f32 %v2081, %v2129
  %v2154 = vadd.f32 %v2082, %v2130
  %v2155 = vadd.f32 %v2083, %v2131
  %v2156 = vadd.f32 %v2084, %v2132
  %v2157 = vadd.f32 %v2085, %v2133
  %v2158 = vadd.f32 %v2086, %v2134
  %v2159 = vadd.f32 %v2087, %v2135
  %v2160 = vadd.f32 %v2088, %v2136
  %v2161 = vadd.f32 %v2089, %v2137
  %v2162 = vadd.f32 %v2090, %v2138
  %v2163 = vadd.f32 %v2091, %v2139
  %v2164 = vadd.f32 %v2092, %v2140
  %v2165 = vadd.f32 %v2093, %v2129
  %v2166 = vadd.f32 %v2094, %v2130
  %v2167 = vadd.f32 %v2095, %v2131
  %v2168 = vadd.f32 %v2096, %v2132
  %v2169 = vadd.f32 %v2097, %v2133
  %v2170 = vadd.f32 %v2098, %v2134
  %v2171 = vadd.f32 %v2099, %v2135
  %v2172 = vadd.f32 %v2100, %v2136
  %v2173 = vadd.f32 %v2101, %v2137
  %v2174 = vadd.f32 %v2102, %v2138
  %v2175 = vadd.f32 %v2103, %v2139
  %v2176 = vadd.f32 %v2104, %v2140
  %v2177 = vmul.f32 %v1828, %v1128
  %v2178 = vmul.f32 %v1829, %v1132
  %v2179 = vmul.f32 %v1830, %v1136
  %v2180 = vmul.f32 %v1831, %v1140
  %v2181 = vmul.f32 %v1832, %v1144
  %v2182 = vmul.f32 %v1833, %v1148
  %v2183 = vmul.f32 %v1834, %v1152
  %v2184 = vmul.f32 %v1835, %v1156
  %v2185 = vmul.f32 %v1836, %v1160
  %v2186 = vmul.f32 %v1837, %v1164
  %v2187 = vmul.f32 %v1838, %v1168
  %v2188 = vmul.f32 %v1839, %v1172
  %v2201 = vrot.slane %v2177, 2
  %v2202 = vrot.slane %v2178, 2
  %v2203 = vrot.slane %v2179, 2
  %v2204 = vrot.slane %v2180, 2
  %v2205 = vrot.slane %v2181, 2
  %v2206 = vrot.slane %v2182, 2
  %v2207 = vrot.slane %v2183, 2
  %v2208 = vrot.slane %v2184, 2
  %v2209 = vrot.slane %v2185, 2
  %v2210 = vrot.slane %v2186, 2
  %v2211 = vrot.slane %v2187, 2
  %v2212 = vrot.slane %v2188, 2
  %v2225 = vadd.f32 %v2153, %v2201
  %v2226 = vadd.f32 %v2154, %v2202
  %v2227 = vadd.f32 %v2155, %v2203
  %v2228 = vadd.f32 %v2156, %v2204
  %v2229 = vadd.f32 %v2157, %v2205
  %v2230 = vadd.f32 %v2158, %v2206
  %v2231 = vadd.f32 %v2159, %v2207
  %v2232 = vadd.f32 %v2160, %v2208
  %v2233 = vadd.f32 %v2161, %v2209
  %v2234 = vadd.f32 %v2162, %v2210
  %v2235 = vadd.f32 %v2163, %v2211
  %v2236 = vadd.f32 %v2164, %v2212
  %v2237 = vadd.f32 %v2165, %v2201
  %v2238 = vadd.f32 %v2166, %v2202
  %v2239 = vadd.f32 %v2167, %v2203
  %v2240 = vadd.f32 %v2168, %v2204
  %v2241 = vadd.f32 %v2169, %v2205
  %v2242 = vadd.f32 %v2170, %v2206
  %v2243 = vadd.f32 %v2171, %v2207
  %v2244 = vadd.f32 %v2172, %v2208
  %v2245 = vadd.f32 %v2173, %v2209
  %v2246 = vadd.f32 %v2174, %v2210
  %v2247 = vadd.f32 %v2175, %v2211
  %v2248 = vadd.f32 %v2176, %v2212
  %v2249 = vmul.f32 %v1841, %v1262
  %v2250 = vmul.f32 %v1842, %v1266
  %v2251 = vmul.f32 %v1843, %v1270
  %v2252 = vmul.f32 %v1844, %v1274
  %v2253 = vmul.f32 %v1845, %v1278
  %v2254 = vmul.f32 %v1846, %v1282
  %v2255 = vmul.f32 %v1847, %v1286
  %v2256 = vmul.f32 %v1848, %v1290
  %v2257 = vmul.f32 %v1849, %v1294
  %v2258 = vmul.f32 %v1850, %v1298
  %v2259 = vmul.f32 %v1851, %v1302
  %v2260 = vmul.f32 %v1852, %v1306
  %v2261 = vmul.f32 %v1853, %v1262
  %v2262 = vmul.f32 %v1854, %v1266
  %v2263 = vmul.f32 %v1855, %v1270
  %v2264 = vmul.f32 %v1856, %v1274
  %v2265 = vmul.f32 %v1857, %v1278
  %v2266 = vmul.f32 %v1858, %v1282
  %v2267 = vmul.f32 %v1859, %v1286
  %v2268 = vmul.f32 %v1860, %v1290
  %v2269 = vmul.f32 %v1861, %v1294
  %v2270 = vmul.f32 %v1862, %v1298
  %v2271 = vmul.f32 %v1863, %v1302
  %v2272 = vmul.f32 %v1864, %v1306
  %v2273 = vadd.f32 %v2225, %v2249
  %v2274 = vadd.f32 %v2226, %v2250
  %v2275 = vadd.f32 %v2227, %v2251
  %v2276 = vadd.f32 %v2228, %v2252
  %v2277 = vadd.f32 %v2229, %v2253
  %v2278 = vadd.f32 %v2230, %v2254
  %v2279 = vadd.f32 %v2231, %v2255
  %v2280 = vadd.f32 %v2232, %v2256
  %v2281 = vadd.f32 %v2233, %v2257
  %v2282 = vadd.f32 %v2234, %v2258
  %v2283 = vadd.f32 %v2235, %v2259
  %v2284 = vadd.f32 %v2236, %v2260
  %v2285 = vadd.f32 %v2237, %v2261
  %v2286 = vadd.f32 %v2238, %v2262
  %v2287 = vadd.f32 %v2239, %v2263
  %v2288 = vadd.f32 %v2240, %v2264
  %v2289 = vadd.f32 %v2241, %v2265
  %v2290 = vadd.f32 %v2242, %v2266
  %v2291 = vadd.f32 %v2243, %v2267
  %v2292 = vadd.f32 %v2244, %v2268
  %v2293 = vadd.f32 %v2245, %v2269
  %v2294 = vadd.f32 %v2246, %v2270
  %v2295 = vadd.f32 %v2247, %v2271
  %v2296 = vadd.f32 %v2248, %v2272
  %v2297 = vmul.f32 %v1853, %v1372
  %v2298 = vmul.f32 %v1854, %v1376
  %v2299 = vmul.f32 %v1855, %v1380
  %v2300 = vmul.f32 %v1856, %v1384
  %v2301 = vmul.f32 %v1857, %v1388
  %v2302 = vmul.f32 %v1858, %v1392
  %v2303 = vmul.f32 %v1859, %v1396
  %v2304 = vmul.f32 %v1860, %v1400
  %v2305 = vmul.f32 %v1861, %v1404
  %v2306 = vmul.f32 %v1862, %v1408
  %v2307 = vmul.f32 %v1863, %v1412
  %v2308 = vmul.f32 %v1864, %v1416
  %v2321 = vrot.slane %v2297, 1
  %v2322 = vrot.slane %v2298, 1
  %v2323 = vrot.slane %v2299, 1
  %v2324 = vrot.slane %v2300, 1
  %v2325 = vrot.slane %v2301, 1
  %v2326 = vrot.slane %v2302, 1
  %v2327 = vrot.slane %v2303, 1
  %v2328 = vrot.slane %v2304, 1
  %v2329 = vrot.slane %v2305, 1
  %v2330 = vrot.slane %v2306, 1
  %v2331 = vrot.slane %v2307, 1
  %v2332 = vrot.slane %v2308, 1
  %v2345 = vadd.f32 %v2273, %v2321
  %v2346 = vadd.f32 %v2274, %v2322
  %v2347 = vadd.f32 %v2275, %v2323
  %v2348 = vadd.f32 %v2276, %v2324
  %v2349 = vadd.f32 %v2277, %v2325
  %v2350 = vadd.f32 %v2278, %v2326
  %v2351 = vadd.f32 %v2279, %v2327
  %v2352 = vadd.f32 %v2280, %v2328
  %v2353 = vadd.f32 %v2281, %v2329
  %v2354 = vadd.f32 %v2282, %v2330
  %v2355 = vadd.f32 %v2283, %v2331
  %v2356 = vadd.f32 %v2284, %v2332
  %v2357 = vadd.f32 %v2285, %v2321
  %v2358 = vadd.f32 %v2286, %v2322
  %v2359 = vadd.f32 %v2287, %v2323
  %v2360 = vadd.f32 %v2288, %v2324
  %v2361 = vadd.f32 %v2289, %v2325
  %v2362 = vadd.f32 %v2290, %v2326
  %v2363 = vadd.f32 %v2291, %v2327
  %v2364 = vadd.f32 %v2292, %v2328
  %v2365 = vadd.f32 %v2293, %v2329
  %v2366 = vadd.f32 %v2294, %v2330
  %v2367 = vadd.f32 %v2295, %v2331
  %v2368 = vadd.f32 %v2296, %v2332
  %v2369 = vmul.f32 %v1853, %v1506
  %v2370 = vmul.f32 %v1854, %v1510
  %v2371 = vmul.f32 %v1855, %v1514
  %v2372 = vmul.f32 %v1856, %v1518
  %v2373 = vmul.f32 %v1857, %v1522
  %v2374 = vmul.f32 %v1858, %v1526
  %v2375 = vmul.f32 %v1859, %v1530
  %v2376 = vmul.f32 %v1860, %v1534
  %v2377 = vmul.f32 %v1861, %v1538
  %v2378 = vmul.f32 %v1862, %v1542
  %v2379 = vmul.f32 %v1863, %v1546
  %v2380 = vmul.f32 %v1864, %v1550
  %v2393 = vrot.slane %v2369, 2
  %v2394 = vrot.slane %v2370, 2
  %v2395 = vrot.slane %v2371, 2
  %v2396 = vrot.slane %v2372, 2
  %v2397 = vrot.slane %v2373, 2
  %v2398 = vrot.slane %v2374, 2
  %v2399 = vrot.slane %v2375, 2
  %v2400 = vrot.slane %v2376, 2
  %v2401 = vrot.slane %v2377, 2
  %v2402 = vrot.slane %v2378, 2
  %v2403 = vrot.slane %v2379, 2
  %v2404 = vrot.slane %v2380, 2
  %v2417 = vadd.f32 %v2345, %v2393
  %v2418 = vadd.f32 %v2346, %v2394
  %v2419 = vadd.f32 %v2347, %v2395
  %v2420 = vadd.f32 %v2348, %v2396
  %v2421 = vadd.f32 %v2349, %v2397
  %v2422 = vadd.f32 %v2350, %v2398
  %v2423 = vadd.f32 %v2351, %v2399
  %v2424 = vadd.f32 %v2352, %v2400
  %v2425 = vadd.f32 %v2353, %v2401
  %v2426 = vadd.f32 %v2354, %v2402
  %v2427 = vadd.f32 %v2355, %v2403
  %v2428 = vadd.f32 %v2356, %v2404
  %v2429 = vadd.f32 %v2357, %v2393
  %v2430 = vadd.f32 %v2358, %v2394
  %v2431 = vadd.f32 %v2359, %v2395
  %v2432 = vadd.f32 %v2360, %v2396
  %v2433 = vadd.f32 %v2361, %v2397
  %v2434 = vadd.f32 %v2362, %v2398
  %v2435 = vadd.f32 %v2363, %v2399
  %v2436 = vadd.f32 %v2364, %v2400
  %v2437 = vadd.f32 %v2365, %v2401
  %v2438 = vadd.f32 %v2366, %v2402
  %v2439 = vadd.f32 %v2367, %v2403
  %v2440 = vadd.f32 %v2368, %v2404
  %v2441 = vadd.f32 %v1635, %v2417
  %v2442 = vadd.f32 %v1636, %v2418
  %v2443 = vadd.f32 %v1637, %v2419
  %v2444 = vadd.f32 %v1638, %v2420
  %v2445 = vadd.f32 %v1639, %v2421
  %v2446 = vadd.f32 %v1640, %v2422
  %v2447 = vadd.f32 %v1641, %v2423
  %v2448 = vadd.f32 %v1642, %v2424
  %v2449 = vadd.f32 %v1643, %v2425
  %v2450 = vadd.f32 %v1644, %v2426
  %v2451 = vadd.f32 %v1645, %v2427
  %v2452 = vadd.f32 %v1646, %v2428
  %v2453 = vadd.f32 %v1647, %v2429
  %v2454 = vadd.f32 %v1648, %v2430
  %v2455 = vadd.f32 %v1649, %v2431
  %v2456 = vadd.f32 %v1650, %v2432
  %v2457 = vadd.f32 %v1651, %v2433
  %v2458 = vadd.f32 %v1652, %v2434
  %v2459 = vadd.f32 %v1653, %v2435
  %v2460 = vadd.f32 %v1654, %v2436
  %v2461 = vadd.f32 %v1655, %v2437
  %v2462 = vadd.f32 %v1656, %v2438
  %v2463 = vadd.f32 %v1657, %v2439
  %v2464 = vadd.f32 %v1658, %v2440
  %v2465 = vmul.f32 %v2417, %v2417
  %v2466 = vmul.f32 %v2418, %v2418
  %v2467 = vmul.f32 %v2419, %v2419
  %v2468 = vmul.f32 %v2420, %v2420
  %v2469 = vmul.f32 %v2421, %v2421
  %v2470 = vmul.f32 %v2422, %v2422
  %v2471 = vmul.f32 %v2423, %v2423
  %v2472 = vmul.f32 %v2424, %v2424
  %v2473 = vmul.f32 %v2425, %v2425
  %v2474 = vmul.f32 %v2426, %v2426
  %v2475 = vmul.f32 %v2427, %v2427
  %v2476 = vmul.f32 %v2428, %v2428
  %v2477 = vmul.f32 %v2429, %v2429
  %v2478 = vmul.f32 %v2430, %v2430
  %v2479 = vmul.f32 %v2431, %v2431
  %v2480 = vmul.f32 %v2432, %v2432
  %v2481 = vmul.f32 %v2433, %v2433
  %v2482 = vmul.f32 %v2434, %v2434
  %v2483 = vmul.f32 %v2435, %v2435
  %v2484 = vmul.f32 %v2436, %v2436
  %v2485 = vmul.f32 %v2437, %v2437
  %v2486 = vmul.f32 %v2438, %v2438
  %v2487 = vmul.f32 %v2439, %v2439
  %v2488 = vmul.f32 %v2440, %v2440
  %v2489 = vadd.f32 %v1683, %v2465
  %v2490 = vadd.f32 %v1684, %v2466
  %v2491 = vadd.f32 %v1685, %v2467
  %v2492 = vadd.f32 %v1686, %v2468
  %v2493 = vadd.f32 %v1687, %v2469
  %v2494 = vadd.f32 %v1688, %v2470
  %v2495 = vadd.f32 %v1689, %v2471
  %v2496 = vadd.f32 %v1690, %v2472
  %v2497 = vadd.f32 %v1691, %v2473
  %v2498 = vadd.f32 %v1692, %v2474
  %v2499 = vadd.f32 %v1693, %v2475
  %v2500 = vadd.f32 %v1694, %v2476
  %v2501 = vadd.f32 %v1695, %v2477
  %v2502 = vadd.f32 %v1696, %v2478
  %v2503 = vadd.f32 %v1697, %v2479
  %v2504 = vadd.f32 %v1698, %v2480
  %v2505 = vadd.f32 %v1699, %v2481
  %v2506 = vadd.f32 %v1700, %v2482
  %v2507 = vadd.f32 %v1701, %v2483
  %v2508 = vadd.f32 %v1702, %v2484
  %v2509 = vadd.f32 %v1703, %v2485
  %v2510 = vadd.f32 %v1704, %v2486
  %v2511 = vadd.f32 %v1705, %v2487
  %v2512 = vadd.f32 %v1706, %v2488
  %v2537 = vrot.slane %v2417, 7
  %v2538 = vrot.slane %v2429, 7
  %v2539 = vsel %vm1731, %v2537, %v2538
  %v2540 = vrot.slane %v2418, 7
  %v2541 = vrot.slane %v2430, 7
  %v2542 = vsel %vm1731, %v2540, %v2541
  %v2543 = vrot.slane %v2419, 7
  %v2544 = vrot.slane %v2431, 7
  %v2545 = vsel %vm1731, %v2543, %v2544
  %v2546 = vrot.slane %v2420, 7
  %v2547 = vrot.slane %v2432, 7
  %v2548 = vsel %vm1731, %v2546, %v2547
  %v2549 = vrot.slane %v2421, 7
  %v2550 = vrot.slane %v2433, 7
  %v2551 = vsel %vm1731, %v2549, %v2550
  %v2552 = vrot.slane %v2422, 7
  %v2553 = vrot.slane %v2434, 7
  %v2554 = vsel %vm1731, %v2552, %v2553
  %v2555 = vrot.slane %v2423, 7
  %v2556 = vrot.slane %v2435, 7
  %v2557 = vsel %vm1731, %v2555, %v2556
  %v2558 = vrot.slane %v2424, 7
  %v2559 = vrot.slane %v2436, 7
  %v2560 = vsel %vm1731, %v2558, %v2559
  %v2561 = vrot.slane %v2425, 7
  %v2562 = vrot.slane %v2437, 7
  %v2563 = vsel %vm1731, %v2561, %v2562
  %v2564 = vrot.slane %v2426, 7
  %v2565 = vrot.slane %v2438, 7
  %v2566 = vsel %vm1731, %v2564, %v2565
  %v2567 = vrot.slane %v2427, 7
  %v2568 = vrot.slane %v2439, 7
  %v2569 = vsel %vm1731, %v2567, %v2568
  %v2570 = vrot.slane %v2428, 7
  %v2571 = vrot.slane %v2440, 7
  %v2572 = vsel %vm1731, %v2570, %v2571
  %s2585 = scalar_lea.vmem %s4, 96
  %2586 = vst [vmem:[%s2585] sm:$0x7f] %v2539
  %2587 = vst [vmem:[%s2585 + $0x8] sm:$0x7f] %v2542
  %2588 = vst [vmem:[%s2585 + $0x10] sm:$0x7f] %v2545
  %2589 = vst [vmem:[%s2585 + $0x18] sm:$0x7f] %v2548
  %2590 = vst [vmem:[%s2585 + $0x20] sm:$0x7f] %v2551
  %2591 = vst [vmem:[%s2585 + $0x28] sm:$0x7f] %v2554
  %2592 = vst [vmem:[%s2585 + $0x30] sm:$0x7f] %v2557
  %2593 = vst [vmem:[%s2585 + $0x38] sm:$0x7f] %v2560
  %2594 = vst [vmem:[%s2585 + $0x40] sm:$0x7f] %v2563
  %2595 = vst [vmem:[%s2585 + $0x48] sm:$0x7f] %v2566
  %2596 = vst [vmem:[%s2585 + $0x50] sm:$0x7f] %v2569
  %2597 = vst [vmem:[%s2585 + $0x58] sm:$0x7f] %v2572
  %v2598 = vld [vmem:[%s476] sm:$0xff]
  %v2599 = vld [vmem:[%s476 + $0x8] sm:$0xff]
  %v2600 = vld [vmem:[%s476 + $0x10] sm:$0xff]
  %v2601 = vld [vmem:[%s476 + $0x18] sm:$0xff]
  %v2602 = vld [vmem:[%s476 + $0x20] sm:$0xff]
  %v2603 = vld [vmem:[%s476 + $0x28] sm:$0xff]
  %v2604 = vld [vmem:[%s476 + $0x30] sm:$0xff]
  %v2605 = vld [vmem:[%s476 + $0x38] sm:$0xff]
  %v2606 = vld [vmem:[%s476 + $0x40] sm:$0xff]
  %v2607 = vld [vmem:[%s476 + $0x48] sm:$0xff]
  %v2608 = vld [vmem:[%s476 + $0x50] sm:$0xff]
  %v2609 = vld [vmem:[%s476 + $0x58] sm:$0xff]
  %v2610 = vld [vmem:[%s476 + $0x60] sm:$0xff]
  %v2611 = vld [vmem:[%s476 + $0x68] sm:$0xff]
  %v2612 = vld [vmem:[%s476 + $0x70] sm:$0xff]
  %v2613 = vld [vmem:[%s476 + $0x78] sm:$0xff]
  %v2614 = vld [vmem:[%s476 + $0x80] sm:$0xff]
  %v2615 = vld [vmem:[%s476 + $0x88] sm:$0xff]
  %v2616 = vld [vmem:[%s476 + $0x90] sm:$0xff]
  %v2617 = vld [vmem:[%s476 + $0x98] sm:$0xff]
  %v2618 = vld [vmem:[%s476 + $0xa0] sm:$0xff]
  %v2619 = vld [vmem:[%s476 + $0xa8] sm:$0xff]
  %v2620 = vld [vmem:[%s476 + $0xb0] sm:$0xff]
  %v2621 = vld [vmem:[%s476 + $0xb8] sm:$0xff]
  %v2622 = vld [vmem:[%s1840] sm:$0xff]
  %v2623 = vld [vmem:[%s1840 + $0x8] sm:$0xff]
  %v2624 = vld [vmem:[%s1840 + $0x10] sm:$0xff]
  %v2625 = vld [vmem:[%s1840 + $0x18] sm:$0xff]
  %v2626 = vld [vmem:[%s1840 + $0x20] sm:$0xff]
  %v2627 = vld [vmem:[%s1840 + $0x28] sm:$0xff]
  %v2628 = vld [vmem:[%s1840 + $0x30] sm:$0xff]
  %v2629 = vld [vmem:[%s1840 + $0x38] sm:$0xff]
  %v2630 = vld [vmem:[%s1840 + $0x40] sm:$0xff]
  %v2631 = vld [vmem:[%s1840 + $0x48] sm:$0xff]
  %v2632 = vld [vmem:[%s1840 + $0x50] sm:$0xff]
  %v2633 = vld [vmem:[%s1840 + $0x58] sm:$0xff]
  %v2634 = vld [vmem:[%s1840 + $0x60] sm:$0xff]
  %v2635 = vld [vmem:[%s1840 + $0x68] sm:$0xff]
  %v2636 = vld [vmem:[%s1840 + $0x70] sm:$0xff]
  %v2637 = vld [vmem:[%s1840 + $0x78] sm:$0xff]
  %v2638 = vld [vmem:[%s1840 + $0x80] sm:$0xff]
  %v2639 = vld [vmem:[%s1840 + $0x88] sm:$0xff]
  %v2640 = vld [vmem:[%s1840 + $0x90] sm:$0xff]
  %v2641 = vld [vmem:[%s1840 + $0x98] sm:$0xff]
  %v2642 = vld [vmem:[%s1840 + $0xa0] sm:$0xff]
  %v2643 = vld [vmem:[%s1840 + $0xa8] sm:$0xff]
  %v2644 = vld [vmem:[%s1840 + $0xb0] sm:$0xff]
  %v2645 = vld [vmem:[%s1840 + $0xb8] sm:$0xff]
  %s2646 = scalar_lea.vmem [#allocation2], 768
  %v2647 = vld [vmem:[%s2646] sm:$0xff]
  %v2648 = vld [vmem:[%s2646 + $0x8] sm:$0xff]
  %v2649 = vld [vmem:[%s2646 + $0x10] sm:$0xff]
  %v2650 = vld [vmem:[%s2646 + $0x18] sm:$0xff]
  %v2651 = vld [vmem:[%s2646 + $0x20] sm:$0xff]
  %v2652 = vld [vmem:[%s2646 + $0x28] sm:$0xff]
  %v2653 = vld [vmem:[%s2646 + $0x30] sm:$0xff]
  %v2654 = vld [vmem:[%s2646 + $0x38] sm:$0xff]
  %v2655 = vld [vmem:[%s2646 + $0x40] sm:$0xff]
  %v2656 = vld [vmem:[%s2646 + $0x48] sm:$0xff]
  %v2657 = vld [vmem:[%s2646 + $0x50] sm:$0xff]
  %v2658 = vld [vmem:[%s2646 + $0x58] sm:$0xff]
  %v2659 = vld [vmem:[%s2646 + $0x60] sm:$0xff]
  %v2660 = vld [vmem:[%s2646 + $0x68] sm:$0xff]
  %v2661 = vld [vmem:[%s2646 + $0x70] sm:$0xff]
  %v2662 = vld [vmem:[%s2646 + $0x78] sm:$0xff]
  %v2663 = vld [vmem:[%s2646 + $0x80] sm:$0xff]
  %v2664 = vld [vmem:[%s2646 + $0x88] sm:$0xff]
  %v2665 = vld [vmem:[%s2646 + $0x90] sm:$0xff]
  %v2666 = vld [vmem:[%s2646 + $0x98] sm:$0xff]
  %v2667 = vld [vmem:[%s2646 + $0xa0] sm:$0xff]
  %v2668 = vld [vmem:[%s2646 + $0xa8] sm:$0xff]
  %v2669 = vld [vmem:[%s2646 + $0xb0] sm:$0xff]
  %v2670 = vld [vmem:[%s2646 + $0xb8] sm:$0xff]
  %v2671 = vmul.f32 %v2598, %v506
  %v2672 = vmul.f32 %v2599, %v510
  %v2673 = vmul.f32 %v2600, %v514
  %v2674 = vmul.f32 %v2601, %v518
  %v2675 = vmul.f32 %v2602, %v522
  %v2676 = vmul.f32 %v2603, %v526
  %v2677 = vmul.f32 %v2604, %v530
  %v2678 = vmul.f32 %v2605, %v534
  %v2679 = vmul.f32 %v2606, %v538
  %v2680 = vmul.f32 %v2607, %v542
  %v2681 = vmul.f32 %v2608, %v546
  %v2682 = vmul.f32 %v2609, %v550
  %v2683 = vmul.f32 %v2610, %v506
  %v2684 = vmul.f32 %v2611, %v510
  %v2685 = vmul.f32 %v2612, %v514
  %v2686 = vmul.f32 %v2613, %v518
  %v2687 = vmul.f32 %v2614, %v522
  %v2688 = vmul.f32 %v2615, %v526
  %v2689 = vmul.f32 %v2616, %v530
  %v2690 = vmul.f32 %v2617, %v534
  %v2691 = vmul.f32 %v2618, %v538
  %v2692 = vmul.f32 %v2619, %v542
  %v2693 = vmul.f32 %v2620, %v546
  %v2694 = vmul.f32 %v2621, %v550
  %v2695 = vadd.f32 %v2671, 0.0
  %v2696 = vadd.f32 %v2672, 0.0
  %v2697 = vadd.f32 %v2673, 0.0
  %v2698 = vadd.f32 %v2674, 0.0
  %v2699 = vadd.f32 %v2675, 0.0
  %v2700 = vadd.f32 %v2676, 0.0
  %v2701 = vadd.f32 %v2677, 0.0
  %v2702 = vadd.f32 %v2678, 0.0
  %v2703 = vadd.f32 %v2679, 0.0
  %v2704 = vadd.f32 %v2680, 0.0
  %v2705 = vadd.f32 %v2681, 0.0
  %v2706 = vadd.f32 %v2682, 0.0
  %v2707 = vadd.f32 %v2683, 0.0
  %v2708 = vadd.f32 %v2684, 0.0
  %v2709 = vadd.f32 %v2685, 0.0
  %v2710 = vadd.f32 %v2686, 0.0
  %v2711 = vadd.f32 %v2687, 0.0
  %v2712 = vadd.f32 %v2688, 0.0
  %v2713 = vadd.f32 %v2689, 0.0
  %v2714 = vadd.f32 %v2690, 0.0
  %v2715 = vadd.f32 %v2691, 0.0
  %v2716 = vadd.f32 %v2692, 0.0
  %v2717 = vadd.f32 %v2693, 0.0
  %v2718 = vadd.f32 %v2694, 0.0
  %v2719 = vmul.f32 %v2610, %v616
  %v2720 = vmul.f32 %v2611, %v620
  %v2721 = vmul.f32 %v2612, %v624
  %v2722 = vmul.f32 %v2613, %v628
  %v2723 = vmul.f32 %v2614, %v632
  %v2724 = vmul.f32 %v2615, %v636
  %v2725 = vmul.f32 %v2616, %v640
  %v2726 = vmul.f32 %v2617, %v644
  %v2727 = vmul.f32 %v2618, %v648
  %v2728 = vmul.f32 %v2619, %v652
  %v2729 = vmul.f32 %v2620, %v656
  %v2730 = vmul.f32 %v2621, %v660
  %v2743 = vrot.slane %v2719, 1
  %v2744 = vrot.slane %v2720, 1
  %v2745 = vrot.slane %v2721, 1
  %v2746 = vrot.slane %v2722, 1
  %v2747 = vrot.slane %v2723, 1
  %v2748 = vrot.slane %v2724, 1
  %v2749 = vrot.slane %v2725, 1
  %v2750 = vrot.slane %v2726, 1
  %v2751 = vrot.slane %v2727, 1
  %v2752 = vrot.slane %v2728, 1
  %v2753 = vrot.slane %v2729, 1
  %v2754 = vrot.slane %v2730, 1
  %v2767 = vadd.f32 %v2695, %v2743
  %v2768 = vadd.f32 %v2696, %v2744
  %v2769 = vadd.f32 %v2697, %v2745
  %v2770 = vadd.f32 %v2698, %v2746
  %v2771 = vadd.f32 %v2699, %v2747
  %v2772 = vadd.f32 %v2700, %v2748
  %v2773 = vadd.f32 %v2701, %v2749
  %v2774 = vadd.f32 %v2702, %v2750
  %v2775 = vadd.f32 %v2703, %v2751
  %v2776 = vadd.f32 %v2704, %v2752
  %v2777 = vadd.f32 %v2705, %v2753
  %v2778 = vadd.f32 %v2706, %v2754
  %v2779 = vadd.f32 %v2707, %v2743
  %v2780 = vadd.f32 %v2708, %v2744
  %v2781 = vadd.f32 %v2709, %v2745
  %v2782 = vadd.f32 %v2710, %v2746
  %v2783 = vadd.f32 %v2711, %v2747
  %v2784 = vadd.f32 %v2712, %v2748
  %v2785 = vadd.f32 %v2713, %v2749
  %v2786 = vadd.f32 %v2714, %v2750
  %v2787 = vadd.f32 %v2715, %v2751
  %v2788 = vadd.f32 %v2716, %v2752
  %v2789 = vadd.f32 %v2717, %v2753
  %v2790 = vadd.f32 %v2718, %v2754
  %v2791 = vmul.f32 %v2610, %v750
  %v2792 = vmul.f32 %v2611, %v754
  %v2793 = vmul.f32 %v2612, %v758
  %v2794 = vmul.f32 %v2613, %v762
  %v2795 = vmul.f32 %v2614, %v766
  %v2796 = vmul.f32 %v2615, %v770
  %v2797 = vmul.f32 %v2616, %v774
  %v2798 = vmul.f32 %v2617, %v778
  %v2799 = vmul.f32 %v2618, %v782
  %v2800 = vmul.f32 %v2619, %v786
  %v2801 = vmul.f32 %v2620, %v790
  %v2802 = vmul.f32 %v2621, %v794
  %v2815 = vrot.slane %v2791, 2
  %v2816 = vrot.slane %v2792, 2
  %v2817 = vrot.slane %v2793, 2
  %v2818 = vrot.slane %v2794, 2
  %v2819 = vrot.slane %v2795, 2
  %v2820 = vrot.slane %v2796, 2
  %v2821 = vrot.slane %v2797, 2
  %v2822 = vrot.slane %v2798, 2
  %v2823 = vrot.slane %v2799, 2
  %v2824 = vrot.slane %v2800, 2
  %v2825 = vrot.slane %v2801, 2
  %v2826 = vrot.slane %v2802, 2
  %v2839 = vadd.f32 %v2767, %v2815
  %v2840 = vadd.f32 %v2768, %v2816
  %v2841 = vadd.f32 %v2769, %v2817
  %v2842 = vadd.f32 %v2770, %v2818
  %v2843 = vadd.f32 %v2771, %v2819
  %v2844 = vadd.f32 %v2772, %v2820
  %v2845 = vadd.f32 %v2773, %v2821
  %v2846 = vadd.f32 %v2774, %v2822
  %v2847 = vadd.f32 %v2775, %v2823
  %v2848 = vadd.f32 %v2776, %v2824
  %v2849 = vadd.f32 %v2777, %v2825
  %v2850 = vadd.f32 %v2778, %v2826
  %v2851 = vadd.f32 %v2779, %v2815
  %v2852 = vadd.f32 %v2780, %v2816
  %v2853 = vadd.f32 %v2781, %v2817
  %v2854 = vadd.f32 %v2782, %v2818
  %v2855 = vadd.f32 %v2783, %v2819
  %v2856 = vadd.f32 %v2784, %v2820
  %v2857 = vadd.f32 %v2785, %v2821
  %v2858 = vadd.f32 %v2786, %v2822
  %v2859 = vadd.f32 %v2787, %v2823
  %v2860 = vadd.f32 %v2788, %v2824
  %v2861 = vadd.f32 %v2789, %v2825
  %v2862 = vadd.f32 %v2790, %v2826
  %v2863 = vmul.f32 %v2622, %v884
  %v2864 = vmul.f32 %v2623, %v888
  %v2865 = vmul.f32 %v2624, %v892
  %v2866 = vmul.f32 %v2625, %v896
  %v2867 = vmul.f32 %v2626, %v900
  %v2868 = vmul.f32 %v2627, %v904
  %v2869 = vmul.f32 %v2628, %v908
  %v2870 = vmul.f32 %v2629, %v912
  %v2871 = vmul.f32 %v2630, %v916
  %v2872 = vmul.f32 %v2631, %v920
  %v2873 = vmul.f32 %v2632, %v924
  %v2874 = vmul.f32 %v2633, %v928
  %v2875 = vmul.f32 %v2634, %v884
  %v2876 = vmul.f32 %v2635, %v888
  %v2877 = vmul.f32 %v2636, %v892
  %v2878 = vmul.f32 %v2637, %v896
  %v2879 = vmul.f32 %v2638, %v900
  %v2880 = vmul.f32 %v2639, %v904
  %v2881 = vmul.f32 %v2640, %v908
  %v2882 = vmul.f32 %v2641, %v912
  %v2883 = vmul.f32 %v2642, %v916
  %v2884 = vmul.f32 %v2643, %v920
  %v2885 = vmul.f32 %v2644, %v924
  %v2886 = vmul.f32 %v2645, %v928
  %v2887 = vadd.f32 %v2839, %v2863
  %v2888 = vadd.f32 %v2840, %v2864
  %v2889 = vadd.f32 %v2841, %v2865
  %v2890 = vadd.f32 %v2842, %v2866
  %v2891 = vadd.f32 %v2843, %v2867
  %v2892 = vadd.f32 %v2844, %v2868
  %v2893 = vadd.f32 %v2845, %v2869
  %v2894 = vadd.f32 %v2846, %v2870
  %v2895 = vadd.f32 %v2847, %v2871
  %v2896 = vadd.f32 %v2848, %v2872
  %v2897 = vadd.f32 %v2849, %v2873
  %v2898 = vadd.f32 %v2850, %v2874
  %v2899 = vadd.f32 %v2851, %v2875
  %v2900 = vadd.f32 %v2852, %v2876
  %v2901 = vadd.f32 %v2853, %v2877
  %v2902 = vadd.f32 %v2854, %v2878
  %v2903 = vadd.f32 %v2855, %v2879
  %v2904 = vadd.f32 %v2856, %v2880
  %v2905 = vadd.f32 %v2857, %v2881
  %v2906 = vadd.f32 %v2858, %v2882
  %v2907 = vadd.f32 %v2859, %v2883
  %v2908 = vadd.f32 %v2860, %v2884
  %v2909 = vadd.f32 %v2861, %v2885
  %v2910 = vadd.f32 %v2862, %v2886
  %v2911 = vmul.f32 %v2634, %v994
  %v2912 = vmul.f32 %v2635, %v998
  %v2913 = vmul.f32 %v2636, %v1002
  %v2914 = vmul.f32 %v2637, %v1006
  %v2915 = vmul.f32 %v2638, %v1010
  %v2916 = vmul.f32 %v2639, %v1014
  %v2917 = vmul.f32 %v2640, %v1018
  %v2918 = vmul.f32 %v2641, %v1022
  %v2919 = vmul.f32 %v2642, %v1026
  %v2920 = vmul.f32 %v2643, %v1030
  %v2921 = vmul.f32 %v2644, %v1034
  %v2922 = vmul.f32 %v2645, %v1038
  %v2935 = vrot.slane %v2911, 1
  %v2936 = vrot.slane %v2912, 1
  %v2937 = vrot.slane %v2913, 1
  %v2938 = vrot.slane %v2914, 1
  %v2939 = vrot.slane %v2915, 1
  %v2940 = vrot.slane %v2916, 1
  %v2941 = vrot.slane %v2917, 1
  %v2942 = vrot.slane %v2918, 1
  %v2943 = vrot.slane %v2919, 1
  %v2944 = vrot.slane %v2920, 1
  %v2945 = vrot.slane %v2921, 1
  %v2946 = vrot.slane %v2922, 1
  %v2959 = vadd.f32 %v2887, %v2935
  %v2960 = vadd.f32 %v2888, %v2936
  %v2961 = vadd.f32 %v2889, %v2937
  %v2962 = vadd.f32 %v2890, %v2938
  %v2963 = vadd.f32 %v2891, %v2939
  %v2964 = vadd.f32 %v2892, %v2940
  %v2965 = vadd.f32 %v2893, %v2941
  %v2966 = vadd.f32 %v2894, %v2942
  %v2967 = vadd.f32 %v2895, %v2943
  %v2968 = vadd.f32 %v2896, %v2944
  %v2969 = vadd.f32 %v2897, %v2945
  %v2970 = vadd.f32 %v2898, %v2946
  %v2971 = vadd.f32 %v2899, %v2935
  %v2972 = vadd.f32 %v2900, %v2936
  %v2973 = vadd.f32 %v2901, %v2937
  %v2974 = vadd.f32 %v2902, %v2938
  %v2975 = vadd.f32 %v2903, %v2939
  %v2976 = vadd.f32 %v2904, %v2940
  %v2977 = vadd.f32 %v2905, %v2941
  %v2978 = vadd.f32 %v2906, %v2942
  %v2979 = vadd.f32 %v2907, %v2943
  %v2980 = vadd.f32 %v2908, %v2944
  %v2981 = vadd.f32 %v2909, %v2945
  %v2982 = vadd.f32 %v2910, %v2946
  %v2983 = vmul.f32 %v2634, %v1128
  %v2984 = vmul.f32 %v2635, %v1132
  %v2985 = vmul.f32 %v2636, %v1136
  %v2986 = vmul.f32 %v2637, %v1140
  %v2987 = vmul.f32 %v2638, %v1144
  %v2988 = vmul.f32 %v2639, %v1148
  %v2989 = vmul.f32 %v2640, %v1152
  %v2990 = vmul.f32 %v2641, %v1156
  %v2991 = vmul.f32 %v2642, %v1160
  %v2992 = vmul.f32 %v2643, %v1164
  %v2993 = vmul.f32 %v2644, %v1168
  %v2994 = vmul.f32 %v2645, %v1172
  %v3007 = vrot.slane %v2983, 2
  %v3008 = vrot.slane %v2984, 2
  %v3009 = vrot.slane %v2985, 2
  %v3010 = vrot.slane %v2986, 2
  %v3011 = vrot.slane %v2987, 2
  %v3012 = vrot.slane %v2988, 2
  %v3013 = vrot.slane %v2989, 2
  %v3014 = vrot.slane %v2990, 2
  %v3015 = vrot.slane %v2991, 2
  %v3016 = vrot.slane %v2992, 2
  %v3017 = vrot.slane %v2993, 2
  %v3018 = vrot.slane %v2994, 2
  %v3031 = vadd.f32 %v2959, %v3007
  %v3032 = vadd.f32 %v2960, %v3008
  %v3033 = vadd.f32 %v2961, %v3009
  %v3034 = vadd.f32 %v2962, %v3010
  %v3035 = vadd.f32 %v2963, %v3011
  %v3036 = vadd.f32 %v2964, %v3012
  %v3037 = vadd.f32 %v2965, %v3013
  %v3038 = vadd.f32 %v2966, %v3014
  %v3039 = vadd.f32 %v2967, %v3015
  %v3040 = vadd.f32 %v2968, %v3016
  %v3041 = vadd.f32 %v2969, %v3017
  %v3042 = vadd.f32 %v2970, %v3018
  %v3043 = vadd.f32 %v2971, %v3007
  %v3044 = vadd.f32 %v2972, %v3008
  %v3045 = vadd.f32 %v2973, %v3009
  %v3046 = vadd.f32 %v2974, %v3010
  %v3047 = vadd.f32 %v2975, %v3011
  %v3048 = vadd.f32 %v2976, %v3012
  %v3049 = vadd.f32 %v2977, %v3013
  %v3050 = vadd.f32 %v2978, %v3014
  %v3051 = vadd.f32 %v2979, %v3015
  %v3052 = vadd.f32 %v2980, %v3016
  %v3053 = vadd.f32 %v2981, %v3017
  %v3054 = vadd.f32 %v2982, %v3018
  %v3055 = vmul.f32 %v2647, %v1262
  %v3056 = vmul.f32 %v2648, %v1266
  %v3057 = vmul.f32 %v2649, %v1270
  %v3058 = vmul.f32 %v2650, %v1274
  %v3059 = vmul.f32 %v2651, %v1278
  %v3060 = vmul.f32 %v2652, %v1282
  %v3061 = vmul.f32 %v2653, %v1286
  %v3062 = vmul.f32 %v2654, %v1290
  %v3063 = vmul.f32 %v2655, %v1294
  %v3064 = vmul.f32 %v2656, %v1298
  %v3065 = vmul.f32 %v2657, %v1302
  %v3066 = vmul.f32 %v2658, %v1306
  %v3067 = vmul.f32 %v2659, %v1262
  %v3068 = vmul.f32 %v2660, %v1266
  %v3069 = vmul.f32 %v2661, %v1270
  %v3070 = vmul.f32 %v2662, %v1274
  %v3071 = vmul.f32 %v2663, %v1278
  %v3072 = vmul.f32 %v2664, %v1282
  %v3073 = vmul.f32 %v2665, %v1286
  %v3074 = vmul.f32 %v2666, %v1290
  %v3075 = vmul.f32 %v2667, %v1294
  %v3076 = vmul.f32 %v2668, %v1298
  %v3077 = vmul.f32 %v2669, %v1302
  %v3078 = vmul.f32 %v2670, %v1306
  %v3079 = vadd.f32 %v3031, %v3055
  %v3080 = vadd.f32 %v3032, %v3056
  %v3081 = vadd.f32 %v3033, %v3057
  %v3082 = vadd.f32 %v3034, %v3058
  %v3083 = vadd.f32 %v3035, %v3059
  %v3084 = vadd.f32 %v3036, %v3060
  %v3085 = vadd.f32 %v3037, %v3061
  %v3086 = vadd.f32 %v3038, %v3062
  %v3087 = vadd.f32 %v3039, %v3063
  %v3088 = vadd.f32 %v3040, %v3064
  %v3089 = vadd.f32 %v3041, %v3065
  %v3090 = vadd.f32 %v3042, %v3066
  %v3091 = vadd.f32 %v3043, %v3067
  %v3092 = vadd.f32 %v3044, %v3068
  %v3093 = vadd.f32 %v3045, %v3069
  %v3094 = vadd.f32 %v3046, %v3070
  %v3095 = vadd.f32 %v3047, %v3071
  %v3096 = vadd.f32 %v3048, %v3072
  %v3097 = vadd.f32 %v3049, %v3073
  %v3098 = vadd.f32 %v3050, %v3074
  %v3099 = vadd.f32 %v3051, %v3075
  %v3100 = vadd.f32 %v3052, %v3076
  %v3101 = vadd.f32 %v3053, %v3077
  %v3102 = vadd.f32 %v3054, %v3078
  %v3103 = vmul.f32 %v2659, %v1372
  %v3104 = vmul.f32 %v2660, %v1376
  %v3105 = vmul.f32 %v2661, %v1380
  %v3106 = vmul.f32 %v2662, %v1384
  %v3107 = vmul.f32 %v2663, %v1388
  %v3108 = vmul.f32 %v2664, %v1392
  %v3109 = vmul.f32 %v2665, %v1396
  %v3110 = vmul.f32 %v2666, %v1400
  %v3111 = vmul.f32 %v2667, %v1404
  %v3112 = vmul.f32 %v2668, %v1408
  %v3113 = vmul.f32 %v2669, %v1412
  %v3114 = vmul.f32 %v2670, %v1416
  %v3127 = vrot.slane %v3103, 1
  %v3128 = vrot.slane %v3104, 1
  %v3129 = vrot.slane %v3105, 1
  %v3130 = vrot.slane %v3106, 1
  %v3131 = vrot.slane %v3107, 1
  %v3132 = vrot.slane %v3108, 1
  %v3133 = vrot.slane %v3109, 1
  %v3134 = vrot.slane %v3110, 1
  %v3135 = vrot.slane %v3111, 1
  %v3136 = vrot.slane %v3112, 1
  %v3137 = vrot.slane %v3113, 1
  %v3138 = vrot.slane %v3114, 1
  %v3151 = vadd.f32 %v3079, %v3127
  %v3152 = vadd.f32 %v3080, %v3128
  %v3153 = vadd.f32 %v3081, %v3129
  %v3154 = vadd.f32 %v3082, %v3130
  %v3155 = vadd.f32 %v3083, %v3131
  %v3156 = vadd.f32 %v3084, %v3132
  %v3157 = vadd.f32 %v3085, %v3133
  %v3158 = vadd.f32 %v3086, %v3134
  %v3159 = vadd.f32 %v3087, %v3135
  %v3160 = vadd.f32 %v3088, %v3136
  %v3161 = vadd.f32 %v3089, %v3137
  %v3162 = vadd.f32 %v3090, %v3138
  %v3163 = vadd.f32 %v3091, %v3127
  %v3164 = vadd.f32 %v3092, %v3128
  %v3165 = vadd.f32 %v3093, %v3129
  %v3166 = vadd.f32 %v3094, %v3130
  %v3167 = vadd.f32 %v3095, %v3131
  %v3168 = vadd.f32 %v3096, %v3132
  %v3169 = vadd.f32 %v3097, %v3133
  %v3170 = vadd.f32 %v3098, %v3134
  %v3171 = vadd.f32 %v3099, %v3135
  %v3172 = vadd.f32 %v3100, %v3136
  %v3173 = vadd.f32 %v3101, %v3137
  %v3174 = vadd.f32 %v3102, %v3138
  %v3175 = vmul.f32 %v2659, %v1506
  %v3176 = vmul.f32 %v2660, %v1510
  %v3177 = vmul.f32 %v2661, %v1514
  %v3178 = vmul.f32 %v2662, %v1518
  %v3179 = vmul.f32 %v2663, %v1522
  %v3180 = vmul.f32 %v2664, %v1526
  %v3181 = vmul.f32 %v2665, %v1530
  %v3182 = vmul.f32 %v2666, %v1534
  %v3183 = vmul.f32 %v2667, %v1538
  %v3184 = vmul.f32 %v2668, %v1542
  %v3185 = vmul.f32 %v2669, %v1546
  %v3186 = vmul.f32 %v2670, %v1550
  %v3199 = vrot.slane %v3175, 2
  %v3200 = vrot.slane %v3176, 2
  %v3201 = vrot.slane %v3177, 2
  %v3202 = vrot.slane %v3178, 2
  %v3203 = vrot.slane %v3179, 2
  %v3204 = vrot.slane %v3180, 2
  %v3205 = vrot.slane %v3181, 2
  %v3206 = vrot.slane %v3182, 2
  %v3207 = vrot.slane %v3183, 2
  %v3208 = vrot.slane %v3184, 2
  %v3209 = vrot.slane %v3185, 2
  %v3210 = vrot.slane %v3186, 2
  %v3223 = vadd.f32 %v3151, %v3199
  %v3224 = vadd.f32 %v3152, %v3200
  %v3225 = vadd.f32 %v3153, %v3201
  %v3226 = vadd.f32 %v3154, %v3202
  %v3227 = vadd.f32 %v3155, %v3203
  %v3228 = vadd.f32 %v3156, %v3204
  %v3229 = vadd.f32 %v3157, %v3205
  %v3230 = vadd.f32 %v3158, %v3206
  %v3231 = vadd.f32 %v3159, %v3207
  %v3232 = vadd.f32 %v3160, %v3208
  %v3233 = vadd.f32 %v3161, %v3209
  %v3234 = vadd.f32 %v3162, %v3210
  %v3235 = vadd.f32 %v3163, %v3199
  %v3236 = vadd.f32 %v3164, %v3200
  %v3237 = vadd.f32 %v3165, %v3201
  %v3238 = vadd.f32 %v3166, %v3202
  %v3239 = vadd.f32 %v3167, %v3203
  %v3240 = vadd.f32 %v3168, %v3204
  %v3241 = vadd.f32 %v3169, %v3205
  %v3242 = vadd.f32 %v3170, %v3206
  %v3243 = vadd.f32 %v3171, %v3207
  %v3244 = vadd.f32 %v3172, %v3208
  %v3245 = vadd.f32 %v3173, %v3209
  %v3246 = vadd.f32 %v3174, %v3210
  %v3247 = vadd.f32 %v2441, %v3223
  %v3248 = vadd.f32 %v2442, %v3224
  %v3249 = vadd.f32 %v2443, %v3225
  %v3250 = vadd.f32 %v2444, %v3226
  %v3251 = vadd.f32 %v2445, %v3227
  %v3252 = vadd.f32 %v2446, %v3228
  %v3253 = vadd.f32 %v2447, %v3229
  %v3254 = vadd.f32 %v2448, %v3230
  %v3255 = vadd.f32 %v2449, %v3231
  %v3256 = vadd.f32 %v2450, %v3232
  %v3257 = vadd.f32 %v2451, %v3233
  %v3258 = vadd.f32 %v2452, %v3234
  %v3259 = vadd.f32 %v2453, %v3235
  %v3260 = vadd.f32 %v2454, %v3236
  %v3261 = vadd.f32 %v2455, %v3237
  %v3262 = vadd.f32 %v2456, %v3238
  %v3263 = vadd.f32 %v2457, %v3239
  %v3264 = vadd.f32 %v2458, %v3240
  %v3265 = vadd.f32 %v2459, %v3241
  %v3266 = vadd.f32 %v2460, %v3242
  %v3267 = vadd.f32 %v2461, %v3243
  %v3268 = vadd.f32 %v2462, %v3244
  %v3269 = vadd.f32 %v2463, %v3245
  %v3270 = vadd.f32 %v2464, %v3246
  %v3271 = vmul.f32 %v3223, %v3223
  %v3272 = vmul.f32 %v3224, %v3224
  %v3273 = vmul.f32 %v3225, %v3225
  %v3274 = vmul.f32 %v3226, %v3226
  %v3275 = vmul.f32 %v3227, %v3227
  %v3276 = vmul.f32 %v3228, %v3228
  %v3277 = vmul.f32 %v3229, %v3229
  %v3278 = vmul.f32 %v3230, %v3230
  %v3279 = vmul.f32 %v3231, %v3231
  %v3280 = vmul.f32 %v3232, %v3232
  %v3281 = vmul.f32 %v3233, %v3233
  %v3282 = vmul.f32 %v3234, %v3234
  %v3283 = vmul.f32 %v3235, %v3235
  %v3284 = vmul.f32 %v3236, %v3236
  %v3285 = vmul.f32 %v3237, %v3237
  %v3286 = vmul.f32 %v3238, %v3238
  %v3287 = vmul.f32 %v3239, %v3239
  %v3288 = vmul.f32 %v3240, %v3240
  %v3289 = vmul.f32 %v3241, %v3241
  %v3290 = vmul.f32 %v3242, %v3242
  %v3291 = vmul.f32 %v3243, %v3243
  %v3292 = vmul.f32 %v3244, %v3244
  %v3293 = vmul.f32 %v3245, %v3245
  %v3294 = vmul.f32 %v3246, %v3246
  %v3295 = vadd.f32 %v2489, %v3271
  %v3296 = vadd.f32 %v2490, %v3272
  %v3297 = vadd.f32 %v2491, %v3273
  %v3298 = vadd.f32 %v2492, %v3274
  %v3299 = vadd.f32 %v2493, %v3275
  %v3300 = vadd.f32 %v2494, %v3276
  %v3301 = vadd.f32 %v2495, %v3277
  %v3302 = vadd.f32 %v2496, %v3278
  %v3303 = vadd.f32 %v2497, %v3279
  %v3304 = vadd.f32 %v2498, %v3280
  %v3305 = vadd.f32 %v2499, %v3281
  %v3306 = vadd.f32 %v2500, %v3282
  %v3307 = vadd.f32 %v2501, %v3283
  %v3308 = vadd.f32 %v2502, %v3284
  %v3309 = vadd.f32 %v2503, %v3285
  %v3310 = vadd.f32 %v2504, %v3286
  %v3311 = vadd.f32 %v2505, %v3287
  %v3312 = vadd.f32 %v2506, %v3288
  %v3313 = vadd.f32 %v2507, %v3289
  %v3314 = vadd.f32 %v2508, %v3290
  %v3315 = vadd.f32 %v2509, %v3291
  %v3316 = vadd.f32 %v2510, %v3292
  %v3317 = vadd.f32 %v2511, %v3293
  %v3318 = vadd.f32 %v2512, %v3294
  %v3343 = vrot.slane %v3223, 7
  %v3344 = vrot.slane %v3235, 7
  %v3345 = vsel %vm1731, %v3343, %v3344
  %v3346 = vrot.slane %v3224, 7
  %v3347 = vrot.slane %v3236, 7
  %v3348 = vsel %vm1731, %v3346, %v3347
  %v3349 = vrot.slane %v3225, 7
  %v3350 = vrot.slane %v3237, 7
  %v3351 = vsel %vm1731, %v3349, %v3350
  %v3352 = vrot.slane %v3226, 7
  %v3353 = vrot.slane %v3238, 7
  %v3354 = vsel %vm1731, %v3352, %v3353
  %v3355 = vrot.slane %v3227, 7
  %v3356 = vrot.slane %v3239, 7
  %v3357 = vsel %vm1731, %v3355, %v3356
  %v3358 = vrot.slane %v3228, 7
  %v3359 = vrot.slane %v3240, 7
  %v3360 = vsel %vm1731, %v3358, %v3359
  %v3361 = vrot.slane %v3229, 7
  %v3362 = vrot.slane %v3241, 7
  %v3363 = vsel %vm1731, %v3361, %v3362
  %v3364 = vrot.slane %v3230, 7
  %v3365 = vrot.slane %v3242, 7
  %v3366 = vsel %vm1731, %v3364, %v3365
  %v3367 = vrot.slane %v3231, 7
  %v3368 = vrot.slane %v3243, 7
  %v3369 = vsel %vm1731, %v3367, %v3368
  %v3370 = vrot.slane %v3232, 7
  %v3371 = vrot.slane %v3244, 7
  %v3372 = vsel %vm1731, %v3370, %v3371
  %v3373 = vrot.slane %v3233, 7
  %v3374 = vrot.slane %v3245, 7
  %v3375 = vsel %vm1731, %v3373, %v3374
  %v3376 = vrot.slane %v3234, 7
  %v3377 = vrot.slane %v3246, 7
  %v3378 = vsel %vm1731, %v3376, %v3377
  %s3391 = scalar_lea.vmem %s4, 192
  %3392 = vst [vmem:[%s3391] sm:$0x7f] %v3345
  %3393 = vst [vmem:[%s3391 + $0x8] sm:$0x7f] %v3348
  %3394 = vst [vmem:[%s3391 + $0x10] sm:$0x7f] %v3351
  %3395 = vst [vmem:[%s3391 + $0x18] sm:$0x7f] %v3354
  %3396 = vst [vmem:[%s3391 + $0x20] sm:$0x7f] %v3357
  %3397 = vst [vmem:[%s3391 + $0x28] sm:$0x7f] %v3360
  %3398 = vst [vmem:[%s3391 + $0x30] sm:$0x7f] %v3363
  %3399 = vst [vmem:[%s3391 + $0x38] sm:$0x7f] %v3366
  %3400 = vst [vmem:[%s3391 + $0x40] sm:$0x7f] %v3369
  %3401 = vst [vmem:[%s3391 + $0x48] sm:$0x7f] %v3372
  %3402 = vst [vmem:[%s3391 + $0x50] sm:$0x7f] %v3375
  %3403 = vst [vmem:[%s3391 + $0x58] sm:$0x7f] %v3378
  %v3404 = vld [vmem:[%s1840] sm:$0xff]
  %v3405 = vld [vmem:[%s1840 + $0x8] sm:$0xff]
  %v3406 = vld [vmem:[%s1840 + $0x10] sm:$0xff]
  %v3407 = vld [vmem:[%s1840 + $0x18] sm:$0xff]
  %v3408 = vld [vmem:[%s1840 + $0x20] sm:$0xff]
  %v3409 = vld [vmem:[%s1840 + $0x28] sm:$0xff]
  %v3410 = vld [vmem:[%s1840 + $0x30] sm:$0xff]
  %v3411 = vld [vmem:[%s1840 + $0x38] sm:$0xff]
  %v3412 = vld [vmem:[%s1840 + $0x40] sm:$0xff]
  %v3413 = vld [vmem:[%s1840 + $0x48] sm:$0xff]
  %v3414 = vld [vmem:[%s1840 + $0x50] sm:$0xff]
  %v3415 = vld [vmem:[%s1840 + $0x58] sm:$0xff]
  %v3416 = vld [vmem:[%s1840 + $0x60] sm:$0xff]
  %v3417 = vld [vmem:[%s1840 + $0x68] sm:$0xff]
  %v3418 = vld [vmem:[%s1840 + $0x70] sm:$0xff]
  %v3419 = vld [vmem:[%s1840 + $0x78] sm:$0xff]
  %v3420 = vld [vmem:[%s1840 + $0x80] sm:$0xff]
  %v3421 = vld [vmem:[%s1840 + $0x88] sm:$0xff]
  %v3422 = vld [vmem:[%s1840 + $0x90] sm:$0xff]
  %v3423 = vld [vmem:[%s1840 + $0x98] sm:$0xff]
  %v3424 = vld [vmem:[%s1840 + $0xa0] sm:$0xff]
  %v3425 = vld [vmem:[%s1840 + $0xa8] sm:$0xff]
  %v3426 = vld [vmem:[%s1840 + $0xb0] sm:$0xff]
  %v3427 = vld [vmem:[%s1840 + $0xb8] sm:$0xff]
  %v3428 = vld [vmem:[%s2646] sm:$0xff]
  %v3429 = vld [vmem:[%s2646 + $0x8] sm:$0xff]
  %v3430 = vld [vmem:[%s2646 + $0x10] sm:$0xff]
  %v3431 = vld [vmem:[%s2646 + $0x18] sm:$0xff]
  %v3432 = vld [vmem:[%s2646 + $0x20] sm:$0xff]
  %v3433 = vld [vmem:[%s2646 + $0x28] sm:$0xff]
  %v3434 = vld [vmem:[%s2646 + $0x30] sm:$0xff]
  %v3435 = vld [vmem:[%s2646 + $0x38] sm:$0xff]
  %v3436 = vld [vmem:[%s2646 + $0x40] sm:$0xff]
  %v3437 = vld [vmem:[%s2646 + $0x48] sm:$0xff]
  %v3438 = vld [vmem:[%s2646 + $0x50] sm:$0xff]
  %v3439 = vld [vmem:[%s2646 + $0x58] sm:$0xff]
  %v3440 = vld [vmem:[%s2646 + $0x60] sm:$0xff]
  %v3441 = vld [vmem:[%s2646 + $0x68] sm:$0xff]
  %v3442 = vld [vmem:[%s2646 + $0x70] sm:$0xff]
  %v3443 = vld [vmem:[%s2646 + $0x78] sm:$0xff]
  %v3444 = vld [vmem:[%s2646 + $0x80] sm:$0xff]
  %v3445 = vld [vmem:[%s2646 + $0x88] sm:$0xff]
  %v3446 = vld [vmem:[%s2646 + $0x90] sm:$0xff]
  %v3447 = vld [vmem:[%s2646 + $0x98] sm:$0xff]
  %v3448 = vld [vmem:[%s2646 + $0xa0] sm:$0xff]
  %v3449 = vld [vmem:[%s2646 + $0xa8] sm:$0xff]
  %v3450 = vld [vmem:[%s2646 + $0xb0] sm:$0xff]
  %v3451 = vld [vmem:[%s2646 + $0xb8] sm:$0xff]
  %s3452 = scalar_lea.vmem [#allocation2], 960
  %v3453 = vld [vmem:[%s3452] sm:$0xff]
  %v3454 = vld [vmem:[%s3452 + $0x8] sm:$0xff]
  %v3455 = vld [vmem:[%s3452 + $0x10] sm:$0xff]
  %v3456 = vld [vmem:[%s3452 + $0x18] sm:$0xff]
  %v3457 = vld [vmem:[%s3452 + $0x20] sm:$0xff]
  %v3458 = vld [vmem:[%s3452 + $0x28] sm:$0xff]
  %v3459 = vld [vmem:[%s3452 + $0x30] sm:$0xff]
  %v3460 = vld [vmem:[%s3452 + $0x38] sm:$0xff]
  %v3461 = vld [vmem:[%s3452 + $0x40] sm:$0xff]
  %v3462 = vld [vmem:[%s3452 + $0x48] sm:$0xff]
  %v3463 = vld [vmem:[%s3452 + $0x50] sm:$0xff]
  %v3464 = vld [vmem:[%s3452 + $0x58] sm:$0xff]
  %v3465 = vld [vmem:[%s3452 + $0x60] sm:$0xff]
  %v3466 = vld [vmem:[%s3452 + $0x68] sm:$0xff]
  %v3467 = vld [vmem:[%s3452 + $0x70] sm:$0xff]
  %v3468 = vld [vmem:[%s3452 + $0x78] sm:$0xff]
  %v3469 = vld [vmem:[%s3452 + $0x80] sm:$0xff]
  %v3470 = vld [vmem:[%s3452 + $0x88] sm:$0xff]
  %v3471 = vld [vmem:[%s3452 + $0x90] sm:$0xff]
  %v3472 = vld [vmem:[%s3452 + $0x98] sm:$0xff]
  %v3473 = vld [vmem:[%s3452 + $0xa0] sm:$0xff]
  %v3474 = vld [vmem:[%s3452 + $0xa8] sm:$0xff]
  %v3475 = vld [vmem:[%s3452 + $0xb0] sm:$0xff]
  %v3476 = vld [vmem:[%s3452 + $0xb8] sm:$0xff]
  %v3477 = vmul.f32 %v3404, %v506
  %v3478 = vmul.f32 %v3405, %v510
  %v3479 = vmul.f32 %v3406, %v514
  %v3480 = vmul.f32 %v3407, %v518
  %v3481 = vmul.f32 %v3408, %v522
  %v3482 = vmul.f32 %v3409, %v526
  %v3483 = vmul.f32 %v3410, %v530
  %v3484 = vmul.f32 %v3411, %v534
  %v3485 = vmul.f32 %v3412, %v538
  %v3486 = vmul.f32 %v3413, %v542
  %v3487 = vmul.f32 %v3414, %v546
  %v3488 = vmul.f32 %v3415, %v550
  %v3489 = vmul.f32 %v3416, %v506
  %v3490 = vmul.f32 %v3417, %v510
  %v3491 = vmul.f32 %v3418, %v514
  %v3492 = vmul.f32 %v3419, %v518
  %v3493 = vmul.f32 %v3420, %v522
  %v3494 = vmul.f32 %v3421, %v526
  %v3495 = vmul.f32 %v3422, %v530
  %v3496 = vmul.f32 %v3423, %v534
  %v3497 = vmul.f32 %v3424, %v538
  %v3498 = vmul.f32 %v3425, %v542
  %v3499 = vmul.f32 %v3426, %v546
  %v3500 = vmul.f32 %v3427, %v550
  %v3501 = vadd.f32 %v3477, 0.0
  %v3502 = vadd.f32 %v3478, 0.0
  %v3503 = vadd.f32 %v3479, 0.0
  %v3504 = vadd.f32 %v3480, 0.0
  %v3505 = vadd.f32 %v3481, 0.0
  %v3506 = vadd.f32 %v3482, 0.0
  %v3507 = vadd.f32 %v3483, 0.0
  %v3508 = vadd.f32 %v3484, 0.0
  %v3509 = vadd.f32 %v3485, 0.0
  %v3510 = vadd.f32 %v3486, 0.0
  %v3511 = vadd.f32 %v3487, 0.0
  %v3512 = vadd.f32 %v3488, 0.0
  %v3513 = vadd.f32 %v3489, 0.0
  %v3514 = vadd.f32 %v3490, 0.0
  %v3515 = vadd.f32 %v3491, 0.0
  %v3516 = vadd.f32 %v3492, 0.0
  %v3517 = vadd.f32 %v3493, 0.0
  %v3518 = vadd.f32 %v3494, 0.0
  %v3519 = vadd.f32 %v3495, 0.0
  %v3520 = vadd.f32 %v3496, 0.0
  %v3521 = vadd.f32 %v3497, 0.0
  %v3522 = vadd.f32 %v3498, 0.0
  %v3523 = vadd.f32 %v3499, 0.0
  %v3524 = vadd.f32 %v3500, 0.0
  %v3525 = vmul.f32 %v3416, %v616
  %v3526 = vmul.f32 %v3417, %v620
  %v3527 = vmul.f32 %v3418, %v624
  %v3528 = vmul.f32 %v3419, %v628
  %v3529 = vmul.f32 %v3420, %v632
  %v3530 = vmul.f32 %v3421, %v636
  %v3531 = vmul.f32 %v3422, %v640
  %v3532 = vmul.f32 %v3423, %v644
  %v3533 = vmul.f32 %v3424, %v648
  %v3534 = vmul.f32 %v3425, %v652
  %v3535 = vmul.f32 %v3426, %v656
  %v3536 = vmul.f32 %v3427, %v660
  %v3549 = vrot.slane %v3525, 1
  %v3550 = vrot.slane %v3526, 1
  %v3551 = vrot.slane %v3527, 1
  %v3552 = vrot.slane %v3528, 1
  %v3553 = vrot.slane %v3529, 1
  %v3554 = vrot.slane %v3530, 1
  %v3555 = vrot.slane %v3531, 1
  %v3556 = vrot.slane %v3532, 1
  %v3557 = vrot.slane %v3533, 1
  %v3558 = vrot.slane %v3534, 1
  %v3559 = vrot.slane %v3535, 1
  %v3560 = vrot.slane %v3536, 1
  %v3573 = vadd.f32 %v3501, %v3549
  %v3574 = vadd.f32 %v3502, %v3550
  %v3575 = vadd.f32 %v3503, %v3551
  %v3576 = vadd.f32 %v3504, %v3552
  %v3577 = vadd.f32 %v3505, %v3553
  %v3578 = vadd.f32 %v3506, %v3554
  %v3579 = vadd.f32 %v3507, %v3555
  %v3580 = vadd.f32 %v3508, %v3556
  %v3581 = vadd.f32 %v3509, %v3557
  %v3582 = vadd.f32 %v3510, %v3558
  %v3583 = vadd.f32 %v3511, %v3559
  %v3584 = vadd.f32 %v3512, %v3560
  %v3585 = vadd.f32 %v3513, %v3549
  %v3586 = vadd.f32 %v3514, %v3550
  %v3587 = vadd.f32 %v3515, %v3551
  %v3588 = vadd.f32 %v3516, %v3552
  %v3589 = vadd.f32 %v3517, %v3553
  %v3590 = vadd.f32 %v3518, %v3554
  %v3591 = vadd.f32 %v3519, %v3555
  %v3592 = vadd.f32 %v3520, %v3556
  %v3593 = vadd.f32 %v3521, %v3557
  %v3594 = vadd.f32 %v3522, %v3558
  %v3595 = vadd.f32 %v3523, %v3559
  %v3596 = vadd.f32 %v3524, %v3560
  %v3597 = vmul.f32 %v3416, %v750
  %v3598 = vmul.f32 %v3417, %v754
  %v3599 = vmul.f32 %v3418, %v758
  %v3600 = vmul.f32 %v3419, %v762
  %v3601 = vmul.f32 %v3420, %v766
  %v3602 = vmul.f32 %v3421, %v770
  %v3603 = vmul.f32 %v3422, %v774
  %v3604 = vmul.f32 %v3423, %v778
  %v3605 = vmul.f32 %v3424, %v782
  %v3606 = vmul.f32 %v3425, %v786
  %v3607 = vmul.f32 %v3426, %v790
  %v3608 = vmul.f32 %v3427, %v794
  %v3621 = vrot.slane %v3597, 2
  %v3622 = vrot.slane %v3598, 2
  %v3623 = vrot.slane %v3599, 2
  %v3624 = vrot.slane %v3600, 2
  %v3625 = vrot.slane %v3601, 2
  %v3626 = vrot.slane %v3602, 2
  %v3627 = vrot.slane %v3603, 2
  %v3628 = vrot.slane %v3604, 2
  %v3629 = vrot.slane %v3605, 2
  %v3630 = vrot.slane %v3606, 2
  %v3631 = vrot.slane %v3607, 2
  %v3632 = vrot.slane %v3608, 2
  %v3645 = vadd.f32 %v3573, %v3621
  %v3646 = vadd.f32 %v3574, %v3622
  %v3647 = vadd.f32 %v3575, %v3623
  %v3648 = vadd.f32 %v3576, %v3624
  %v3649 = vadd.f32 %v3577, %v3625
  %v3650 = vadd.f32 %v3578, %v3626
  %v3651 = vadd.f32 %v3579, %v3627
  %v3652 = vadd.f32 %v3580, %v3628
  %v3653 = vadd.f32 %v3581, %v3629
  %v3654 = vadd.f32 %v3582, %v3630
  %v3655 = vadd.f32 %v3583, %v3631
  %v3656 = vadd.f32 %v3584, %v3632
  %v3657 = vadd.f32 %v3585, %v3621
  %v3658 = vadd.f32 %v3586, %v3622
  %v3659 = vadd.f32 %v3587, %v3623
  %v3660 = vadd.f32 %v3588, %v3624
  %v3661 = vadd.f32 %v3589, %v3625
  %v3662 = vadd.f32 %v3590, %v3626
  %v3663 = vadd.f32 %v3591, %v3627
  %v3664 = vadd.f32 %v3592, %v3628
  %v3665 = vadd.f32 %v3593, %v3629
  %v3666 = vadd.f32 %v3594, %v3630
  %v3667 = vadd.f32 %v3595, %v3631
  %v3668 = vadd.f32 %v3596, %v3632
  %v3669 = vmul.f32 %v3428, %v884
  %v3670 = vmul.f32 %v3429, %v888
  %v3671 = vmul.f32 %v3430, %v892
  %v3672 = vmul.f32 %v3431, %v896
  %v3673 = vmul.f32 %v3432, %v900
  %v3674 = vmul.f32 %v3433, %v904
  %v3675 = vmul.f32 %v3434, %v908
  %v3676 = vmul.f32 %v3435, %v912
  %v3677 = vmul.f32 %v3436, %v916
  %v3678 = vmul.f32 %v3437, %v920
  %v3679 = vmul.f32 %v3438, %v924
  %v3680 = vmul.f32 %v3439, %v928
  %v3681 = vmul.f32 %v3440, %v884
  %v3682 = vmul.f32 %v3441, %v888
  %v3683 = vmul.f32 %v3442, %v892
  %v3684 = vmul.f32 %v3443, %v896
  %v3685 = vmul.f32 %v3444, %v900
  %v3686 = vmul.f32 %v3445, %v904
  %v3687 = vmul.f32 %v3446, %v908
  %v3688 = vmul.f32 %v3447, %v912
  %v3689 = vmul.f32 %v3448, %v916
  %v3690 = vmul.f32 %v3449, %v920
  %v3691 = vmul.f32 %v3450, %v924
  %v3692 = vmul.f32 %v3451, %v928
  %v3693 = vadd.f32 %v3645, %v3669
  %v3694 = vadd.f32 %v3646, %v3670
  %v3695 = vadd.f32 %v3647, %v3671
  %v3696 = vadd.f32 %v3648, %v3672
  %v3697 = vadd.f32 %v3649, %v3673
  %v3698 = vadd.f32 %v3650, %v3674
  %v3699 = vadd.f32 %v3651, %v3675
  %v3700 = vadd.f32 %v3652, %v3676
  %v3701 = vadd.f32 %v3653, %v3677
  %v3702 = vadd.f32 %v3654, %v3678
  %v3703 = vadd.f32 %v3655, %v3679
  %v3704 = vadd.f32 %v3656, %v3680
  %v3705 = vadd.f32 %v3657, %v3681
  %v3706 = vadd.f32 %v3658, %v3682
  %v3707 = vadd.f32 %v3659, %v3683
  %v3708 = vadd.f32 %v3660, %v3684
  %v3709 = vadd.f32 %v3661, %v3685
  %v3710 = vadd.f32 %v3662, %v3686
  %v3711 = vadd.f32 %v3663, %v3687
  %v3712 = vadd.f32 %v3664, %v3688
  %v3713 = vadd.f32 %v3665, %v3689
  %v3714 = vadd.f32 %v3666, %v3690
  %v3715 = vadd.f32 %v3667, %v3691
  %v3716 = vadd.f32 %v3668, %v3692
  %v3717 = vmul.f32 %v3440, %v994
  %v3718 = vmul.f32 %v3441, %v998
  %v3719 = vmul.f32 %v3442, %v1002
  %v3720 = vmul.f32 %v3443, %v1006
  %v3721 = vmul.f32 %v3444, %v1010
  %v3722 = vmul.f32 %v3445, %v1014
  %v3723 = vmul.f32 %v3446, %v1018
  %v3724 = vmul.f32 %v3447, %v1022
  %v3725 = vmul.f32 %v3448, %v1026
  %v3726 = vmul.f32 %v3449, %v1030
  %v3727 = vmul.f32 %v3450, %v1034
  %v3728 = vmul.f32 %v3451, %v1038
  %v3741 = vrot.slane %v3717, 1
  %v3742 = vrot.slane %v3718, 1
  %v3743 = vrot.slane %v3719, 1
  %v3744 = vrot.slane %v3720, 1
  %v3745 = vrot.slane %v3721, 1
  %v3746 = vrot.slane %v3722, 1
  %v3747 = vrot.slane %v3723, 1
  %v3748 = vrot.slane %v3724, 1
  %v3749 = vrot.slane %v3725, 1
  %v3750 = vrot.slane %v3726, 1
  %v3751 = vrot.slane %v3727, 1
  %v3752 = vrot.slane %v3728, 1
  %v3765 = vadd.f32 %v3693, %v3741
  %v3766 = vadd.f32 %v3694, %v3742
  %v3767 = vadd.f32 %v3695, %v3743
  %v3768 = vadd.f32 %v3696, %v3744
  %v3769 = vadd.f32 %v3697, %v3745
  %v3770 = vadd.f32 %v3698, %v3746
  %v3771 = vadd.f32 %v3699, %v3747
  %v3772 = vadd.f32 %v3700, %v3748
  %v3773 = vadd.f32 %v3701, %v3749
  %v3774 = vadd.f32 %v3702, %v3750
  %v3775 = vadd.f32 %v3703, %v3751
  %v3776 = vadd.f32 %v3704, %v3752
  %v3777 = vadd.f32 %v3705, %v3741
  %v3778 = vadd.f32 %v3706, %v3742
  %v3779 = vadd.f32 %v3707, %v3743
  %v3780 = vadd.f32 %v3708, %v3744
  %v3781 = vadd.f32 %v3709, %v3745
  %v3782 = vadd.f32 %v3710, %v3746
  %v3783 = vadd.f32 %v3711, %v3747
  %v3784 = vadd.f32 %v3712, %v3748
  %v3785 = vadd.f32 %v3713, %v3749
  %v3786 = vadd.f32 %v3714, %v3750
  %v3787 = vadd.f32 %v3715, %v3751
  %v3788 = vadd.f32 %v3716, %v3752
  %v3789 = vmul.f32 %v3440, %v1128
  %v3790 = vmul.f32 %v3441, %v1132
  %v3791 = vmul.f32 %v3442, %v1136
  %v3792 = vmul.f32 %v3443, %v1140
  %v3793 = vmul.f32 %v3444, %v1144
  %v3794 = vmul.f32 %v3445, %v1148
  %v3795 = vmul.f32 %v3446, %v1152
  %v3796 = vmul.f32 %v3447, %v1156
  %v3797 = vmul.f32 %v3448, %v1160
  %v3798 = vmul.f32 %v3449, %v1164
  %v3799 = vmul.f32 %v3450, %v1168
  %v3800 = vmul.f32 %v3451, %v1172
  %v3813 = vrot.slane %v3789, 2
  %v3814 = vrot.slane %v3790, 2
  %v3815 = vrot.slane %v3791, 2
  %v3816 = vrot.slane %v3792, 2
  %v3817 = vrot.slane %v3793, 2
  %v3818 = vrot.slane %v3794, 2
  %v3819 = vrot.slane %v3795, 2
  %v3820 = vrot.slane %v3796, 2
  %v3821 = vrot.slane %v3797, 2
  %v3822 = vrot.slane %v3798, 2
  %v3823 = vrot.slane %v3799, 2
  %v3824 = vrot.slane %v3800, 2
  %v3837 = vadd.f32 %v3765, %v3813
  %v3838 = vadd.f32 %v3766, %v3814
  %v3839 = vadd.f32 %v3767, %v3815
  %v3840 = vadd.f32 %v3768, %v3816
  %v3841 = vadd.f32 %v3769, %v3817
  %v3842 = vadd.f32 %v3770, %v3818
  %v3843 = vadd.f32 %v3771, %v3819
  %v3844 = vadd.f32 %v3772, %v3820
  %v3845 = vadd.f32 %v3773, %v3821
  %v3846 = vadd.f32 %v3774, %v3822
  %v3847 = vadd.f32 %v3775, %v3823
  %v3848 = vadd.f32 %v3776, %v3824
  %v3849 = vadd.f32 %v3777, %v3813
  %v3850 = vadd.f32 %v3778, %v3814
  %v3851 = vadd.f32 %v3779, %v3815
  %v3852 = vadd.f32 %v3780, %v3816
  %v3853 = vadd.f32 %v3781, %v3817
  %v3854 = vadd.f32 %v3782, %v3818
  %v3855 = vadd.f32 %v3783, %v3819
  %v3856 = vadd.f32 %v3784, %v3820
  %v3857 = vadd.f32 %v3785, %v3821
  %v3858 = vadd.f32 %v3786, %v3822
  %v3859 = vadd.f32 %v3787, %v3823
  %v3860 = vadd.f32 %v3788, %v3824
  %v3861 = vmul.f32 %v3453, %v1262
  %v3862 = vmul.f32 %v3454, %v1266
  %v3863 = vmul.f32 %v3455, %v1270
  %v3864 = vmul.f32 %v3456, %v1274
  %v3865 = vmul.f32 %v3457, %v1278
  %v3866 = vmul.f32 %v3458, %v1282
  %v3867 = vmul.f32 %v3459, %v1286
  %v3868 = vmul.f32 %v3460, %v1290
  %v3869 = vmul.f32 %v3461, %v1294
  %v3870 = vmul.f32 %v3462, %v1298
  %v3871 = vmul.f32 %v3463, %v1302
  %v3872 = vmul.f32 %v3464, %v1306
  %v3873 = vmul.f32 %v3465, %v1262
  %v3874 = vmul.f32 %v3466, %v1266
  %v3875 = vmul.f32 %v3467, %v1270
  %v3876 = vmul.f32 %v3468, %v1274
  %v3877 = vmul.f32 %v3469, %v1278
  %v3878 = vmul.f32 %v3470, %v1282
  %v3879 = vmul.f32 %v3471, %v1286
  %v3880 = vmul.f32 %v3472, %v1290
  %v3881 = vmul.f32 %v3473, %v1294
  %v3882 = vmul.f32 %v3474, %v1298
  %v3883 = vmul.f32 %v3475, %v1302
  %v3884 = vmul.f32 %v3476, %v1306
  %v3885 = vadd.f32 %v3837, %v3861
  %v3886 = vadd.f32 %v3838, %v3862
  %v3887 = vadd.f32 %v3839, %v3863
  %v3888 = vadd.f32 %v3840, %v3864
  %v3889 = vadd.f32 %v3841, %v3865
  %v3890 = vadd.f32 %v3842, %v3866
  %v3891 = vadd.f32 %v3843, %v3867
  %v3892 = vadd.f32 %v3844, %v3868
  %v3893 = vadd.f32 %v3845, %v3869
  %v3894 = vadd.f32 %v3846, %v3870
  %v3895 = vadd.f32 %v3847, %v3871
  %v3896 = vadd.f32 %v3848, %v3872
  %v3897 = vadd.f32 %v3849, %v3873
  %v3898 = vadd.f32 %v3850, %v3874
  %v3899 = vadd.f32 %v3851, %v3875
  %v3900 = vadd.f32 %v3852, %v3876
  %v3901 = vadd.f32 %v3853, %v3877
  %v3902 = vadd.f32 %v3854, %v3878
  %v3903 = vadd.f32 %v3855, %v3879
  %v3904 = vadd.f32 %v3856, %v3880
  %v3905 = vadd.f32 %v3857, %v3881
  %v3906 = vadd.f32 %v3858, %v3882
  %v3907 = vadd.f32 %v3859, %v3883
  %v3908 = vadd.f32 %v3860, %v3884
  %v3909 = vmul.f32 %v3465, %v1372
  %v3910 = vmul.f32 %v3466, %v1376
  %v3911 = vmul.f32 %v3467, %v1380
  %v3912 = vmul.f32 %v3468, %v1384
  %v3913 = vmul.f32 %v3469, %v1388
  %v3914 = vmul.f32 %v3470, %v1392
  %v3915 = vmul.f32 %v3471, %v1396
  %v3916 = vmul.f32 %v3472, %v1400
  %v3917 = vmul.f32 %v3473, %v1404
  %v3918 = vmul.f32 %v3474, %v1408
  %v3919 = vmul.f32 %v3475, %v1412
  %v3920 = vmul.f32 %v3476, %v1416
  %v3933 = vrot.slane %v3909, 1
  %v3934 = vrot.slane %v3910, 1
  %v3935 = vrot.slane %v3911, 1
  %v3936 = vrot.slane %v3912, 1
  %v3937 = vrot.slane %v3913, 1
  %v3938 = vrot.slane %v3914, 1
  %v3939 = vrot.slane %v3915, 1
  %v3940 = vrot.slane %v3916, 1
  %v3941 = vrot.slane %v3917, 1
  %v3942 = vrot.slane %v3918, 1
  %v3943 = vrot.slane %v3919, 1
  %v3944 = vrot.slane %v3920, 1
  %v3957 = vadd.f32 %v3885, %v3933
  %v3958 = vadd.f32 %v3886, %v3934
  %v3959 = vadd.f32 %v3887, %v3935
  %v3960 = vadd.f32 %v3888, %v3936
  %v3961 = vadd.f32 %v3889, %v3937
  %v3962 = vadd.f32 %v3890, %v3938
  %v3963 = vadd.f32 %v3891, %v3939
  %v3964 = vadd.f32 %v3892, %v3940
  %v3965 = vadd.f32 %v3893, %v3941
  %v3966 = vadd.f32 %v3894, %v3942
  %v3967 = vadd.f32 %v3895, %v3943
  %v3968 = vadd.f32 %v3896, %v3944
  %v3969 = vadd.f32 %v3897, %v3933
  %v3970 = vadd.f32 %v3898, %v3934
  %v3971 = vadd.f32 %v3899, %v3935
  %v3972 = vadd.f32 %v3900, %v3936
  %v3973 = vadd.f32 %v3901, %v3937
  %v3974 = vadd.f32 %v3902, %v3938
  %v3975 = vadd.f32 %v3903, %v3939
  %v3976 = vadd.f32 %v3904, %v3940
  %v3977 = vadd.f32 %v3905, %v3941
  %v3978 = vadd.f32 %v3906, %v3942
  %v3979 = vadd.f32 %v3907, %v3943
  %v3980 = vadd.f32 %v3908, %v3944
  %v3981 = vmul.f32 %v3465, %v1506
  %v3982 = vmul.f32 %v3466, %v1510
  %v3983 = vmul.f32 %v3467, %v1514
  %v3984 = vmul.f32 %v3468, %v1518
  %v3985 = vmul.f32 %v3469, %v1522
  %v3986 = vmul.f32 %v3470, %v1526
  %v3987 = vmul.f32 %v3471, %v1530
  %v3988 = vmul.f32 %v3472, %v1534
  %v3989 = vmul.f32 %v3473, %v1538
  %v3990 = vmul.f32 %v3474, %v1542
  %v3991 = vmul.f32 %v3475, %v1546
  %v3992 = vmul.f32 %v3476, %v1550
  %v4005 = vrot.slane %v3981, 2
  %v4006 = vrot.slane %v3982, 2
  %v4007 = vrot.slane %v3983, 2
  %v4008 = vrot.slane %v3984, 2
  %v4009 = vrot.slane %v3985, 2
  %v4010 = vrot.slane %v3986, 2
  %v4011 = vrot.slane %v3987, 2
  %v4012 = vrot.slane %v3988, 2
  %v4013 = vrot.slane %v3989, 2
  %v4014 = vrot.slane %v3990, 2
  %v4015 = vrot.slane %v3991, 2
  %v4016 = vrot.slane %v3992, 2
  %v4029 = vadd.f32 %v3957, %v4005
  %v4030 = vadd.f32 %v3958, %v4006
  %v4031 = vadd.f32 %v3959, %v4007
  %v4032 = vadd.f32 %v3960, %v4008
  %v4033 = vadd.f32 %v3961, %v4009
  %v4034 = vadd.f32 %v3962, %v4010
  %v4035 = vadd.f32 %v3963, %v4011
  %v4036 = vadd.f32 %v3964, %v4012
  %v4037 = vadd.f32 %v3965, %v4013
  %v4038 = vadd.f32 %v3966, %v4014
  %v4039 = vadd.f32 %v3967, %v4015
  %v4040 = vadd.f32 %v3968, %v4016
  %v4041 = vadd.f32 %v3969, %v4005
  %v4042 = vadd.f32 %v3970, %v4006
  %v4043 = vadd.f32 %v3971, %v4007
  %v4044 = vadd.f32 %v3972, %v4008
  %v4045 = vadd.f32 %v3973, %v4009
  %v4046 = vadd.f32 %v3974, %v4010
  %v4047 = vadd.f32 %v3975, %v4011
  %v4048 = vadd.f32 %v3976, %v4012
  %v4049 = vadd.f32 %v3977, %v4013
  %v4050 = vadd.f32 %v3978, %v4014
  %v4051 = vadd.f32 %v3979, %v4015
  %v4052 = vadd.f32 %v3980, %v4016
  %v4053 = vadd.f32 %v3247, %v4029
  %v4054 = vadd.f32 %v3248, %v4030
  %v4055 = vadd.f32 %v3249, %v4031
  %v4056 = vadd.f32 %v3250, %v4032
  %v4057 = vadd.f32 %v3251, %v4033
  %v4058 = vadd.f32 %v3252, %v4034
  %v4059 = vadd.f32 %v3253, %v4035
  %v4060 = vadd.f32 %v3254, %v4036
  %v4061 = vadd.f32 %v3255, %v4037
  %v4062 = vadd.f32 %v3256, %v4038
  %v4063 = vadd.f32 %v3257, %v4039
  %v4064 = vadd.f32 %v3258, %v4040
  %v4065 = vadd.f32 %v3259, %v4041
  %v4066 = vadd.f32 %v3260, %v4042
  %v4067 = vadd.f32 %v3261, %v4043
  %v4068 = vadd.f32 %v3262, %v4044
  %v4069 = vadd.f32 %v3263, %v4045
  %v4070 = vadd.f32 %v3264, %v4046
  %v4071 = vadd.f32 %v3265, %v4047
  %v4072 = vadd.f32 %v3266, %v4048
  %v4073 = vadd.f32 %v3267, %v4049
  %v4074 = vadd.f32 %v3268, %v4050
  %v4075 = vadd.f32 %v3269, %v4051
  %v4076 = vadd.f32 %v3270, %v4052
  %v4077 = vmul.f32 %v4029, %v4029
  %v4078 = vmul.f32 %v4030, %v4030
  %v4079 = vmul.f32 %v4031, %v4031
  %v4080 = vmul.f32 %v4032, %v4032
  %v4081 = vmul.f32 %v4033, %v4033
  %v4082 = vmul.f32 %v4034, %v4034
  %v4083 = vmul.f32 %v4035, %v4035
  %v4084 = vmul.f32 %v4036, %v4036
  %v4085 = vmul.f32 %v4037, %v4037
  %v4086 = vmul.f32 %v4038, %v4038
  %v4087 = vmul.f32 %v4039, %v4039
  %v4088 = vmul.f32 %v4040, %v4040
  %v4089 = vmul.f32 %v4041, %v4041
  %v4090 = vmul.f32 %v4042, %v4042
  %v4091 = vmul.f32 %v4043, %v4043
  %v4092 = vmul.f32 %v4044, %v4044
  %v4093 = vmul.f32 %v4045, %v4045
  %v4094 = vmul.f32 %v4046, %v4046
  %v4095 = vmul.f32 %v4047, %v4047
  %v4096 = vmul.f32 %v4048, %v4048
  %v4097 = vmul.f32 %v4049, %v4049
  %v4098 = vmul.f32 %v4050, %v4050
  %v4099 = vmul.f32 %v4051, %v4051
  %v4100 = vmul.f32 %v4052, %v4052
  %v4101 = vadd.f32 %v3295, %v4077
  %v4102 = vadd.f32 %v3296, %v4078
  %v4103 = vadd.f32 %v3297, %v4079
  %v4104 = vadd.f32 %v3298, %v4080
  %v4105 = vadd.f32 %v3299, %v4081
  %v4106 = vadd.f32 %v3300, %v4082
  %v4107 = vadd.f32 %v3301, %v4083
  %v4108 = vadd.f32 %v3302, %v4084
  %v4109 = vadd.f32 %v3303, %v4085
  %v4110 = vadd.f32 %v3304, %v4086
  %v4111 = vadd.f32 %v3305, %v4087
  %v4112 = vadd.f32 %v3306, %v4088
  %v4113 = vadd.f32 %v3307, %v4089
  %v4114 = vadd.f32 %v3308, %v4090
  %v4115 = vadd.f32 %v3309, %v4091
  %v4116 = vadd.f32 %v3310, %v4092
  %v4117 = vadd.f32 %v3311, %v4093
  %v4118 = vadd.f32 %v3312, %v4094
  %v4119 = vadd.f32 %v3313, %v4095
  %v4120 = vadd.f32 %v3314, %v4096
  %v4121 = vadd.f32 %v3315, %v4097
  %v4122 = vadd.f32 %v3316, %v4098
  %v4123 = vadd.f32 %v3317, %v4099
  %v4124 = vadd.f32 %v3318, %v4100
  %v4149 = vrot.slane %v4029, 7
  %v4150 = vrot.slane %v4041, 7
  %v4151 = vsel %vm1731, %v4149, %v4150
  %v4152 = vrot.slane %v4030, 7
  %v4153 = vrot.slane %v4042, 7
  %v4154 = vsel %vm1731, %v4152, %v4153
  %v4155 = vrot.slane %v4031, 7
  %v4156 = vrot.slane %v4043, 7
  %v4157 = vsel %vm1731, %v4155, %v4156
  %v4158 = vrot.slane %v4032, 7
  %v4159 = vrot.slane %v4044, 7
  %v4160 = vsel %vm1731, %v4158, %v4159
  %v4161 = vrot.slane %v4033, 7
  %v4162 = vrot.slane %v4045, 7
  %v4163 = vsel %vm1731, %v4161, %v4162
  %v4164 = vrot.slane %v4034, 7
  %v4165 = vrot.slane %v4046, 7
  %v4166 = vsel %vm1731, %v4164, %v4165
  %v4167 = vrot.slane %v4035, 7
  %v4168 = vrot.slane %v4047, 7
  %v4169 = vsel %vm1731, %v4167, %v4168
  %v4170 = vrot.slane %v4036, 7
  %v4171 = vrot.slane %v4048, 7
  %v4172 = vsel %vm1731, %v4170, %v4171
  %v4173 = vrot.slane %v4037, 7
  %v4174 = vrot.slane %v4049, 7
  %v4175 = vsel %vm1731, %v4173, %v4174
  %v4176 = vrot.slane %v4038, 7
  %v4177 = vrot.slane %v4050, 7
  %v4178 = vsel %vm1731, %v4176, %v4177
  %v4179 = vrot.slane %v4039, 7
  %v4180 = vrot.slane %v4051, 7
  %v4181 = vsel %vm1731, %v4179, %v4180
  %v4182 = vrot.slane %v4040, 7
  %v4183 = vrot.slane %v4052, 7
  %v4184 = vsel %vm1731, %v4182, %v4183
  %s4197 = scalar_lea.vmem %s4, 288
  %4198 = vst [vmem:[%s4197] sm:$0x7f] %v4151
  %4199 = vst [vmem:[%s4197 + $0x8] sm:$0x7f] %v4154
  %4200 = vst [vmem:[%s4197 + $0x10] sm:$0x7f] %v4157
  %4201 = vst [vmem:[%s4197 + $0x18] sm:$0x7f] %v4160
  %4202 = vst [vmem:[%s4197 + $0x20] sm:$0x7f] %v4163
  %4203 = vst [vmem:[%s4197 + $0x28] sm:$0x7f] %v4166
  %4204 = vst [vmem:[%s4197 + $0x30] sm:$0x7f] %v4169
  %4205 = vst [vmem:[%s4197 + $0x38] sm:$0x7f] %v4172
  %4206 = vst [vmem:[%s4197 + $0x40] sm:$0x7f] %v4175
  %4207 = vst [vmem:[%s4197 + $0x48] sm:$0x7f] %v4178
  %4208 = vst [vmem:[%s4197 + $0x50] sm:$0x7f] %v4181
  %4209 = vst [vmem:[%s4197 + $0x58] sm:$0x7f] %v4184
  %v4210 = vld [vmem:[%s2646] sm:$0xff]
  %v4211 = vld [vmem:[%s2646 + $0x8] sm:$0xff]
  %v4212 = vld [vmem:[%s2646 + $0x10] sm:$0xff]
  %v4213 = vld [vmem:[%s2646 + $0x18] sm:$0xff]
  %v4214 = vld [vmem:[%s2646 + $0x20] sm:$0xff]
  %v4215 = vld [vmem:[%s2646 + $0x28] sm:$0xff]
  %v4216 = vld [vmem:[%s2646 + $0x30] sm:$0xff]
  %v4217 = vld [vmem:[%s2646 + $0x38] sm:$0xff]
  %v4218 = vld [vmem:[%s2646 + $0x40] sm:$0xff]
  %v4219 = vld [vmem:[%s2646 + $0x48] sm:$0xff]
  %v4220 = vld [vmem:[%s2646 + $0x50] sm:$0xff]
  %v4221 = vld [vmem:[%s2646 + $0x58] sm:$0xff]
  %v4222 = vld [vmem:[%s2646 + $0x60] sm:$0xff]
  %v4223 = vld [vmem:[%s2646 + $0x68] sm:$0xff]
  %v4224 = vld [vmem:[%s2646 + $0x70] sm:$0xff]
  %v4225 = vld [vmem:[%s2646 + $0x78] sm:$0xff]
  %v4226 = vld [vmem:[%s2646 + $0x80] sm:$0xff]
  %v4227 = vld [vmem:[%s2646 + $0x88] sm:$0xff]
  %v4228 = vld [vmem:[%s2646 + $0x90] sm:$0xff]
  %v4229 = vld [vmem:[%s2646 + $0x98] sm:$0xff]
  %v4230 = vld [vmem:[%s2646 + $0xa0] sm:$0xff]
  %v4231 = vld [vmem:[%s2646 + $0xa8] sm:$0xff]
  %v4232 = vld [vmem:[%s2646 + $0xb0] sm:$0xff]
  %v4233 = vld [vmem:[%s2646 + $0xb8] sm:$0xff]
  %v4234 = vld [vmem:[%s3452] sm:$0xff]
  %v4235 = vld [vmem:[%s3452 + $0x8] sm:$0xff]
  %v4236 = vld [vmem:[%s3452 + $0x10] sm:$0xff]
  %v4237 = vld [vmem:[%s3452 + $0x18] sm:$0xff]
  %v4238 = vld [vmem:[%s3452 + $0x20] sm:$0xff]
  %v4239 = vld [vmem:[%s3452 + $0x28] sm:$0xff]
  %v4240 = vld [vmem:[%s3452 + $0x30] sm:$0xff]
  %v4241 = vld [vmem:[%s3452 + $0x38] sm:$0xff]
  %v4242 = vld [vmem:[%s3452 + $0x40] sm:$0xff]
  %v4243 = vld [vmem:[%s3452 + $0x48] sm:$0xff]
  %v4244 = vld [vmem:[%s3452 + $0x50] sm:$0xff]
  %v4245 = vld [vmem:[%s3452 + $0x58] sm:$0xff]
  %v4246 = vld [vmem:[%s3452 + $0x60] sm:$0xff]
  %v4247 = vld [vmem:[%s3452 + $0x68] sm:$0xff]
  %v4248 = vld [vmem:[%s3452 + $0x70] sm:$0xff]
  %v4249 = vld [vmem:[%s3452 + $0x78] sm:$0xff]
  %v4250 = vld [vmem:[%s3452 + $0x80] sm:$0xff]
  %v4251 = vld [vmem:[%s3452 + $0x88] sm:$0xff]
  %v4252 = vld [vmem:[%s3452 + $0x90] sm:$0xff]
  %v4253 = vld [vmem:[%s3452 + $0x98] sm:$0xff]
  %v4254 = vld [vmem:[%s3452 + $0xa0] sm:$0xff]
  %v4255 = vld [vmem:[%s3452 + $0xa8] sm:$0xff]
  %v4256 = vld [vmem:[%s3452 + $0xb0] sm:$0xff]
  %v4257 = vld [vmem:[%s3452 + $0xb8] sm:$0xff]
  %s4258 = scalar_lea.vmem [#allocation2], 1152
  %v4259 = vld [vmem:[%s4258] sm:$0xff]
  %v4260 = vld [vmem:[%s4258 + $0x8] sm:$0xff]
  %v4261 = vld [vmem:[%s4258 + $0x10] sm:$0xff]
  %v4262 = vld [vmem:[%s4258 + $0x18] sm:$0xff]
  %v4263 = vld [vmem:[%s4258 + $0x20] sm:$0xff]
  %v4264 = vld [vmem:[%s4258 + $0x28] sm:$0xff]
  %v4265 = vld [vmem:[%s4258 + $0x30] sm:$0xff]
  %v4266 = vld [vmem:[%s4258 + $0x38] sm:$0xff]
  %v4267 = vld [vmem:[%s4258 + $0x40] sm:$0xff]
  %v4268 = vld [vmem:[%s4258 + $0x48] sm:$0xff]
  %v4269 = vld [vmem:[%s4258 + $0x50] sm:$0xff]
  %v4270 = vld [vmem:[%s4258 + $0x58] sm:$0xff]
  %v4271 = vld [vmem:[%s4258 + $0x60] sm:$0xff]
  %v4272 = vld [vmem:[%s4258 + $0x68] sm:$0xff]
  %v4273 = vld [vmem:[%s4258 + $0x70] sm:$0xff]
  %v4274 = vld [vmem:[%s4258 + $0x78] sm:$0xff]
  %v4275 = vld [vmem:[%s4258 + $0x80] sm:$0xff]
  %v4276 = vld [vmem:[%s4258 + $0x88] sm:$0xff]
  %v4277 = vld [vmem:[%s4258 + $0x90] sm:$0xff]
  %v4278 = vld [vmem:[%s4258 + $0x98] sm:$0xff]
  %v4279 = vld [vmem:[%s4258 + $0xa0] sm:$0xff]
  %v4280 = vld [vmem:[%s4258 + $0xa8] sm:$0xff]
  %v4281 = vld [vmem:[%s4258 + $0xb0] sm:$0xff]
  %v4282 = vld [vmem:[%s4258 + $0xb8] sm:$0xff]
  %v4283 = vmul.f32 %v4210, %v506
  %v4284 = vmul.f32 %v4211, %v510
  %v4285 = vmul.f32 %v4212, %v514
  %v4286 = vmul.f32 %v4213, %v518
  %v4287 = vmul.f32 %v4214, %v522
  %v4288 = vmul.f32 %v4215, %v526
  %v4289 = vmul.f32 %v4216, %v530
  %v4290 = vmul.f32 %v4217, %v534
  %v4291 = vmul.f32 %v4218, %v538
  %v4292 = vmul.f32 %v4219, %v542
  %v4293 = vmul.f32 %v4220, %v546
  %v4294 = vmul.f32 %v4221, %v550
  %v4295 = vmul.f32 %v4222, %v506
  %v4296 = vmul.f32 %v4223, %v510
  %v4297 = vmul.f32 %v4224, %v514
  %v4298 = vmul.f32 %v4225, %v518
  %v4299 = vmul.f32 %v4226, %v522
  %v4300 = vmul.f32 %v4227, %v526
  %v4301 = vmul.f32 %v4228, %v530
  %v4302 = vmul.f32 %v4229, %v534
  %v4303 = vmul.f32 %v4230, %v538
  %v4304 = vmul.f32 %v4231, %v542
  %v4305 = vmul.f32 %v4232, %v546
  %v4306 = vmul.f32 %v4233, %v550
  %v4307 = vadd.f32 %v4283, 0.0
  %v4308 = vadd.f32 %v4284, 0.0
  %v4309 = vadd.f32 %v4285, 0.0
  %v4310 = vadd.f32 %v4286, 0.0
  %v4311 = vadd.f32 %v4287, 0.0
  %v4312 = vadd.f32 %v4288, 0.0
  %v4313 = vadd.f32 %v4289, 0.0
  %v4314 = vadd.f32 %v4290, 0.0
  %v4315 = vadd.f32 %v4291, 0.0
  %v4316 = vadd.f32 %v4292, 0.0
  %v4317 = vadd.f32 %v4293, 0.0
  %v4318 = vadd.f32 %v4294, 0.0
  %v4319 = vadd.f32 %v4295, 0.0
  %v4320 = vadd.f32 %v4296, 0.0
  %v4321 = vadd.f32 %v4297, 0.0
  %v4322 = vadd.f32 %v4298, 0.0
  %v4323 = vadd.f32 %v4299, 0.0
  %v4324 = vadd.f32 %v4300, 0.0
  %v4325 = vadd.f32 %v4301, 0.0
  %v4326 = vadd.f32 %v4302, 0.0
  %v4327 = vadd.f32 %v4303, 0.0
  %v4328 = vadd.f32 %v4304, 0.0
  %v4329 = vadd.f32 %v4305, 0.0
  %v4330 = vadd.f32 %v4306, 0.0
  %v4331 = vmul.f32 %v4222, %v616
  %v4332 = vmul.f32 %v4223, %v620
  %v4333 = vmul.f32 %v4224, %v624
  %v4334 = vmul.f32 %v4225, %v628
  %v4335 = vmul.f32 %v4226, %v632
  %v4336 = vmul.f32 %v4227, %v636
  %v4337 = vmul.f32 %v4228, %v640
  %v4338 = vmul.f32 %v4229, %v644
  %v4339 = vmul.f32 %v4230, %v648
  %v4340 = vmul.f32 %v4231, %v652
  %v4341 = vmul.f32 %v4232, %v656
  %v4342 = vmul.f32 %v4233, %v660
  %v4355 = vrot.slane %v4331, 1
  %v4356 = vrot.slane %v4332, 1
  %v4357 = vrot.slane %v4333, 1
  %v4358 = vrot.slane %v4334, 1
  %v4359 = vrot.slane %v4335, 1
  %v4360 = vrot.slane %v4336, 1
  %v4361 = vrot.slane %v4337, 1
  %v4362 = vrot.slane %v4338, 1
  %v4363 = vrot.slane %v4339, 1
  %v4364 = vrot.slane %v4340, 1
  %v4365 = vrot.slane %v4341, 1
  %v4366 = vrot.slane %v4342, 1
  %v4379 = vadd.f32 %v4307, %v4355
  %v4380 = vadd.f32 %v4308, %v4356
  %v4381 = vadd.f32 %v4309, %v4357
  %v4382 = vadd.f32 %v4310, %v4358
  %v4383 = vadd.f32 %v4311, %v4359
  %v4384 = vadd.f32 %v4312, %v4360
  %v4385 = vadd.f32 %v4313, %v4361
  %v4386 = vadd.f32 %v4314, %v4362
  %v4387 = vadd.f32 %v4315, %v4363
  %v4388 = vadd.f32 %v4316, %v4364
  %v4389 = vadd.f32 %v4317, %v4365
  %v4390 = vadd.f32 %v4318, %v4366
  %v4391 = vadd.f32 %v4319, %v4355
  %v4392 = vadd.f32 %v4320, %v4356
  %v4393 = vadd.f32 %v4321, %v4357
  %v4394 = vadd.f32 %v4322, %v4358
  %v4395 = vadd.f32 %v4323, %v4359
  %v4396 = vadd.f32 %v4324, %v4360
  %v4397 = vadd.f32 %v4325, %v4361
  %v4398 = vadd.f32 %v4326, %v4362
  %v4399 = vadd.f32 %v4327, %v4363
  %v4400 = vadd.f32 %v4328, %v4364
  %v4401 = vadd.f32 %v4329, %v4365
  %v4402 = vadd.f32 %v4330, %v4366
  %v4403 = vmul.f32 %v4222, %v750
  %v4404 = vmul.f32 %v4223, %v754
  %v4405 = vmul.f32 %v4224, %v758
  %v4406 = vmul.f32 %v4225, %v762
  %v4407 = vmul.f32 %v4226, %v766
  %v4408 = vmul.f32 %v4227, %v770
  %v4409 = vmul.f32 %v4228, %v774
  %v4410 = vmul.f32 %v4229, %v778
  %v4411 = vmul.f32 %v4230, %v782
  %v4412 = vmul.f32 %v4231, %v786
  %v4413 = vmul.f32 %v4232, %v790
  %v4414 = vmul.f32 %v4233, %v794
  %v4427 = vrot.slane %v4403, 2
  %v4428 = vrot.slane %v4404, 2
  %v4429 = vrot.slane %v4405, 2
  %v4430 = vrot.slane %v4406, 2
  %v4431 = vrot.slane %v4407, 2
  %v4432 = vrot.slane %v4408, 2
  %v4433 = vrot.slane %v4409, 2
  %v4434 = vrot.slane %v4410, 2
  %v4435 = vrot.slane %v4411, 2
  %v4436 = vrot.slane %v4412, 2
  %v4437 = vrot.slane %v4413, 2
  %v4438 = vrot.slane %v4414, 2
  %v4451 = vadd.f32 %v4379, %v4427
  %v4452 = vadd.f32 %v4380, %v4428
  %v4453 = vadd.f32 %v4381, %v4429
  %v4454 = vadd.f32 %v4382, %v4430
  %v4455 = vadd.f32 %v4383, %v4431
  %v4456 = vadd.f32 %v4384, %v4432
  %v4457 = vadd.f32 %v4385, %v4433
  %v4458 = vadd.f32 %v4386, %v4434
  %v4459 = vadd.f32 %v4387, %v4435
  %v4460 = vadd.f32 %v4388, %v4436
  %v4461 = vadd.f32 %v4389, %v4437
  %v4462 = vadd.f32 %v4390, %v4438
  %v4463 = vadd.f32 %v4391, %v4427
  %v4464 = vadd.f32 %v4392, %v4428
  %v4465 = vadd.f32 %v4393, %v4429
  %v4466 = vadd.f32 %v4394, %v4430
  %v4467 = vadd.f32 %v4395, %v4431
  %v4468 = vadd.f32 %v4396, %v4432
  %v4469 = vadd.f32 %v4397, %v4433
  %v4470 = vadd.f32 %v4398, %v4434
  %v4471 = vadd.f32 %v4399, %v4435
  %v4472 = vadd.f32 %v4400, %v4436
  %v4473 = vadd.f32 %v4401, %v4437
  %v4474 = vadd.f32 %v4402, %v4438
  %v4475 = vmul.f32 %v4234, %v884
  %v4476 = vmul.f32 %v4235, %v888
  %v4477 = vmul.f32 %v4236, %v892
  %v4478 = vmul.f32 %v4237, %v896
  %v4479 = vmul.f32 %v4238, %v900
  %v4480 = vmul.f32 %v4239, %v904
  %v4481 = vmul.f32 %v4240, %v908
  %v4482 = vmul.f32 %v4241, %v912
  %v4483 = vmul.f32 %v4242, %v916
  %v4484 = vmul.f32 %v4243, %v920
  %v4485 = vmul.f32 %v4244, %v924
  %v4486 = vmul.f32 %v4245, %v928
  %v4487 = vmul.f32 %v4246, %v884
  %v4488 = vmul.f32 %v4247, %v888
  %v4489 = vmul.f32 %v4248, %v892
  %v4490 = vmul.f32 %v4249, %v896
  %v4491 = vmul.f32 %v4250, %v900
  %v4492 = vmul.f32 %v4251, %v904
  %v4493 = vmul.f32 %v4252, %v908
  %v4494 = vmul.f32 %v4253, %v912
  %v4495 = vmul.f32 %v4254, %v916
  %v4496 = vmul.f32 %v4255, %v920
  %v4497 = vmul.f32 %v4256, %v924
  %v4498 = vmul.f32 %v4257, %v928
  %v4499 = vadd.f32 %v4451, %v4475
  %v4500 = vadd.f32 %v4452, %v4476
  %v4501 = vadd.f32 %v4453, %v4477
  %v4502 = vadd.f32 %v4454, %v4478
  %v4503 = vadd.f32 %v4455, %v4479
  %v4504 = vadd.f32 %v4456, %v4480
  %v4505 = vadd.f32 %v4457, %v4481
  %v4506 = vadd.f32 %v4458, %v4482
  %v4507 = vadd.f32 %v4459, %v4483
  %v4508 = vadd.f32 %v4460, %v4484
  %v4509 = vadd.f32 %v4461, %v4485
  %v4510 = vadd.f32 %v4462, %v4486
  %v4511 = vadd.f32 %v4463, %v4487
  %v4512 = vadd.f32 %v4464, %v4488
  %v4513 = vadd.f32 %v4465, %v4489
  %v4514 = vadd.f32 %v4466, %v4490
  %v4515 = vadd.f32 %v4467, %v4491
  %v4516 = vadd.f32 %v4468, %v4492
  %v4517 = vadd.f32 %v4469, %v4493
  %v4518 = vadd.f32 %v4470, %v4494
  %v4519 = vadd.f32 %v4471, %v4495
  %v4520 = vadd.f32 %v4472, %v4496
  %v4521 = vadd.f32 %v4473, %v4497
  %v4522 = vadd.f32 %v4474, %v4498
  %v4523 = vmul.f32 %v4246, %v994
  %v4524 = vmul.f32 %v4247, %v998
  %v4525 = vmul.f32 %v4248, %v1002
  %v4526 = vmul.f32 %v4249, %v1006
  %v4527 = vmul.f32 %v4250, %v1010
  %v4528 = vmul.f32 %v4251, %v1014
  %v4529 = vmul.f32 %v4252, %v1018
  %v4530 = vmul.f32 %v4253, %v1022
  %v4531 = vmul.f32 %v4254, %v1026
  %v4532 = vmul.f32 %v4255, %v1030
  %v4533 = vmul.f32 %v4256, %v1034
  %v4534 = vmul.f32 %v4257, %v1038
  %v4547 = vrot.slane %v4523, 1
  %v4548 = vrot.slane %v4524, 1
  %v4549 = vrot.slane %v4525, 1
  %v4550 = vrot.slane %v4526, 1
  %v4551 = vrot.slane %v4527, 1
  %v4552 = vrot.slane %v4528, 1
  %v4553 = vrot.slane %v4529, 1
  %v4554 = vrot.slane %v4530, 1
  %v4555 = vrot.slane %v4531, 1
  %v4556 = vrot.slane %v4532, 1
  %v4557 = vrot.slane %v4533, 1
  %v4558 = vrot.slane %v4534, 1
  %v4571 = vadd.f32 %v4499, %v4547
  %v4572 = vadd.f32 %v4500, %v4548
  %v4573 = vadd.f32 %v4501, %v4549
  %v4574 = vadd.f32 %v4502, %v4550
  %v4575 = vadd.f32 %v4503, %v4551
  %v4576 = vadd.f32 %v4504, %v4552
  %v4577 = vadd.f32 %v4505, %v4553
  %v4578 = vadd.f32 %v4506, %v4554
  %v4579 = vadd.f32 %v4507, %v4555
  %v4580 = vadd.f32 %v4508, %v4556
  %v4581 = vadd.f32 %v4509, %v4557
  %v4582 = vadd.f32 %v4510, %v4558
  %v4583 = vadd.f32 %v4511, %v4547
  %v4584 = vadd.f32 %v4512, %v4548
  %v4585 = vadd.f32 %v4513, %v4549
  %v4586 = vadd.f32 %v4514, %v4550
  %v4587 = vadd.f32 %v4515, %v4551
  %v4588 = vadd.f32 %v4516, %v4552
  %v4589 = vadd.f32 %v4517, %v4553
  %v4590 = vadd.f32 %v4518, %v4554
  %v4591 = vadd.f32 %v4519, %v4555
  %v4592 = vadd.f32 %v4520, %v4556
  %v4593 = vadd.f32 %v4521, %v4557
  %v4594 = vadd.f32 %v4522, %v4558
  %v4595 = vmul.f32 %v4246, %v1128
  %v4596 = vmul.f32 %v4247, %v1132
  %v4597 = vmul.f32 %v4248, %v1136
  %v4598 = vmul.f32 %v4249, %v1140
  %v4599 = vmul.f32 %v4250, %v1144
  %v4600 = vmul.f32 %v4251, %v1148
  %v4601 = vmul.f32 %v4252, %v1152
  %v4602 = vmul.f32 %v4253, %v1156
  %v4603 = vmul.f32 %v4254, %v1160
  %v4604 = vmul.f32 %v4255, %v1164
  %v4605 = vmul.f32 %v4256, %v1168
  %v4606 = vmul.f32 %v4257, %v1172
  %v4619 = vrot.slane %v4595, 2
  %v4620 = vrot.slane %v4596, 2
  %v4621 = vrot.slane %v4597, 2
  %v4622 = vrot.slane %v4598, 2
  %v4623 = vrot.slane %v4599, 2
  %v4624 = vrot.slane %v4600, 2
  %v4625 = vrot.slane %v4601, 2
  %v4626 = vrot.slane %v4602, 2
  %v4627 = vrot.slane %v4603, 2
  %v4628 = vrot.slane %v4604, 2
  %v4629 = vrot.slane %v4605, 2
  %v4630 = vrot.slane %v4606, 2
  %v4643 = vadd.f32 %v4571, %v4619
  %v4644 = vadd.f32 %v4572, %v4620
  %v4645 = vadd.f32 %v4573, %v4621
  %v4646 = vadd.f32 %v4574, %v4622
  %v4647 = vadd.f32 %v4575, %v4623
  %v4648 = vadd.f32 %v4576, %v4624
  %v4649 = vadd.f32 %v4577, %v4625
  %v4650 = vadd.f32 %v4578, %v4626
  %v4651 = vadd.f32 %v4579, %v4627
  %v4652 = vadd.f32 %v4580, %v4628
  %v4653 = vadd.f32 %v4581, %v4629
  %v4654 = vadd.f32 %v4582, %v4630
  %v4655 = vadd.f32 %v4583, %v4619
  %v4656 = vadd.f32 %v4584, %v4620
  %v4657 = vadd.f32 %v4585, %v4621
  %v4658 = vadd.f32 %v4586, %v4622
  %v4659 = vadd.f32 %v4587, %v4623
  %v4660 = vadd.f32 %v4588, %v4624
  %v4661 = vadd.f32 %v4589, %v4625
  %v4662 = vadd.f32 %v4590, %v4626
  %v4663 = vadd.f32 %v4591, %v4627
  %v4664 = vadd.f32 %v4592, %v4628
  %v4665 = vadd.f32 %v4593, %v4629
  %v4666 = vadd.f32 %v4594, %v4630
  %v4667 = vmul.f32 %v4259, %v1262
  %v4668 = vmul.f32 %v4260, %v1266
  %v4669 = vmul.f32 %v4261, %v1270
  %v4670 = vmul.f32 %v4262, %v1274
  %v4671 = vmul.f32 %v4263, %v1278
  %v4672 = vmul.f32 %v4264, %v1282
  %v4673 = vmul.f32 %v4265, %v1286
  %v4674 = vmul.f32 %v4266, %v1290
  %v4675 = vmul.f32 %v4267, %v1294
  %v4676 = vmul.f32 %v4268, %v1298
  %v4677 = vmul.f32 %v4269, %v1302
  %v4678 = vmul.f32 %v4270, %v1306
  %v4679 = vmul.f32 %v4271, %v1262
  %v4680 = vmul.f32 %v4272, %v1266
  %v4681 = vmul.f32 %v4273, %v1270
  %v4682 = vmul.f32 %v4274, %v1274
  %v4683 = vmul.f32 %v4275, %v1278
  %v4684 = vmul.f32 %v4276, %v1282
  %v4685 = vmul.f32 %v4277, %v1286
  %v4686 = vmul.f32 %v4278, %v1290
  %v4687 = vmul.f32 %v4279, %v1294
  %v4688 = vmul.f32 %v4280, %v1298
  %v4689 = vmul.f32 %v4281, %v1302
  %v4690 = vmul.f32 %v4282, %v1306
  %v4691 = vadd.f32 %v4643, %v4667
  %v4692 = vadd.f32 %v4644, %v4668
  %v4693 = vadd.f32 %v4645, %v4669
  %v4694 = vadd.f32 %v4646, %v4670
  %v4695 = vadd.f32 %v4647, %v4671
  %v4696 = vadd.f32 %v4648, %v4672
  %v4697 = vadd.f32 %v4649, %v4673
  %v4698 = vadd.f32 %v4650, %v4674
  %v4699 = vadd.f32 %v4651, %v4675
  %v4700 = vadd.f32 %v4652, %v4676
  %v4701 = vadd.f32 %v4653, %v4677
  %v4702 = vadd.f32 %v4654, %v4678
  %v4703 = vadd.f32 %v4655, %v4679
  %v4704 = vadd.f32 %v4656, %v4680
  %v4705 = vadd.f32 %v4657, %v4681
  %v4706 = vadd.f32 %v4658, %v4682
  %v4707 = vadd.f32 %v4659, %v4683
  %v4708 = vadd.f32 %v4660, %v4684
  %v4709 = vadd.f32 %v4661, %v4685
  %v4710 = vadd.f32 %v4662, %v4686
  %v4711 = vadd.f32 %v4663, %v4687
  %v4712 = vadd.f32 %v4664, %v4688
  %v4713 = vadd.f32 %v4665, %v4689
  %v4714 = vadd.f32 %v4666, %v4690
  %v4715 = vmul.f32 %v4271, %v1372
  %v4716 = vmul.f32 %v4272, %v1376
  %v4717 = vmul.f32 %v4273, %v1380
  %v4718 = vmul.f32 %v4274, %v1384
  %v4719 = vmul.f32 %v4275, %v1388
  %v4720 = vmul.f32 %v4276, %v1392
  %v4721 = vmul.f32 %v4277, %v1396
  %v4722 = vmul.f32 %v4278, %v1400
  %v4723 = vmul.f32 %v4279, %v1404
  %v4724 = vmul.f32 %v4280, %v1408
  %v4725 = vmul.f32 %v4281, %v1412
  %v4726 = vmul.f32 %v4282, %v1416
  %v4739 = vrot.slane %v4715, 1
  %v4740 = vrot.slane %v4716, 1
  %v4741 = vrot.slane %v4717, 1
  %v4742 = vrot.slane %v4718, 1
  %v4743 = vrot.slane %v4719, 1
  %v4744 = vrot.slane %v4720, 1
  %v4745 = vrot.slane %v4721, 1
  %v4746 = vrot.slane %v4722, 1
  %v4747 = vrot.slane %v4723, 1
  %v4748 = vrot.slane %v4724, 1
  %v4749 = vrot.slane %v4725, 1
  %v4750 = vrot.slane %v4726, 1
  %v4763 = vadd.f32 %v4691, %v4739
  %v4764 = vadd.f32 %v4692, %v4740
  %v4765 = vadd.f32 %v4693, %v4741
  %v4766 = vadd.f32 %v4694, %v4742
  %v4767 = vadd.f32 %v4695, %v4743
  %v4768 = vadd.f32 %v4696, %v4744
  %v4769 = vadd.f32 %v4697, %v4745
  %v4770 = vadd.f32 %v4698, %v4746
  %v4771 = vadd.f32 %v4699, %v4747
  %v4772 = vadd.f32 %v4700, %v4748
  %v4773 = vadd.f32 %v4701, %v4749
  %v4774 = vadd.f32 %v4702, %v4750
  %v4775 = vadd.f32 %v4703, %v4739
  %v4776 = vadd.f32 %v4704, %v4740
  %v4777 = vadd.f32 %v4705, %v4741
  %v4778 = vadd.f32 %v4706, %v4742
  %v4779 = vadd.f32 %v4707, %v4743
  %v4780 = vadd.f32 %v4708, %v4744
  %v4781 = vadd.f32 %v4709, %v4745
  %v4782 = vadd.f32 %v4710, %v4746
  %v4783 = vadd.f32 %v4711, %v4747
  %v4784 = vadd.f32 %v4712, %v4748
  %v4785 = vadd.f32 %v4713, %v4749
  %v4786 = vadd.f32 %v4714, %v4750
  %v4787 = vmul.f32 %v4271, %v1506
  %v4788 = vmul.f32 %v4272, %v1510
  %v4789 = vmul.f32 %v4273, %v1514
  %v4790 = vmul.f32 %v4274, %v1518
  %v4791 = vmul.f32 %v4275, %v1522
  %v4792 = vmul.f32 %v4276, %v1526
  %v4793 = vmul.f32 %v4277, %v1530
  %v4794 = vmul.f32 %v4278, %v1534
  %v4795 = vmul.f32 %v4279, %v1538
  %v4796 = vmul.f32 %v4280, %v1542
  %v4797 = vmul.f32 %v4281, %v1546
  %v4798 = vmul.f32 %v4282, %v1550
  %v4811 = vrot.slane %v4787, 2
  %v4812 = vrot.slane %v4788, 2
  %v4813 = vrot.slane %v4789, 2
  %v4814 = vrot.slane %v4790, 2
  %v4815 = vrot.slane %v4791, 2
  %v4816 = vrot.slane %v4792, 2
  %v4817 = vrot.slane %v4793, 2
  %v4818 = vrot.slane %v4794, 2
  %v4819 = vrot.slane %v4795, 2
  %v4820 = vrot.slane %v4796, 2
  %v4821 = vrot.slane %v4797, 2
  %v4822 = vrot.slane %v4798, 2
  %v4835 = vadd.f32 %v4763, %v4811
  %v4836 = vadd.f32 %v4764, %v4812
  %v4837 = vadd.f32 %v4765, %v4813
  %v4838 = vadd.f32 %v4766, %v4814
  %v4839 = vadd.f32 %v4767, %v4815
  %v4840 = vadd.f32 %v4768, %v4816
  %v4841 = vadd.f32 %v4769, %v4817
  %v4842 = vadd.f32 %v4770, %v4818
  %v4843 = vadd.f32 %v4771, %v4819
  %v4844 = vadd.f32 %v4772, %v4820
  %v4845 = vadd.f32 %v4773, %v4821
  %v4846 = vadd.f32 %v4774, %v4822
  %v4847 = vadd.f32 %v4775, %v4811
  %v4848 = vadd.f32 %v4776, %v4812
  %v4849 = vadd.f32 %v4777, %v4813
  %v4850 = vadd.f32 %v4778, %v4814
  %v4851 = vadd.f32 %v4779, %v4815
  %v4852 = vadd.f32 %v4780, %v4816
  %v4853 = vadd.f32 %v4781, %v4817
  %v4854 = vadd.f32 %v4782, %v4818
  %v4855 = vadd.f32 %v4783, %v4819
  %v4856 = vadd.f32 %v4784, %v4820
  %v4857 = vadd.f32 %v4785, %v4821
  %v4858 = vadd.f32 %v4786, %v4822
  %v4859 = vadd.f32 %v4053, %v4835
  %v4860 = vadd.f32 %v4054, %v4836
  %v4861 = vadd.f32 %v4055, %v4837
  %v4862 = vadd.f32 %v4056, %v4838
  %v4863 = vadd.f32 %v4057, %v4839
  %v4864 = vadd.f32 %v4058, %v4840
  %v4865 = vadd.f32 %v4059, %v4841
  %v4866 = vadd.f32 %v4060, %v4842
  %v4867 = vadd.f32 %v4061, %v4843
  %v4868 = vadd.f32 %v4062, %v4844
  %v4869 = vadd.f32 %v4063, %v4845
  %v4870 = vadd.f32 %v4064, %v4846
  %v4871 = vadd.f32 %v4065, %v4847
  %v4872 = vadd.f32 %v4066, %v4848
  %v4873 = vadd.f32 %v4067, %v4849
  %v4874 = vadd.f32 %v4068, %v4850
  %v4875 = vadd.f32 %v4069, %v4851
  %v4876 = vadd.f32 %v4070, %v4852
  %v4877 = vadd.f32 %v4071, %v4853
  %v4878 = vadd.f32 %v4072, %v4854
  %v4879 = vadd.f32 %v4073, %v4855
  %v4880 = vadd.f32 %v4074, %v4856
  %v4881 = vadd.f32 %v4075, %v4857
  %v4882 = vadd.f32 %v4076, %v4858
  %v4883 = vmul.f32 %v4835, %v4835
  %v4884 = vmul.f32 %v4836, %v4836
  %v4885 = vmul.f32 %v4837, %v4837
  %v4886 = vmul.f32 %v4838, %v4838
  %v4887 = vmul.f32 %v4839, %v4839
  %v4888 = vmul.f32 %v4840, %v4840
  %v4889 = vmul.f32 %v4841, %v4841
  %v4890 = vmul.f32 %v4842, %v4842
  %v4891 = vmul.f32 %v4843, %v4843
  %v4892 = vmul.f32 %v4844, %v4844
  %v4893 = vmul.f32 %v4845, %v4845
  %v4894 = vmul.f32 %v4846, %v4846
  %v4895 = vmul.f32 %v4847, %v4847
  %v4896 = vmul.f32 %v4848, %v4848
  %v4897 = vmul.f32 %v4849, %v4849
  %v4898 = vmul.f32 %v4850, %v4850
  %v4899 = vmul.f32 %v4851, %v4851
  %v4900 = vmul.f32 %v4852, %v4852
  %v4901 = vmul.f32 %v4853, %v4853
  %v4902 = vmul.f32 %v4854, %v4854
  %v4903 = vmul.f32 %v4855, %v4855
  %v4904 = vmul.f32 %v4856, %v4856
  %v4905 = vmul.f32 %v4857, %v4857
  %v4906 = vmul.f32 %v4858, %v4858
  %v4907 = vadd.f32 %v4101, %v4883
  %v4908 = vadd.f32 %v4102, %v4884
  %v4909 = vadd.f32 %v4103, %v4885
  %v4910 = vadd.f32 %v4104, %v4886
  %v4911 = vadd.f32 %v4105, %v4887
  %v4912 = vadd.f32 %v4106, %v4888
  %v4913 = vadd.f32 %v4107, %v4889
  %v4914 = vadd.f32 %v4108, %v4890
  %v4915 = vadd.f32 %v4109, %v4891
  %v4916 = vadd.f32 %v4110, %v4892
  %v4917 = vadd.f32 %v4111, %v4893
  %v4918 = vadd.f32 %v4112, %v4894
  %v4919 = vadd.f32 %v4113, %v4895
  %v4920 = vadd.f32 %v4114, %v4896
  %v4921 = vadd.f32 %v4115, %v4897
  %v4922 = vadd.f32 %v4116, %v4898
  %v4923 = vadd.f32 %v4117, %v4899
  %v4924 = vadd.f32 %v4118, %v4900
  %v4925 = vadd.f32 %v4119, %v4901
  %v4926 = vadd.f32 %v4120, %v4902
  %v4927 = vadd.f32 %v4121, %v4903
  %v4928 = vadd.f32 %v4122, %v4904
  %v4929 = vadd.f32 %v4123, %v4905
  %v4930 = vadd.f32 %v4124, %v4906
  %v4955 = vrot.slane %v4835, 7
  %v4956 = vrot.slane %v4847, 7
  %v4957 = vsel %vm1731, %v4955, %v4956
  %v4958 = vrot.slane %v4836, 7
  %v4959 = vrot.slane %v4848, 7
  %v4960 = vsel %vm1731, %v4958, %v4959
  %v4961 = vrot.slane %v4837, 7
  %v4962 = vrot.slane %v4849, 7
  %v4963 = vsel %vm1731, %v4961, %v4962
  %v4964 = vrot.slane %v4838, 7
  %v4965 = vrot.slane %v4850, 7
  %v4966 = vsel %vm1731, %v4964, %v4965
  %v4967 = vrot.slane %v4839, 7
  %v4968 = vrot.slane %v4851, 7
  %v4969 = vsel %vm1731, %v4967, %v4968
  %v4970 = vrot.slane %v4840, 7
  %v4971 = vrot.slane %v4852, 7
  %v4972 = vsel %vm1731, %v4970, %v4971
  %v4973 = vrot.slane %v4841, 7
  %v4974 = vrot.slane %v4853, 7
  %v4975 = vsel %vm1731, %v4973, %v4974
  %v4976 = vrot.slane %v4842, 7
  %v4977 = vrot.slane %v4854, 7
  %v4978 = vsel %vm1731, %v4976, %v4977
  %v4979 = vrot.slane %v4843, 7
  %v4980 = vrot.slane %v4855, 7
  %v4981 = vsel %vm1731, %v4979, %v4980
  %v4982 = vrot.slane %v4844, 7
  %v4983 = vrot.slane %v4856, 7
  %v4984 = vsel %vm1731, %v4982, %v4983
  %v4985 = vrot.slane %v4845, 7
  %v4986 = vrot.slane %v4857, 7
  %v4987 = vsel %vm1731, %v4985, %v4986
  %v4988 = vrot.slane %v4846, 7
  %v4989 = vrot.slane %v4858, 7
  %v4990 = vsel %vm1731, %v4988, %v4989
  %s5003 = scalar_lea.vmem %s4, 384
  %5004 = vst [vmem:[%s5003] sm:$0x7f] %v4957
  %5005 = vst [vmem:[%s5003 + $0x8] sm:$0x7f] %v4960
  %5006 = vst [vmem:[%s5003 + $0x10] sm:$0x7f] %v4963
  %5007 = vst [vmem:[%s5003 + $0x18] sm:$0x7f] %v4966
  %5008 = vst [vmem:[%s5003 + $0x20] sm:$0x7f] %v4969
  %5009 = vst [vmem:[%s5003 + $0x28] sm:$0x7f] %v4972
  %5010 = vst [vmem:[%s5003 + $0x30] sm:$0x7f] %v4975
  %5011 = vst [vmem:[%s5003 + $0x38] sm:$0x7f] %v4978
  %5012 = vst [vmem:[%s5003 + $0x40] sm:$0x7f] %v4981
  %5013 = vst [vmem:[%s5003 + $0x48] sm:$0x7f] %v4984
  %5014 = vst [vmem:[%s5003 + $0x50] sm:$0x7f] %v4987
  %5015 = vst [vmem:[%s5003 + $0x58] sm:$0x7f] %v4990
  %v5016 = vld [vmem:[%s3452] sm:$0xff]
  %v5017 = vld [vmem:[%s3452 + $0x8] sm:$0xff]
  %v5018 = vld [vmem:[%s3452 + $0x10] sm:$0xff]
  %v5019 = vld [vmem:[%s3452 + $0x18] sm:$0xff]
  %v5020 = vld [vmem:[%s3452 + $0x20] sm:$0xff]
  %v5021 = vld [vmem:[%s3452 + $0x28] sm:$0xff]
  %v5022 = vld [vmem:[%s3452 + $0x30] sm:$0xff]
  %v5023 = vld [vmem:[%s3452 + $0x38] sm:$0xff]
  %v5024 = vld [vmem:[%s3452 + $0x40] sm:$0xff]
  %v5025 = vld [vmem:[%s3452 + $0x48] sm:$0xff]
  %v5026 = vld [vmem:[%s3452 + $0x50] sm:$0xff]
  %v5027 = vld [vmem:[%s3452 + $0x58] sm:$0xff]
  %v5028 = vld [vmem:[%s3452 + $0x60] sm:$0xff]
  %v5029 = vld [vmem:[%s3452 + $0x68] sm:$0xff]
  %v5030 = vld [vmem:[%s3452 + $0x70] sm:$0xff]
  %v5031 = vld [vmem:[%s3452 + $0x78] sm:$0xff]
  %v5032 = vld [vmem:[%s3452 + $0x80] sm:$0xff]
  %v5033 = vld [vmem:[%s3452 + $0x88] sm:$0xff]
  %v5034 = vld [vmem:[%s3452 + $0x90] sm:$0xff]
  %v5035 = vld [vmem:[%s3452 + $0x98] sm:$0xff]
  %v5036 = vld [vmem:[%s3452 + $0xa0] sm:$0xff]
  %v5037 = vld [vmem:[%s3452 + $0xa8] sm:$0xff]
  %v5038 = vld [vmem:[%s3452 + $0xb0] sm:$0xff]
  %v5039 = vld [vmem:[%s3452 + $0xb8] sm:$0xff]
  %v5040 = vld [vmem:[%s4258] sm:$0xff]
  %v5041 = vld [vmem:[%s4258 + $0x8] sm:$0xff]
  %v5042 = vld [vmem:[%s4258 + $0x10] sm:$0xff]
  %v5043 = vld [vmem:[%s4258 + $0x18] sm:$0xff]
  %v5044 = vld [vmem:[%s4258 + $0x20] sm:$0xff]
  %v5045 = vld [vmem:[%s4258 + $0x28] sm:$0xff]
  %v5046 = vld [vmem:[%s4258 + $0x30] sm:$0xff]
  %v5047 = vld [vmem:[%s4258 + $0x38] sm:$0xff]
  %v5048 = vld [vmem:[%s4258 + $0x40] sm:$0xff]
  %v5049 = vld [vmem:[%s4258 + $0x48] sm:$0xff]
  %v5050 = vld [vmem:[%s4258 + $0x50] sm:$0xff]
  %v5051 = vld [vmem:[%s4258 + $0x58] sm:$0xff]
  %v5052 = vld [vmem:[%s4258 + $0x60] sm:$0xff]
  %v5053 = vld [vmem:[%s4258 + $0x68] sm:$0xff]
  %v5054 = vld [vmem:[%s4258 + $0x70] sm:$0xff]
  %v5055 = vld [vmem:[%s4258 + $0x78] sm:$0xff]
  %v5056 = vld [vmem:[%s4258 + $0x80] sm:$0xff]
  %v5057 = vld [vmem:[%s4258 + $0x88] sm:$0xff]
  %v5058 = vld [vmem:[%s4258 + $0x90] sm:$0xff]
  %v5059 = vld [vmem:[%s4258 + $0x98] sm:$0xff]
  %v5060 = vld [vmem:[%s4258 + $0xa0] sm:$0xff]
  %v5061 = vld [vmem:[%s4258 + $0xa8] sm:$0xff]
  %v5062 = vld [vmem:[%s4258 + $0xb0] sm:$0xff]
  %v5063 = vld [vmem:[%s4258 + $0xb8] sm:$0xff]
  %s5064 = scalar_lea.vmem [#allocation2], 1344
  %v5065 = vld [vmem:[%s5064] sm:$0xff]
  %v5066 = vld [vmem:[%s5064 + $0x8] sm:$0xff]
  %v5067 = vld [vmem:[%s5064 + $0x10] sm:$0xff]
  %v5068 = vld [vmem:[%s5064 + $0x18] sm:$0xff]
  %v5069 = vld [vmem:[%s5064 + $0x20] sm:$0xff]
  %v5070 = vld [vmem:[%s5064 + $0x28] sm:$0xff]
  %v5071 = vld [vmem:[%s5064 + $0x30] sm:$0xff]
  %v5072 = vld [vmem:[%s5064 + $0x38] sm:$0xff]
  %v5073 = vld [vmem:[%s5064 + $0x40] sm:$0xff]
  %v5074 = vld [vmem:[%s5064 + $0x48] sm:$0xff]
  %v5075 = vld [vmem:[%s5064 + $0x50] sm:$0xff]
  %v5076 = vld [vmem:[%s5064 + $0x58] sm:$0xff]
  %v5077 = vld [vmem:[%s5064 + $0x60] sm:$0xff]
  %v5078 = vld [vmem:[%s5064 + $0x68] sm:$0xff]
  %v5079 = vld [vmem:[%s5064 + $0x70] sm:$0xff]
  %v5080 = vld [vmem:[%s5064 + $0x78] sm:$0xff]
  %v5081 = vld [vmem:[%s5064 + $0x80] sm:$0xff]
  %v5082 = vld [vmem:[%s5064 + $0x88] sm:$0xff]
  %v5083 = vld [vmem:[%s5064 + $0x90] sm:$0xff]
  %v5084 = vld [vmem:[%s5064 + $0x98] sm:$0xff]
  %v5085 = vld [vmem:[%s5064 + $0xa0] sm:$0xff]
  %v5086 = vld [vmem:[%s5064 + $0xa8] sm:$0xff]
  %v5087 = vld [vmem:[%s5064 + $0xb0] sm:$0xff]
  %v5088 = vld [vmem:[%s5064 + $0xb8] sm:$0xff]
  %v5089 = vmul.f32 %v5016, %v506
  %v5090 = vmul.f32 %v5017, %v510
  %v5091 = vmul.f32 %v5018, %v514
  %v5092 = vmul.f32 %v5019, %v518
  %v5093 = vmul.f32 %v5020, %v522
  %v5094 = vmul.f32 %v5021, %v526
  %v5095 = vmul.f32 %v5022, %v530
  %v5096 = vmul.f32 %v5023, %v534
  %v5097 = vmul.f32 %v5024, %v538
  %v5098 = vmul.f32 %v5025, %v542
  %v5099 = vmul.f32 %v5026, %v546
  %v5100 = vmul.f32 %v5027, %v550
  %v5101 = vmul.f32 %v5028, %v506
  %v5102 = vmul.f32 %v5029, %v510
  %v5103 = vmul.f32 %v5030, %v514
  %v5104 = vmul.f32 %v5031, %v518
  %v5105 = vmul.f32 %v5032, %v522
  %v5106 = vmul.f32 %v5033, %v526
  %v5107 = vmul.f32 %v5034, %v530
  %v5108 = vmul.f32 %v5035, %v534
  %v5109 = vmul.f32 %v5036, %v538
  %v5110 = vmul.f32 %v5037, %v542
  %v5111 = vmul.f32 %v5038, %v546
  %v5112 = vmul.f32 %v5039, %v550
  %v5113 = vadd.f32 %v5089, 0.0
  %v5114 = vadd.f32 %v5090, 0.0
  %v5115 = vadd.f32 %v5091, 0.0
  %v5116 = vadd.f32 %v5092, 0.0
  %v5117 = vadd.f32 %v5093, 0.0
  %v5118 = vadd.f32 %v5094, 0.0
  %v5119 = vadd.f32 %v5095, 0.0
  %v5120 = vadd.f32 %v5096, 0.0
  %v5121 = vadd.f32 %v5097, 0.0
  %v5122 = vadd.f32 %v5098, 0.0
  %v5123 = vadd.f32 %v5099, 0.0
  %v5124 = vadd.f32 %v5100, 0.0
  %v5125 = vadd.f32 %v5101, 0.0
  %v5126 = vadd.f32 %v5102, 0.0
  %v5127 = vadd.f32 %v5103, 0.0
  %v5128 = vadd.f32 %v5104, 0.0
  %v5129 = vadd.f32 %v5105, 0.0
  %v5130 = vadd.f32 %v5106, 0.0
  %v5131 = vadd.f32 %v5107, 0.0
  %v5132 = vadd.f32 %v5108, 0.0
  %v5133 = vadd.f32 %v5109, 0.0
  %v5134 = vadd.f32 %v5110, 0.0
  %v5135 = vadd.f32 %v5111, 0.0
  %v5136 = vadd.f32 %v5112, 0.0
  %v5137 = vmul.f32 %v5028, %v616
  %v5138 = vmul.f32 %v5029, %v620
  %v5139 = vmul.f32 %v5030, %v624
  %v5140 = vmul.f32 %v5031, %v628
  %v5141 = vmul.f32 %v5032, %v632
  %v5142 = vmul.f32 %v5033, %v636
  %v5143 = vmul.f32 %v5034, %v640
  %v5144 = vmul.f32 %v5035, %v644
  %v5145 = vmul.f32 %v5036, %v648
  %v5146 = vmul.f32 %v5037, %v652
  %v5147 = vmul.f32 %v5038, %v656
  %v5148 = vmul.f32 %v5039, %v660
  %v5161 = vrot.slane %v5137, 1
  %v5162 = vrot.slane %v5138, 1
  %v5163 = vrot.slane %v5139, 1
  %v5164 = vrot.slane %v5140, 1
  %v5165 = vrot.slane %v5141, 1
  %v5166 = vrot.slane %v5142, 1
  %v5167 = vrot.slane %v5143, 1
  %v5168 = vrot.slane %v5144, 1
  %v5169 = vrot.slane %v5145, 1
  %v5170 = vrot.slane %v5146, 1
  %v5171 = vrot.slane %v5147, 1
  %v5172 = vrot.slane %v5148, 1
  %v5185 = vadd.f32 %v5113, %v5161
  %v5186 = vadd.f32 %v5114, %v5162
  %v5187 = vadd.f32 %v5115, %v5163
  %v5188 = vadd.f32 %v5116, %v5164
  %v5189 = vadd.f32 %v5117, %v5165
  %v5190 = vadd.f32 %v5118, %v5166
  %v5191 = vadd.f32 %v5119, %v5167
  %v5192 = vadd.f32 %v5120, %v5168
  %v5193 = vadd.f32 %v5121, %v5169
  %v5194 = vadd.f32 %v5122, %v5170
  %v5195 = vadd.f32 %v5123, %v5171
  %v5196 = vadd.f32 %v5124, %v5172
  %v5197 = vadd.f32 %v5125, %v5161
  %v5198 = vadd.f32 %v5126, %v5162
  %v5199 = vadd.f32 %v5127, %v5163
  %v5200 = vadd.f32 %v5128, %v5164
  %v5201 = vadd.f32 %v5129, %v5165
  %v5202 = vadd.f32 %v5130, %v5166
  %v5203 = vadd.f32 %v5131, %v5167
  %v5204 = vadd.f32 %v5132, %v5168
  %v5205 = vadd.f32 %v5133, %v5169
  %v5206 = vadd.f32 %v5134, %v5170
  %v5207 = vadd.f32 %v5135, %v5171
  %v5208 = vadd.f32 %v5136, %v5172
  %v5209 = vmul.f32 %v5028, %v750
  %v5210 = vmul.f32 %v5029, %v754
  %v5211 = vmul.f32 %v5030, %v758
  %v5212 = vmul.f32 %v5031, %v762
  %v5213 = vmul.f32 %v5032, %v766
  %v5214 = vmul.f32 %v5033, %v770
  %v5215 = vmul.f32 %v5034, %v774
  %v5216 = vmul.f32 %v5035, %v778
  %v5217 = vmul.f32 %v5036, %v782
  %v5218 = vmul.f32 %v5037, %v786
  %v5219 = vmul.f32 %v5038, %v790
  %v5220 = vmul.f32 %v5039, %v794
  %v5233 = vrot.slane %v5209, 2
  %v5234 = vrot.slane %v5210, 2
  %v5235 = vrot.slane %v5211, 2
  %v5236 = vrot.slane %v5212, 2
  %v5237 = vrot.slane %v5213, 2
  %v5238 = vrot.slane %v5214, 2
  %v5239 = vrot.slane %v5215, 2
  %v5240 = vrot.slane %v5216, 2
  %v5241 = vrot.slane %v5217, 2
  %v5242 = vrot.slane %v5218, 2
  %v5243 = vrot.slane %v5219, 2
  %v5244 = vrot.slane %v5220, 2
  %v5257 = vadd.f32 %v5185, %v5233
  %v5258 = vadd.f32 %v5186, %v5234
  %v5259 = vadd.f32 %v5187, %v5235
  %v5260 = vadd.f32 %v5188, %v5236
  %v5261 = vadd.f32 %v5189, %v5237
  %v5262 = vadd.f32 %v5190, %v5238
  %v5263 = vadd.f32 %v5191, %v5239
  %v5264 = vadd.f32 %v5192, %v5240
  %v5265 = vadd.f32 %v5193, %v5241
  %v5266 = vadd.f32 %v5194, %v5242
  %v5267 = vadd.f32 %v5195, %v5243
  %v5268 = vadd.f32 %v5196, %v5244
  %v5269 = vadd.f32 %v5197, %v5233
  %v5270 = vadd.f32 %v5198, %v5234
  %v5271 = vadd.f32 %v5199, %v5235
  %v5272 = vadd.f32 %v5200, %v5236
  %v5273 = vadd.f32 %v5201, %v5237
  %v5274 = vadd.f32 %v5202, %v5238
  %v5275 = vadd.f32 %v5203, %v5239
  %v5276 = vadd.f32 %v5204, %v5240
  %v5277 = vadd.f32 %v5205, %v5241
  %v5278 = vadd.f32 %v5206, %v5242
  %v5279 = vadd.f32 %v5207, %v5243
  %v5280 = vadd.f32 %v5208, %v5244
  %v5281 = vmul.f32 %v5040, %v884
  %v5282 = vmul.f32 %v5041, %v888
  %v5283 = vmul.f32 %v5042, %v892
  %v5284 = vmul.f32 %v5043, %v896
  %v5285 = vmul.f32 %v5044, %v900
  %v5286 = vmul.f32 %v5045, %v904
  %v5287 = vmul.f32 %v5046, %v908
  %v5288 = vmul.f32 %v5047, %v912
  %v5289 = vmul.f32 %v5048, %v916
  %v5290 = vmul.f32 %v5049, %v920
  %v5291 = vmul.f32 %v5050, %v924
  %v5292 = vmul.f32 %v5051, %v928
  %v5293 = vmul.f32 %v5052, %v884
  %v5294 = vmul.f32 %v5053, %v888
  %v5295 = vmul.f32 %v5054, %v892
  %v5296 = vmul.f32 %v5055, %v896
  %v5297 = vmul.f32 %v5056, %v900
  %v5298 = vmul.f32 %v5057, %v904
  %v5299 = vmul.f32 %v5058, %v908
  %v5300 = vmul.f32 %v5059, %v912
  %v5301 = vmul.f32 %v5060, %v916
  %v5302 = vmul.f32 %v5061, %v920
  %v5303 = vmul.f32 %v5062, %v924
  %v5304 = vmul.f32 %v5063, %v928
  %v5305 = vadd.f32 %v5257, %v5281
  %v5306 = vadd.f32 %v5258, %v5282
  %v5307 = vadd.f32 %v5259, %v5283
  %v5308 = vadd.f32 %v5260, %v5284
  %v5309 = vadd.f32 %v5261, %v5285
  %v5310 = vadd.f32 %v5262, %v5286
  %v5311 = vadd.f32 %v5263, %v5287
  %v5312 = vadd.f32 %v5264, %v5288
  %v5313 = vadd.f32 %v5265, %v5289
  %v5314 = vadd.f32 %v5266, %v5290
  %v5315 = vadd.f32 %v5267, %v5291
  %v5316 = vadd.f32 %v5268, %v5292
  %v5317 = vadd.f32 %v5269, %v5293
  %v5318 = vadd.f32 %v5270, %v5294
  %v5319 = vadd.f32 %v5271, %v5295
  %v5320 = vadd.f32 %v5272, %v5296
  %v5321 = vadd.f32 %v5273, %v5297
  %v5322 = vadd.f32 %v5274, %v5298
  %v5323 = vadd.f32 %v5275, %v5299
  %v5324 = vadd.f32 %v5276, %v5300
  %v5325 = vadd.f32 %v5277, %v5301
  %v5326 = vadd.f32 %v5278, %v5302
  %v5327 = vadd.f32 %v5279, %v5303
  %v5328 = vadd.f32 %v5280, %v5304
  %v5329 = vmul.f32 %v5052, %v994
  %v5330 = vmul.f32 %v5053, %v998
  %v5331 = vmul.f32 %v5054, %v1002
  %v5332 = vmul.f32 %v5055, %v1006
  %v5333 = vmul.f32 %v5056, %v1010
  %v5334 = vmul.f32 %v5057, %v1014
  %v5335 = vmul.f32 %v5058, %v1018
  %v5336 = vmul.f32 %v5059, %v1022
  %v5337 = vmul.f32 %v5060, %v1026
  %v5338 = vmul.f32 %v5061, %v1030
  %v5339 = vmul.f32 %v5062, %v1034
  %v5340 = vmul.f32 %v5063, %v1038
  %v5353 = vrot.slane %v5329, 1
  %v5354 = vrot.slane %v5330, 1
  %v5355 = vrot.slane %v5331, 1
  %v5356 = vrot.slane %v5332, 1
  %v5357 = vrot.slane %v5333, 1
  %v5358 = vrot.slane %v5334, 1
  %v5359 = vrot.slane %v5335, 1
  %v5360 = vrot.slane %v5336, 1
  %v5361 = vrot.slane %v5337, 1
  %v5362 = vrot.slane %v5338, 1
  %v5363 = vrot.slane %v5339, 1
  %v5364 = vrot.slane %v5340, 1
  %v5377 = vadd.f32 %v5305, %v5353
  %v5378 = vadd.f32 %v5306, %v5354
  %v5379 = vadd.f32 %v5307, %v5355
  %v5380 = vadd.f32 %v5308, %v5356
  %v5381 = vadd.f32 %v5309, %v5357
  %v5382 = vadd.f32 %v5310, %v5358
  %v5383 = vadd.f32 %v5311, %v5359
  %v5384 = vadd.f32 %v5312, %v5360
  %v5385 = vadd.f32 %v5313, %v5361
  %v5386 = vadd.f32 %v5314, %v5362
  %v5387 = vadd.f32 %v5315, %v5363
  %v5388 = vadd.f32 %v5316, %v5364
  %v5389 = vadd.f32 %v5317, %v5353
  %v5390 = vadd.f32 %v5318, %v5354
  %v5391 = vadd.f32 %v5319, %v5355
  %v5392 = vadd.f32 %v5320, %v5356
  %v5393 = vadd.f32 %v5321, %v5357
  %v5394 = vadd.f32 %v5322, %v5358
  %v5395 = vadd.f32 %v5323, %v5359
  %v5396 = vadd.f32 %v5324, %v5360
  %v5397 = vadd.f32 %v5325, %v5361
  %v5398 = vadd.f32 %v5326, %v5362
  %v5399 = vadd.f32 %v5327, %v5363
  %v5400 = vadd.f32 %v5328, %v5364
  %v5401 = vmul.f32 %v5052, %v1128
  %v5402 = vmul.f32 %v5053, %v1132
  %v5403 = vmul.f32 %v5054, %v1136
  %v5404 = vmul.f32 %v5055, %v1140
  %v5405 = vmul.f32 %v5056, %v1144
  %v5406 = vmul.f32 %v5057, %v1148
  %v5407 = vmul.f32 %v5058, %v1152
  %v5408 = vmul.f32 %v5059, %v1156
  %v5409 = vmul.f32 %v5060, %v1160
  %v5410 = vmul.f32 %v5061, %v1164
  %v5411 = vmul.f32 %v5062, %v1168
  %v5412 = vmul.f32 %v5063, %v1172
  %v5425 = vrot.slane %v5401, 2
  %v5426 = vrot.slane %v5402, 2
  %v5427 = vrot.slane %v5403, 2
  %v5428 = vrot.slane %v5404, 2
  %v5429 = vrot.slane %v5405, 2
  %v5430 = vrot.slane %v5406, 2
  %v5431 = vrot.slane %v5407, 2
  %v5432 = vrot.slane %v5408, 2
  %v5433 = vrot.slane %v5409, 2
  %v5434 = vrot.slane %v5410, 2
  %v5435 = vrot.slane %v5411, 2
  %v5436 = vrot.slane %v5412, 2
  %v5449 = vadd.f32 %v5377, %v5425
  %v5450 = vadd.f32 %v5378, %v5426
  %v5451 = vadd.f32 %v5379, %v5427
  %v5452 = vadd.f32 %v5380, %v5428
  %v5453 = vadd.f32 %v5381, %v5429
  %v5454 = vadd.f32 %v5382, %v5430
  %v5455 = vadd.f32 %v5383, %v5431
  %v5456 = vadd.f32 %v5384, %v5432
  %v5457 = vadd.f32 %v5385, %v5433
  %v5458 = vadd.f32 %v5386, %v5434
  %v5459 = vadd.f32 %v5387, %v5435
  %v5460 = vadd.f32 %v5388, %v5436
  %v5461 = vadd.f32 %v5389, %v5425
  %v5462 = vadd.f32 %v5390, %v5426
  %v5463 = vadd.f32 %v5391, %v5427
  %v5464 = vadd.f32 %v5392, %v5428
  %v5465 = vadd.f32 %v5393, %v5429
  %v5466 = vadd.f32 %v5394, %v5430
  %v5467 = vadd.f32 %v5395, %v5431
  %v5468 = vadd.f32 %v5396, %v5432
  %v5469 = vadd.f32 %v5397, %v5433
  %v5470 = vadd.f32 %v5398, %v5434
  %v5471 = vadd.f32 %v5399, %v5435
  %v5472 = vadd.f32 %v5400, %v5436
  %v5473 = vmul.f32 %v5065, %v1262
  %v5474 = vmul.f32 %v5066, %v1266
  %v5475 = vmul.f32 %v5067, %v1270
  %v5476 = vmul.f32 %v5068, %v1274
  %v5477 = vmul.f32 %v5069, %v1278
  %v5478 = vmul.f32 %v5070, %v1282
  %v5479 = vmul.f32 %v5071, %v1286
  %v5480 = vmul.f32 %v5072, %v1290
  %v5481 = vmul.f32 %v5073, %v1294
  %v5482 = vmul.f32 %v5074, %v1298
  %v5483 = vmul.f32 %v5075, %v1302
  %v5484 = vmul.f32 %v5076, %v1306
  %v5485 = vmul.f32 %v5077, %v1262
  %v5486 = vmul.f32 %v5078, %v1266
  %v5487 = vmul.f32 %v5079, %v1270
  %v5488 = vmul.f32 %v5080, %v1274
  %v5489 = vmul.f32 %v5081, %v1278
  %v5490 = vmul.f32 %v5082, %v1282
  %v5491 = vmul.f32 %v5083, %v1286
  %v5492 = vmul.f32 %v5084, %v1290
  %v5493 = vmul.f32 %v5085, %v1294
  %v5494 = vmul.f32 %v5086, %v1298
  %v5495 = vmul.f32 %v5087, %v1302
  %v5496 = vmul.f32 %v5088, %v1306
  %v5497 = vadd.f32 %v5449, %v5473
  %v5498 = vadd.f32 %v5450, %v5474
  %v5499 = vadd.f32 %v5451, %v5475
  %v5500 = vadd.f32 %v5452, %v5476
  %v5501 = vadd.f32 %v5453, %v5477
  %v5502 = vadd.f32 %v5454, %v5478
  %v5503 = vadd.f32 %v5455, %v5479
  %v5504 = vadd.f32 %v5456, %v5480
  %v5505 = vadd.f32 %v5457, %v5481
  %v5506 = vadd.f32 %v5458, %v5482
  %v5507 = vadd.f32 %v5459, %v5483
  %v5508 = vadd.f32 %v5460, %v5484
  %v5509 = vadd.f32 %v5461, %v5485
  %v5510 = vadd.f32 %v5462, %v5486
  %v5511 = vadd.f32 %v5463, %v5487
  %v5512 = vadd.f32 %v5464, %v5488
  %v5513 = vadd.f32 %v5465, %v5489
  %v5514 = vadd.f32 %v5466, %v5490
  %v5515 = vadd.f32 %v5467, %v5491
  %v5516 = vadd.f32 %v5468, %v5492
  %v5517 = vadd.f32 %v5469, %v5493
  %v5518 = vadd.f32 %v5470, %v5494
  %v5519 = vadd.f32 %v5471, %v5495
  %v5520 = vadd.f32 %v5472, %v5496
  %v5521 = vmul.f32 %v5077, %v1372
  %v5522 = vmul.f32 %v5078, %v1376
  %v5523 = vmul.f32 %v5079, %v1380
  %v5524 = vmul.f32 %v5080, %v1384
  %v5525 = vmul.f32 %v5081, %v1388
  %v5526 = vmul.f32 %v5082, %v1392
  %v5527 = vmul.f32 %v5083, %v1396
  %v5528 = vmul.f32 %v5084, %v1400
  %v5529 = vmul.f32 %v5085, %v1404
  %v5530 = vmul.f32 %v5086, %v1408
  %v5531 = vmul.f32 %v5087, %v1412
  %v5532 = vmul.f32 %v5088, %v1416
  %v5545 = vrot.slane %v5521, 1
  %v5546 = vrot.slane %v5522, 1
  %v5547 = vrot.slane %v5523, 1
  %v5548 = vrot.slane %v5524, 1
  %v5549 = vrot.slane %v5525, 1
  %v5550 = vrot.slane %v5526, 1
  %v5551 = vrot.slane %v5527, 1
  %v5552 = vrot.slane %v5528, 1
  %v5553 = vrot.slane %v5529, 1
  %v5554 = vrot.slane %v5530, 1
  %v5555 = vrot.slane %v5531, 1
  %v5556 = vrot.slane %v5532, 1
  %v5569 = vadd.f32 %v5497, %v5545
  %v5570 = vadd.f32 %v5498, %v5546
  %v5571 = vadd.f32 %v5499, %v5547
  %v5572 = vadd.f32 %v5500, %v5548
  %v5573 = vadd.f32 %v5501, %v5549
  %v5574 = vadd.f32 %v5502, %v5550
  %v5575 = vadd.f32 %v5503, %v5551
  %v5576 = vadd.f32 %v5504, %v5552
  %v5577 = vadd.f32 %v5505, %v5553
  %v5578 = vadd.f32 %v5506, %v5554
  %v5579 = vadd.f32 %v5507, %v5555
  %v5580 = vadd.f32 %v5508, %v5556
  %v5581 = vadd.f32 %v5509, %v5545
  %v5582 = vadd.f32 %v5510, %v5546
  %v5583 = vadd.f32 %v5511, %v5547
  %v5584 = vadd.f32 %v5512, %v5548
  %v5585 = vadd.f32 %v5513, %v5549
  %v5586 = vadd.f32 %v5514, %v5550
  %v5587 = vadd.f32 %v5515, %v5551
  %v5588 = vadd.f32 %v5516, %v5552
  %v5589 = vadd.f32 %v5517, %v5553
  %v5590 = vadd.f32 %v5518, %v5554
  %v5591 = vadd.f32 %v5519, %v5555
  %v5592 = vadd.f32 %v5520, %v5556
  %v5593 = vmul.f32 %v5077, %v1506
  %v5594 = vmul.f32 %v5078, %v1510
  %v5595 = vmul.f32 %v5079, %v1514
  %v5596 = vmul.f32 %v5080, %v1518
  %v5597 = vmul.f32 %v5081, %v1522
  %v5598 = vmul.f32 %v5082, %v1526
  %v5599 = vmul.f32 %v5083, %v1530
  %v5600 = vmul.f32 %v5084, %v1534
  %v5601 = vmul.f32 %v5085, %v1538
  %v5602 = vmul.f32 %v5086, %v1542
  %v5603 = vmul.f32 %v5087, %v1546
  %v5604 = vmul.f32 %v5088, %v1550
  %v5617 = vrot.slane %v5593, 2
  %v5618 = vrot.slane %v5594, 2
  %v5619 = vrot.slane %v5595, 2
  %v5620 = vrot.slane %v5596, 2
  %v5621 = vrot.slane %v5597, 2
  %v5622 = vrot.slane %v5598, 2
  %v5623 = vrot.slane %v5599, 2
  %v5624 = vrot.slane %v5600, 2
  %v5625 = vrot.slane %v5601, 2
  %v5626 = vrot.slane %v5602, 2
  %v5627 = vrot.slane %v5603, 2
  %v5628 = vrot.slane %v5604, 2
  %v5641 = vadd.f32 %v5569, %v5617
  %v5642 = vadd.f32 %v5570, %v5618
  %v5643 = vadd.f32 %v5571, %v5619
  %v5644 = vadd.f32 %v5572, %v5620
  %v5645 = vadd.f32 %v5573, %v5621
  %v5646 = vadd.f32 %v5574, %v5622
  %v5647 = vadd.f32 %v5575, %v5623
  %v5648 = vadd.f32 %v5576, %v5624
  %v5649 = vadd.f32 %v5577, %v5625
  %v5650 = vadd.f32 %v5578, %v5626
  %v5651 = vadd.f32 %v5579, %v5627
  %v5652 = vadd.f32 %v5580, %v5628
  %v5653 = vadd.f32 %v5581, %v5617
  %v5654 = vadd.f32 %v5582, %v5618
  %v5655 = vadd.f32 %v5583, %v5619
  %v5656 = vadd.f32 %v5584, %v5620
  %v5657 = vadd.f32 %v5585, %v5621
  %v5658 = vadd.f32 %v5586, %v5622
  %v5659 = vadd.f32 %v5587, %v5623
  %v5660 = vadd.f32 %v5588, %v5624
  %v5661 = vadd.f32 %v5589, %v5625
  %v5662 = vadd.f32 %v5590, %v5626
  %v5663 = vadd.f32 %v5591, %v5627
  %v5664 = vadd.f32 %v5592, %v5628
  %v5665 = vadd.f32 %v4859, %v5641
  %v5666 = vadd.f32 %v4860, %v5642
  %v5667 = vadd.f32 %v4861, %v5643
  %v5668 = vadd.f32 %v4862, %v5644
  %v5669 = vadd.f32 %v4863, %v5645
  %v5670 = vadd.f32 %v4864, %v5646
  %v5671 = vadd.f32 %v4865, %v5647
  %v5672 = vadd.f32 %v4866, %v5648
  %v5673 = vadd.f32 %v4867, %v5649
  %v5674 = vadd.f32 %v4868, %v5650
  %v5675 = vadd.f32 %v4869, %v5651
  %v5676 = vadd.f32 %v4870, %v5652
  %v5677 = vadd.f32 %v4871, %v5653
  %v5678 = vadd.f32 %v4872, %v5654
  %v5679 = vadd.f32 %v4873, %v5655
  %v5680 = vadd.f32 %v4874, %v5656
  %v5681 = vadd.f32 %v4875, %v5657
  %v5682 = vadd.f32 %v4876, %v5658
  %v5683 = vadd.f32 %v4877, %v5659
  %v5684 = vadd.f32 %v4878, %v5660
  %v5685 = vadd.f32 %v4879, %v5661
  %v5686 = vadd.f32 %v4880, %v5662
  %v5687 = vadd.f32 %v4881, %v5663
  %v5688 = vadd.f32 %v4882, %v5664
  %v5689 = vmul.f32 %v5641, %v5641
  %v5690 = vmul.f32 %v5642, %v5642
  %v5691 = vmul.f32 %v5643, %v5643
  %v5692 = vmul.f32 %v5644, %v5644
  %v5693 = vmul.f32 %v5645, %v5645
  %v5694 = vmul.f32 %v5646, %v5646
  %v5695 = vmul.f32 %v5647, %v5647
  %v5696 = vmul.f32 %v5648, %v5648
  %v5697 = vmul.f32 %v5649, %v5649
  %v5698 = vmul.f32 %v5650, %v5650
  %v5699 = vmul.f32 %v5651, %v5651
  %v5700 = vmul.f32 %v5652, %v5652
  %v5701 = vmul.f32 %v5653, %v5653
  %v5702 = vmul.f32 %v5654, %v5654
  %v5703 = vmul.f32 %v5655, %v5655
  %v5704 = vmul.f32 %v5656, %v5656
  %v5705 = vmul.f32 %v5657, %v5657
  %v5706 = vmul.f32 %v5658, %v5658
  %v5707 = vmul.f32 %v5659, %v5659
  %v5708 = vmul.f32 %v5660, %v5660
  %v5709 = vmul.f32 %v5661, %v5661
  %v5710 = vmul.f32 %v5662, %v5662
  %v5711 = vmul.f32 %v5663, %v5663
  %v5712 = vmul.f32 %v5664, %v5664
  %v5713 = vadd.f32 %v4907, %v5689
  %v5714 = vadd.f32 %v4908, %v5690
  %v5715 = vadd.f32 %v4909, %v5691
  %v5716 = vadd.f32 %v4910, %v5692
  %v5717 = vadd.f32 %v4911, %v5693
  %v5718 = vadd.f32 %v4912, %v5694
  %v5719 = vadd.f32 %v4913, %v5695
  %v5720 = vadd.f32 %v4914, %v5696
  %v5721 = vadd.f32 %v4915, %v5697
  %v5722 = vadd.f32 %v4916, %v5698
  %v5723 = vadd.f32 %v4917, %v5699
  %v5724 = vadd.f32 %v4918, %v5700
  %v5725 = vadd.f32 %v4919, %v5701
  %v5726 = vadd.f32 %v4920, %v5702
  %v5727 = vadd.f32 %v4921, %v5703
  %v5728 = vadd.f32 %v4922, %v5704
  %v5729 = vadd.f32 %v4923, %v5705
  %v5730 = vadd.f32 %v4924, %v5706
  %v5731 = vadd.f32 %v4925, %v5707
  %v5732 = vadd.f32 %v4926, %v5708
  %v5733 = vadd.f32 %v4927, %v5709
  %v5734 = vadd.f32 %v4928, %v5710
  %v5735 = vadd.f32 %v4929, %v5711
  %v5736 = vadd.f32 %v4930, %v5712
  %v5761 = vrot.slane %v5641, 7
  %v5762 = vrot.slane %v5653, 7
  %v5763 = vsel %vm1731, %v5761, %v5762
  %v5764 = vrot.slane %v5642, 7
  %v5765 = vrot.slane %v5654, 7
  %v5766 = vsel %vm1731, %v5764, %v5765
  %v5767 = vrot.slane %v5643, 7
  %v5768 = vrot.slane %v5655, 7
  %v5769 = vsel %vm1731, %v5767, %v5768
  %v5770 = vrot.slane %v5644, 7
  %v5771 = vrot.slane %v5656, 7
  %v5772 = vsel %vm1731, %v5770, %v5771
  %v5773 = vrot.slane %v5645, 7
  %v5774 = vrot.slane %v5657, 7
  %v5775 = vsel %vm1731, %v5773, %v5774
  %v5776 = vrot.slane %v5646, 7
  %v5777 = vrot.slane %v5658, 7
  %v5778 = vsel %vm1731, %v5776, %v5777
  %v5779 = vrot.slane %v5647, 7
  %v5780 = vrot.slane %v5659, 7
  %v5781 = vsel %vm1731, %v5779, %v5780
  %v5782 = vrot.slane %v5648, 7
  %v5783 = vrot.slane %v5660, 7
  %v5784 = vsel %vm1731, %v5782, %v5783
  %v5785 = vrot.slane %v5649, 7
  %v5786 = vrot.slane %v5661, 7
  %v5787 = vsel %vm1731, %v5785, %v5786
  %v5788 = vrot.slane %v5650, 7
  %v5789 = vrot.slane %v5662, 7
  %v5790 = vsel %vm1731, %v5788, %v5789
  %v5791 = vrot.slane %v5651, 7
  %v5792 = vrot.slane %v5663, 7
  %v5793 = vsel %vm1731, %v5791, %v5792
  %v5794 = vrot.slane %v5652, 7
  %v5795 = vrot.slane %v5664, 7
  %v5796 = vsel %vm1731, %v5794, %v5795
  %s5809 = scalar_lea.vmem %s4, 480
  %5810 = vst [vmem:[%s5809] sm:$0x7f] %v5763
  %5811 = vst [vmem:[%s5809 + $0x8] sm:$0x7f] %v5766
  %5812 = vst [vmem:[%s5809 + $0x10] sm:$0x7f] %v5769
  %5813 = vst [vmem:[%s5809 + $0x18] sm:$0x7f] %v5772
  %5814 = vst [vmem:[%s5809 + $0x20] sm:$0x7f] %v5775
  %5815 = vst [vmem:[%s5809 + $0x28] sm:$0x7f] %v5778
  %5816 = vst [vmem:[%s5809 + $0x30] sm:$0x7f] %v5781
  %5817 = vst [vmem:[%s5809 + $0x38] sm:$0x7f] %v5784
  %5818 = vst [vmem:[%s5809 + $0x40] sm:$0x7f] %v5787
  %5819 = vst [vmem:[%s5809 + $0x48] sm:$0x7f] %v5790
  %5820 = vst [vmem:[%s5809 + $0x50] sm:$0x7f] %v5793
  %5821 = vst [vmem:[%s5809 + $0x58] sm:$0x7f] %v5796
  %v5822 = vld [vmem:[%s4258] sm:$0xff]
  %v5823 = vld [vmem:[%s4258 + $0x8] sm:$0xff]
  %v5824 = vld [vmem:[%s4258 + $0x10] sm:$0xff]
  %v5825 = vld [vmem:[%s4258 + $0x18] sm:$0xff]
  %v5826 = vld [vmem:[%s4258 + $0x20] sm:$0xff]
  %v5827 = vld [vmem:[%s4258 + $0x28] sm:$0xff]
  %v5828 = vld [vmem:[%s4258 + $0x30] sm:$0xff]
  %v5829 = vld [vmem:[%s4258 + $0x38] sm:$0xff]
  %v5830 = vld [vmem:[%s4258 + $0x40] sm:$0xff]
  %v5831 = vld [vmem:[%s4258 + $0x48] sm:$0xff]
  %v5832 = vld [vmem:[%s4258 + $0x50] sm:$0xff]
  %v5833 = vld [vmem:[%s4258 + $0x58] sm:$0xff]
  %v5834 = vld [vmem:[%s4258 + $0x60] sm:$0xff]
  %v5835 = vld [vmem:[%s4258 + $0x68] sm:$0xff]
  %v5836 = vld [vmem:[%s4258 + $0x70] sm:$0xff]
  %v5837 = vld [vmem:[%s4258 + $0x78] sm:$0xff]
  %v5838 = vld [vmem:[%s4258 + $0x80] sm:$0xff]
  %v5839 = vld [vmem:[%s4258 + $0x88] sm:$0xff]
  %v5840 = vld [vmem:[%s4258 + $0x90] sm:$0xff]
  %v5841 = vld [vmem:[%s4258 + $0x98] sm:$0xff]
  %v5842 = vld [vmem:[%s4258 + $0xa0] sm:$0xff]
  %v5843 = vld [vmem:[%s4258 + $0xa8] sm:$0xff]
  %v5844 = vld [vmem:[%s4258 + $0xb0] sm:$0xff]
  %v5845 = vld [vmem:[%s4258 + $0xb8] sm:$0xff]
  %v5846 = vld [vmem:[%s5064] sm:$0xff]
  %v5847 = vld [vmem:[%s5064 + $0x8] sm:$0xff]
  %v5848 = vld [vmem:[%s5064 + $0x10] sm:$0xff]
  %v5849 = vld [vmem:[%s5064 + $0x18] sm:$0xff]
  %v5850 = vld [vmem:[%s5064 + $0x20] sm:$0xff]
  %v5851 = vld [vmem:[%s5064 + $0x28] sm:$0xff]
  %v5852 = vld [vmem:[%s5064 + $0x30] sm:$0xff]
  %v5853 = vld [vmem:[%s5064 + $0x38] sm:$0xff]
  %v5854 = vld [vmem:[%s5064 + $0x40] sm:$0xff]
  %v5855 = vld [vmem:[%s5064 + $0x48] sm:$0xff]
  %v5856 = vld [vmem:[%s5064 + $0x50] sm:$0xff]
  %v5857 = vld [vmem:[%s5064 + $0x58] sm:$0xff]
  %v5858 = vld [vmem:[%s5064 + $0x60] sm:$0xff]
  %v5859 = vld [vmem:[%s5064 + $0x68] sm:$0xff]
  %v5860 = vld [vmem:[%s5064 + $0x70] sm:$0xff]
  %v5861 = vld [vmem:[%s5064 + $0x78] sm:$0xff]
  %v5862 = vld [vmem:[%s5064 + $0x80] sm:$0xff]
  %v5863 = vld [vmem:[%s5064 + $0x88] sm:$0xff]
  %v5864 = vld [vmem:[%s5064 + $0x90] sm:$0xff]
  %v5865 = vld [vmem:[%s5064 + $0x98] sm:$0xff]
  %v5866 = vld [vmem:[%s5064 + $0xa0] sm:$0xff]
  %v5867 = vld [vmem:[%s5064 + $0xa8] sm:$0xff]
  %v5868 = vld [vmem:[%s5064 + $0xb0] sm:$0xff]
  %v5869 = vld [vmem:[%s5064 + $0xb8] sm:$0xff]
  %s5870 = scalar_lea.vmem [#allocation2], 1536
  %v5871 = vld [vmem:[%s5870] sm:$0xff]
  %v5872 = vld [vmem:[%s5870 + $0x8] sm:$0xff]
  %v5873 = vld [vmem:[%s5870 + $0x10] sm:$0xff]
  %v5874 = vld [vmem:[%s5870 + $0x18] sm:$0xff]
  %v5875 = vld [vmem:[%s5870 + $0x20] sm:$0xff]
  %v5876 = vld [vmem:[%s5870 + $0x28] sm:$0xff]
  %v5877 = vld [vmem:[%s5870 + $0x30] sm:$0xff]
  %v5878 = vld [vmem:[%s5870 + $0x38] sm:$0xff]
  %v5879 = vld [vmem:[%s5870 + $0x40] sm:$0xff]
  %v5880 = vld [vmem:[%s5870 + $0x48] sm:$0xff]
  %v5881 = vld [vmem:[%s5870 + $0x50] sm:$0xff]
  %v5882 = vld [vmem:[%s5870 + $0x58] sm:$0xff]
  %v5883 = vld [vmem:[%s5870 + $0x60] sm:$0xff]
  %v5884 = vld [vmem:[%s5870 + $0x68] sm:$0xff]
  %v5885 = vld [vmem:[%s5870 + $0x70] sm:$0xff]
  %v5886 = vld [vmem:[%s5870 + $0x78] sm:$0xff]
  %v5887 = vld [vmem:[%s5870 + $0x80] sm:$0xff]
  %v5888 = vld [vmem:[%s5870 + $0x88] sm:$0xff]
  %v5889 = vld [vmem:[%s5870 + $0x90] sm:$0xff]
  %v5890 = vld [vmem:[%s5870 + $0x98] sm:$0xff]
  %v5891 = vld [vmem:[%s5870 + $0xa0] sm:$0xff]
  %v5892 = vld [vmem:[%s5870 + $0xa8] sm:$0xff]
  %v5893 = vld [vmem:[%s5870 + $0xb0] sm:$0xff]
  %v5894 = vld [vmem:[%s5870 + $0xb8] sm:$0xff]
  %v5895 = vmul.f32 %v5822, %v506
  %v5896 = vmul.f32 %v5823, %v510
  %v5897 = vmul.f32 %v5824, %v514
  %v5898 = vmul.f32 %v5825, %v518
  %v5899 = vmul.f32 %v5826, %v522
  %v5900 = vmul.f32 %v5827, %v526
  %v5901 = vmul.f32 %v5828, %v530
  %v5902 = vmul.f32 %v5829, %v534
  %v5903 = vmul.f32 %v5830, %v538
  %v5904 = vmul.f32 %v5831, %v542
  %v5905 = vmul.f32 %v5832, %v546
  %v5906 = vmul.f32 %v5833, %v550
  %v5907 = vmul.f32 %v5834, %v506
  %v5908 = vmul.f32 %v5835, %v510
  %v5909 = vmul.f32 %v5836, %v514
  %v5910 = vmul.f32 %v5837, %v518
  %v5911 = vmul.f32 %v5838, %v522
  %v5912 = vmul.f32 %v5839, %v526
  %v5913 = vmul.f32 %v5840, %v530
  %v5914 = vmul.f32 %v5841, %v534
  %v5915 = vmul.f32 %v5842, %v538
  %v5916 = vmul.f32 %v5843, %v542
  %v5917 = vmul.f32 %v5844, %v546
  %v5918 = vmul.f32 %v5845, %v550
  %v5919 = vadd.f32 %v5895, 0.0
  %v5920 = vadd.f32 %v5896, 0.0
  %v5921 = vadd.f32 %v5897, 0.0
  %v5922 = vadd.f32 %v5898, 0.0
  %v5923 = vadd.f32 %v5899, 0.0
  %v5924 = vadd.f32 %v5900, 0.0
  %v5925 = vadd.f32 %v5901, 0.0
  %v5926 = vadd.f32 %v5902, 0.0
  %v5927 = vadd.f32 %v5903, 0.0
  %v5928 = vadd.f32 %v5904, 0.0
  %v5929 = vadd.f32 %v5905, 0.0
  %v5930 = vadd.f32 %v5906, 0.0
  %v5931 = vadd.f32 %v5907, 0.0
  %v5932 = vadd.f32 %v5908, 0.0
  %v5933 = vadd.f32 %v5909, 0.0
  %v5934 = vadd.f32 %v5910, 0.0
  %v5935 = vadd.f32 %v5911, 0.0
  %v5936 = vadd.f32 %v5912, 0.0
  %v5937 = vadd.f32 %v5913, 0.0
  %v5938 = vadd.f32 %v5914, 0.0
  %v5939 = vadd.f32 %v5915, 0.0
  %v5940 = vadd.f32 %v5916, 0.0
  %v5941 = vadd.f32 %v5917, 0.0
  %v5942 = vadd.f32 %v5918, 0.0
  %v5943 = vmul.f32 %v5834, %v616
  %v5944 = vmul.f32 %v5835, %v620
  %v5945 = vmul.f32 %v5836, %v624
  %v5946 = vmul.f32 %v5837, %v628
  %v5947 = vmul.f32 %v5838, %v632
  %v5948 = vmul.f32 %v5839, %v636
  %v5949 = vmul.f32 %v5840, %v640
  %v5950 = vmul.f32 %v5841, %v644
  %v5951 = vmul.f32 %v5842, %v648
  %v5952 = vmul.f32 %v5843, %v652
  %v5953 = vmul.f32 %v5844, %v656
  %v5954 = vmul.f32 %v5845, %v660
  %v5967 = vrot.slane %v5943, 1
  %v5968 = vrot.slane %v5944, 1
  %v5969 = vrot.slane %v5945, 1
  %v5970 = vrot.slane %v5946, 1
  %v5971 = vrot.slane %v5947, 1
  %v5972 = vrot.slane %v5948, 1
  %v5973 = vrot.slane %v5949, 1
  %v5974 = vrot.slane %v5950, 1
  %v5975 = vrot.slane %v5951, 1
  %v5976 = vrot.slane %v5952, 1
  %v5977 = vrot.slane %v5953, 1
  %v5978 = vrot.slane %v5954, 1
  %v5991 = vadd.f32 %v5919, %v5967
  %v5992 = vadd.f32 %v5920, %v5968
  %v5993 = vadd.f32 %v5921, %v5969
  %v5994 = vadd.f32 %v5922, %v5970
  %v5995 = vadd.f32 %v5923, %v5971
  %v5996 = vadd.f32 %v5924, %v5972
  %v5997 = vadd.f32 %v5925, %v5973
  %v5998 = vadd.f32 %v5926, %v5974
  %v5999 = vadd.f32 %v5927, %v5975
  %v6000 = vadd.f32 %v5928, %v5976
  %v6001 = vadd.f32 %v5929, %v5977
  %v6002 = vadd.f32 %v5930, %v5978
  %v6003 = vadd.f32 %v5931, %v5967
  %v6004 = vadd.f32 %v5932, %v5968
  %v6005 = vadd.f32 %v5933, %v5969
  %v6006 = vadd.f32 %v5934, %v5970
  %v6007 = vadd.f32 %v5935, %v5971
  %v6008 = vadd.f32 %v5936, %v5972
  %v6009 = vadd.f32 %v5937, %v5973
  %v6010 = vadd.f32 %v5938, %v5974
  %v6011 = vadd.f32 %v5939, %v5975
  %v6012 = vadd.f32 %v5940, %v5976
  %v6013 = vadd.f32 %v5941, %v5977
  %v6014 = vadd.f32 %v5942, %v5978
  %v6015 = vmul.f32 %v5834, %v750
  %v6016 = vmul.f32 %v5835, %v754
  %v6017 = vmul.f32 %v5836, %v758
  %v6018 = vmul.f32 %v5837, %v762
  %v6019 = vmul.f32 %v5838, %v766
  %v6020 = vmul.f32 %v5839, %v770
  %v6021 = vmul.f32 %v5840, %v774
  %v6022 = vmul.f32 %v5841, %v778
  %v6023 = vmul.f32 %v5842, %v782
  %v6024 = vmul.f32 %v5843, %v786
  %v6025 = vmul.f32 %v5844, %v790
  %v6026 = vmul.f32 %v5845, %v794
  %v6039 = vrot.slane %v6015, 2
  %v6040 = vrot.slane %v6016, 2
  %v6041 = vrot.slane %v6017, 2
  %v6042 = vrot.slane %v6018, 2
  %v6043 = vrot.slane %v6019, 2
  %v6044 = vrot.slane %v6020, 2
  %v6045 = vrot.slane %v6021, 2
  %v6046 = vrot.slane %v6022, 2
  %v6047 = vrot.slane %v6023, 2
  %v6048 = vrot.slane %v6024, 2
  %v6049 = vrot.slane %v6025, 2
  %v6050 = vrot.slane %v6026, 2
  %v6063 = vadd.f32 %v5991, %v6039
  %v6064 = vadd.f32 %v5992, %v6040
  %v6065 = vadd.f32 %v5993, %v6041
  %v6066 = vadd.f32 %v5994, %v6042
  %v6067 = vadd.f32 %v5995, %v6043
  %v6068 = vadd.f32 %v5996, %v6044
  %v6069 = vadd.f32 %v5997, %v6045
  %v6070 = vadd.f32 %v5998, %v6046
  %v6071 = vadd.f32 %v5999, %v6047
  %v6072 = vadd.f32 %v6000, %v6048
  %v6073 = vadd.f32 %v6001, %v6049
  %v6074 = vadd.f32 %v6002, %v6050
  %v6075 = vadd.f32 %v6003, %v6039
  %v6076 = vadd.f32 %v6004, %v6040
  %v6077 = vadd.f32 %v6005, %v6041
  %v6078 = vadd.f32 %v6006, %v6042
  %v6079 = vadd.f32 %v6007, %v6043
  %v6080 = vadd.f32 %v6008, %v6044
  %v6081 = vadd.f32 %v6009, %v6045
  %v6082 = vadd.f32 %v6010, %v6046
  %v6083 = vadd.f32 %v6011, %v6047
  %v6084 = vadd.f32 %v6012, %v6048
  %v6085 = vadd.f32 %v6013, %v6049
  %v6086 = vadd.f32 %v6014, %v6050
  %v6087 = vmul.f32 %v5846, %v884
  %v6088 = vmul.f32 %v5847, %v888
  %v6089 = vmul.f32 %v5848, %v892
  %v6090 = vmul.f32 %v5849, %v896
  %v6091 = vmul.f32 %v5850, %v900
  %v6092 = vmul.f32 %v5851, %v904
  %v6093 = vmul.f32 %v5852, %v908
  %v6094 = vmul.f32 %v5853, %v912
  %v6095 = vmul.f32 %v5854, %v916
  %v6096 = vmul.f32 %v5855, %v920
  %v6097 = vmul.f32 %v5856, %v924
  %v6098 = vmul.f32 %v5857, %v928
  %v6099 = vmul.f32 %v5858, %v884
  %v6100 = vmul.f32 %v5859, %v888
  %v6101 = vmul.f32 %v5860, %v892
  %v6102 = vmul.f32 %v5861, %v896
  %v6103 = vmul.f32 %v5862, %v900
  %v6104 = vmul.f32 %v5863, %v904
  %v6105 = vmul.f32 %v5864, %v908
  %v6106 = vmul.f32 %v5865, %v912
  %v6107 = vmul.f32 %v5866, %v916
  %v6108 = vmul.f32 %v5867, %v920
  %v6109 = vmul.f32 %v5868, %v924
  %v6110 = vmul.f32 %v5869, %v928
  %v6111 = vadd.f32 %v6063, %v6087
  %v6112 = vadd.f32 %v6064, %v6088
  %v6113 = vadd.f32 %v6065, %v6089
  %v6114 = vadd.f32 %v6066, %v6090
  %v6115 = vadd.f32 %v6067, %v6091
  %v6116 = vadd.f32 %v6068, %v6092
  %v6117 = vadd.f32 %v6069, %v6093
  %v6118 = vadd.f32 %v6070, %v6094
  %v6119 = vadd.f32 %v6071, %v6095
  %v6120 = vadd.f32 %v6072, %v6096
  %v6121 = vadd.f32 %v6073, %v6097
  %v6122 = vadd.f32 %v6074, %v6098
  %v6123 = vadd.f32 %v6075, %v6099
  %v6124 = vadd.f32 %v6076, %v6100
  %v6125 = vadd.f32 %v6077, %v6101
  %v6126 = vadd.f32 %v6078, %v6102
  %v6127 = vadd.f32 %v6079, %v6103
  %v6128 = vadd.f32 %v6080, %v6104
  %v6129 = vadd.f32 %v6081, %v6105
  %v6130 = vadd.f32 %v6082, %v6106
  %v6131 = vadd.f32 %v6083, %v6107
  %v6132 = vadd.f32 %v6084, %v6108
  %v6133 = vadd.f32 %v6085, %v6109
  %v6134 = vadd.f32 %v6086, %v6110
  %v6135 = vmul.f32 %v5858, %v994
  %v6136 = vmul.f32 %v5859, %v998
  %v6137 = vmul.f32 %v5860, %v1002
  %v6138 = vmul.f32 %v5861, %v1006
  %v6139 = vmul.f32 %v5862, %v1010
  %v6140 = vmul.f32 %v5863, %v1014
  %v6141 = vmul.f32 %v5864, %v1018
  %v6142 = vmul.f32 %v5865, %v1022
  %v6143 = vmul.f32 %v5866, %v1026
  %v6144 = vmul.f32 %v5867, %v1030
  %v6145 = vmul.f32 %v5868, %v1034
  %v6146 = vmul.f32 %v5869, %v1038
  %v6159 = vrot.slane %v6135, 1
  %v6160 = vrot.slane %v6136, 1
  %v6161 = vrot.slane %v6137, 1
  %v6162 = vrot.slane %v6138, 1
  %v6163 = vrot.slane %v6139, 1
  %v6164 = vrot.slane %v6140, 1
  %v6165 = vrot.slane %v6141, 1
  %v6166 = vrot.slane %v6142, 1
  %v6167 = vrot.slane %v6143, 1
  %v6168 = vrot.slane %v6144, 1
  %v6169 = vrot.slane %v6145, 1
  %v6170 = vrot.slane %v6146, 1
  %v6183 = vadd.f32 %v6111, %v6159
  %v6184 = vadd.f32 %v6112, %v6160
  %v6185 = vadd.f32 %v6113, %v6161
  %v6186 = vadd.f32 %v6114, %v6162
  %v6187 = vadd.f32 %v6115, %v6163
  %v6188 = vadd.f32 %v6116, %v6164
  %v6189 = vadd.f32 %v6117, %v6165
  %v6190 = vadd.f32 %v6118, %v6166
  %v6191 = vadd.f32 %v6119, %v6167
  %v6192 = vadd.f32 %v6120, %v6168
  %v6193 = vadd.f32 %v6121, %v6169
  %v6194 = vadd.f32 %v6122, %v6170
  %v6195 = vadd.f32 %v6123, %v6159
  %v6196 = vadd.f32 %v6124, %v6160
  %v6197 = vadd.f32 %v6125, %v6161
  %v6198 = vadd.f32 %v6126, %v6162
  %v6199 = vadd.f32 %v6127, %v6163
  %v6200 = vadd.f32 %v6128, %v6164
  %v6201 = vadd.f32 %v6129, %v6165
  %v6202 = vadd.f32 %v6130, %v6166
  %v6203 = vadd.f32 %v6131, %v6167
  %v6204 = vadd.f32 %v6132, %v6168
  %v6205 = vadd.f32 %v6133, %v6169
  %v6206 = vadd.f32 %v6134, %v6170
  %v6207 = vmul.f32 %v5858, %v1128
  %v6208 = vmul.f32 %v5859, %v1132
  %v6209 = vmul.f32 %v5860, %v1136
  %v6210 = vmul.f32 %v5861, %v1140
  %v6211 = vmul.f32 %v5862, %v1144
  %v6212 = vmul.f32 %v5863, %v1148
  %v6213 = vmul.f32 %v5864, %v1152
  %v6214 = vmul.f32 %v5865, %v1156
  %v6215 = vmul.f32 %v5866, %v1160
  %v6216 = vmul.f32 %v5867, %v1164
  %v6217 = vmul.f32 %v5868, %v1168
  %v6218 = vmul.f32 %v5869, %v1172
  %v6231 = vrot.slane %v6207, 2
  %v6232 = vrot.slane %v6208, 2
  %v6233 = vrot.slane %v6209, 2
  %v6234 = vrot.slane %v6210, 2
  %v6235 = vrot.slane %v6211, 2
  %v6236 = vrot.slane %v6212, 2
  %v6237 = vrot.slane %v6213, 2
  %v6238 = vrot.slane %v6214, 2
  %v6239 = vrot.slane %v6215, 2
  %v6240 = vrot.slane %v6216, 2
  %v6241 = vrot.slane %v6217, 2
  %v6242 = vrot.slane %v6218, 2
  %v6255 = vadd.f32 %v6183, %v6231
  %v6256 = vadd.f32 %v6184, %v6232
  %v6257 = vadd.f32 %v6185, %v6233
  %v6258 = vadd.f32 %v6186, %v6234
  %v6259 = vadd.f32 %v6187, %v6235
  %v6260 = vadd.f32 %v6188, %v6236
  %v6261 = vadd.f32 %v6189, %v6237
  %v6262 = vadd.f32 %v6190, %v6238
  %v6263 = vadd.f32 %v6191, %v6239
  %v6264 = vadd.f32 %v6192, %v6240
  %v6265 = vadd.f32 %v6193, %v6241
  %v6266 = vadd.f32 %v6194, %v6242
  %v6267 = vadd.f32 %v6195, %v6231
  %v6268 = vadd.f32 %v6196, %v6232
  %v6269 = vadd.f32 %v6197, %v6233
  %v6270 = vadd.f32 %v6198, %v6234
  %v6271 = vadd.f32 %v6199, %v6235
  %v6272 = vadd.f32 %v6200, %v6236
  %v6273 = vadd.f32 %v6201, %v6237
  %v6274 = vadd.f32 %v6202, %v6238
  %v6275 = vadd.f32 %v6203, %v6239
  %v6276 = vadd.f32 %v6204, %v6240
  %v6277 = vadd.f32 %v6205, %v6241
  %v6278 = vadd.f32 %v6206, %v6242
  %v6279 = vmul.f32 %v5871, %v1262
  %v6280 = vmul.f32 %v5872, %v1266
  %v6281 = vmul.f32 %v5873, %v1270
  %v6282 = vmul.f32 %v5874, %v1274
  %v6283 = vmul.f32 %v5875, %v1278
  %v6284 = vmul.f32 %v5876, %v1282
  %v6285 = vmul.f32 %v5877, %v1286
  %v6286 = vmul.f32 %v5878, %v1290
  %v6287 = vmul.f32 %v5879, %v1294
  %v6288 = vmul.f32 %v5880, %v1298
  %v6289 = vmul.f32 %v5881, %v1302
  %v6290 = vmul.f32 %v5882, %v1306
  %v6291 = vmul.f32 %v5883, %v1262
  %v6292 = vmul.f32 %v5884, %v1266
  %v6293 = vmul.f32 %v5885, %v1270
  %v6294 = vmul.f32 %v5886, %v1274
  %v6295 = vmul.f32 %v5887, %v1278
  %v6296 = vmul.f32 %v5888, %v1282
  %v6297 = vmul.f32 %v5889, %v1286
  %v6298 = vmul.f32 %v5890, %v1290
  %v6299 = vmul.f32 %v5891, %v1294
  %v6300 = vmul.f32 %v5892, %v1298
  %v6301 = vmul.f32 %v5893, %v1302
  %v6302 = vmul.f32 %v5894, %v1306
  %v6303 = vadd.f32 %v6255, %v6279
  %v6304 = vadd.f32 %v6256, %v6280
  %v6305 = vadd.f32 %v6257, %v6281
  %v6306 = vadd.f32 %v6258, %v6282
  %v6307 = vadd.f32 %v6259, %v6283
  %v6308 = vadd.f32 %v6260, %v6284
  %v6309 = vadd.f32 %v6261, %v6285
  %v6310 = vadd.f32 %v6262, %v6286
  %v6311 = vadd.f32 %v6263, %v6287
  %v6312 = vadd.f32 %v6264, %v6288
  %v6313 = vadd.f32 %v6265, %v6289
  %v6314 = vadd.f32 %v6266, %v6290
  %v6315 = vadd.f32 %v6267, %v6291
  %v6316 = vadd.f32 %v6268, %v6292
  %v6317 = vadd.f32 %v6269, %v6293
  %v6318 = vadd.f32 %v6270, %v6294
  %v6319 = vadd.f32 %v6271, %v6295
  %v6320 = vadd.f32 %v6272, %v6296
  %v6321 = vadd.f32 %v6273, %v6297
  %v6322 = vadd.f32 %v6274, %v6298
  %v6323 = vadd.f32 %v6275, %v6299
  %v6324 = vadd.f32 %v6276, %v6300
  %v6325 = vadd.f32 %v6277, %v6301
  %v6326 = vadd.f32 %v6278, %v6302
  %v6327 = vmul.f32 %v5883, %v1372
  %v6328 = vmul.f32 %v5884, %v1376
  %v6329 = vmul.f32 %v5885, %v1380
  %v6330 = vmul.f32 %v5886, %v1384
  %v6331 = vmul.f32 %v5887, %v1388
  %v6332 = vmul.f32 %v5888, %v1392
  %v6333 = vmul.f32 %v5889, %v1396
  %v6334 = vmul.f32 %v5890, %v1400
  %v6335 = vmul.f32 %v5891, %v1404
  %v6336 = vmul.f32 %v5892, %v1408
  %v6337 = vmul.f32 %v5893, %v1412
  %v6338 = vmul.f32 %v5894, %v1416
  %v6351 = vrot.slane %v6327, 1
  %v6352 = vrot.slane %v6328, 1
  %v6353 = vrot.slane %v6329, 1
  %v6354 = vrot.slane %v6330, 1
  %v6355 = vrot.slane %v6331, 1
  %v6356 = vrot.slane %v6332, 1
  %v6357 = vrot.slane %v6333, 1
  %v6358 = vrot.slane %v6334, 1
  %v6359 = vrot.slane %v6335, 1
  %v6360 = vrot.slane %v6336, 1
  %v6361 = vrot.slane %v6337, 1
  %v6362 = vrot.slane %v6338, 1
  %v6375 = vadd.f32 %v6303, %v6351
  %v6376 = vadd.f32 %v6304, %v6352
  %v6377 = vadd.f32 %v6305, %v6353
  %v6378 = vadd.f32 %v6306, %v6354
  %v6379 = vadd.f32 %v6307, %v6355
  %v6380 = vadd.f32 %v6308, %v6356
  %v6381 = vadd.f32 %v6309, %v6357
  %v6382 = vadd.f32 %v6310, %v6358
  %v6383 = vadd.f32 %v6311, %v6359
  %v6384 = vadd.f32 %v6312, %v6360
  %v6385 = vadd.f32 %v6313, %v6361
  %v6386 = vadd.f32 %v6314, %v6362
  %v6387 = vadd.f32 %v6315, %v6351
  %v6388 = vadd.f32 %v6316, %v6352
  %v6389 = vadd.f32 %v6317, %v6353
  %v6390 = vadd.f32 %v6318, %v6354
  %v6391 = vadd.f32 %v6319, %v6355
  %v6392 = vadd.f32 %v6320, %v6356
  %v6393 = vadd.f32 %v6321, %v6357
  %v6394 = vadd.f32 %v6322, %v6358
  %v6395 = vadd.f32 %v6323, %v6359
  %v6396 = vadd.f32 %v6324, %v6360
  %v6397 = vadd.f32 %v6325, %v6361
  %v6398 = vadd.f32 %v6326, %v6362
  %v6399 = vmul.f32 %v5883, %v1506
  %v6400 = vmul.f32 %v5884, %v1510
  %v6401 = vmul.f32 %v5885, %v1514
  %v6402 = vmul.f32 %v5886, %v1518
  %v6403 = vmul.f32 %v5887, %v1522
  %v6404 = vmul.f32 %v5888, %v1526
  %v6405 = vmul.f32 %v5889, %v1530
  %v6406 = vmul.f32 %v5890, %v1534
  %v6407 = vmul.f32 %v5891, %v1538
  %v6408 = vmul.f32 %v5892, %v1542
  %v6409 = vmul.f32 %v5893, %v1546
  %v6410 = vmul.f32 %v5894, %v1550
  %v6423 = vrot.slane %v6399, 2
  %v6424 = vrot.slane %v6400, 2
  %v6425 = vrot.slane %v6401, 2
  %v6426 = vrot.slane %v6402, 2
  %v6427 = vrot.slane %v6403, 2
  %v6428 = vrot.slane %v6404, 2
  %v6429 = vrot.slane %v6405, 2
  %v6430 = vrot.slane %v6406, 2
  %v6431 = vrot.slane %v6407, 2
  %v6432 = vrot.slane %v6408, 2
  %v6433 = vrot.slane %v6409, 2
  %v6434 = vrot.slane %v6410, 2
  %v6447 = vadd.f32 %v6375, %v6423
  %v6448 = vadd.f32 %v6376, %v6424
  %v6449 = vadd.f32 %v6377, %v6425
  %v6450 = vadd.f32 %v6378, %v6426
  %v6451 = vadd.f32 %v6379, %v6427
  %v6452 = vadd.f32 %v6380, %v6428
  %v6453 = vadd.f32 %v6381, %v6429
  %v6454 = vadd.f32 %v6382, %v6430
  %v6455 = vadd.f32 %v6383, %v6431
  %v6456 = vadd.f32 %v6384, %v6432
  %v6457 = vadd.f32 %v6385, %v6433
  %v6458 = vadd.f32 %v6386, %v6434
  %v6459 = vadd.f32 %v6387, %v6423
  %v6460 = vadd.f32 %v6388, %v6424
  %v6461 = vadd.f32 %v6389, %v6425
  %v6462 = vadd.f32 %v6390, %v6426
  %v6463 = vadd.f32 %v6391, %v6427
  %v6464 = vadd.f32 %v6392, %v6428
  %v6465 = vadd.f32 %v6393, %v6429
  %v6466 = vadd.f32 %v6394, %v6430
  %v6467 = vadd.f32 %v6395, %v6431
  %v6468 = vadd.f32 %v6396, %v6432
  %v6469 = vadd.f32 %v6397, %v6433
  %v6470 = vadd.f32 %v6398, %v6434
  %v6471 = vadd.f32 %v5665, %v6447
  %v6472 = vadd.f32 %v5666, %v6448
  %v6473 = vadd.f32 %v5667, %v6449
  %v6474 = vadd.f32 %v5668, %v6450
  %v6475 = vadd.f32 %v5669, %v6451
  %v6476 = vadd.f32 %v5670, %v6452
  %v6477 = vadd.f32 %v5671, %v6453
  %v6478 = vadd.f32 %v5672, %v6454
  %v6479 = vadd.f32 %v5673, %v6455
  %v6480 = vadd.f32 %v5674, %v6456
  %v6481 = vadd.f32 %v5675, %v6457
  %v6482 = vadd.f32 %v5676, %v6458
  %v6483 = vadd.f32 %v5677, %v6459
  %v6484 = vadd.f32 %v5678, %v6460
  %v6485 = vadd.f32 %v5679, %v6461
  %v6486 = vadd.f32 %v5680, %v6462
  %v6487 = vadd.f32 %v5681, %v6463
  %v6488 = vadd.f32 %v5682, %v6464
  %v6489 = vadd.f32 %v5683, %v6465
  %v6490 = vadd.f32 %v5684, %v6466
  %v6491 = vadd.f32 %v5685, %v6467
  %v6492 = vadd.f32 %v5686, %v6468
  %v6493 = vadd.f32 %v5687, %v6469
  %v6494 = vadd.f32 %v5688, %v6470
  %v6495 = vmul.f32 %v6447, %v6447
  %v6496 = vmul.f32 %v6448, %v6448
  %v6497 = vmul.f32 %v6449, %v6449
  %v6498 = vmul.f32 %v6450, %v6450
  %v6499 = vmul.f32 %v6451, %v6451
  %v6500 = vmul.f32 %v6452, %v6452
  %v6501 = vmul.f32 %v6453, %v6453
  %v6502 = vmul.f32 %v6454, %v6454
  %v6503 = vmul.f32 %v6455, %v6455
  %v6504 = vmul.f32 %v6456, %v6456
  %v6505 = vmul.f32 %v6457, %v6457
  %v6506 = vmul.f32 %v6458, %v6458
  %v6507 = vmul.f32 %v6459, %v6459
  %v6508 = vmul.f32 %v6460, %v6460
  %v6509 = vmul.f32 %v6461, %v6461
  %v6510 = vmul.f32 %v6462, %v6462
  %v6511 = vmul.f32 %v6463, %v6463
  %v6512 = vmul.f32 %v6464, %v6464
  %v6513 = vmul.f32 %v6465, %v6465
  %v6514 = vmul.f32 %v6466, %v6466
  %v6515 = vmul.f32 %v6467, %v6467
  %v6516 = vmul.f32 %v6468, %v6468
  %v6517 = vmul.f32 %v6469, %v6469
  %v6518 = vmul.f32 %v6470, %v6470
  %v6519 = vadd.f32 %v5713, %v6495
  %v6520 = vadd.f32 %v5714, %v6496
  %v6521 = vadd.f32 %v5715, %v6497
  %v6522 = vadd.f32 %v5716, %v6498
  %v6523 = vadd.f32 %v5717, %v6499
  %v6524 = vadd.f32 %v5718, %v6500
  %v6525 = vadd.f32 %v5719, %v6501
  %v6526 = vadd.f32 %v5720, %v6502
  %v6527 = vadd.f32 %v5721, %v6503
  %v6528 = vadd.f32 %v5722, %v6504
  %v6529 = vadd.f32 %v5723, %v6505
  %v6530 = vadd.f32 %v5724, %v6506
  %v6531 = vadd.f32 %v5725, %v6507
  %v6532 = vadd.f32 %v5726, %v6508
  %v6533 = vadd.f32 %v5727, %v6509
  %v6534 = vadd.f32 %v5728, %v6510
  %v6535 = vadd.f32 %v5729, %v6511
  %v6536 = vadd.f32 %v5730, %v6512
  %v6537 = vadd.f32 %v5731, %v6513
  %v6538 = vadd.f32 %v5732, %v6514
  %v6539 = vadd.f32 %v5733, %v6515
  %v6540 = vadd.f32 %v5734, %v6516
  %v6541 = vadd.f32 %v5735, %v6517
  %v6542 = vadd.f32 %v5736, %v6518
  %v6567 = vrot.slane %v6447, 7
  %v6568 = vrot.slane %v6459, 7
  %v6569 = vsel %vm1731, %v6567, %v6568
  %v6570 = vrot.slane %v6448, 7
  %v6571 = vrot.slane %v6460, 7
  %v6572 = vsel %vm1731, %v6570, %v6571
  %v6573 = vrot.slane %v6449, 7
  %v6574 = vrot.slane %v6461, 7
  %v6575 = vsel %vm1731, %v6573, %v6574
  %v6576 = vrot.slane %v6450, 7
  %v6577 = vrot.slane %v6462, 7
  %v6578 = vsel %vm1731, %v6576, %v6577
  %v6579 = vrot.slane %v6451, 7
  %v6580 = vrot.slane %v6463, 7
  %v6581 = vsel %vm1731, %v6579, %v6580
  %v6582 = vrot.slane %v6452, 7
  %v6583 = vrot.slane %v6464, 7
  %v6584 = vsel %vm1731, %v6582, %v6583
  %v6585 = vrot.slane %v6453, 7
  %v6586 = vrot.slane %v6465, 7
  %v6587 = vsel %vm1731, %v6585, %v6586
  %v6588 = vrot.slane %v6454, 7
  %v6589 = vrot.slane %v6466, 7
  %v6590 = vsel %vm1731, %v6588, %v6589
  %v6591 = vrot.slane %v6455, 7
  %v6592 = vrot.slane %v6467, 7
  %v6593 = vsel %vm1731, %v6591, %v6592
  %v6594 = vrot.slane %v6456, 7
  %v6595 = vrot.slane %v6468, 7
  %v6596 = vsel %vm1731, %v6594, %v6595
  %v6597 = vrot.slane %v6457, 7
  %v6598 = vrot.slane %v6469, 7
  %v6599 = vsel %vm1731, %v6597, %v6598
  %v6600 = vrot.slane %v6458, 7
  %v6601 = vrot.slane %v6470, 7
  %v6602 = vsel %vm1731, %v6600, %v6601
  %s6615 = scalar_lea.vmem %s4, 576
  %6616 = vst [vmem:[%s6615] sm:$0x7f] %v6569
  %6617 = vst [vmem:[%s6615 + $0x8] sm:$0x7f] %v6572
  %6618 = vst [vmem:[%s6615 + $0x10] sm:$0x7f] %v6575
  %6619 = vst [vmem:[%s6615 + $0x18] sm:$0x7f] %v6578
  %6620 = vst [vmem:[%s6615 + $0x20] sm:$0x7f] %v6581
  %6621 = vst [vmem:[%s6615 + $0x28] sm:$0x7f] %v6584
  %6622 = vst [vmem:[%s6615 + $0x30] sm:$0x7f] %v6587
  %6623 = vst [vmem:[%s6615 + $0x38] sm:$0x7f] %v6590
  %6624 = vst [vmem:[%s6615 + $0x40] sm:$0x7f] %v6593
  %6625 = vst [vmem:[%s6615 + $0x48] sm:$0x7f] %v6596
  %6626 = vst [vmem:[%s6615 + $0x50] sm:$0x7f] %v6599
  %6627 = vst [vmem:[%s6615 + $0x58] sm:$0x7f] %v6602
  %v6652 = vrot.slane %v6471, 7
  %v6653 = vrot.slane %v6483, 7
  %v6654 = vsel %vm1731, %v6652, %v6653
  %v6655 = vrot.slane %v6472, 7
  %v6656 = vrot.slane %v6484, 7
  %v6657 = vsel %vm1731, %v6655, %v6656
  %v6658 = vrot.slane %v6473, 7
  %v6659 = vrot.slane %v6485, 7
  %v6660 = vsel %vm1731, %v6658, %v6659
  %v6661 = vrot.slane %v6474, 7
  %v6662 = vrot.slane %v6486, 7
  %v6663 = vsel %vm1731, %v6661, %v6662
  %v6664 = vrot.slane %v6475, 7
  %v6665 = vrot.slane %v6487, 7
  %v6666 = vsel %vm1731, %v6664, %v6665
  %v6667 = vrot.slane %v6476, 7
  %v6668 = vrot.slane %v6488, 7
  %v6669 = vsel %vm1731, %v6667, %v6668
  %v6670 = vrot.slane %v6477, 7
  %v6671 = vrot.slane %v6489, 7
  %v6672 = vsel %vm1731, %v6670, %v6671
  %v6673 = vrot.slane %v6478, 7
  %v6674 = vrot.slane %v6490, 7
  %v6675 = vsel %vm1731, %v6673, %v6674
  %v6676 = vrot.slane %v6479, 7
  %v6677 = vrot.slane %v6491, 7
  %v6678 = vsel %vm1731, %v6676, %v6677
  %v6679 = vrot.slane %v6480, 7
  %v6680 = vrot.slane %v6492, 7
  %v6681 = vsel %vm1731, %v6679, %v6680
  %v6682 = vrot.slane %v6481, 7
  %v6683 = vrot.slane %v6493, 7
  %v6684 = vsel %vm1731, %v6682, %v6683
  %v6685 = vrot.slane %v6482, 7
  %v6686 = vrot.slane %v6494, 7
  %v6687 = vsel %vm1731, %v6685, %v6686
  %vm6700 = vcmask 1046528
  %v6701 = vsel %vm6700, %v6654, 0.0
  %v6702 = vrot.slane %v6701, 4
  %v6703 = vadd.f32 %v6701, %v6702
  %v6704 = vrot.slane %v6703, 2
  %v6705 = vadd.f32 %v6703, %v6704
  %v6706 = vrot.slane %v6705, 1
  %v6707 = vadd.f32 %v6705, %v6706
  %v6708 = vsel %vm6700, %v6657, 0.0
  %v6709 = vrot.slane %v6708, 4
  %v6710 = vadd.f32 %v6708, %v6709
  %v6711 = vrot.slane %v6710, 2
  %v6712 = vadd.f32 %v6710, %v6711
  %v6713 = vrot.slane %v6712, 1
  %v6714 = vadd.f32 %v6712, %v6713
  %v6715 = vsel %vm6700, %v6660, 0.0
  %v6716 = vrot.slane %v6715, 4
  %v6717 = vadd.f32 %v6715, %v6716
  %v6718 = vrot.slane %v6717, 2
  %v6719 = vadd.f32 %v6717, %v6718
  %v6720 = vrot.slane %v6719, 1
  %v6721 = vadd.f32 %v6719, %v6720
  %v6722 = vsel %vm6700, %v6663, 0.0
  %v6723 = vrot.slane %v6722, 4
  %v6724 = vadd.f32 %v6722, %v6723
  %v6725 = vrot.slane %v6724, 2
  %v6726 = vadd.f32 %v6724, %v6725
  %v6727 = vrot.slane %v6726, 1
  %v6728 = vadd.f32 %v6726, %v6727
  %v6729 = vsel %vm6700, %v6666, 0.0
  %v6730 = vrot.slane %v6729, 4
  %v6731 = vadd.f32 %v6729, %v6730
  %v6732 = vrot.slane %v6731, 2
  %v6733 = vadd.f32 %v6731, %v6732
  %v6734 = vrot.slane %v6733, 1
  %v6735 = vadd.f32 %v6733, %v6734
  %v6736 = vsel %vm6700, %v6669, 0.0
  %v6737 = vrot.slane %v6736, 4
  %v6738 = vadd.f32 %v6736, %v6737
  %v6739 = vrot.slane %v6738, 2
  %v6740 = vadd.f32 %v6738, %v6739
  %v6741 = vrot.slane %v6740, 1
  %v6742 = vadd.f32 %v6740, %v6741
  %v6743 = vsel %vm6700, %v6672, 0.0
  %v6744 = vrot.slane %v6743, 4
  %v6745 = vadd.f32 %v6743, %v6744
  %v6746 = vrot.slane %v6745, 2
  %v6747 = vadd.f32 %v6745, %v6746
  %v6748 = vrot.slane %v6747, 1
  %v6749 = vadd.f32 %v6747, %v6748
  %v6750 = vsel %vm6700, %v6675, 0.0
  %v6751 = vrot.slane %v6750, 4
  %v6752 = vadd.f32 %v6750, %v6751
  %v6753 = vrot.slane %v6752, 2
  %v6754 = vadd.f32 %v6752, %v6753
  %v6755 = vrot.slane %v6754, 1
  %v6756 = vadd.f32 %v6754, %v6755
  %v6757 = vsel %vm6700, %v6678, 0.0
  %v6758 = vrot.slane %v6757, 4
  %v6759 = vadd.f32 %v6757, %v6758
  %v6760 = vrot.slane %v6759, 2
  %v6761 = vadd.f32 %v6759, %v6760
  %v6762 = vrot.slane %v6761, 1
  %v6763 = vadd.f32 %v6761, %v6762
  %v6764 = vsel %vm6700, %v6681, 0.0
  %v6765 = vrot.slane %v6764, 4
  %v6766 = vadd.f32 %v6764, %v6765
  %v6767 = vrot.slane %v6766, 2
  %v6768 = vadd.f32 %v6766, %v6767
  %v6769 = vrot.slane %v6768, 1
  %v6770 = vadd.f32 %v6768, %v6769
  %v6771 = vsel %vm6700, %v6684, 0.0
  %v6772 = vrot.slane %v6771, 4
  %v6773 = vadd.f32 %v6771, %v6772
  %v6774 = vrot.slane %v6773, 2
  %v6775 = vadd.f32 %v6773, %v6774
  %v6776 = vrot.slane %v6775, 1
  %v6777 = vadd.f32 %v6775, %v6776
  %v6778 = vsel %vm6700, %v6687, 0.0
  %v6779 = vrot.slane %v6778, 4
  %v6780 = vadd.f32 %v6778, %v6779
  %v6781 = vrot.slane %v6780, 2
  %v6782 = vadd.f32 %v6780, %v6781
  %v6783 = vrot.slane %v6782, 1
  %v6784 = vadd.f32 %v6782, %v6783
  %v6785 = vmul.f32 %v6707, 0.020408163
  %v6786 = vmul.f32 %v6714, 0.020408163
  %v6787 = vmul.f32 %v6721, 0.020408163
  %v6788 = vmul.f32 %v6728, 0.020408163
  %v6789 = vmul.f32 %v6735, 0.020408163
  %v6790 = vmul.f32 %v6742, 0.020408163
  %v6791 = vmul.f32 %v6749, 0.020408163
  %v6792 = vmul.f32 %v6756, 0.020408163
  %v6793 = vmul.f32 %v6763, 0.020408163
  %v6794 = vmul.f32 %v6770, 0.020408163
  %v6795 = vmul.f32 %v6777, 0.020408163
  %v6796 = vmul.f32 %v6784, 0.020408163
  %v6821 = vrot.slane %v6519, 7
  %v6822 = vrot.slane %v6531, 7
  %v6823 = vsel %vm1731, %v6821, %v6822
  %v6824 = vrot.slane %v6520, 7
  %v6825 = vrot.slane %v6532, 7
  %v6826 = vsel %vm1731, %v6824, %v6825
  %v6827 = vrot.slane %v6521, 7
  %v6828 = vrot.slane %v6533, 7
  %v6829 = vsel %vm1731, %v6827, %v6828
  %v6830 = vrot.slane %v6522, 7
  %v6831 = vrot.slane %v6534, 7
  %v6832 = vsel %vm1731, %v6830, %v6831
  %v6833 = vrot.slane %v6523, 7
  %v6834 = vrot.slane %v6535, 7
  %v6835 = vsel %vm1731, %v6833, %v6834
  %v6836 = vrot.slane %v6524, 7
  %v6837 = vrot.slane %v6536, 7
  %v6838 = vsel %vm1731, %v6836, %v6837
  %v6839 = vrot.slane %v6525, 7
  %v6840 = vrot.slane %v6537, 7
  %v6841 = vsel %vm1731, %v6839, %v6840
  %v6842 = vrot.slane %v6526, 7
  %v6843 = vrot.slane %v6538, 7
  %v6844 = vsel %vm1731, %v6842, %v6843
  %v6845 = vrot.slane %v6527, 7
  %v6846 = vrot.slane %v6539, 7
  %v6847 = vsel %vm1731, %v6845, %v6846
  %v6848 = vrot.slane %v6528, 7
  %v6849 = vrot.slane %v6540, 7
  %v6850 = vsel %vm1731, %v6848, %v6849
  %v6851 = vrot.slane %v6529, 7
  %v6852 = vrot.slane %v6541, 7
  %v6853 = vsel %vm1731, %v6851, %v6852
  %v6854 = vrot.slane %v6530, 7
  %v6855 = vrot.slane %v6542, 7
  %v6856 = vsel %vm1731, %v6854, %v6855
  %v6869 = vsel %vm6700, %v6823, 0.0
  %v6870 = vrot.slane %v6869, 4
  %v6871 = vadd.f32 %v6869, %v6870
  %v6872 = vrot.slane %v6871, 2
  %v6873 = vadd.f32 %v6871, %v6872
  %v6874 = vrot.slane %v6873, 1
  %v6875 = vadd.f32 %v6873, %v6874
  %v6876 = vsel %vm6700, %v6826, 0.0
  %v6877 = vrot.slane %v6876, 4
  %v6878 = vadd.f32 %v6876, %v6877
  %v6879 = vrot.slane %v6878, 2
  %v6880 = vadd.f32 %v6878, %v6879
  %v6881 = vrot.slane %v6880, 1
  %v6882 = vadd.f32 %v6880, %v6881
  %v6883 = vsel %vm6700, %v6829, 0.0
  %v6884 = vrot.slane %v6883, 4
  %v6885 = vadd.f32 %v6883, %v6884
  %v6886 = vrot.slane %v6885, 2
  %v6887 = vadd.f32 %v6885, %v6886
  %v6888 = vrot.slane %v6887, 1
  %v6889 = vadd.f32 %v6887, %v6888
  %v6890 = vsel %vm6700, %v6832, 0.0
  %v6891 = vrot.slane %v6890, 4
  %v6892 = vadd.f32 %v6890, %v6891
  %v6893 = vrot.slane %v6892, 2
  %v6894 = vadd.f32 %v6892, %v6893
  %v6895 = vrot.slane %v6894, 1
  %v6896 = vadd.f32 %v6894, %v6895
  %v6897 = vsel %vm6700, %v6835, 0.0
  %v6898 = vrot.slane %v6897, 4
  %v6899 = vadd.f32 %v6897, %v6898
  %v6900 = vrot.slane %v6899, 2
  %v6901 = vadd.f32 %v6899, %v6900
  %v6902 = vrot.slane %v6901, 1
  %v6903 = vadd.f32 %v6901, %v6902
  %v6904 = vsel %vm6700, %v6838, 0.0
  %v6905 = vrot.slane %v6904, 4
  %v6906 = vadd.f32 %v6904, %v6905
  %v6907 = vrot.slane %v6906, 2
  %v6908 = vadd.f32 %v6906, %v6907
  %v6909 = vrot.slane %v6908, 1
  %v6910 = vadd.f32 %v6908, %v6909
  %v6911 = vsel %vm6700, %v6841, 0.0
  %v6912 = vrot.slane %v6911, 4
  %v6913 = vadd.f32 %v6911, %v6912
  %v6914 = vrot.slane %v6913, 2
  %v6915 = vadd.f32 %v6913, %v6914
  %v6916 = vrot.slane %v6915, 1
  %v6917 = vadd.f32 %v6915, %v6916
  %v6918 = vsel %vm6700, %v6844, 0.0
  %v6919 = vrot.slane %v6918, 4
  %v6920 = vadd.f32 %v6918, %v6919
  %v6921 = vrot.slane %v6920, 2
  %v6922 = vadd.f32 %v6920, %v6921
  %v6923 = vrot.slane %v6922, 1
  %v6924 = vadd.f32 %v6922, %v6923
  %v6925 = vsel %vm6700, %v6847, 0.0
  %v6926 = vrot.slane %v6925, 4
  %v6927 = vadd.f32 %v6925, %v6926
  %v6928 = vrot.slane %v6927, 2
  %v6929 = vadd.f32 %v6927, %v6928
  %v6930 = vrot.slane %v6929, 1
  %v6931 = vadd.f32 %v6929, %v6930
  %v6932 = vsel %vm6700, %v6850, 0.0
  %v6933 = vrot.slane %v6932, 4
  %v6934 = vadd.f32 %v6932, %v6933
  %v6935 = vrot.slane %v6934, 2
  %v6936 = vadd.f32 %v6934, %v6935
  %v6937 = vrot.slane %v6936, 1
  %v6938 = vadd.f32 %v6936, %v6937
  %v6939 = vsel %vm6700, %v6853, 0.0
  %v6940 = vrot.slane %v6939, 4
  %v6941 = vadd.f32 %v6939, %v6940
  %v6942 = vrot.slane %v6941, 2
  %v6943 = vadd.f32 %v6941, %v6942
  %v6944 = vrot.slane %v6943, 1
  %v6945 = vadd.f32 %v6943, %v6944
  %v6946 = vsel %vm6700, %v6856, 0.0
  %v6947 = vrot.slane %v6946, 4
  %v6948 = vadd.f32 %v6946, %v6947
  %v6949 = vrot.slane %v6948, 2
  %v6950 = vadd.f32 %v6948, %v6949
  %v6951 = vrot.slane %v6950, 1
  %v6952 = vadd.f32 %v6950, %v6951
  %v6953 = vmul.f32 %v6875, 0.020408163
  %v6954 = vmul.f32 %v6882, 0.020408163
  %v6955 = vmul.f32 %v6889, 0.020408163
  %v6956 = vmul.f32 %v6896, 0.020408163
  %v6957 = vmul.f32 %v6903, 0.020408163
  %v6958 = vmul.f32 %v6910, 0.020408163
  %v6959 = vmul.f32 %v6917, 0.020408163
  %v6960 = vmul.f32 %v6924, 0.020408163
  %v6961 = vmul.f32 %v6931, 0.020408163
  %v6962 = vmul.f32 %v6938, 0.020408163
  %v6963 = vmul.f32 %v6945, 0.020408163
  %v6964 = vmul.f32 %v6952, 0.020408163
  %v6965 = vmul.f32 %v6785, %v6785
  %v6966 = vmul.f32 %v6786, %v6786
  %v6967 = vmul.f32 %v6787, %v6787
  %v6968 = vmul.f32 %v6788, %v6788
  %v6969 = vmul.f32 %v6789, %v6789
  %v6970 = vmul.f32 %v6790, %v6790
  %v6971 = vmul.f32 %v6791, %v6791
  %v6972 = vmul.f32 %v6792, %v6792
  %v6973 = vmul.f32 %v6793, %v6793
  %v6974 = vmul.f32 %v6794, %v6794
  %v6975 = vmul.f32 %v6795, %v6795
  %v6976 = vmul.f32 %v6796, %v6796
  %v6977 = vsub.f32 %v6953, %v6965
  %v6978 = vsub.f32 %v6954, %v6966
  %v6979 = vsub.f32 %v6955, %v6967
  %v6980 = vsub.f32 %v6956, %v6968
  %v6981 = vsub.f32 %v6957, %v6969
  %v6982 = vsub.f32 %v6958, %v6970
  %v6983 = vsub.f32 %v6959, %v6971
  %v6984 = vsub.f32 %v6960, %v6972
  %v6985 = vsub.f32 %v6961, %v6973
  %v6986 = vsub.f32 %v6962, %v6974
  %v6987 = vsub.f32 %v6963, %v6975
  %v6988 = vsub.f32 %v6964, %v6976
  %v6989 = vld [vmem:[%s2] sm:$0xff]
  %v6990 = vld [vmem:[%s2 + $0x8] sm:$0xf]
  %v6991 = vadd.f32 %v6977, 0.001
  %v6992 = vadd.f32 %v6978, 0.001
  %v6993 = vadd.f32 %v6979, 0.001
  %v6994 = vadd.f32 %v6980, 0.001
  %v6995 = vadd.f32 %v6981, 0.001
  %v6996 = vadd.f32 %v6982, 0.001
  %v6997 = vadd.f32 %v6983, 0.001
  %v6998 = vadd.f32 %v6984, 0.001
  %v6999 = vadd.f32 %v6985, 0.001
  %v7000 = vadd.f32 %v6986, 0.001
  %v7001 = vadd.f32 %v6987, 0.001
  %v7002 = vadd.f32 %v6988, 0.001
  %v7003 = vrsqrt.pop %v6991
  %v7004 = vrsqrt.pop %v6992
  %v7005 = vrsqrt.pop %v6993
  %v7006 = vrsqrt.pop %v6994
  %v7007 = vrsqrt.pop %v6995
  %v7008 = vrsqrt.pop %v6996
  %v7009 = vrsqrt.pop %v6997
  %v7010 = vrsqrt.pop %v6998
  %v7011 = vrsqrt.pop %v6999
  %v7012 = vrsqrt.pop %v7000
  %v7013 = vrsqrt.pop %v7001
  %v7014 = vrsqrt.pop %v7002
  %v7027 = vcombine.low %v7003, %v7004
  %v7028 = vcombine.low %v7005, %v7006
  %v7029 = vcombine.low %v7007, %v7008
  %v7030 = vcombine.low %v7009, %v7010
  %v7032 = vunpack.c.l.s4 1966171168
  %v7033 = vunpack.c.0.s8 %v7032
  %v7034 = vlaneseq
  %v7035 = vshrl.u32 %v7034, 7
  %v7036 = vsub.s32 %v7033, %v7035
  %v7037 = vrot.slane %v7027, %v7036
  %v7039 = vunpack.c.l.s4 1966171168
  %v7040 = vunpack.c.0.s8 %v7039
  %v7041 = vlaneseq
  %v7042 = vshrl.u32 %v7041, 7
  %v7043 = vsub.s32 %v7040, %v7042
  %v7044 = vrot.slane %v7028, %v7043
  %v7046 = vunpack.c.l.s4 1966171168
  %v7047 = vunpack.c.0.s8 %v7046
  %v7048 = vlaneseq
  %v7049 = vshrl.u32 %v7048, 7
  %v7050 = vsub.s32 %v7047, %v7049
  %v7051 = vrot.slane %v7029, %v7050
  %v7053 = vunpack.c.l.s4 1966171168
  %v7054 = vunpack.c.0.s8 %v7053
  %v7055 = vlaneseq
  %v7056 = vshrl.u32 %v7055, 7
  %v7057 = vsub.s32 %v7054, %v7056
  %v7058 = vrot.slane %v7030, %v7057
  %v7059 = vcombine.low %v7037, %v7044
  %v7060 = vcombine.low %v7051, %v7058
  %v7062 = vunpack.c.l.s4 1966171168
  %v7063 = vunpack.c.0.s8 %v7062
  %v7064 = vlaneseq
  %v7065 = vshrl.u32 %v7064, 7
  %v7066 = vsub.s32 %v7063, %v7065
  %v7067 = vrot.slane %v7059, %v7066
  %v7069 = vunpack.c.l.s4 1966171168
  %v7070 = vunpack.c.0.s8 %v7069
  %v7071 = vlaneseq
  %v7072 = vshrl.u32 %v7071, 7
  %v7073 = vsub.s32 %v7070, %v7072
  %v7074 = vrot.slane %v7060, %v7073
  %v7075 = vcombine.low %v7067, %v7074
  %v7076 = vcombine.low %v7011, %v7012
  %v7077 = vcombine.low %v7013, %v7014
  %v7079 = vunpack.c.l.s4 1966171168
  %v7080 = vunpack.c.0.s8 %v7079
  %v7081 = vlaneseq
  %v7082 = vshrl.u32 %v7081, 7
  %v7083 = vsub.s32 %v7080, %v7082
  %v7084 = vrot.slane %v7076, %v7083
  %v7086 = vunpack.c.l.s4 1966171168
  %v7087 = vunpack.c.0.s8 %v7086
  %v7088 = vlaneseq
  %v7089 = vshrl.u32 %v7088, 7
  %v7090 = vsub.s32 %v7087, %v7089
  %v7091 = vrot.slane %v7077, %v7090
  %v7092 = vcombine.low %v7084, %v7091
  %v7094 = vunpack.c.l.s4 1966171168
  %v7095 = vunpack.c.0.s8 %v7094
  %v7096 = vlaneseq
  %v7097 = vshrl.u32 %v7096, 7
  %v7098 = vsub.s32 %v7095, %v7097
  %v7099 = vrot.slane %v7092, %v7098
  %v7102 = vmul.f32 %v6989, %v7075
  %v7103 = vmul.f32 %v6990, %v7099
  %v7104 = vld [vmem:[%s3] sm:$0xff]
  %v7105 = vld [vmem:[%s3 + $0x8] sm:$0xf]
  %v7108 = vlaneseq
  %v7109 = vshrl.u32 %v7108, 7
  %v7110 = vsub.s32 0, %v7109
  %v7111 = vrot.slane %v7102, %v7110
  %v7112 = vlaneseq
  %v7113 = vshrl.u32 %v7112, 7
  %v7114 = vsub.s32 1, %v7113
  %v7115 = vrot.slane %v7102, %v7114
  %v7116 = vlaneseq
  %v7117 = vshrl.u32 %v7116, 7
  %v7118 = vsub.s32 2, %v7117
  %v7119 = vrot.slane %v7102, %v7118
  %v7120 = vlaneseq
  %v7121 = vshrl.u32 %v7120, 7
  %v7122 = vsub.s32 3, %v7121
  %v7123 = vrot.slane %v7102, %v7122
  %v7124 = vlaneseq
  %v7125 = vshrl.u32 %v7124, 7
  %v7126 = vsub.s32 4, %v7125
  %v7127 = vrot.slane %v7102, %v7126
  %v7128 = vlaneseq
  %v7129 = vshrl.u32 %v7128, 7
  %v7130 = vsub.s32 5, %v7129
  %v7131 = vrot.slane %v7102, %v7130
  %v7132 = vlaneseq
  %v7133 = vshrl.u32 %v7132, 7
  %v7134 = vsub.s32 6, %v7133
  %v7135 = vrot.slane %v7102, %v7134
  %v7136 = vlaneseq
  %v7137 = vshrl.u32 %v7136, 7
  %v7138 = vsub.s32 7, %v7137
  %v7139 = vrot.slane %v7102, %v7138
  %v7140 = vlaneseq
  %v7141 = vshrl.u32 %v7140, 7
  %v7142 = vsub.s32 0, %v7141
  %v7143 = vrot.slane %v7103, %v7142
  %v7144 = vlaneseq
  %v7145 = vshrl.u32 %v7144, 7
  %v7146 = vsub.s32 1, %v7145
  %v7147 = vrot.slane %v7103, %v7146
  %v7148 = vlaneseq
  %v7149 = vshrl.u32 %v7148, 7
  %v7150 = vsub.s32 2, %v7149
  %v7151 = vrot.slane %v7103, %v7150
  %v7152 = vlaneseq
  %v7153 = vshrl.u32 %v7152, 7
  %v7154 = vsub.s32 3, %v7153
  %v7155 = vrot.slane %v7103, %v7154
  %v7168 = vmul.f32 %v6785, %v7111
  %v7169 = vmul.f32 %v6786, %v7115
  %v7170 = vmul.f32 %v6787, %v7119
  %v7171 = vmul.f32 %v6788, %v7123
  %v7172 = vmul.f32 %v6789, %v7127
  %v7173 = vmul.f32 %v6790, %v7131
  %v7174 = vmul.f32 %v6791, %v7135
  %v7175 = vmul.f32 %v6792, %v7139
  %v7176 = vmul.f32 %v6793, %v7143
  %v7177 = vmul.f32 %v6794, %v7147
  %v7178 = vmul.f32 %v6795, %v7151
  %v7179 = vmul.f32 %v6796, %v7155
  %v7192 = vcombine.low %v7168, %v7169
  %v7193 = vcombine.low %v7170, %v7171
  %v7194 = vcombine.low %v7172, %v7173
  %v7195 = vcombine.low %v7174, %v7175
  %v7197 = vunpack.c.l.s4 1966171168
  %v7198 = vunpack.c.0.s8 %v7197
  %v7199 = vlaneseq
  %v7200 = vshrl.u32 %v7199, 7
  %v7201 = vsub.s32 %v7198, %v7200
  %v7202 = vrot.slane %v7192, %v7201
  %v7204 = vunpack.c.l.s4 1966171168
  %v7205 = vunpack.c.0.s8 %v7204
  %v7206 = vlaneseq
  %v7207 = vshrl.u32 %v7206, 7
  %v7208 = vsub.s32 %v7205, %v7207
  %v7209 = vrot.slane %v7193, %v7208
  %v7211 = vunpack.c.l.s4 1966171168
  %v7212 = vunpack.c.0.s8 %v7211
  %v7213 = vlaneseq
  %v7214 = vshrl.u32 %v7213, 7
  %v7215 = vsub.s32 %v7212, %v7214
  %v7216 = vrot.slane %v7194, %v7215
  %v7218 = vunpack.c.l.s4 1966171168
  %v7219 = vunpack.c.0.s8 %v7218
  %v7220 = vlaneseq
  %v7221 = vshrl.u32 %v7220, 7
  %v7222 = vsub.s32 %v7219, %v7221
  %v7223 = vrot.slane %v7195, %v7222
  %v7224 = vcombine.low %v7202, %v7209
  %v7225 = vcombine.low %v7216, %v7223
  %v7227 = vunpack.c.l.s4 1966171168
  %v7228 = vunpack.c.0.s8 %v7227
  %v7229 = vlaneseq
  %v7230 = vshrl.u32 %v7229, 7
  %v7231 = vsub.s32 %v7228, %v7230
  %v7232 = vrot.slane %v7224, %v7231
  %v7234 = vunpack.c.l.s4 1966171168
  %v7235 = vunpack.c.0.s8 %v7234
  %v7236 = vlaneseq
  %v7237 = vshrl.u32 %v7236, 7
  %v7238 = vsub.s32 %v7235, %v7237
  %v7239 = vrot.slane %v7225, %v7238
  %v7240 = vcombine.low %v7232, %v7239
  %v7241 = vcombine.low %v7176, %v7177
  %v7242 = vcombine.low %v7178, %v7179
  %v7244 = vunpack.c.l.s4 1966171168
  %v7245 = vunpack.c.0.s8 %v7244
  %v7246 = vlaneseq
  %v7247 = vshrl.u32 %v7246, 7
  %v7248 = vsub.s32 %v7245, %v7247
  %v7249 = vrot.slane %v7241, %v7248
  %v7251 = vunpack.c.l.s4 1966171168
  %v7252 = vunpack.c.0.s8 %v7251
  %v7253 = vlaneseq
  %v7254 = vshrl.u32 %v7253, 7
  %v7255 = vsub.s32 %v7252, %v7254
  %v7256 = vrot.slane %v7242, %v7255
  %v7257 = vcombine.low %v7249, %v7256
  %v7259 = vunpack.c.l.s4 1966171168
  %v7260 = vunpack.c.0.s8 %v7259
  %v7261 = vlaneseq
  %v7262 = vshrl.u32 %v7261, 7
  %v7263 = vsub.s32 %v7260, %v7262
  %v7264 = vrot.slane %v7257, %v7263
  %v7267 = vsub.f32 %v7104, %v7240
  %v7268 = vsub.f32 %v7105, %v7264
  %v7269 = vld [vmem:[%s4] sm:$0x7f]
  %v7270 = vld [vmem:[%s4 + $0x8] sm:$0x7f]
  %v7271 = vld [vmem:[%s4 + $0x10] sm:$0x7f]
  %v7272 = vld [vmem:[%s4 + $0x18] sm:$0x7f]
  %v7273 = vld [vmem:[%s4 + $0x20] sm:$0x7f]
  %v7274 = vld [vmem:[%s4 + $0x28] sm:$0x7f]
  %v7275 = vld [vmem:[%s4 + $0x30] sm:$0x7f]
  %v7276 = vld [vmem:[%s4 + $0x38] sm:$0x7f]
  %v7277 = vld [vmem:[%s4 + $0x40] sm:$0x7f]
  %v7278 = vld [vmem:[%s4 + $0x48] sm:$0x7f]
  %v7279 = vld [vmem:[%s4 + $0x50] sm:$0x7f]
  %v7280 = vld [vmem:[%s4 + $0x58] sm:$0x7f]
  %v7281 = vmul.f32 %v7269, %v7111
  %v7282 = vmul.f32 %v7270, %v7115
  %v7283 = vmul.f32 %v7271, %v7119
  %v7284 = vmul.f32 %v7272, %v7123
  %v7285 = vmul.f32 %v7273, %v7127
  %v7286 = vmul.f32 %v7274, %v7131
  %v7287 = vmul.f32 %v7275, %v7135
  %v7288 = vmul.f32 %v7276, %v7139
  %v7289 = vmul.f32 %v7277, %v7143
  %v7290 = vmul.f32 %v7278, %v7147
  %v7291 = vmul.f32 %v7279, %v7151
  %v7292 = vmul.f32 %v7280, %v7155
  %v7295 = vlaneseq
  %v7296 = vshrl.u32 %v7295, 7
  %v7297 = vsub.s32 0, %v7296
  %v7298 = vrot.slane %v7267, %v7297
  %v7299 = vlaneseq
  %v7300 = vshrl.u32 %v7299, 7
  %v7301 = vsub.s32 1, %v7300
  %v7302 = vrot.slane %v7267, %v7301
  %v7303 = vlaneseq
  %v7304 = vshrl.u32 %v7303, 7
  %v7305 = vsub.s32 2, %v7304
  %v7306 = vrot.slane %v7267, %v7305
  %v7307 = vlaneseq
  %v7308 = vshrl.u32 %v7307, 7
  %v7309 = vsub.s32 3, %v7308
  %v7310 = vrot.slane %v7267, %v7309
  %v7311 = vlaneseq
  %v7312 = vshrl.u32 %v7311, 7
  %v7313 = vsub.s32 4, %v7312
  %v7314 = vrot.slane %v7267, %v7313
  %v7315 = vlaneseq
  %v7316 = vshrl.u32 %v7315, 7
  %v7317 = vsub.s32 5, %v7316
  %v7318 = vrot.slane %v7267, %v7317
  %v7319 = vlaneseq
  %v7320 = vshrl.u32 %v7319, 7
  %v7321 = vsub.s32 6, %v7320
  %v7322 = vrot.slane %v7267, %v7321
  %v7323 = vlaneseq
  %v7324 = vshrl.u32 %v7323, 7
  %v7325 = vsub.s32 7, %v7324
  %v7326 = vrot.slane %v7267, %v7325
  %v7327 = vlaneseq
  %v7328 = vshrl.u32 %v7327, 7
  %v7329 = vsub.s32 0, %v7328
  %v7330 = vrot.slane %v7268, %v7329
  %v7331 = vlaneseq
  %v7332 = vshrl.u32 %v7331, 7
  %v7333 = vsub.s32 1, %v7332
  %v7334 = vrot.slane %v7268, %v7333
  %v7335 = vlaneseq
  %v7336 = vshrl.u32 %v7335, 7
  %v7337 = vsub.s32 2, %v7336
  %v7338 = vrot.slane %v7268, %v7337
  %v7339 = vlaneseq
  %v7340 = vshrl.u32 %v7339, 7
  %v7341 = vsub.s32 3, %v7340
  %v7342 = vrot.slane %v7268, %v7341
  %v7355 = vadd.f32 %v7281, %v7298
  %v7356 = vadd.f32 %v7282, %v7302
  %v7357 = vadd.f32 %v7283, %v7306
  %v7358 = vadd.f32 %v7284, %v7310
  %v7359 = vadd.f32 %v7285, %v7314
  %v7360 = vadd.f32 %v7286, %v7318
  %v7361 = vadd.f32 %v7287, %v7322
  %v7362 = vadd.f32 %v7288, %v7326
  %v7363 = vadd.f32 %v7289, %v7330
  %v7364 = vadd.f32 %v7290, %v7334
  %v7365 = vadd.f32 %v7291, %v7338
  %v7366 = vadd.f32 %v7292, %v7342
  %7367 = vst [vmem:[%s4] sm:$0x7f] %v7355
  %7368 = vst [vmem:[%s4 + $0x8] sm:$0x7f] %v7356
  %7369 = vst [vmem:[%s4 + $0x10] sm:$0x7f] %v7357
  %7370 = vst [vmem:[%s4 + $0x18] sm:$0x7f] %v7358
  %7371 = vst [vmem:[%s4 + $0x20] sm:$0x7f] %v7359
  %7372 = vst [vmem:[%s4 + $0x28] sm:$0x7f] %v7360
  %7373 = vst [vmem:[%s4 + $0x30] sm:$0x7f] %v7361
  %7374 = vst [vmem:[%s4 + $0x38] sm:$0x7f] %v7362
  %7375 = vst [vmem:[%s4 + $0x40] sm:$0x7f] %v7363
  %7376 = vst [vmem:[%s4 + $0x48] sm:$0x7f] %v7364
  %7377 = vst [vmem:[%s4 + $0x50] sm:$0x7f] %v7365
  %7378 = vst [vmem:[%s4 + $0x58] sm:$0x7f] %v7366
  %v7379 = vld [vmem:[%s2585] sm:$0x7f]
  %v7380 = vld [vmem:[%s2585 + $0x8] sm:$0x7f]
  %v7381 = vld [vmem:[%s2585 + $0x10] sm:$0x7f]
  %v7382 = vld [vmem:[%s2585 + $0x18] sm:$0x7f]
  %v7383 = vld [vmem:[%s2585 + $0x20] sm:$0x7f]
  %v7384 = vld [vmem:[%s2585 + $0x28] sm:$0x7f]
  %v7385 = vld [vmem:[%s2585 + $0x30] sm:$0x7f]
  %v7386 = vld [vmem:[%s2585 + $0x38] sm:$0x7f]
  %v7387 = vld [vmem:[%s2585 + $0x40] sm:$0x7f]
  %v7388 = vld [vmem:[%s2585 + $0x48] sm:$0x7f]
  %v7389 = vld [vmem:[%s2585 + $0x50] sm:$0x7f]
  %v7390 = vld [vmem:[%s2585 + $0x58] sm:$0x7f]
  %v7391 = vmul.f32 %v7379, %v7111
  %v7392 = vmul.f32 %v7380, %v7115
  %v7393 = vmul.f32 %v7381, %v7119
  %v7394 = vmul.f32 %v7382, %v7123
  %v7395 = vmul.f32 %v7383, %v7127
  %v7396 = vmul.f32 %v7384, %v7131
  %v7397 = vmul.f32 %v7385, %v7135
  %v7398 = vmul.f32 %v7386, %v7139
  %v7399 = vmul.f32 %v7387, %v7143
  %v7400 = vmul.f32 %v7388, %v7147
  %v7401 = vmul.f32 %v7389, %v7151
  %v7402 = vmul.f32 %v7390, %v7155
  %v7403 = vadd.f32 %v7391, %v7298
  %v7404 = vadd.f32 %v7392, %v7302
  %v7405 = vadd.f32 %v7393, %v7306
  %v7406 = vadd.f32 %v7394, %v7310
  %v7407 = vadd.f32 %v7395, %v7314
  %v7408 = vadd.f32 %v7396, %v7318
  %v7409 = vadd.f32 %v7397, %v7322
  %v7410 = vadd.f32 %v7398, %v7326
  %v7411 = vadd.f32 %v7399, %v7330
  %v7412 = vadd.f32 %v7400, %v7334
  %v7413 = vadd.f32 %v7401, %v7338
  %v7414 = vadd.f32 %v7402, %v7342
  %7415 = vst [vmem:[%s2585] sm:$0x7f] %v7403
  %7416 = vst [vmem:[%s2585 + $0x8] sm:$0x7f] %v7404
  %7417 = vst [vmem:[%s2585 + $0x10] sm:$0x7f] %v7405
  %7418 = vst [vmem:[%s2585 + $0x18] sm:$0x7f] %v7406
  %7419 = vst [vmem:[%s2585 + $0x20] sm:$0x7f] %v7407
  %7420 = vst [vmem:[%s2585 + $0x28] sm:$0x7f] %v7408
  %7421 = vst [vmem:[%s2585 + $0x30] sm:$0x7f] %v7409
  %7422 = vst [vmem:[%s2585 + $0x38] sm:$0x7f] %v7410
  %7423 = vst [vmem:[%s2585 + $0x40] sm:$0x7f] %v7411
  %7424 = vst [vmem:[%s2585 + $0x48] sm:$0x7f] %v7412
  %7425 = vst [vmem:[%s2585 + $0x50] sm:$0x7f] %v7413
  %7426 = vst [vmem:[%s2585 + $0x58] sm:$0x7f] %v7414
  %v7427 = vld [vmem:[%s3391] sm:$0x7f]
  %v7428 = vld [vmem:[%s3391 + $0x8] sm:$0x7f]
  %v7429 = vld [vmem:[%s3391 + $0x10] sm:$0x7f]
  %v7430 = vld [vmem:[%s3391 + $0x18] sm:$0x7f]
  %v7431 = vld [vmem:[%s3391 + $0x20] sm:$0x7f]
  %v7432 = vld [vmem:[%s3391 + $0x28] sm:$0x7f]
  %v7433 = vld [vmem:[%s3391 + $0x30] sm:$0x7f]
  %v7434 = vld [vmem:[%s3391 + $0x38] sm:$0x7f]
  %v7435 = vld [vmem:[%s3391 + $0x40] sm:$0x7f]
  %v7436 = vld [vmem:[%s3391 + $0x48] sm:$0x7f]
  %v7437 = vld [vmem:[%s3391 + $0x50] sm:$0x7f]
  %v7438 = vld [vmem:[%s3391 + $0x58] sm:$0x7f]
  %v7439 = vmul.f32 %v7427, %v7111
  %v7440 = vmul.f32 %v7428, %v7115
  %v7441 = vmul.f32 %v7429, %v7119
  %v7442 = vmul.f32 %v7430, %v7123
  %v7443 = vmul.f32 %v7431, %v7127
  %v7444 = vmul.f32 %v7432, %v7131
  %v7445 = vmul.f32 %v7433, %v7135
  %v7446 = vmul.f32 %v7434, %v7139
  %v7447 = vmul.f32 %v7435, %v7143
  %v7448 = vmul.f32 %v7436, %v7147
  %v7449 = vmul.f32 %v7437, %v7151
  %v7450 = vmul.f32 %v7438, %v7155
  %v7451 = vadd.f32 %v7439, %v7298
  %v7452 = vadd.f32 %v7440, %v7302
  %v7453 = vadd.f32 %v7441, %v7306
  %v7454 = vadd.f32 %v7442, %v7310
  %v7455 = vadd.f32 %v7443, %v7314
  %v7456 = vadd.f32 %v7444, %v7318
  %v7457 = vadd.f32 %v7445, %v7322
  %v7458 = vadd.f32 %v7446, %v7326
  %v7459 = vadd.f32 %v7447, %v7330
  %v7460 = vadd.f32 %v7448, %v7334
  %v7461 = vadd.f32 %v7449, %v7338
  %v7462 = vadd.f32 %v7450, %v7342
  %7463 = vst [vmem:[%s3391] sm:$0x7f] %v7451
  %7464 = vst [vmem:[%s3391 + $0x8] sm:$0x7f] %v7452
  %7465 = vst [vmem:[%s3391 + $0x10] sm:$0x7f] %v7453
  %7466 = vst [vmem:[%s3391 + $0x18] sm:$0x7f] %v7454
  %7467 = vst [vmem:[%s3391 + $0x20] sm:$0x7f] %v7455
  %7468 = vst [vmem:[%s3391 + $0x28] sm:$0x7f] %v7456
  %7469 = vst [vmem:[%s3391 + $0x30] sm:$0x7f] %v7457
  %7470 = vst [vmem:[%s3391 + $0x38] sm:$0x7f] %v7458
  %7471 = vst [vmem:[%s3391 + $0x40] sm:$0x7f] %v7459
  %7472 = vst [vmem:[%s3391 + $0x48] sm:$0x7f] %v7460
  %7473 = vst [vmem:[%s3391 + $0x50] sm:$0x7f] %v7461
  %7474 = vst [vmem:[%s3391 + $0x58] sm:$0x7f] %v7462
  %v7475 = vld [vmem:[%s4197] sm:$0x7f]
  %v7476 = vld [vmem:[%s4197 + $0x8] sm:$0x7f]
  %v7477 = vld [vmem:[%s4197 + $0x10] sm:$0x7f]
  %v7478 = vld [vmem:[%s4197 + $0x18] sm:$0x7f]
  %v7479 = vld [vmem:[%s4197 + $0x20] sm:$0x7f]
  %v7480 = vld [vmem:[%s4197 + $0x28] sm:$0x7f]
  %v7481 = vld [vmem:[%s4197 + $0x30] sm:$0x7f]
  %v7482 = vld [vmem:[%s4197 + $0x38] sm:$0x7f]
  %v7483 = vld [vmem:[%s4197 + $0x40] sm:$0x7f]
  %v7484 = vld [vmem:[%s4197 + $0x48] sm:$0x7f]
  %v7485 = vld [vmem:[%s4197 + $0x50] sm:$0x7f]
  %v7486 = vld [vmem:[%s4197 + $0x58] sm:$0x7f]
  %v7487 = vmul.f32 %v7475, %v7111
  %v7488 = vmul.f32 %v7476, %v7115
  %v7489 = vmul.f32 %v7477, %v7119
  %v7490 = vmul.f32 %v7478, %v7123
  %v7491 = vmul.f32 %v7479, %v7127
  %v7492 = vmul.f32 %v7480, %v7131
  %v7493 = vmul.f32 %v7481, %v7135
  %v7494 = vmul.f32 %v7482, %v7139
  %v7495 = vmul.f32 %v7483, %v7143
  %v7496 = vmul.f32 %v7484, %v7147
  %v7497 = vmul.f32 %v7485, %v7151
  %v7498 = vmul.f32 %v7486, %v7155
  %v7499 = vadd.f32 %v7487, %v7298
  %v7500 = vadd.f32 %v7488, %v7302
  %v7501 = vadd.f32 %v7489, %v7306
  %v7502 = vadd.f32 %v7490, %v7310
  %v7503 = vadd.f32 %v7491, %v7314
  %v7504 = vadd.f32 %v7492, %v7318
  %v7505 = vadd.f32 %v7493, %v7322
  %v7506 = vadd.f32 %v7494, %v7326
  %v7507 = vadd.f32 %v7495, %v7330
  %v7508 = vadd.f32 %v7496, %v7334
  %v7509 = vadd.f32 %v7497, %v7338
  %v7510 = vadd.f32 %v7498, %v7342
  %7511 = vst [vmem:[%s4197] sm:$0x7f] %v7499
  %7512 = vst [vmem:[%s4197 + $0x8] sm:$0x7f] %v7500
  %7513 = vst [vmem:[%s4197 + $0x10] sm:$0x7f] %v7501
  %7514 = vst [vmem:[%s4197 + $0x18] sm:$0x7f] %v7502
  %7515 = vst [vmem:[%s4197 + $0x20] sm:$0x7f] %v7503
  %7516 = vst [vmem:[%s4197 + $0x28] sm:$0x7f] %v7504
  %7517 = vst [vmem:[%s4197 + $0x30] sm:$0x7f] %v7505
  %7518 = vst [vmem:[%s4197 + $0x38] sm:$0x7f] %v7506
  %7519 = vst [vmem:[%s4197 + $0x40] sm:$0x7f] %v7507
  %7520 = vst [vmem:[%s4197 + $0x48] sm:$0x7f] %v7508
  %7521 = vst [vmem:[%s4197 + $0x50] sm:$0x7f] %v7509
  %7522 = vst [vmem:[%s4197 + $0x58] sm:$0x7f] %v7510
  %v7523 = vld [vmem:[%s5003] sm:$0x7f]
  %v7524 = vld [vmem:[%s5003 + $0x8] sm:$0x7f]
  %v7525 = vld [vmem:[%s5003 + $0x10] sm:$0x7f]
  %v7526 = vld [vmem:[%s5003 + $0x18] sm:$0x7f]
  %v7527 = vld [vmem:[%s5003 + $0x20] sm:$0x7f]
  %v7528 = vld [vmem:[%s5003 + $0x28] sm:$0x7f]
  %v7529 = vld [vmem:[%s5003 + $0x30] sm:$0x7f]
  %v7530 = vld [vmem:[%s5003 + $0x38] sm:$0x7f]
  %v7531 = vld [vmem:[%s5003 + $0x40] sm:$0x7f]
  %v7532 = vld [vmem:[%s5003 + $0x48] sm:$0x7f]
  %v7533 = vld [vmem:[%s5003 + $0x50] sm:$0x7f]
  %v7534 = vld [vmem:[%s5003 + $0x58] sm:$0x7f]
  %v7535 = vmul.f32 %v7523, %v7111
  %v7536 = vmul.f32 %v7524, %v7115
  %v7537 = vmul.f32 %v7525, %v7119
  %v7538 = vmul.f32 %v7526, %v7123
  %v7539 = vmul.f32 %v7527, %v7127
  %v7540 = vmul.f32 %v7528, %v7131
  %v7541 = vmul.f32 %v7529, %v7135
  %v7542 = vmul.f32 %v7530, %v7139
  %v7543 = vmul.f32 %v7531, %v7143
  %v7544 = vmul.f32 %v7532, %v7147
  %v7545 = vmul.f32 %v7533, %v7151
  %v7546 = vmul.f32 %v7534, %v7155
  %v7547 = vadd.f32 %v7535, %v7298
  %v7548 = vadd.f32 %v7536, %v7302
  %v7549 = vadd.f32 %v7537, %v7306
  %v7550 = vadd.f32 %v7538, %v7310
  %v7551 = vadd.f32 %v7539, %v7314
  %v7552 = vadd.f32 %v7540, %v7318
  %v7553 = vadd.f32 %v7541, %v7322
  %v7554 = vadd.f32 %v7542, %v7326
  %v7555 = vadd.f32 %v7543, %v7330
  %v7556 = vadd.f32 %v7544, %v7334
  %v7557 = vadd.f32 %v7545, %v7338
  %v7558 = vadd.f32 %v7546, %v7342
  %7559 = vst [vmem:[%s5003] sm:$0x7f] %v7547
  %7560 = vst [vmem:[%s5003 + $0x8] sm:$0x7f] %v7548
  %7561 = vst [vmem:[%s5003 + $0x10] sm:$0x7f] %v7549
  %7562 = vst [vmem:[%s5003 + $0x18] sm:$0x7f] %v7550
  %7563 = vst [vmem:[%s5003 + $0x20] sm:$0x7f] %v7551
  %7564 = vst [vmem:[%s5003 + $0x28] sm:$0x7f] %v7552
  %7565 = vst [vmem:[%s5003 + $0x30] sm:$0x7f] %v7553
  %7566 = vst [vmem:[%s5003 + $0x38] sm:$0x7f] %v7554
  %7567 = vst [vmem:[%s5003 + $0x40] sm:$0x7f] %v7555
  %7568 = vst [vmem:[%s5003 + $0x48] sm:$0x7f] %v7556
  %7569 = vst [vmem:[%s5003 + $0x50] sm:$0x7f] %v7557
  %7570 = vst [vmem:[%s5003 + $0x58] sm:$0x7f] %v7558
  %v7571 = vld [vmem:[%s5809] sm:$0x7f]
  %v7572 = vld [vmem:[%s5809 + $0x8] sm:$0x7f]
  %v7573 = vld [vmem:[%s5809 + $0x10] sm:$0x7f]
  %v7574 = vld [vmem:[%s5809 + $0x18] sm:$0x7f]
  %v7575 = vld [vmem:[%s5809 + $0x20] sm:$0x7f]
  %v7576 = vld [vmem:[%s5809 + $0x28] sm:$0x7f]
  %v7577 = vld [vmem:[%s5809 + $0x30] sm:$0x7f]
  %v7578 = vld [vmem:[%s5809 + $0x38] sm:$0x7f]
  %v7579 = vld [vmem:[%s5809 + $0x40] sm:$0x7f]
  %v7580 = vld [vmem:[%s5809 + $0x48] sm:$0x7f]
  %v7581 = vld [vmem:[%s5809 + $0x50] sm:$0x7f]
  %v7582 = vld [vmem:[%s5809 + $0x58] sm:$0x7f]
  %v7583 = vmul.f32 %v7571, %v7111
  %v7584 = vmul.f32 %v7572, %v7115
  %v7585 = vmul.f32 %v7573, %v7119
  %v7586 = vmul.f32 %v7574, %v7123
  %v7587 = vmul.f32 %v7575, %v7127
  %v7588 = vmul.f32 %v7576, %v7131
  %v7589 = vmul.f32 %v7577, %v7135
  %v7590 = vmul.f32 %v7578, %v7139
  %v7591 = vmul.f32 %v7579, %v7143
  %v7592 = vmul.f32 %v7580, %v7147
  %v7593 = vmul.f32 %v7581, %v7151
  %v7594 = vmul.f32 %v7582, %v7155
  %v7595 = vadd.f32 %v7583, %v7298
  %v7596 = vadd.f32 %v7584, %v7302
  %v7597 = vadd.f32 %v7585, %v7306
  %v7598 = vadd.f32 %v7586, %v7310
  %v7599 = vadd.f32 %v7587, %v7314
  %v7600 = vadd.f32 %v7588, %v7318
  %v7601 = vadd.f32 %v7589, %v7322
  %v7602 = vadd.f32 %v7590, %v7326
  %v7603 = vadd.f32 %v7591, %v7330
  %v7604 = vadd.f32 %v7592, %v7334
  %v7605 = vadd.f32 %v7593, %v7338
  %v7606 = vadd.f32 %v7594, %v7342
  %7607 = vst [vmem:[%s5809] sm:$0x7f] %v7595
  %7608 = vst [vmem:[%s5809 + $0x8] sm:$0x7f] %v7596
  %7609 = vst [vmem:[%s5809 + $0x10] sm:$0x7f] %v7597
  %7610 = vst [vmem:[%s5809 + $0x18] sm:$0x7f] %v7598
  %7611 = vst [vmem:[%s5809 + $0x20] sm:$0x7f] %v7599
  %7612 = vst [vmem:[%s5809 + $0x28] sm:$0x7f] %v7600
  %7613 = vst [vmem:[%s5809 + $0x30] sm:$0x7f] %v7601
  %7614 = vst [vmem:[%s5809 + $0x38] sm:$0x7f] %v7602
  %7615 = vst [vmem:[%s5809 + $0x40] sm:$0x7f] %v7603
  %7616 = vst [vmem:[%s5809 + $0x48] sm:$0x7f] %v7604
  %7617 = vst [vmem:[%s5809 + $0x50] sm:$0x7f] %v7605
  %7618 = vst [vmem:[%s5809 + $0x58] sm:$0x7f] %v7606
  %v7619 = vld [vmem:[%s6615] sm:$0x7f]
  %v7620 = vld [vmem:[%s6615 + $0x8] sm:$0x7f]
  %v7621 = vld [vmem:[%s6615 + $0x10] sm:$0x7f]
  %v7622 = vld [vmem:[%s6615 + $0x18] sm:$0x7f]
  %v7623 = vld [vmem:[%s6615 + $0x20] sm:$0x7f]
  %v7624 = vld [vmem:[%s6615 + $0x28] sm:$0x7f]
  %v7625 = vld [vmem:[%s6615 + $0x30] sm:$0x7f]
  %v7626 = vld [vmem:[%s6615 + $0x38] sm:$0x7f]
  %v7627 = vld [vmem:[%s6615 + $0x40] sm:$0x7f]
  %v7628 = vld [vmem:[%s6615 + $0x48] sm:$0x7f]
  %v7629 = vld [vmem:[%s6615 + $0x50] sm:$0x7f]
  %v7630 = vld [vmem:[%s6615 + $0x58] sm:$0x7f]
  %v7631 = vmul.f32 %v7619, %v7111
  %v7632 = vmul.f32 %v7620, %v7115
  %v7633 = vmul.f32 %v7621, %v7119
  %v7634 = vmul.f32 %v7622, %v7123
  %v7635 = vmul.f32 %v7623, %v7127
  %v7636 = vmul.f32 %v7624, %v7131
  %v7637 = vmul.f32 %v7625, %v7135
  %v7638 = vmul.f32 %v7626, %v7139
  %v7639 = vmul.f32 %v7627, %v7143
  %v7640 = vmul.f32 %v7628, %v7147
  %v7641 = vmul.f32 %v7629, %v7151
  %v7642 = vmul.f32 %v7630, %v7155
  %v7643 = vadd.f32 %v7631, %v7298
  %v7644 = vadd.f32 %v7632, %v7302
  %v7645 = vadd.f32 %v7633, %v7306
  %v7646 = vadd.f32 %v7634, %v7310
  %v7647 = vadd.f32 %v7635, %v7314
  %v7648 = vadd.f32 %v7636, %v7318
  %v7649 = vadd.f32 %v7637, %v7322
  %v7650 = vadd.f32 %v7638, %v7326
  %v7651 = vadd.f32 %v7639, %v7330
  %v7652 = vadd.f32 %v7640, %v7334
  %v7653 = vadd.f32 %v7641, %v7338
  %v7654 = vadd.f32 %v7642, %v7342
  %7655 = vst [vmem:[%s6615] sm:$0x7f] %v7643
  %7656 = vst [vmem:[%s6615 + $0x8] sm:$0x7f] %v7644
  %7657 = vst [vmem:[%s6615 + $0x10] sm:$0x7f] %v7645
  %7658 = vst [vmem:[%s6615 + $0x18] sm:$0x7f] %v7646
  %7659 = vst [vmem:[%s6615 + $0x20] sm:$0x7f] %v7647
  %7660 = vst [vmem:[%s6615 + $0x28] sm:$0x7f] %v7648
  %7661 = vst [vmem:[%s6615 + $0x30] sm:$0x7f] %v7649
  %7662 = vst [vmem:[%s6615 + $0x38] sm:$0x7f] %v7650
  %7663 = vst [vmem:[%s6615 + $0x40] sm:$0x7f] %v7651
  %7664 = vst [vmem:[%s6615 + $0x48] sm:$0x7f] %v7652
  %7665 = vst [vmem:[%s6615 + $0x50] sm:$0x7f] %v7653
  %7666 = vst [vmem:[%s6615 + $0x58] sm:$0x7f] %v7654
  // Predicated region
  $region18: #{tpu_custom_call.1} parent=0 // pred_check
    _
  $region19: #{tpu_custom_call.1} parent=0 // pred_check_branch
    %7668 = sbr.rel (0) target = $region21
  $region20: #{tpu_custom_call.1} parent=0 // pred_region
    _
  $region21: #{tpu_custom_call.1} parent=0 // pred_fallthru
    _
  // Predicated region
  $region22: #{tpu_custom_call.1} parent=0 // pred_check
    _
  $region23: #{tpu_custom_call.1} parent=0 // pred_check_branch
    %7670 = sbr.rel (0) target = $region25
  $region24: #{tpu_custom_call.1} parent=0 // pred_region
    _
  $region25: #{tpu_custom_call.1} parent=0 // pred_fallthru
    _

</llo_original>
